<compile_context>
chip_gen: v6e
topology: v6e:2x2x1
jax: 0.10.0
libtpu: 0.0.40
codegen_flags: <defaults>
</compile_context>

<pallas_src>
import jax
import jax.numpy as jnp
from jax.experimental import pallas as pl
from jax.experimental.pallas import tpu as pltpu


HIDDEN = 20            # LSTM hidden size (from the module)
GPAD = 32              # per-gate lane padding (4 gates * 32 = 128 lanes)
CONV_CH = 16
L1_OUT, L2_OUT, N_CLASSES = 200, 50, 2


def _round_up(x, m):
    return (x + m - 1) // m * m


def build_fused_forward(B, F, C, H, W):
    NN = B * F                      # frames folded into batch (row order: f*B + b)
    HW = H * W
    Ho2, Wo2 = H - 4, W - 4         # conv2 output spatial size
    Hp, Wp = Ho2 // 2, Wo2 // 2     # pooled spatial size
    FLAT = CONV_CH * Hp * Wp        # 576 at default shapes
    assert NN % 8 == 0, "frame count must be a multiple of 8 for aligned slabs"

    CHP = 16                        # conv chunk size, in positions
    CHROWS = CHP * NN               # rows per conv chunk (256 at default shapes)
    REACH = 2 * W + 2               # row reach of a 3x3 window at row-stride W
    # Position extents of each stage (position p = h*W + w, slab row = p*NN + n).
    P2_need = 2 * (Hp - 1) * W + 2 * (Wp - 1) + W + 2   # deepest conv2 pos + 1
    P2 = _round_up(P2_need, CHP)
    P1 = _round_up(P2 + REACH, CHP)
    P0 = P1 + REACH
    R0, R1, R2 = P0 * NN, P1 * NN, P2 * NN
    TAP_OFFS = [(di * W + dj) * NN for di in range(3) for dj in range(3)]
    STAGE_W = 9 * max(C, CONV_CH)   # im2col staging width (144 here)

    def kernel(x_ref, w1_ref, b1_ref, w2_ref, b2_ref, w1f_ref, bl1_ref,
               wl2_ref, bl2_ref, wih_ref, whh_ref, blstm_ref, w3_ref, b3_ref,
               out_ref, y1_scr, y2_scr, stage_scr, pool_scr):

        def sigmoid(v):             # EUP exp + EUP approx reciprocal
            return pl.reciprocal(1.0 + jnp.exp(-v), approx=True)

        # ---- conv stage: im2col 9 shifted slices -> ONE K=9*Cin matmul/chunk ----
        def conv_stage(src_ref, w_ref, b_ref, dst_ref, cin, n_rows):
            bias = b_ref[...]
            kw = 9 * cin

            @pl.loop(0, n_rows // CHROWS)
            def _(ci):
                r0 = pl.multiple_of(ci * CHROWS, CHROWS)
                for k in range(9):   # contiguous row slices -> staging columns
                    stage_scr[:, k * cin:(k + 1) * cin] = src_ref[
                        pl.ds(r0 + TAP_OFFS[k], CHROWS), :]
                acc = jnp.dot(stage_scr[:, :kw], w_ref[...],
                              preferred_element_type=jnp.float32)
                dst_ref[pl.ds(r0, CHROWS), :] = jnp.maximum(
                    acc + bias, 0.0).astype(jnp.bfloat16)

        conv_stage(x_ref, w1_ref, b1_ref, y1_scr, C, R1)          # conv1 + ReLU
        conv_stage(y1_scr, w2_ref, b2_ref, y2_scr, CONV_CH, R2)   # conv2 + ReLU

        # ---- maxpool(2x2) + flatten(CHW) staged into (NN, 576), then l1 ----
        k = 0
        for po in range(Hp):
            for qo in range(Wp):
                base = (2 * po * W + 2 * qo) * NN
                p00 = y2_scr[base:base + NN, :]
                p01 = y2_scr[base + NN:base + 2 * NN, :]
                p10 = y2_scr[base + W * NN:base + (W + 1) * NN, :]
                p11 = y2_scr[base + (W + 1) * NN:base + (W + 2) * NN, :]
                pool_scr[:, k * CONV_CH:(k + 1) * CONV_CH] = jnp.maximum(
                    jnp.maximum(p00, p01), jnp.maximum(p10, p11))
                k += 1

        h1 = jnp.maximum(
            jnp.dot(pool_scr[...], w1f_ref[...],
                    preferred_element_type=jnp.float32) + bl1_ref[...], 0.0)

        # ---- l2 + ReLU (dropout = identity in inference) ----
        h2 = jnp.maximum(
            jnp.dot(h1.astype(jnp.bfloat16), wl2_ref[...],
                    preferred_element_type=jnp.float32) + bl2_ref[...], 0.0)

        # ---- LSTM: hoisted input projection + unrolled recurrence (packed gates) ----
        xg = jnp.dot(h2.astype(jnp.bfloat16), wih_ref[...],
                     preferred_element_type=jnp.float32) + blstm_ref[...]  # (NN, 128)
        whh = whh_ref[...]                                                  # (32, 128)
        h = jnp.zeros((B, GPAD), jnp.float32)
        c = jnp.zeros((B, GPAD), jnp.float32)
        for t in range(F):
            g = xg[t * B:(t + 1) * B, :] + jnp.dot(
                h.astype(jnp.bfloat16), whh,
                preferred_element_type=jnp.float32)                         # (B, 128)
            i_g = sigmoid(g[:, 0 * GPAD:1 * GPAD])
            f_g = sigmoid(g[:, 1 * GPAD:2 * GPAD])
            g_g = jnp.tanh(g[:, 2 * GPAD:3 * GPAD])
            o_g = sigmoid(g[:, 3 * GPAD:4 * GPAD])
            c = f_g * c + i_g * g_g
            h = o_g * jnp.tanh(c)

        # ---- l3 + log_softmax (fused head) ----
        z = jnp.dot(h.astype(jnp.bfloat16), w3_ref[...],
                    preferred_element_type=jnp.float32) + b3_ref[...]       # (B, 2)
        m = jnp.max(z, axis=-1, keepdims=True)
        lse = m + jnp.log(jnp.sum(jnp.exp(z - m), axis=-1, keepdims=True))
        out_ref[...] = (z - lse).astype(out_ref.dtype)

    call = pl.pallas_call(
        kernel,
        out_shape=jax.ShapeDtypeStruct((B, N_CLASSES), jnp.float32),
        scratch_shapes=[
            pltpu.VMEM((R1, CONV_CH), jnp.bfloat16),     # conv1 output slab
            pltpu.VMEM((R2, CONV_CH), jnp.bfloat16),     # conv2 output slab
            pltpu.VMEM((CHROWS, STAGE_W), jnp.bfloat16), # im2col staging
            pltpu.VMEM((NN, FLAT), jnp.bfloat16),        # pooled/flatten staging
        ],
    )

    def forward(x, p):
        # Input layout glue (only per-input glue left): (B,F,C,H,W) ->
        # (position, frame, channel), zero-pad positions to P0, flatten, bf16.
        xs = x.transpose(3, 4, 1, 0, 2).reshape(HW, NN, C)
        xs = jnp.pad(xs, ((0, P0 - HW), (0, 0), (0, 0)))
        xs = xs.reshape(R0, C).astype(jnp.bfloat16)
        return call(xs, p["w1"], p["b1"], p["w2"], p["b2"],
                    p["w1f"], p["b_l1"], p["w_l2"], p["b_l2"],
                    p["wih"], p["whh"], p["b_lstm"], p["w3"], p["b3"])

    return forward


# ----------------------------------------------------------------------------
# Deterministic synthetic parameters (shapes per nn.Module __init__) and their
# one-time re-layout into kernel-ready form.
# ----------------------------------------------------------------------------
def init_params(key, channels, flat_dim):
    ks = jax.random.split(key, 12)

    def u(k, shape, scale):
        return scale * jax.random.uniform(k, shape, jnp.float32, -1.0, 1.0)

    return {
        "c1_w": u(ks[0], (3, 3, channels, 16), 0.1),   # (kh, kw, Cin, Cout)
        "c1_b": u(ks[1], (16,), 0.1),
        "c2_w": u(ks[2], (3, 3, 16, 16), 0.1),
        "c2_b": u(ks[3], (16,), 0.1),
        "l1_w": u(ks[4], (flat_dim, 200), 0.05),       # rows in CHW-flatten order
        "l1_b": u(ks[5], (200,), 0.05),
        "l2_w": u(ks[6], (200, 50), 0.05),
        "l2_b": u(ks[7], (50,), 0.05),
        "lstm_wih": u(ks[8], (50, 80), 0.1),           # W_ih^T, gate order i,f,g,o
        "lstm_whh": u(ks[9], (20, 80), 0.1),           # W_hh^T
        "lstm_b": u(ks[10], (1, 80), 0.1),             # b_ih + b_hh combined
        "l3_w": u(ks[11], (20, 2), 0.1),
        "l3_b": jnp.zeros((2,), jnp.float32),
    }


def prepare_params(p, H, W):
    """One-time re-layout of PyTorch-style params into kernel-ready form."""
    Hp, Wp = (H - 4) // 2, (W - 4) // 2

    def pad_gates(w):   # (..., 4*HIDDEN) -> (..., 4*GPAD), each gate zero-padded
        parts = jnp.split(w, 4, axis=-1)
        pad = ((0, 0),) * (w.ndim - 1) + ((0, GPAD - HIDDEN),)
        return jnp.concatenate([jnp.pad(q, pad) for q in parts], axis=-1)

    return {
        # im2col-fused conv weights: row = tap*(Cin) + cin (tap = di*3 + dj)
        "w1": p["c1_w"].reshape(-1, 16).astype(jnp.bfloat16),          # (9*Cin, 16)
        "b1": p["c1_b"].reshape(1, 16),
        "w2": p["c2_w"].reshape(-1, 16).astype(jnp.bfloat16),          # (144, 16)
        "b2": p["c2_b"].reshape(1, 16),
        # l1 rows are in CHW-flatten order (c, po, qo); regroup once into
        # (po, qo, c) row order to match the in-kernel pooled staging slab.
        "w1f": p["l1_w"].reshape(16, Hp, Wp, 200).transpose(1, 2, 0, 3)
                         .reshape(Hp * Wp * 16, 200).astype(jnp.bfloat16),
        "b_l1": p["l1_b"].reshape(1, 200),
        "w_l2": p["l2_w"].astype(jnp.bfloat16),
        "b_l2": p["l2_b"].reshape(1, 50),
        "wih": pad_gates(p["lstm_wih"]).astype(jnp.bfloat16),          # (50, 128)
        "whh": jnp.pad(pad_gates(p["lstm_whh"]),
                       ((0, GPAD - HIDDEN), (0, 0))).astype(jnp.bfloat16),  # (32, 128)
        "b_lstm": pad_gates(p["lstm_b"]),                              # (1, 128) f32
        "w3": jnp.pad(p["l3_w"],
                      ((0, GPAD - HIDDEN), (0, 0))).astype(jnp.bfloat16),   # (32, 2)
        "b3": p["l3_b"].reshape(1, 2),
    }


if __name__ == "__main__":
    B, F, C, H, W = 2, 8, 4, 16, 16
    key = jax.random.PRNGKey(0)
    kx, kp = jax.random.split(key)
    x = jax.random.normal(kx, (B, F, C, H, W), jnp.float32)

    # flat_dim per get_flat_dim(): 16 * ((H-4)//2) * ((W-4)//2)
    flat_dim = 16 * ((H - 4) // 2) * ((W - 4) // 2)
    params = prepare_params(init_params(kp, C, flat_dim), H, W)

    fwd = jax.jit(build_fused_forward(B, F, C, H, W))
    out = jax.block_until_ready(fwd(x, params))
    assert out.shape == (B, 2)
    assert bool(jnp.all(jnp.isfinite(out)))
    print("KERNEL_OK")
</pallas_src>

<mosaic_0001>
module attributes {stable_mosaic.version = 11 : i64} {
  func.func @kernel(%arg0: memref<4384x4xbf16, #tpu.memory_space<vmem>>, %arg1: memref<36x16xbf16, #tpu.memory_space<vmem>>, %arg2: memref<1x16xf32, #tpu.memory_space<vmem>>, %arg3: memref<144x16xbf16, #tpu.memory_space<vmem>>, %arg4: memref<1x16xf32, #tpu.memory_space<vmem>>, %arg5: memref<576x200xbf16, #tpu.memory_space<vmem>>, %arg6: memref<1x200xf32, #tpu.memory_space<vmem>>, %arg7: memref<200x50xbf16, #tpu.memory_space<vmem>>, %arg8: memref<1x50xf32, #tpu.memory_space<vmem>>, %arg9: memref<50x128xbf16, #tpu.memory_space<vmem>>, %arg10: memref<32x128xbf16, #tpu.memory_space<vmem>>, %arg11: memref<1x128xf32, #tpu.memory_space<vmem>>, %arg12: memref<32x2xbf16, #tpu.memory_space<vmem>>, %arg13: memref<1x2xf32, #tpu.memory_space<vmem>>, %arg14: memref<2x2xf32, #tpu.memory_space<vmem>>, %arg15: memref<3840x16xbf16, #tpu.memory_space<vmem>>, %arg16: memref<3072x16xbf16, #tpu.memory_space<vmem>>, %arg17: memref<256x144xbf16, #tpu.memory_space<vmem>>, %arg18: memref<16x576xbf16, #tpu.memory_space<vmem>>) attributes {dimension_semantics = [], scalar_prefetch = 0 : i64, scratch_operands = 4 : i64, tpu.core_type = #tpu.core_type<tc>} {
    %c0 = arith.constant 0 : index
    %c0_0 = arith.constant 0 : index
    %0 = vector.load %arg2[%c0, %c0_0] : memref<1x16xf32, #tpu.memory_space<vmem>>, vector<1x16xf32>
    %c0_i32 = arith.constant 0 : i32
    %c15_i32 = arith.constant 15 : i32
    %1 = arith.addi %c0_i32, %c15_i32 : i32
    %c1_i32 = arith.constant 1 : i32
    scf.for %arg19 = %c0_i32 to %1 step %c1_i32  : i32 {
      %c1_i32_303 = arith.constant 1 : i32
      %591 = arith.muli %arg19, %c1_i32_303 : i32
      %c0_i32_304 = arith.constant 0 : i32
      %592 = arith.addi %c0_i32_304, %591 : i32
      %c256_i32 = arith.constant 256 : i32
      %593 = arith.muli %592, %c256_i32 : i32
      %594 = tpu.assume_multiple %593, 256 : i32
      %c0_i32_305 = arith.constant 0 : i32
      %595 = arith.addi %594, %c0_i32_305 : i32
      %596 = arith.index_cast %595 : i32 to index
      %c0_306 = arith.constant 0 : index
      %597 = vector.load %arg0[%596, %c0_306] : memref<4384x4xbf16, #tpu.memory_space<vmem>>, vector<256x4xbf16>
      %c0_307 = arith.constant 0 : index
      %c0_308 = arith.constant 0 : index
      %598 = vector.load %arg17[%c0_307, %c0_308] : memref<256x144xbf16, #tpu.memory_space<vmem>>, vector<256x4xbf16>
      tpu.vector_store %arg17[%c0_307, %c0_308], %597 {strides = array<i32>} : memref<256x144xbf16, #tpu.memory_space<vmem>>, vector<256x4xbf16>,
      %c16_i32 = arith.constant 16 : i32
      %599 = arith.addi %594, %c16_i32 : i32
      %600 = arith.index_cast %599 : i32 to index
      %c0_309 = arith.constant 0 : index
      %601 = vector.load %arg0[%600, %c0_309] : memref<4384x4xbf16, #tpu.memory_space<vmem>>, vector<256x4xbf16>
      %c0_310 = arith.constant 0 : index
      %c4 = arith.constant 4 : index
      %602 = vector.load %arg17[%c0_310, %c4] : memref<256x144xbf16, #tpu.memory_space<vmem>>, vector<256x4xbf16>
      tpu.vector_store %arg17[%c0_310, %c4], %601 {strides = array<i32>} : memref<256x144xbf16, #tpu.memory_space<vmem>>, vector<256x4xbf16>,
      %c32_i32 = arith.constant 32 : i32
      %603 = arith.addi %594, %c32_i32 : i32
      %604 = arith.index_cast %603 : i32 to index
      %c0_311 = arith.constant 0 : index
      %605 = vector.load %arg0[%604, %c0_311] : memref<4384x4xbf16, #tpu.memory_space<vmem>>, vector<256x4xbf16>
      %c0_312 = arith.constant 0 : index
      %c8 = arith.constant 8 : index
      %606 = vector.load %arg17[%c0_312, %c8] : memref<256x144xbf16, #tpu.memory_space<vmem>>, vector<256x4xbf16>
      tpu.vector_store %arg17[%c0_312, %c8], %605 {strides = array<i32>} : memref<256x144xbf16, #tpu.memory_space<vmem>>, vector<256x4xbf16>,
      %c256_i32_313 = arith.constant 256 : i32
      %607 = arith.addi %594, %c256_i32_313 : i32
      %608 = arith.index_cast %607 : i32 to index
      %c0_314 = arith.constant 0 : index
      %609 = vector.load %arg0[%608, %c0_314] : memref<4384x4xbf16, #tpu.memory_space<vmem>>, vector<256x4xbf16>
      %c0_315 = arith.constant 0 : index
      %c12 = arith.constant 12 : index
      %610 = vector.load %arg17[%c0_315, %c12] : memref<256x144xbf16, #tpu.memory_space<vmem>>, vector<256x4xbf16>
      tpu.vector_store %arg17[%c0_315, %c12], %609 {strides = array<i32>} : memref<256x144xbf16, #tpu.memory_space<vmem>>, vector<256x4xbf16>,
      %c272_i32 = arith.constant 272 : i32
      %611 = arith.addi %594, %c272_i32 : i32
      %612 = arith.index_cast %611 : i32 to index
      %c0_316 = arith.constant 0 : index
      %613 = vector.load %arg0[%612, %c0_316] : memref<4384x4xbf16, #tpu.memory_space<vmem>>, vector<256x4xbf16>
      %c0_317 = arith.constant 0 : index
      %c16_318 = arith.constant 16 : index
      %614 = vector.load %arg17[%c0_317, %c16_318] : memref<256x144xbf16, #tpu.memory_space<vmem>>, vector<256x4xbf16>
      tpu.vector_store %arg17[%c0_317, %c16_318], %613 {strides = array<i32>} : memref<256x144xbf16, #tpu.memory_space<vmem>>, vector<256x4xbf16>,
      %c288_i32 = arith.constant 288 : i32
      %615 = arith.addi %594, %c288_i32 : i32
      %616 = arith.index_cast %615 : i32 to index
      %c0_319 = arith.constant 0 : index
      %617 = vector.load %arg0[%616, %c0_319] : memref<4384x4xbf16, #tpu.memory_space<vmem>>, vector<256x4xbf16>
      %c0_320 = arith.constant 0 : index
      %c20 = arith.constant 20 : index
      %618 = vector.load %arg17[%c0_320, %c20] : memref<256x144xbf16, #tpu.memory_space<vmem>>, vector<256x4xbf16>
      tpu.vector_store %arg17[%c0_320, %c20], %617 {strides = array<i32>} : memref<256x144xbf16, #tpu.memory_space<vmem>>, vector<256x4xbf16>,
      %c512_i32 = arith.constant 512 : i32
      %619 = arith.addi %594, %c512_i32 : i32
      %620 = arith.index_cast %619 : i32 to index
      %c0_321 = arith.constant 0 : index
      %621 = vector.load %arg0[%620, %c0_321] : memref<4384x4xbf16, #tpu.memory_space<vmem>>, vector<256x4xbf16>
      %c0_322 = arith.constant 0 : index
      %c24 = arith.constant 24 : index
      %622 = vector.load %arg17[%c0_322, %c24] : memref<256x144xbf16, #tpu.memory_space<vmem>>, vector<256x4xbf16>
      tpu.vector_store %arg17[%c0_322, %c24], %621 {strides = array<i32>} : memref<256x144xbf16, #tpu.memory_space<vmem>>, vector<256x4xbf16>,
      %c528_i32 = arith.constant 528 : i32
      %623 = arith.addi %594, %c528_i32 : i32
      %624 = arith.index_cast %623 : i32 to index
      %c0_323 = arith.constant 0 : index
      %625 = vector.load %arg0[%624, %c0_323] : memref<4384x4xbf16, #tpu.memory_space<vmem>>, vector<256x4xbf16>
      %c0_324 = arith.constant 0 : index
      %c28 = arith.constant 28 : index
      %626 = vector.load %arg17[%c0_324, %c28] : memref<256x144xbf16, #tpu.memory_space<vmem>>, vector<256x4xbf16>
      tpu.vector_store %arg17[%c0_324, %c28], %625 {strides = array<i32>} : memref<256x144xbf16, #tpu.memory_space<vmem>>, vector<256x4xbf16>,
      %c544_i32 = arith.constant 544 : i32
      %627 = arith.addi %594, %c544_i32 : i32
      %628 = arith.index_cast %627 : i32 to index
      %c0_325 = arith.constant 0 : index
      %629 = vector.load %arg0[%628, %c0_325] : memref<4384x4xbf16, #tpu.memory_space<vmem>>, vector<256x4xbf16>
      %c0_326 = arith.constant 0 : index
      %c32_327 = arith.constant 32 : index
      %630 = vector.load %arg17[%c0_326, %c32_327] : memref<256x144xbf16, #tpu.memory_space<vmem>>, vector<256x4xbf16>
      tpu.vector_store %arg17[%c0_326, %c32_327], %629 {strides = array<i32>} : memref<256x144xbf16, #tpu.memory_space<vmem>>, vector<256x4xbf16>,
      %c0_328 = arith.constant 0 : index
      %c0_329 = arith.constant 0 : index
      %631 = vector.load %arg17[%c0_328, %c0_329] : memref<256x144xbf16, #tpu.memory_space<vmem>>, vector<256x36xbf16>
      %c0_330 = arith.constant 0 : index
      %c0_331 = arith.constant 0 : index
      %632 = vector.load %arg1[%c0_330, %c0_331] : memref<36x16xbf16, #tpu.memory_space<vmem>>, vector<36x16xbf16>
      %cst_332 = arith.constant dense<0.000000e+00> : vector<256x16xf32>
      %633 = tpu.matmul %631, %632, %cst_332 {dimension_numbers = #tpu.dot_dimension_numbers<[1], [0], [0], [1], [0, 0, 1, 1], [], []>} : vector<256x36xbf16>, vector<36x16xbf16>, vector<256x16xf32> -> vector<256x16xf32>
      %634 = vector.broadcast %0 : vector<1x16xf32> to vector<256x16xf32>
      %635 = arith.addf %633, %634 : vector<256x16xf32>
      %cst_333 = arith.constant 0.000000e+00 : f32
      %636 = vector.broadcast %cst_333 : f32 to vector<256x16xf32>
      %637 = arith.maximumf %635, %636 : vector<256x16xf32>
      %638 = arith.truncf %637 : vector<256x16xf32> to vector<256x16xbf16>
      %639 = arith.index_cast %594 : i32 to index
      %c0_334 = arith.constant 0 : index
      %640 = vector.load %arg15[%639, %c0_334] : memref<3840x16xbf16, #tpu.memory_space<vmem>>, vector<256x16xbf16>
      tpu.vector_store %arg15[%639, %c0_334], %638 {strides = array<i32>} : memref<3840x16xbf16, #tpu.memory_space<vmem>>, vector<256x16xbf16>,
    }
    %c15_i32_1 = arith.constant 15 : i32
    %c0_2 = arith.constant 0 : index
    %c0_3 = arith.constant 0 : index
    %2 = vector.load %arg4[%c0_2, %c0_3] : memref<1x16xf32, #tpu.memory_space<vmem>>, vector<1x16xf32>
    %c0_i32_4 = arith.constant 0 : i32
    %c12_i32 = arith.constant 12 : i32
    %3 = arith.addi %c0_i32_4, %c12_i32 : i32
    %c1_i32_5 = arith.constant 1 : i32
    scf.for %arg19 = %c0_i32_4 to %3 step %c1_i32_5  : i32 {
      %c1_i32_303 = arith.constant 1 : i32
      %591 = arith.muli %arg19, %c1_i32_303 : i32
      %c0_i32_304 = arith.constant 0 : i32
      %592 = arith.addi %c0_i32_304, %591 : i32
      %c256_i32 = arith.constant 256 : i32
      %593 = arith.muli %592, %c256_i32 : i32
      %594 = tpu.assume_multiple %593, 256 : i32
      %c0_i32_305 = arith.constant 0 : i32
      %595 = arith.addi %594, %c0_i32_305 : i32
      %596 = arith.index_cast %595 : i32 to index
      %c0_306 = arith.constant 0 : index
      %597 = vector.load %arg15[%596, %c0_306] : memref<3840x16xbf16, #tpu.memory_space<vmem>>, vector<256x16xbf16>
      %c0_307 = arith.constant 0 : index
      %c0_308 = arith.constant 0 : index
      %598 = vector.load %arg17[%c0_307, %c0_308] : memref<256x144xbf16, #tpu.memory_space<vmem>>, vector<256x16xbf16>
      tpu.vector_store %arg17[%c0_307, %c0_308], %597 {strides = array<i32>} : memref<256x144xbf16, #tpu.memory_space<vmem>>, vector<256x16xbf16>,
      %c16_i32 = arith.constant 16 : i32
      %599 = arith.addi %594, %c16_i32 : i32
      %600 = arith.index_cast %599 : i32 to index
      %c0_309 = arith.constant 0 : index
      %601 = vector.load %arg15[%600, %c0_309] : memref<3840x16xbf16, #tpu.memory_space<vmem>>, vector<256x16xbf16>
      %c0_310 = arith.constant 0 : index
      %c16_311 = arith.constant 16 : index
      %602 = vector.load %arg17[%c0_310, %c16_311] : memref<256x144xbf16, #tpu.memory_space<vmem>>, vector<256x16xbf16>
      tpu.vector_store %arg17[%c0_310, %c16_311], %601 {strides = array<i32>} : memref<256x144xbf16, #tpu.memory_space<vmem>>, vector<256x16xbf16>,
      %c32_i32 = arith.constant 32 : i32
      %603 = arith.addi %594, %c32_i32 : i32
      %604 = arith.index_cast %603 : i32 to index
      %c0_312 = arith.constant 0 : index
      %605 = vector.load %arg15[%604, %c0_312] : memref<3840x16xbf16, #tpu.memory_space<vmem>>, vector<256x16xbf16>
      %c0_313 = arith.constant 0 : index
      %c32_314 = arith.constant 32 : index
      %606 = vector.load %arg17[%c0_313, %c32_314] : memref<256x144xbf16, #tpu.memory_space<vmem>>, vector<256x16xbf16>
      tpu.vector_store %arg17[%c0_313, %c32_314], %605 {strides = array<i32>} : memref<256x144xbf16, #tpu.memory_space<vmem>>, vector<256x16xbf16>,
      %c256_i32_315 = arith.constant 256 : i32
      %607 = arith.addi %594, %c256_i32_315 : i32
      %608 = arith.index_cast %607 : i32 to index
      %c0_316 = arith.constant 0 : index
      %609 = vector.load %arg15[%608, %c0_316] : memref<3840x16xbf16, #tpu.memory_space<vmem>>, vector<256x16xbf16>
      %c0_317 = arith.constant 0 : index
      %c48_318 = arith.constant 48 : index
      %610 = vector.load %arg17[%c0_317, %c48_318] : memref<256x144xbf16, #tpu.memory_space<vmem>>, vector<256x16xbf16>
      tpu.vector_store %arg17[%c0_317, %c48_318], %609 {strides = array<i32>} : memref<256x144xbf16, #tpu.memory_space<vmem>>, vector<256x16xbf16>,
      %c272_i32 = arith.constant 272 : i32
      %611 = arith.addi %594, %c272_i32 : i32
      %612 = arith.index_cast %611 : i32 to index
      %c0_319 = arith.constant 0 : index
      %613 = vector.load %arg15[%612, %c0_319] : memref<3840x16xbf16, #tpu.memory_space<vmem>>, vector<256x16xbf16>
      %c0_320 = arith.constant 0 : index
      %c64_321 = arith.constant 64 : index
      %614 = vector.load %arg17[%c0_320, %c64_321] : memref<256x144xbf16, #tpu.memory_space<vmem>>, vector<256x16xbf16>
      tpu.vector_store %arg17[%c0_320, %c64_321], %613 {strides = array<i32>} : memref<256x144xbf16, #tpu.memory_space<vmem>>, vector<256x16xbf16>,
      %c288_i32 = arith.constant 288 : i32
      %615 = arith.addi %594, %c288_i32 : i32
      %616 = arith.index_cast %615 : i32 to index
      %c0_322 = arith.constant 0 : index
      %617 = vector.load %arg15[%616, %c0_322] : memref<3840x16xbf16, #tpu.memory_space<vmem>>, vector<256x16xbf16>
      %c0_323 = arith.constant 0 : index
      %c80_324 = arith.constant 80 : index
      %618 = vector.load %arg17[%c0_323, %c80_324] : memref<256x144xbf16, #tpu.memory_space<vmem>>, vector<256x16xbf16>
      tpu.vector_store %arg17[%c0_323, %c80_324], %617 {strides = array<i32>} : memref<256x144xbf16, #tpu.memory_space<vmem>>, vector<256x16xbf16>,
      %c512_i32 = arith.constant 512 : i32
      %619 = arith.addi %594, %c512_i32 : i32
      %620 = arith.index_cast %619 : i32 to index
      %c0_325 = arith.constant 0 : index
      %621 = vector.load %arg15[%620, %c0_325] : memref<3840x16xbf16, #tpu.memory_space<vmem>>, vector<256x16xbf16>
      %c0_326 = arith.constant 0 : index
      %c96_327 = arith.constant 96 : index
      %622 = vector.load %arg17[%c0_326, %c96_327] : memref<256x144xbf16, #tpu.memory_space<vmem>>, vector<256x16xbf16>
      tpu.vector_store %arg17[%c0_326, %c96_327], %621 {strides = array<i32>} : memref<256x144xbf16, #tpu.memory_space<vmem>>, vector<256x16xbf16>,
      %c528_i32 = arith.constant 528 : i32
      %623 = arith.addi %594, %c528_i32 : i32
      %624 = arith.index_cast %623 : i32 to index
      %c0_328 = arith.constant 0 : index
      %625 = vector.load %arg15[%624, %c0_328] : memref<3840x16xbf16, #tpu.memory_space<vmem>>, vector<256x16xbf16>
      %c0_329 = arith.constant 0 : index
      %c112_330 = arith.constant 112 : index
      %626 = vector.load %arg17[%c0_329, %c112_330] : memref<256x144xbf16, #tpu.memory_space<vmem>>, vector<256x16xbf16>
      tpu.vector_store %arg17[%c0_329, %c112_330], %625 {strides = array<i32>} : memref<256x144xbf16, #tpu.memory_space<vmem>>, vector<256x16xbf16>,
      %c544_i32 = arith.constant 544 : i32
      %627 = arith.addi %594, %c544_i32 : i32
      %628 = arith.index_cast %627 : i32 to index
      %c0_331 = arith.constant 0 : index
      %629 = vector.load %arg15[%628, %c0_331] : memref<3840x16xbf16, #tpu.memory_space<vmem>>, vector<256x16xbf16>
      %c0_332 = arith.constant 0 : index
      %c128_333 = arith.constant 128 : index
      %630 = vector.load %arg17[%c0_332, %c128_333] : memref<256x144xbf16, #tpu.memory_space<vmem>>, vector<256x16xbf16>
      tpu.vector_store %arg17[%c0_332, %c128_333], %629 {strides = array<i32>} : memref<256x144xbf16, #tpu.memory_space<vmem>>, vector<256x16xbf16>,
      %c0_334 = arith.constant 0 : index
      %c0_335 = arith.constant 0 : index
      %631 = vector.load %arg17[%c0_334, %c0_335] : memref<256x144xbf16, #tpu.memory_space<vmem>>, vector<256x144xbf16>
      %c0_336 = arith.constant 0 : index
      %c0_337 = arith.constant 0 : index
      %632 = vector.load %arg3[%c0_336, %c0_337] : memref<144x16xbf16, #tpu.memory_space<vmem>>, vector<144x16xbf16>
      %cst_338 = arith.constant dense<0.000000e+00> : vector<256x16xf32>
      %633 = tpu.matmul %631, %632, %cst_338 {dimension_numbers = #tpu.dot_dimension_numbers<[1], [0], [0], [1], [0, 0, 1, 1], [], []>} : vector<256x144xbf16>, vector<144x16xbf16>, vector<256x16xf32> -> vector<256x16xf32>
      %634 = vector.broadcast %2 : vector<1x16xf32> to vector<256x16xf32>
      %635 = arith.addf %633, %634 : vector<256x16xf32>
      %cst_339 = arith.constant 0.000000e+00 : f32
      %636 = vector.broadcast %cst_339 : f32 to vector<256x16xf32>
      %637 = arith.maximumf %635, %636 : vector<256x16xf32>
      %638 = arith.truncf %637 : vector<256x16xf32> to vector<256x16xbf16>
      %639 = arith.index_cast %594 : i32 to index
      %c0_340 = arith.constant 0 : index
      %640 = vector.load %arg16[%639, %c0_340] : memref<3072x16xbf16, #tpu.memory_space<vmem>>, vector<256x16xbf16>
      tpu.vector_store %arg16[%639, %c0_340], %638 {strides = array<i32>} : memref<3072x16xbf16, #tpu.memory_space<vmem>>, vector<256x16xbf16>,
    }
    %c12_i32_6 = arith.constant 12 : i32
    %c0_7 = arith.constant 0 : index
    %c0_8 = arith.constant 0 : index
    %4 = vector.load %arg16[%c0_7, %c0_8] : memref<3072x16xbf16, #tpu.memory_space<vmem>>, vector<16x16xbf16>
    %c16 = arith.constant 16 : index
    %c0_9 = arith.constant 0 : index
    %5 = vector.load %arg16[%c16, %c0_9] : memref<3072x16xbf16, #tpu.memory_space<vmem>>, vector<16x16xbf16>
    %c256 = arith.constant 256 : index
    %c0_10 = arith.constant 0 : index
    %6 = vector.load %arg16[%c256, %c0_10] : memref<3072x16xbf16, #tpu.memory_space<vmem>>, vector<16x16xbf16>
    %c272 = arith.constant 272 : index
    %c0_11 = arith.constant 0 : index
    %7 = vector.load %arg16[%c272, %c0_11] : memref<3072x16xbf16, #tpu.memory_space<vmem>>, vector<16x16xbf16>
    %8 = arith.maximumf %4, %5 : vector<16x16xbf16>
    %9 = arith.maximumf %6, %7 : vector<16x16xbf16>
    %10 = arith.maximumf %8, %9 : vector<16x16xbf16>
    %c0_12 = arith.constant 0 : index
    %c0_13 = arith.constant 0 : index
    %11 = vector.load %arg18[%c0_12, %c0_13] : memref<16x576xbf16, #tpu.memory_space<vmem>>, vector<16x16xbf16>
    tpu.vector_store %arg18[%c0_12, %c0_13], %10 {strides = array<i32>} : memref<16x576xbf16, #tpu.memory_space<vmem>>, vector<16x16xbf16>,
    %c32 = arith.constant 32 : index
    %c0_14 = arith.constant 0 : index
    %12 = vector.load %arg16[%c32, %c0_14] : memref<3072x16xbf16, #tpu.memory_space<vmem>>, vector<16x16xbf16>
    %c48 = arith.constant 48 : index
    %c0_15 = arith.constant 0 : index
    %13 = vector.load %arg16[%c48, %c0_15] : memref<3072x16xbf16, #tpu.memory_space<vmem>>, vector<16x16xbf16>
    %c288 = arith.constant 288 : index
    %c0_16 = arith.constant 0 : index
    %14 = vector.load %arg16[%c288, %c0_16] : memref<3072x16xbf16, #tpu.memory_space<vmem>>, vector<16x16xbf16>
    %c304 = arith.constant 304 : index
    %c0_17 = arith.constant 0 : index
    %15 = vector.load %arg16[%c304, %c0_17] : memref<3072x16xbf16, #tpu.memory_space<vmem>>, vector<16x16xbf16>
    %16 = arith.maximumf %12, %13 : vector<16x16xbf16>
    %17 = arith.maximumf %14, %15 : vector<16x16xbf16>
    %18 = arith.maximumf %16, %17 : vector<16x16xbf16>
    %c0_18 = arith.constant 0 : index
    %c16_19 = arith.constant 16 : index
    %19 = vector.load %arg18[%c0_18, %c16_19] : memref<16x576xbf16, #tpu.memory_space<vmem>>, vector<16x16xbf16>
    tpu.vector_store %arg18[%c0_18, %c16_19], %18 {strides = array<i32>} : memref<16x576xbf16, #tpu.memory_space<vmem>>, vector<16x16xbf16>,
    %c64 = arith.constant 64 : index
    %c0_20 = arith.constant 0 : index
    %20 = vector.load %arg16[%c64, %c0_20] : memref<3072x16xbf16, #tpu.memory_space<vmem>>, vector<16x16xbf16>
    %c80 = arith.constant 80 : index
    %c0_21 = arith.constant 0 : index
    %21 = vector.load %arg16[%c80, %c0_21] : memref<3072x16xbf16, #tpu.memory_space<vmem>>, vector<16x16xbf16>
    %c320 = arith.constant 320 : index
    %c0_22 = arith.constant 0 : index
    %22 = vector.load %arg16[%c320, %c0_22] : memref<3072x16xbf16, #tpu.memory_space<vmem>>, vector<16x16xbf16>
    %c336 = arith.constant 336 : index
    %c0_23 = arith.constant 0 : index
    %23 = vector.load %arg16[%c336, %c0_23] : memref<3072x16xbf16, #tpu.memory_space<vmem>>, vector<16x16xbf16>
    %24 = arith.maximumf %20, %21 : vector<16x16xbf16>
    %25 = arith.maximumf %22, %23 : vector<16x16xbf16>
    %26 = arith.maximumf %24, %25 : vector<16x16xbf16>
    %c0_24 = arith.constant 0 : index
    %c32_25 = arith.constant 32 : index
    %27 = vector.load %arg18[%c0_24, %c32_25] : memref<16x576xbf16, #tpu.memory_space<vmem>>, vector<16x16xbf16>
    tpu.vector_store %arg18[%c0_24, %c32_25], %26 {strides = array<i32>} : memref<16x576xbf16, #tpu.memory_space<vmem>>, vector<16x16xbf16>,
    %c96 = arith.constant 96 : index
    %c0_26 = arith.constant 0 : index
    %28 = vector.load %arg16[%c96, %c0_26] : memref<3072x16xbf16, #tpu.memory_space<vmem>>, vector<16x16xbf16>
    %c112 = arith.constant 112 : index
    %c0_27 = arith.constant 0 : index
    %29 = vector.load %arg16[%c112, %c0_27] : memref<3072x16xbf16, #tpu.memory_space<vmem>>, vector<16x16xbf16>
    %c352 = arith.constant 352 : index
    %c0_28 = arith.constant 0 : index
    %30 = vector.load %arg16[%c352, %c0_28] : memref<3072x16xbf16, #tpu.memory_space<vmem>>, vector<16x16xbf16>
    %c368 = arith.constant 368 : index
    %c0_29 = arith.constant 0 : index
    %31 = vector.load %arg16[%c368, %c0_29] : memref<3072x16xbf16, #tpu.memory_space<vmem>>, vector<16x16xbf16>
    %32 = arith.maximumf %28, %29 : vector<16x16xbf16>
    %33 = arith.maximumf %30, %31 : vector<16x16xbf16>
    %34 = arith.maximumf %32, %33 : vector<16x16xbf16>
    %c0_30 = arith.constant 0 : index
    %c48_31 = arith.constant 48 : index
    %35 = vector.load %arg18[%c0_30, %c48_31] : memref<16x576xbf16, #tpu.memory_space<vmem>>, vector<16x16xbf16>
    tpu.vector_store %arg18[%c0_30, %c48_31], %34 {strides = array<i32>} : memref<16x576xbf16, #tpu.memory_space<vmem>>, vector<16x16xbf16>,
    %c128 = arith.constant 128 : index
    %c0_32 = arith.constant 0 : index
    %36 = vector.load %arg16[%c128, %c0_32] : memref<3072x16xbf16, #tpu.memory_space<vmem>>, vector<16x16xbf16>
    %c144 = arith.constant 144 : index
    %c0_33 = arith.constant 0 : index
    %37 = vector.load %arg16[%c144, %c0_33] : memref<3072x16xbf16, #tpu.memory_space<vmem>>, vector<16x16xbf16>
    %c384 = arith.constant 384 : index
    %c0_34 = arith.constant 0 : index
    %38 = vector.load %arg16[%c384, %c0_34] : memref<3072x16xbf16, #tpu.memory_space<vmem>>, vector<16x16xbf16>
    %c400 = arith.constant 400 : index
    %c0_35 = arith.constant 0 : index
    %39 = vector.load %arg16[%c400, %c0_35] : memref<3072x16xbf16, #tpu.memory_space<vmem>>, vector<16x16xbf16>
    %40 = arith.maximumf %36, %37 : vector<16x16xbf16>
    %41 = arith.maximumf %38, %39 : vector<16x16xbf16>
    %42 = arith.maximumf %40, %41 : vector<16x16xbf16>
    %c0_36 = arith.constant 0 : index
    %c64_37 = arith.constant 64 : index
    %43 = vector.load %arg18[%c0_36, %c64_37] : memref<16x576xbf16, #tpu.memory_space<vmem>>, vector<16x16xbf16>
    tpu.vector_store %arg18[%c0_36, %c64_37], %42 {strides = array<i32>} : memref<16x576xbf16, #tpu.memory_space<vmem>>, vector<16x16xbf16>,
    %c160 = arith.constant 160 : index
    %c0_38 = arith.constant 0 : index
    %44 = vector.load %arg16[%c160, %c0_38] : memref<3072x16xbf16, #tpu.memory_space<vmem>>, vector<16x16xbf16>
    %c176 = arith.constant 176 : index
    %c0_39 = arith.constant 0 : index
    %45 = vector.load %arg16[%c176, %c0_39] : memref<3072x16xbf16, #tpu.memory_space<vmem>>, vector<16x16xbf16>
    %c416 = arith.constant 416 : index
    %c0_40 = arith.constant 0 : index
    %46 = vector.load %arg16[%c416, %c0_40] : memref<3072x16xbf16, #tpu.memory_space<vmem>>, vector<16x16xbf16>
    %c432 = arith.constant 432 : index
    %c0_41 = arith.constant 0 : index
    %47 = vector.load %arg16[%c432, %c0_41] : memref<3072x16xbf16, #tpu.memory_space<vmem>>, vector<16x16xbf16>
    %48 = arith.maximumf %44, %45 : vector<16x16xbf16>
    %49 = arith.maximumf %46, %47 : vector<16x16xbf16>
    %50 = arith.maximumf %48, %49 : vector<16x16xbf16>
    %c0_42 = arith.constant 0 : index
    %c80_43 = arith.constant 80 : index
    %51 = vector.load %arg18[%c0_42, %c80_43] : memref<16x576xbf16, #tpu.memory_space<vmem>>, vector<16x16xbf16>
    tpu.vector_store %arg18[%c0_42, %c80_43], %50 {strides = array<i32>} : memref<16x576xbf16, #tpu.memory_space<vmem>>, vector<16x16xbf16>,
    %c512 = arith.constant 512 : index
    %c0_44 = arith.constant 0 : index
    %52 = vector.load %arg16[%c512, %c0_44] : memref<3072x16xbf16, #tpu.memory_space<vmem>>, vector<16x16xbf16>
    %c528 = arith.constant 528 : index
    %c0_45 = arith.constant 0 : index
    %53 = vector.load %arg16[%c528, %c0_45] : memref<3072x16xbf16, #tpu.memory_space<vmem>>, vector<16x16xbf16>
    %c768 = arith.constant 768 : index
    %c0_46 = arith.constant 0 : index
    %54 = vector.load %arg16[%c768, %c0_46] : memref<3072x16xbf16, #tpu.memory_space<vmem>>, vector<16x16xbf16>
    %c784 = arith.constant 784 : index
    %c0_47 = arith.constant 0 : index
    %55 = vector.load %arg16[%c784, %c0_47] : memref<3072x16xbf16, #tpu.memory_space<vmem>>, vector<16x16xbf16>
    %56 = arith.maximumf %52, %53 : vector<16x16xbf16>
    %57 = arith.maximumf %54, %55 : vector<16x16xbf16>
    %58 = arith.maximumf %56, %57 : vector<16x16xbf16>
    %c0_48 = arith.constant 0 : index
    %c96_49 = arith.constant 96 : index
    %59 = vector.load %arg18[%c0_48, %c96_49] : memref<16x576xbf16, #tpu.memory_space<vmem>>, vector<16x16xbf16>
    tpu.vector_store %arg18[%c0_48, %c96_49], %58 {strides = array<i32>} : memref<16x576xbf16, #tpu.memory_space<vmem>>, vector<16x16xbf16>,
    %c544 = arith.constant 544 : index
    %c0_50 = arith.constant 0 : index
    %60 = vector.load %arg16[%c544, %c0_50] : memref<3072x16xbf16, #tpu.memory_space<vmem>>, vector<16x16xbf16>
    %c560 = arith.constant 560 : index
    %c0_51 = arith.constant 0 : index
    %61 = vector.load %arg16[%c560, %c0_51] : memref<3072x16xbf16, #tpu.memory_space<vmem>>, vector<16x16xbf16>
    %c800 = arith.constant 800 : index
    %c0_52 = arith.constant 0 : index
    %62 = vector.load %arg16[%c800, %c0_52] : memref<3072x16xbf16, #tpu.memory_space<vmem>>, vector<16x16xbf16>
    %c816 = arith.constant 816 : index
    %c0_53 = arith.constant 0 : index
    %63 = vector.load %arg16[%c816, %c0_53] : memref<3072x16xbf16, #tpu.memory_space<vmem>>, vector<16x16xbf16>
    %64 = arith.maximumf %60, %61 : vector<16x16xbf16>
    %65 = arith.maximumf %62, %63 : vector<16x16xbf16>
    %66 = arith.maximumf %64, %65 : vector<16x16xbf16>
    %c0_54 = arith.constant 0 : index
    %c112_55 = arith.constant 112 : index
    %67 = vector.load %arg18[%c0_54, %c112_55] : memref<16x576xbf16, #tpu.memory_space<vmem>>, vector<16x16xbf16>
    tpu.vector_store %arg18[%c0_54, %c112_55], %66 {strides = array<i32>} : memref<16x576xbf16, #tpu.memory_space<vmem>>, vector<16x16xbf16>,
    %c576 = arith.constant 576 : index
    %c0_56 = arith.constant 0 : index
    %68 = vector.load %arg16[%c576, %c0_56] : memref<3072x16xbf16, #tpu.memory_space<vmem>>, vector<16x16xbf16>
    %c592 = arith.constant 592 : index
    %c0_57 = arith.constant 0 : index
    %69 = vector.load %arg16[%c592, %c0_57] : memref<3072x16xbf16, #tpu.memory_space<vmem>>, vector<16x16xbf16>
    %c832 = arith.constant 832 : index
    %c0_58 = arith.constant 0 : index
    %70 = vector.load %arg16[%c832, %c0_58] : memref<3072x16xbf16, #tpu.memory_space<vmem>>, vector<16x16xbf16>
    %c848 = arith.constant 848 : index
    %c0_59 = arith.constant 0 : index
    %71 = vector.load %arg16[%c848, %c0_59] : memref<3072x16xbf16, #tpu.memory_space<vmem>>, vector<16x16xbf16>
    %72 = arith.maximumf %68, %69 : vector<16x16xbf16>
    %73 = arith.maximumf %70, %71 : vector<16x16xbf16>
    %74 = arith.maximumf %72, %73 : vector<16x16xbf16>
    %c0_60 = arith.constant 0 : index
    %c128_61 = arith.constant 128 : index
    %75 = vector.load %arg18[%c0_60, %c128_61] : memref<16x576xbf16, #tpu.memory_space<vmem>>, vector<16x16xbf16>
    tpu.vector_store %arg18[%c0_60, %c128_61], %74 {strides = array<i32>} : memref<16x576xbf16, #tpu.memory_space<vmem>>, vector<16x16xbf16>,
    %c608 = arith.constant 608 : index
    %c0_62 = arith.constant 0 : index
    %76 = vector.load %arg16[%c608, %c0_62] : memref<3072x16xbf16, #tpu.memory_space<vmem>>, vector<16x16xbf16>
    %c624 = arith.constant 624 : index
    %c0_63 = arith.constant 0 : index
    %77 = vector.load %arg16[%c624, %c0_63] : memref<3072x16xbf16, #tpu.memory_space<vmem>>, vector<16x16xbf16>
    %c864 = arith.constant 864 : index
    %c0_64 = arith.constant 0 : index
    %78 = vector.load %arg16[%c864, %c0_64] : memref<3072x16xbf16, #tpu.memory_space<vmem>>, vector<16x16xbf16>
    %c880 = arith.constant 880 : index
    %c0_65 = arith.constant 0 : index
    %79 = vector.load %arg16[%c880, %c0_65] : memref<3072x16xbf16, #tpu.memory_space<vmem>>, vector<16x16xbf16>
    %80 = arith.maximumf %76, %77 : vector<16x16xbf16>
    %81 = arith.maximumf %78, %79 : vector<16x16xbf16>
    %82 = arith.maximumf %80, %81 : vector<16x16xbf16>
    %c0_66 = arith.constant 0 : index
    %c144_67 = arith.constant 144 : index
    %83 = vector.load %arg18[%c0_66, %c144_67] : memref<16x576xbf16, #tpu.memory_space<vmem>>, vector<16x16xbf16>
    tpu.vector_store %arg18[%c0_66, %c144_67], %82 {strides = array<i32>} : memref<16x576xbf16, #tpu.memory_space<vmem>>, vector<16x16xbf16>,
    %c640 = arith.constant 640 : index
    %c0_68 = arith.constant 0 : index
    %84 = vector.load %arg16[%c640, %c0_68] : memref<3072x16xbf16, #tpu.memory_space<vmem>>, vector<16x16xbf16>
    %c656 = arith.constant 656 : index
    %c0_69 = arith.constant 0 : index
    %85 = vector.load %arg16[%c656, %c0_69] : memref<3072x16xbf16, #tpu.memory_space<vmem>>, vector<16x16xbf16>
    %c896 = arith.constant 896 : index
    %c0_70 = arith.constant 0 : index
    %86 = vector.load %arg16[%c896, %c0_70] : memref<3072x16xbf16, #tpu.memory_space<vmem>>, vector<16x16xbf16>
    %c912 = arith.constant 912 : index
    %c0_71 = arith.constant 0 : index
    %87 = vector.load %arg16[%c912, %c0_71] : memref<3072x16xbf16, #tpu.memory_space<vmem>>, vector<16x16xbf16>
    %88 = arith.maximumf %84, %85 : vector<16x16xbf16>
    %89 = arith.maximumf %86, %87 : vector<16x16xbf16>
    %90 = arith.maximumf %88, %89 : vector<16x16xbf16>
    %c0_72 = arith.constant 0 : index
    %c160_73 = arith.constant 160 : index
    %91 = vector.load %arg18[%c0_72, %c160_73] : memref<16x576xbf16, #tpu.memory_space<vmem>>, vector<16x16xbf16>
    tpu.vector_store %arg18[%c0_72, %c160_73], %90 {strides = array<i32>} : memref<16x576xbf16, #tpu.memory_space<vmem>>, vector<16x16xbf16>,
    %c672 = arith.constant 672 : index
    %c0_74 = arith.constant 0 : index
    %92 = vector.load %arg16[%c672, %c0_74] : memref<3072x16xbf16, #tpu.memory_space<vmem>>, vector<16x16xbf16>
    %c688 = arith.constant 688 : index
    %c0_75 = arith.constant 0 : index
    %93 = vector.load %arg16[%c688, %c0_75] : memref<3072x16xbf16, #tpu.memory_space<vmem>>, vector<16x16xbf16>
    %c928 = arith.constant 928 : index
    %c0_76 = arith.constant 0 : index
    %94 = vector.load %arg16[%c928, %c0_76] : memref<3072x16xbf16, #tpu.memory_space<vmem>>, vector<16x16xbf16>
    %c944 = arith.constant 944 : index
    %c0_77 = arith.constant 0 : index
    %95 = vector.load %arg16[%c944, %c0_77] : memref<3072x16xbf16, #tpu.memory_space<vmem>>, vector<16x16xbf16>
    %96 = arith.maximumf %92, %93 : vector<16x16xbf16>
    %97 = arith.maximumf %94, %95 : vector<16x16xbf16>
    %98 = arith.maximumf %96, %97 : vector<16x16xbf16>
    %c0_78 = arith.constant 0 : index
    %c176_79 = arith.constant 176 : index
    %99 = vector.load %arg18[%c0_78, %c176_79] : memref<16x576xbf16, #tpu.memory_space<vmem>>, vector<16x16xbf16>
    tpu.vector_store %arg18[%c0_78, %c176_79], %98 {strides = array<i32>} : memref<16x576xbf16, #tpu.memory_space<vmem>>, vector<16x16xbf16>,
    %c1024 = arith.constant 1024 : index
    %c0_80 = arith.constant 0 : index
    %100 = vector.load %arg16[%c1024, %c0_80] : memref<3072x16xbf16, #tpu.memory_space<vmem>>, vector<16x16xbf16>
    %c1040 = arith.constant 1040 : index
    %c0_81 = arith.constant 0 : index
    %101 = vector.load %arg16[%c1040, %c0_81] : memref<3072x16xbf16, #tpu.memory_space<vmem>>, vector<16x16xbf16>
    %c1280 = arith.constant 1280 : index
    %c0_82 = arith.constant 0 : index
    %102 = vector.load %arg16[%c1280, %c0_82] : memref<3072x16xbf16, #tpu.memory_space<vmem>>, vector<16x16xbf16>
    %c1296 = arith.constant 1296 : index
    %c0_83 = arith.constant 0 : index
    %103 = vector.load %arg16[%c1296, %c0_83] : memref<3072x16xbf16, #tpu.memory_space<vmem>>, vector<16x16xbf16>
    %104 = arith.maximumf %100, %101 : vector<16x16xbf16>
    %105 = arith.maximumf %102, %103 : vector<16x16xbf16>
    %106 = arith.maximumf %104, %105 : vector<16x16xbf16>
    %c0_84 = arith.constant 0 : index
    %c192 = arith.constant 192 : index
    %107 = vector.load %arg18[%c0_84, %c192] : memref<16x576xbf16, #tpu.memory_space<vmem>>, vector<16x16xbf16>
    tpu.vector_store %arg18[%c0_84, %c192], %106 {strides = array<i32>} : memref<16x576xbf16, #tpu.memory_space<vmem>>, vector<16x16xbf16>,
    %c1056 = arith.constant 1056 : index
    %c0_85 = arith.constant 0 : index
    %108 = vector.load %arg16[%c1056, %c0_85] : memref<3072x16xbf16, #tpu.memory_space<vmem>>, vector<16x16xbf16>
    %c1072 = arith.constant 1072 : index
    %c0_86 = arith.constant 0 : index
    %109 = vector.load %arg16[%c1072, %c0_86] : memref<3072x16xbf16, #tpu.memory_space<vmem>>, vector<16x16xbf16>
    %c1312 = arith.constant 1312 : index
    %c0_87 = arith.constant 0 : index
    %110 = vector.load %arg16[%c1312, %c0_87] : memref<3072x16xbf16, #tpu.memory_space<vmem>>, vector<16x16xbf16>
    %c1328 = arith.constant 1328 : index
    %c0_88 = arith.constant 0 : index
    %111 = vector.load %arg16[%c1328, %c0_88] : memref<3072x16xbf16, #tpu.memory_space<vmem>>, vector<16x16xbf16>
    %112 = arith.maximumf %108, %109 : vector<16x16xbf16>
    %113 = arith.maximumf %110, %111 : vector<16x16xbf16>
    %114 = arith.maximumf %112, %113 : vector<16x16xbf16>
    %c0_89 = arith.constant 0 : index
    %c208 = arith.constant 208 : index
    %115 = vector.load %arg18[%c0_89, %c208] : memref<16x576xbf16, #tpu.memory_space<vmem>>, vector<16x16xbf16>
    tpu.vector_store %arg18[%c0_89, %c208], %114 {strides = array<i32>} : memref<16x576xbf16, #tpu.memory_space<vmem>>, vector<16x16xbf16>,
    %c1088 = arith.constant 1088 : index
    %c0_90 = arith.constant 0 : index
    %116 = vector.load %arg16[%c1088, %c0_90] : memref<3072x16xbf16, #tpu.memory_space<vmem>>, vector<16x16xbf16>
    %c1104 = arith.constant 1104 : index
    %c0_91 = arith.constant 0 : index
    %117 = vector.load %arg16[%c1104, %c0_91] : memref<3072x16xbf16, #tpu.memory_space<vmem>>, vector<16x16xbf16>
    %c1344 = arith.constant 1344 : index
    %c0_92 = arith.constant 0 : index
    %118 = vector.load %arg16[%c1344, %c0_92] : memref<3072x16xbf16, #tpu.memory_space<vmem>>, vector<16x16xbf16>
    %c1360 = arith.constant 1360 : index
    %c0_93 = arith.constant 0 : index
    %119 = vector.load %arg16[%c1360, %c0_93] : memref<3072x16xbf16, #tpu.memory_space<vmem>>, vector<16x16xbf16>
    %120 = arith.maximumf %116, %117 : vector<16x16xbf16>
    %121 = arith.maximumf %118, %119 : vector<16x16xbf16>
    %122 = arith.maximumf %120, %121 : vector<16x16xbf16>
    %c0_94 = arith.constant 0 : index
    %c224 = arith.constant 224 : index
    %123 = vector.load %arg18[%c0_94, %c224] : memref<16x576xbf16, #tpu.memory_space<vmem>>, vector<16x16xbf16>
    tpu.vector_store %arg18[%c0_94, %c224], %122 {strides = array<i32>} : memref<16x576xbf16, #tpu.memory_space<vmem>>, vector<16x16xbf16>,
    %c1120 = arith.constant 1120 : index
    %c0_95 = arith.constant 0 : index
    %124 = vector.load %arg16[%c1120, %c0_95] : memref<3072x16xbf16, #tpu.memory_space<vmem>>, vector<16x16xbf16>
    %c1136 = arith.constant 1136 : index
    %c0_96 = arith.constant 0 : index
    %125 = vector.load %arg16[%c1136, %c0_96] : memref<3072x16xbf16, #tpu.memory_space<vmem>>, vector<16x16xbf16>
    %c1376 = arith.constant 1376 : index
    %c0_97 = arith.constant 0 : index
    %126 = vector.load %arg16[%c1376, %c0_97] : memref<3072x16xbf16, #tpu.memory_space<vmem>>, vector<16x16xbf16>
    %c1392 = arith.constant 1392 : index
    %c0_98 = arith.constant 0 : index
    %127 = vector.load %arg16[%c1392, %c0_98] : memref<3072x16xbf16, #tpu.memory_space<vmem>>, vector<16x16xbf16>
    %128 = arith.maximumf %124, %125 : vector<16x16xbf16>
    %129 = arith.maximumf %126, %127 : vector<16x16xbf16>
    %130 = arith.maximumf %128, %129 : vector<16x16xbf16>
    %c0_99 = arith.constant 0 : index
    %c240 = arith.constant 240 : index
    %131 = vector.load %arg18[%c0_99, %c240] : memref<16x576xbf16, #tpu.memory_space<vmem>>, vector<16x16xbf16>
    tpu.vector_store %arg18[%c0_99, %c240], %130 {strides = array<i32>} : memref<16x576xbf16, #tpu.memory_space<vmem>>, vector<16x16xbf16>,
    %c1152 = arith.constant 1152 : index
    %c0_100 = arith.constant 0 : index
    %132 = vector.load %arg16[%c1152, %c0_100] : memref<3072x16xbf16, #tpu.memory_space<vmem>>, vector<16x16xbf16>
    %c1168 = arith.constant 1168 : index
    %c0_101 = arith.constant 0 : index
    %133 = vector.load %arg16[%c1168, %c0_101] : memref<3072x16xbf16, #tpu.memory_space<vmem>>, vector<16x16xbf16>
    %c1408 = arith.constant 1408 : index
    %c0_102 = arith.constant 0 : index
    %134 = vector.load %arg16[%c1408, %c0_102] : memref<3072x16xbf16, #tpu.memory_space<vmem>>, vector<16x16xbf16>
    %c1424 = arith.constant 1424 : index
    %c0_103 = arith.constant 0 : index
    %135 = vector.load %arg16[%c1424, %c0_103] : memref<3072x16xbf16, #tpu.memory_space<vmem>>, vector<16x16xbf16>
    %136 = arith.maximumf %132, %133 : vector<16x16xbf16>
    %137 = arith.maximumf %134, %135 : vector<16x16xbf16>
    %138 = arith.maximumf %136, %137 : vector<16x16xbf16>
    %c0_104 = arith.constant 0 : index
    %c256_105 = arith.constant 256 : index
    %139 = vector.load %arg18[%c0_104, %c256_105] : memref<16x576xbf16, #tpu.memory_space<vmem>>, vector<16x16xbf16>
    tpu.vector_store %arg18[%c0_104, %c256_105], %138 {strides = array<i32>} : memref<16x576xbf16, #tpu.memory_space<vmem>>, vector<16x16xbf16>,
    %c1184 = arith.constant 1184 : index
    %c0_106 = arith.constant 0 : index
    %140 = vector.load %arg16[%c1184, %c0_106] : memref<3072x16xbf16, #tpu.memory_space<vmem>>, vector<16x16xbf16>
    %c1200 = arith.constant 1200 : index
    %c0_107 = arith.constant 0 : index
    %141 = vector.load %arg16[%c1200, %c0_107] : memref<3072x16xbf16, #tpu.memory_space<vmem>>, vector<16x16xbf16>
    %c1440 = arith.constant 1440 : index
    %c0_108 = arith.constant 0 : index
    %142 = vector.load %arg16[%c1440, %c0_108] : memref<3072x16xbf16, #tpu.memory_space<vmem>>, vector<16x16xbf16>
    %c1456 = arith.constant 1456 : index
    %c0_109 = arith.constant 0 : index
    %143 = vector.load %arg16[%c1456, %c0_109] : memref<3072x16xbf16, #tpu.memory_space<vmem>>, vector<16x16xbf16>
    %144 = arith.maximumf %140, %141 : vector<16x16xbf16>
    %145 = arith.maximumf %142, %143 : vector<16x16xbf16>
    %146 = arith.maximumf %144, %145 : vector<16x16xbf16>
    %c0_110 = arith.constant 0 : index
    %c272_111 = arith.constant 272 : index
    %147 = vector.load %arg18[%c0_110, %c272_111] : memref<16x576xbf16, #tpu.memory_space<vmem>>, vector<16x16xbf16>
    tpu.vector_store %arg18[%c0_110, %c272_111], %146 {strides = array<i32>} : memref<16x576xbf16, #tpu.memory_space<vmem>>, vector<16x16xbf16>,
    %c1536 = arith.constant 1536 : index
    %c0_112 = arith.constant 0 : index
    %148 = vector.load %arg16[%c1536, %c0_112] : memref<3072x16xbf16, #tpu.memory_space<vmem>>, vector<16x16xbf16>
    %c1552 = arith.constant 1552 : index
    %c0_113 = arith.constant 0 : index
    %149 = vector.load %arg16[%c1552, %c0_113] : memref<3072x16xbf16, #tpu.memory_space<vmem>>, vector<16x16xbf16>
    %c1792 = arith.constant 1792 : index
    %c0_114 = arith.constant 0 : index
    %150 = vector.load %arg16[%c1792, %c0_114] : memref<3072x16xbf16, #tpu.memory_space<vmem>>, vector<16x16xbf16>
    %c1808 = arith.constant 1808 : index
    %c0_115 = arith.constant 0 : index
    %151 = vector.load %arg16[%c1808, %c0_115] : memref<3072x16xbf16, #tpu.memory_space<vmem>>, vector<16x16xbf16>
    %152 = arith.maximumf %148, %149 : vector<16x16xbf16>
    %153 = arith.maximumf %150, %151 : vector<16x16xbf16>
    %154 = arith.maximumf %152, %153 : vector<16x16xbf16>
    %c0_116 = arith.constant 0 : index
    %c288_117 = arith.constant 288 : index
    %155 = vector.load %arg18[%c0_116, %c288_117] : memref<16x576xbf16, #tpu.memory_space<vmem>>, vector<16x16xbf16>
    tpu.vector_store %arg18[%c0_116, %c288_117], %154 {strides = array<i32>} : memref<16x576xbf16, #tpu.memory_space<vmem>>, vector<16x16xbf16>,
    %c1568 = arith.constant 1568 : index
    %c0_118 = arith.constant 0 : index
    %156 = vector.load %arg16[%c1568, %c0_118] : memref<3072x16xbf16, #tpu.memory_space<vmem>>, vector<16x16xbf16>
    %c1584 = arith.constant 1584 : index
    %c0_119 = arith.constant 0 : index
    %157 = vector.load %arg16[%c1584, %c0_119] : memref<3072x16xbf16, #tpu.memory_space<vmem>>, vector<16x16xbf16>
    %c1824 = arith.constant 1824 : index
    %c0_120 = arith.constant 0 : index
    %158 = vector.load %arg16[%c1824, %c0_120] : memref<3072x16xbf16, #tpu.memory_space<vmem>>, vector<16x16xbf16>
    %c1840 = arith.constant 1840 : index
    %c0_121 = arith.constant 0 : index
    %159 = vector.load %arg16[%c1840, %c0_121] : memref<3072x16xbf16, #tpu.memory_space<vmem>>, vector<16x16xbf16>
    %160 = arith.maximumf %156, %157 : vector<16x16xbf16>
    %161 = arith.maximumf %158, %159 : vector<16x16xbf16>
    %162 = arith.maximumf %160, %161 : vector<16x16xbf16>
    %c0_122 = arith.constant 0 : index
    %c304_123 = arith.constant 304 : index
    %163 = vector.load %arg18[%c0_122, %c304_123] : memref<16x576xbf16, #tpu.memory_space<vmem>>, vector<16x16xbf16>
    tpu.vector_store %arg18[%c0_122, %c304_123], %162 {strides = array<i32>} : memref<16x576xbf16, #tpu.memory_space<vmem>>, vector<16x16xbf16>,
    %c1600 = arith.constant 1600 : index
    %c0_124 = arith.constant 0 : index
    %164 = vector.load %arg16[%c1600, %c0_124] : memref<3072x16xbf16, #tpu.memory_space<vmem>>, vector<16x16xbf16>
    %c1616 = arith.constant 1616 : index
    %c0_125 = arith.constant 0 : index
    %165 = vector.load %arg16[%c1616, %c0_125] : memref<3072x16xbf16, #tpu.memory_space<vmem>>, vector<16x16xbf16>
    %c1856 = arith.constant 1856 : index
    %c0_126 = arith.constant 0 : index
    %166 = vector.load %arg16[%c1856, %c0_126] : memref<3072x16xbf16, #tpu.memory_space<vmem>>, vector<16x16xbf16>
    %c1872 = arith.constant 1872 : index
    %c0_127 = arith.constant 0 : index
    %167 = vector.load %arg16[%c1872, %c0_127] : memref<3072x16xbf16, #tpu.memory_space<vmem>>, vector<16x16xbf16>
    %168 = arith.maximumf %164, %165 : vector<16x16xbf16>
    %169 = arith.maximumf %166, %167 : vector<16x16xbf16>
    %170 = arith.maximumf %168, %169 : vector<16x16xbf16>
    %c0_128 = arith.constant 0 : index
    %c320_129 = arith.constant 320 : index
    %171 = vector.load %arg18[%c0_128, %c320_129] : memref<16x576xbf16, #tpu.memory_space<vmem>>, vector<16x16xbf16>
    tpu.vector_store %arg18[%c0_128, %c320_129], %170 {strides = array<i32>} : memref<16x576xbf16, #tpu.memory_space<vmem>>, vector<16x16xbf16>,
    %c1632 = arith.constant 1632 : index
    %c0_130 = arith.constant 0 : index
    %172 = vector.load %arg16[%c1632, %c0_130] : memref<3072x16xbf16, #tpu.memory_space<vmem>>, vector<16x16xbf16>
    %c1648 = arith.constant 1648 : index
    %c0_131 = arith.constant 0 : index
    %173 = vector.load %arg16[%c1648, %c0_131] : memref<3072x16xbf16, #tpu.memory_space<vmem>>, vector<16x16xbf16>
    %c1888 = arith.constant 1888 : index
    %c0_132 = arith.constant 0 : index
    %174 = vector.load %arg16[%c1888, %c0_132] : memref<3072x16xbf16, #tpu.memory_space<vmem>>, vector<16x16xbf16>
    %c1904 = arith.constant 1904 : index
    %c0_133 = arith.constant 0 : index
    %175 = vector.load %arg16[%c1904, %c0_133] : memref<3072x16xbf16, #tpu.memory_space<vmem>>, vector<16x16xbf16>
    %176 = arith.maximumf %172, %173 : vector<16x16xbf16>
    %177 = arith.maximumf %174, %175 : vector<16x16xbf16>
    %178 = arith.maximumf %176, %177 : vector<16x16xbf16>
    %c0_134 = arith.constant 0 : index
    %c336_135 = arith.constant 336 : index
    %179 = vector.load %arg18[%c0_134, %c336_135] : memref<16x576xbf16, #tpu.memory_space<vmem>>, vector<16x16xbf16>
    tpu.vector_store %arg18[%c0_134, %c336_135], %178 {strides = array<i32>} : memref<16x576xbf16, #tpu.memory_space<vmem>>, vector<16x16xbf16>,
    %c1664 = arith.constant 1664 : index
    %c0_136 = arith.constant 0 : index
    %180 = vector.load %arg16[%c1664, %c0_136] : memref<3072x16xbf16, #tpu.memory_space<vmem>>, vector<16x16xbf16>
    %c1680 = arith.constant 1680 : index
    %c0_137 = arith.constant 0 : index
    %181 = vector.load %arg16[%c1680, %c0_137] : memref<3072x16xbf16, #tpu.memory_space<vmem>>, vector<16x16xbf16>
    %c1920 = arith.constant 1920 : index
    %c0_138 = arith.constant 0 : index
    %182 = vector.load %arg16[%c1920, %c0_138] : memref<3072x16xbf16, #tpu.memory_space<vmem>>, vector<16x16xbf16>
    %c1936 = arith.constant 1936 : index
    %c0_139 = arith.constant 0 : index
    %183 = vector.load %arg16[%c1936, %c0_139] : memref<3072x16xbf16, #tpu.memory_space<vmem>>, vector<16x16xbf16>
    %184 = arith.maximumf %180, %181 : vector<16x16xbf16>
    %185 = arith.maximumf %182, %183 : vector<16x16xbf16>
    %186 = arith.maximumf %184, %185 : vector<16x16xbf16>
    %c0_140 = arith.constant 0 : index
    %c352_141 = arith.constant 352 : index
    %187 = vector.load %arg18[%c0_140, %c352_141] : memref<16x576xbf16, #tpu.memory_space<vmem>>, vector<16x16xbf16>
    tpu.vector_store %arg18[%c0_140, %c352_141], %186 {strides = array<i32>} : memref<16x576xbf16, #tpu.memory_space<vmem>>, vector<16x16xbf16>,
    %c1696 = arith.constant 1696 : index
    %c0_142 = arith.constant 0 : index
    %188 = vector.load %arg16[%c1696, %c0_142] : memref<3072x16xbf16, #tpu.memory_space<vmem>>, vector<16x16xbf16>
    %c1712 = arith.constant 1712 : index
    %c0_143 = arith.constant 0 : index
    %189 = vector.load %arg16[%c1712, %c0_143] : memref<3072x16xbf16, #tpu.memory_space<vmem>>, vector<16x16xbf16>
    %c1952 = arith.constant 1952 : index
    %c0_144 = arith.constant 0 : index
    %190 = vector.load %arg16[%c1952, %c0_144] : memref<3072x16xbf16, #tpu.memory_space<vmem>>, vector<16x16xbf16>
    %c1968 = arith.constant 1968 : index
    %c0_145 = arith.constant 0 : index
    %191 = vector.load %arg16[%c1968, %c0_145] : memref<3072x16xbf16, #tpu.memory_space<vmem>>, vector<16x16xbf16>
    %192 = arith.maximumf %188, %189 : vector<16x16xbf16>
    %193 = arith.maximumf %190, %191 : vector<16x16xbf16>
    %194 = arith.maximumf %192, %193 : vector<16x16xbf16>
    %c0_146 = arith.constant 0 : index
    %c368_147 = arith.constant 368 : index
    %195 = vector.load %arg18[%c0_146, %c368_147] : memref<16x576xbf16, #tpu.memory_space<vmem>>, vector<16x16xbf16>
    tpu.vector_store %arg18[%c0_146, %c368_147], %194 {strides = array<i32>} : memref<16x576xbf16, #tpu.memory_space<vmem>>, vector<16x16xbf16>,
    %c2048 = arith.constant 2048 : index
    %c0_148 = arith.constant 0 : index
    %196 = vector.load %arg16[%c2048, %c0_148] : memref<3072x16xbf16, #tpu.memory_space<vmem>>, vector<16x16xbf16>
    %c2064 = arith.constant 2064 : index
    %c0_149 = arith.constant 0 : index
    %197 = vector.load %arg16[%c2064, %c0_149] : memref<3072x16xbf16, #tpu.memory_space<vmem>>, vector<16x16xbf16>
    %c2304 = arith.constant 2304 : index
    %c0_150 = arith.constant 0 : index
    %198 = vector.load %arg16[%c2304, %c0_150] : memref<3072x16xbf16, #tpu.memory_space<vmem>>, vector<16x16xbf16>
    %c2320 = arith.constant 2320 : index
    %c0_151 = arith.constant 0 : index
    %199 = vector.load %arg16[%c2320, %c0_151] : memref<3072x16xbf16, #tpu.memory_space<vmem>>, vector<16x16xbf16>
    %200 = arith.maximumf %196, %197 : vector<16x16xbf16>
    %201 = arith.maximumf %198, %199 : vector<16x16xbf16>
    %202 = arith.maximumf %200, %201 : vector<16x16xbf16>
    %c0_152 = arith.constant 0 : index
    %c384_153 = arith.constant 384 : index
    %203 = vector.load %arg18[%c0_152, %c384_153] : memref<16x576xbf16, #tpu.memory_space<vmem>>, vector<16x16xbf16>
    tpu.vector_store %arg18[%c0_152, %c384_153], %202 {strides = array<i32>} : memref<16x576xbf16, #tpu.memory_space<vmem>>, vector<16x16xbf16>,
    %c2080 = arith.constant 2080 : index
    %c0_154 = arith.constant 0 : index
    %204 = vector.load %arg16[%c2080, %c0_154] : memref<3072x16xbf16, #tpu.memory_space<vmem>>, vector<16x16xbf16>
    %c2096 = arith.constant 2096 : index
    %c0_155 = arith.constant 0 : index
    %205 = vector.load %arg16[%c2096, %c0_155] : memref<3072x16xbf16, #tpu.memory_space<vmem>>, vector<16x16xbf16>
    %c2336 = arith.constant 2336 : index
    %c0_156 = arith.constant 0 : index
    %206 = vector.load %arg16[%c2336, %c0_156] : memref<3072x16xbf16, #tpu.memory_space<vmem>>, vector<16x16xbf16>
    %c2352 = arith.constant 2352 : index
    %c0_157 = arith.constant 0 : index
    %207 = vector.load %arg16[%c2352, %c0_157] : memref<3072x16xbf16, #tpu.memory_space<vmem>>, vector<16x16xbf16>
    %208 = arith.maximumf %204, %205 : vector<16x16xbf16>
    %209 = arith.maximumf %206, %207 : vector<16x16xbf16>
    %210 = arith.maximumf %208, %209 : vector<16x16xbf16>
    %c0_158 = arith.constant 0 : index
    %c400_159 = arith.constant 400 : index
    %211 = vector.load %arg18[%c0_158, %c400_159] : memref<16x576xbf16, #tpu.memory_space<vmem>>, vector<16x16xbf16>
    tpu.vector_store %arg18[%c0_158, %c400_159], %210 {strides = array<i32>} : memref<16x576xbf16, #tpu.memory_space<vmem>>, vector<16x16xbf16>,
    %c2112 = arith.constant 2112 : index
    %c0_160 = arith.constant 0 : index
    %212 = vector.load %arg16[%c2112, %c0_160] : memref<3072x16xbf16, #tpu.memory_space<vmem>>, vector<16x16xbf16>
    %c2128 = arith.constant 2128 : index
    %c0_161 = arith.constant 0 : index
    %213 = vector.load %arg16[%c2128, %c0_161] : memref<3072x16xbf16, #tpu.memory_space<vmem>>, vector<16x16xbf16>
    %c2368 = arith.constant 2368 : index
    %c0_162 = arith.constant 0 : index
    %214 = vector.load %arg16[%c2368, %c0_162] : memref<3072x16xbf16, #tpu.memory_space<vmem>>, vector<16x16xbf16>
    %c2384 = arith.constant 2384 : index
    %c0_163 = arith.constant 0 : index
    %215 = vector.load %arg16[%c2384, %c0_163] : memref<3072x16xbf16, #tpu.memory_space<vmem>>, vector<16x16xbf16>
    %216 = arith.maximumf %212, %213 : vector<16x16xbf16>
    %217 = arith.maximumf %214, %215 : vector<16x16xbf16>
    %218 = arith.maximumf %216, %217 : vector<16x16xbf16>
    %c0_164 = arith.constant 0 : index
    %c416_165 = arith.constant 416 : index
    %219 = vector.load %arg18[%c0_164, %c416_165] : memref<16x576xbf16, #tpu.memory_space<vmem>>, vector<16x16xbf16>
    tpu.vector_store %arg18[%c0_164, %c416_165], %218 {strides = array<i32>} : memref<16x576xbf16, #tpu.memory_space<vmem>>, vector<16x16xbf16>,
    %c2144 = arith.constant 2144 : index
    %c0_166 = arith.constant 0 : index
    %220 = vector.load %arg16[%c2144, %c0_166] : memref<3072x16xbf16, #tpu.memory_space<vmem>>, vector<16x16xbf16>
    %c2160 = arith.constant 2160 : index
    %c0_167 = arith.constant 0 : index
    %221 = vector.load %arg16[%c2160, %c0_167] : memref<3072x16xbf16, #tpu.memory_space<vmem>>, vector<16x16xbf16>
    %c2400 = arith.constant 2400 : index
    %c0_168 = arith.constant 0 : index
    %222 = vector.load %arg16[%c2400, %c0_168] : memref<3072x16xbf16, #tpu.memory_space<vmem>>, vector<16x16xbf16>
    %c2416 = arith.constant 2416 : index
    %c0_169 = arith.constant 0 : index
    %223 = vector.load %arg16[%c2416, %c0_169] : memref<3072x16xbf16, #tpu.memory_space<vmem>>, vector<16x16xbf16>
    %224 = arith.maximumf %220, %221 : vector<16x16xbf16>
    %225 = arith.maximumf %222, %223 : vector<16x16xbf16>
    %226 = arith.maximumf %224, %225 : vector<16x16xbf16>
    %c0_170 = arith.constant 0 : index
    %c432_171 = arith.constant 432 : index
    %227 = vector.load %arg18[%c0_170, %c432_171] : memref<16x576xbf16, #tpu.memory_space<vmem>>, vector<16x16xbf16>
    tpu.vector_store %arg18[%c0_170, %c432_171], %226 {strides = array<i32>} : memref<16x576xbf16, #tpu.memory_space<vmem>>, vector<16x16xbf16>,
    %c2176 = arith.constant 2176 : index
    %c0_172 = arith.constant 0 : index
    %228 = vector.load %arg16[%c2176, %c0_172] : memref<3072x16xbf16, #tpu.memory_space<vmem>>, vector<16x16xbf16>
    %c2192 = arith.constant 2192 : index
    %c0_173 = arith.constant 0 : index
    %229 = vector.load %arg16[%c2192, %c0_173] : memref<3072x16xbf16, #tpu.memory_space<vmem>>, vector<16x16xbf16>
    %c2432 = arith.constant 2432 : index
    %c0_174 = arith.constant 0 : index
    %230 = vector.load %arg16[%c2432, %c0_174] : memref<3072x16xbf16, #tpu.memory_space<vmem>>, vector<16x16xbf16>
    %c2448 = arith.constant 2448 : index
    %c0_175 = arith.constant 0 : index
    %231 = vector.load %arg16[%c2448, %c0_175] : memref<3072x16xbf16, #tpu.memory_space<vmem>>, vector<16x16xbf16>
    %232 = arith.maximumf %228, %229 : vector<16x16xbf16>
    %233 = arith.maximumf %230, %231 : vector<16x16xbf16>
    %234 = arith.maximumf %232, %233 : vector<16x16xbf16>
    %c0_176 = arith.constant 0 : index
    %c448 = arith.constant 448 : index
    %235 = vector.load %arg18[%c0_176, %c448] : memref<16x576xbf16, #tpu.memory_space<vmem>>, vector<16x16xbf16>
    tpu.vector_store %arg18[%c0_176, %c448], %234 {strides = array<i32>} : memref<16x576xbf16, #tpu.memory_space<vmem>>, vector<16x16xbf16>,
    %c2208 = arith.constant 2208 : index
    %c0_177 = arith.constant 0 : index
    %236 = vector.load %arg16[%c2208, %c0_177] : memref<3072x16xbf16, #tpu.memory_space<vmem>>, vector<16x16xbf16>
    %c2224 = arith.constant 2224 : index
    %c0_178 = arith.constant 0 : index
    %237 = vector.load %arg16[%c2224, %c0_178] : memref<3072x16xbf16, #tpu.memory_space<vmem>>, vector<16x16xbf16>
    %c2464 = arith.constant 2464 : index
    %c0_179 = arith.constant 0 : index
    %238 = vector.load %arg16[%c2464, %c0_179] : memref<3072x16xbf16, #tpu.memory_space<vmem>>, vector<16x16xbf16>
    %c2480 = arith.constant 2480 : index
    %c0_180 = arith.constant 0 : index
    %239 = vector.load %arg16[%c2480, %c0_180] : memref<3072x16xbf16, #tpu.memory_space<vmem>>, vector<16x16xbf16>
    %240 = arith.maximumf %236, %237 : vector<16x16xbf16>
    %241 = arith.maximumf %238, %239 : vector<16x16xbf16>
    %242 = arith.maximumf %240, %241 : vector<16x16xbf16>
    %c0_181 = arith.constant 0 : index
    %c464 = arith.constant 464 : index
    %243 = vector.load %arg18[%c0_181, %c464] : memref<16x576xbf16, #tpu.memory_space<vmem>>, vector<16x16xbf16>
    tpu.vector_store %arg18[%c0_181, %c464], %242 {strides = array<i32>} : memref<16x576xbf16, #tpu.memory_space<vmem>>, vector<16x16xbf16>,
    %c2560 = arith.constant 2560 : index
    %c0_182 = arith.constant 0 : index
    %244 = vector.load %arg16[%c2560, %c0_182] : memref<3072x16xbf16, #tpu.memory_space<vmem>>, vector<16x16xbf16>
    %c2576 = arith.constant 2576 : index
    %c0_183 = arith.constant 0 : index
    %245 = vector.load %arg16[%c2576, %c0_183] : memref<3072x16xbf16, #tpu.memory_space<vmem>>, vector<16x16xbf16>
    %c2816 = arith.constant 2816 : index
    %c0_184 = arith.constant 0 : index
    %246 = vector.load %arg16[%c2816, %c0_184] : memref<3072x16xbf16, #tpu.memory_space<vmem>>, vector<16x16xbf16>
    %c2832 = arith.constant 2832 : index
    %c0_185 = arith.constant 0 : index
    %247 = vector.load %arg16[%c2832, %c0_185] : memref<3072x16xbf16, #tpu.memory_space<vmem>>, vector<16x16xbf16>
    %248 = arith.maximumf %244, %245 : vector<16x16xbf16>
    %249 = arith.maximumf %246, %247 : vector<16x16xbf16>
    %250 = arith.maximumf %248, %249 : vector<16x16xbf16>
    %c0_186 = arith.constant 0 : index
    %c480 = arith.constant 480 : index
    %251 = vector.load %arg18[%c0_186, %c480] : memref<16x576xbf16, #tpu.memory_space<vmem>>, vector<16x16xbf16>
    tpu.vector_store %arg18[%c0_186, %c480], %250 {strides = array<i32>} : memref<16x576xbf16, #tpu.memory_space<vmem>>, vector<16x16xbf16>,
    %c2592 = arith.constant 2592 : index
    %c0_187 = arith.constant 0 : index
    %252 = vector.load %arg16[%c2592, %c0_187] : memref<3072x16xbf16, #tpu.memory_space<vmem>>, vector<16x16xbf16>
    %c2608 = arith.constant 2608 : index
    %c0_188 = arith.constant 0 : index
    %253 = vector.load %arg16[%c2608, %c0_188] : memref<3072x16xbf16, #tpu.memory_space<vmem>>, vector<16x16xbf16>
    %c2848 = arith.constant 2848 : index
    %c0_189 = arith.constant 0 : index
    %254 = vector.load %arg16[%c2848, %c0_189] : memref<3072x16xbf16, #tpu.memory_space<vmem>>, vector<16x16xbf16>
    %c2864 = arith.constant 2864 : index
    %c0_190 = arith.constant 0 : index
    %255 = vector.load %arg16[%c2864, %c0_190] : memref<3072x16xbf16, #tpu.memory_space<vmem>>, vector<16x16xbf16>
    %256 = arith.maximumf %252, %253 : vector<16x16xbf16>
    %257 = arith.maximumf %254, %255 : vector<16x16xbf16>
    %258 = arith.maximumf %256, %257 : vector<16x16xbf16>
    %c0_191 = arith.constant 0 : index
    %c496 = arith.constant 496 : index
    %259 = vector.load %arg18[%c0_191, %c496] : memref<16x576xbf16, #tpu.memory_space<vmem>>, vector<16x16xbf16>
    tpu.vector_store %arg18[%c0_191, %c496], %258 {strides = array<i32>} : memref<16x576xbf16, #tpu.memory_space<vmem>>, vector<16x16xbf16>,
    %c2624 = arith.constant 2624 : index
    %c0_192 = arith.constant 0 : index
    %260 = vector.load %arg16[%c2624, %c0_192] : memref<3072x16xbf16, #tpu.memory_space<vmem>>, vector<16x16xbf16>
    %c2640 = arith.constant 2640 : index
    %c0_193 = arith.constant 0 : index
    %261 = vector.load %arg16[%c2640, %c0_193] : memref<3072x16xbf16, #tpu.memory_space<vmem>>, vector<16x16xbf16>
    %c2880 = arith.constant 2880 : index
    %c0_194 = arith.constant 0 : index
    %262 = vector.load %arg16[%c2880, %c0_194] : memref<3072x16xbf16, #tpu.memory_space<vmem>>, vector<16x16xbf16>
    %c2896 = arith.constant 2896 : index
    %c0_195 = arith.constant 0 : index
    %263 = vector.load %arg16[%c2896, %c0_195] : memref<3072x16xbf16, #tpu.memory_space<vmem>>, vector<16x16xbf16>
    %264 = arith.maximumf %260, %261 : vector<16x16xbf16>
    %265 = arith.maximumf %262, %263 : vector<16x16xbf16>
    %266 = arith.maximumf %264, %265 : vector<16x16xbf16>
    %c0_196 = arith.constant 0 : index
    %c512_197 = arith.constant 512 : index
    %267 = vector.load %arg18[%c0_196, %c512_197] : memref<16x576xbf16, #tpu.memory_space<vmem>>, vector<16x16xbf16>
    tpu.vector_store %arg18[%c0_196, %c512_197], %266 {strides = array<i32>} : memref<16x576xbf16, #tpu.memory_space<vmem>>, vector<16x16xbf16>,
    %c2656 = arith.constant 2656 : index
    %c0_198 = arith.constant 0 : index
    %268 = vector.load %arg16[%c2656, %c0_198] : memref<3072x16xbf16, #tpu.memory_space<vmem>>, vector<16x16xbf16>
    %c2672 = arith.constant 2672 : index
    %c0_199 = arith.constant 0 : index
    %269 = vector.load %arg16[%c2672, %c0_199] : memref<3072x16xbf16, #tpu.memory_space<vmem>>, vector<16x16xbf16>
    %c2912 = arith.constant 2912 : index
    %c0_200 = arith.constant 0 : index
    %270 = vector.load %arg16[%c2912, %c0_200] : memref<3072x16xbf16, #tpu.memory_space<vmem>>, vector<16x16xbf16>
    %c2928 = arith.constant 2928 : index
    %c0_201 = arith.constant 0 : index
    %271 = vector.load %arg16[%c2928, %c0_201] : memref<3072x16xbf16, #tpu.memory_space<vmem>>, vector<16x16xbf16>
    %272 = arith.maximumf %268, %269 : vector<16x16xbf16>
    %273 = arith.maximumf %270, %271 : vector<16x16xbf16>
    %274 = arith.maximumf %272, %273 : vector<16x16xbf16>
    %c0_202 = arith.constant 0 : index
    %c528_203 = arith.constant 528 : index
    %275 = vector.load %arg18[%c0_202, %c528_203] : memref<16x576xbf16, #tpu.memory_space<vmem>>, vector<16x16xbf16>
    tpu.vector_store %arg18[%c0_202, %c528_203], %274 {strides = array<i32>} : memref<16x576xbf16, #tpu.memory_space<vmem>>, vector<16x16xbf16>,
    %c2688 = arith.constant 2688 : index
    %c0_204 = arith.constant 0 : index
    %276 = vector.load %arg16[%c2688, %c0_204] : memref<3072x16xbf16, #tpu.memory_space<vmem>>, vector<16x16xbf16>
    %c2704 = arith.constant 2704 : index
    %c0_205 = arith.constant 0 : index
    %277 = vector.load %arg16[%c2704, %c0_205] : memref<3072x16xbf16, #tpu.memory_space<vmem>>, vector<16x16xbf16>
    %c2944 = arith.constant 2944 : index
    %c0_206 = arith.constant 0 : index
    %278 = vector.load %arg16[%c2944, %c0_206] : memref<3072x16xbf16, #tpu.memory_space<vmem>>, vector<16x16xbf16>
    %c2960 = arith.constant 2960 : index
    %c0_207 = arith.constant 0 : index
    %279 = vector.load %arg16[%c2960, %c0_207] : memref<3072x16xbf16, #tpu.memory_space<vmem>>, vector<16x16xbf16>
    %280 = arith.maximumf %276, %277 : vector<16x16xbf16>
    %281 = arith.maximumf %278, %279 : vector<16x16xbf16>
    %282 = arith.maximumf %280, %281 : vector<16x16xbf16>
    %c0_208 = arith.constant 0 : index
    %c544_209 = arith.constant 544 : index
    %283 = vector.load %arg18[%c0_208, %c544_209] : memref<16x576xbf16, #tpu.memory_space<vmem>>, vector<16x16xbf16>
    tpu.vector_store %arg18[%c0_208, %c544_209], %282 {strides = array<i32>} : memref<16x576xbf16, #tpu.memory_space<vmem>>, vector<16x16xbf16>,
    %c2720 = arith.constant 2720 : index
    %c0_210 = arith.constant 0 : index
    %284 = vector.load %arg16[%c2720, %c0_210] : memref<3072x16xbf16, #tpu.memory_space<vmem>>, vector<16x16xbf16>
    %c2736 = arith.constant 2736 : index
    %c0_211 = arith.constant 0 : index
    %285 = vector.load %arg16[%c2736, %c0_211] : memref<3072x16xbf16, #tpu.memory_space<vmem>>, vector<16x16xbf16>
    %c2976 = arith.constant 2976 : index
    %c0_212 = arith.constant 0 : index
    %286 = vector.load %arg16[%c2976, %c0_212] : memref<3072x16xbf16, #tpu.memory_space<vmem>>, vector<16x16xbf16>
    %c2992 = arith.constant 2992 : index
    %c0_213 = arith.constant 0 : index
    %287 = vector.load %arg16[%c2992, %c0_213] : memref<3072x16xbf16, #tpu.memory_space<vmem>>, vector<16x16xbf16>
    %288 = arith.maximumf %284, %285 : vector<16x16xbf16>
    %289 = arith.maximumf %286, %287 : vector<16x16xbf16>
    %290 = arith.maximumf %288, %289 : vector<16x16xbf16>
    %c0_214 = arith.constant 0 : index
    %c560_215 = arith.constant 560 : index
    %291 = vector.load %arg18[%c0_214, %c560_215] : memref<16x576xbf16, #tpu.memory_space<vmem>>, vector<16x16xbf16>
    tpu.vector_store %arg18[%c0_214, %c560_215], %290 {strides = array<i32>} : memref<16x576xbf16, #tpu.memory_space<vmem>>, vector<16x16xbf16>,
    %c0_216 = arith.constant 0 : index
    %c0_217 = arith.constant 0 : index
    %292 = vector.load %arg18[%c0_216, %c0_217] : memref<16x576xbf16, #tpu.memory_space<vmem>>, vector<16x576xbf16>
    %c0_218 = arith.constant 0 : index
    %c0_219 = arith.constant 0 : index
    %293 = vector.load %arg5[%c0_218, %c0_219] : memref<576x200xbf16, #tpu.memory_space<vmem>>, vector<576x200xbf16>
    %cst = arith.constant dense<0.000000e+00> : vector<16x200xf32>
    %294 = tpu.matmul %292, %293, %cst {dimension_numbers = #tpu.dot_dimension_numbers<[1], [0], [0], [1], [0, 0, 1, 1], [], []>} : vector<16x576xbf16>, vector<576x200xbf16>, vector<16x200xf32> -> vector<16x200xf32>
    %c0_220 = arith.constant 0 : index
    %c0_221 = arith.constant 0 : index
    %295 = vector.load %arg6[%c0_220, %c0_221] : memref<1x200xf32, #tpu.memory_space<vmem>>, vector<1x200xf32>
    %296 = vector.broadcast %295 : vector<1x200xf32> to vector<16x200xf32>
    %297 = arith.addf %294, %296 : vector<16x200xf32>
    %cst_222 = arith.constant 0.000000e+00 : f32
    %298 = vector.broadcast %cst_222 : f32 to vector<16x200xf32>
    %299 = arith.maximumf %297, %298 : vector<16x200xf32>
    %300 = arith.truncf %299 : vector<16x200xf32> to vector<16x200xbf16>
    %c0_223 = arith.constant 0 : index
    %c0_224 = arith.constant 0 : index
    %301 = vector.load %arg7[%c0_223, %c0_224] : memref<200x50xbf16, #tpu.memory_space<vmem>>, vector<200x50xbf16>
    %cst_225 = arith.constant dense<0.000000e+00> : vector<16x50xf32>
    %302 = tpu.matmul %300, %301, %cst_225 {dimension_numbers = #tpu.dot_dimension_numbers<[1], [0], [0], [1], [0, 0, 1, 1], [], []>} : vector<16x200xbf16>, vector<200x50xbf16>, vector<16x50xf32> -> vector<16x50xf32>
    %c0_226 = arith.constant 0 : index
    %c0_227 = arith.constant 0 : index
    %303 = vector.load %arg8[%c0_226, %c0_227] : memref<1x50xf32, #tpu.memory_space<vmem>>, vector<1x50xf32>
    %304 = vector.broadcast %303 : vector<1x50xf32> to vector<16x50xf32>
    %305 = arith.addf %302, %304 : vector<16x50xf32>
    %cst_228 = arith.constant 0.000000e+00 : f32
    %306 = vector.broadcast %cst_228 : f32 to vector<16x50xf32>
    %307 = arith.maximumf %305, %306 : vector<16x50xf32>
    %308 = arith.truncf %307 : vector<16x50xf32> to vector<16x50xbf16>
    %c0_229 = arith.constant 0 : index
    %c0_230 = arith.constant 0 : index
    %309 = vector.load %arg9[%c0_229, %c0_230] : memref<50x128xbf16, #tpu.memory_space<vmem>>, vector<50x128xbf16>
    %cst_231 = arith.constant dense<0.000000e+00> : vector<16x128xf32>
    %310 = tpu.matmul %308, %309, %cst_231 {dimension_numbers = #tpu.dot_dimension_numbers<[1], [0], [0], [1], [0, 0, 1, 1], [], []>} : vector<16x50xbf16>, vector<50x128xbf16>, vector<16x128xf32> -> vector<16x128xf32>
    %c0_232 = arith.constant 0 : index
    %c0_233 = arith.constant 0 : index
    %311 = vector.load %arg11[%c0_232, %c0_233] : memref<1x128xf32, #tpu.memory_space<vmem>>, vector<1x128xf32>
    %312 = vector.broadcast %311 : vector<1x128xf32> to vector<16x128xf32>
    %313 = arith.addf %310, %312 : vector<16x128xf32>
    %c0_234 = arith.constant 0 : index
    %c0_235 = arith.constant 0 : index
    %314 = vector.load %arg10[%c0_234, %c0_235] : memref<32x128xbf16, #tpu.memory_space<vmem>>, vector<32x128xbf16>
    %cst_236 = arith.constant 0.000000e+00 : f32
    %315 = vector.broadcast %cst_236 : f32 to vector<2x32xf32>
    %cst_237 = arith.constant 0.000000e+00 : f32
    %316 = vector.broadcast %cst_237 : f32 to vector<2x32xf32>
    %317 = vector.extract_strided_slice %313 {offsets = [0, 0], sizes = [2, 128], strides = [1, 1]} : vector<16x128xf32> to vector<2x128xf32>
    %318 = arith.truncf %315 : vector<2x32xf32> to vector<2x32xbf16>
    %cst_238 = arith.constant dense<0.000000e+00> : vector<2x128xf32>
    %319 = tpu.matmul %318, %314, %cst_238 {dimension_numbers = #tpu.dot_dimension_numbers<[1], [0], [0], [1], [0, 0, 1, 1], [], []>} : vector<2x32xbf16>, vector<32x128xbf16>, vector<2x128xf32> -> vector<2x128xf32>
    %320 = arith.addf %317, %319 : vector<2x128xf32>
    %321 = vector.extract_strided_slice %320 {offsets = [0, 0], sizes = [2, 32], strides = [1, 1]} : vector<2x128xf32> to vector<2x32xf32>
    %cst_239 = arith.constant 0.000000e+00 : f32
    %322 = vector.broadcast %cst_239 : f32 to vector<2x32xf32>
    %323 = arith.subf %322, %321 : vector<2x32xf32>
    %324 = math.exp %323 : vector<2x32xf32>
    %cst_240 = arith.constant 1.000000e+00 : f32
    %325 = vector.broadcast %cst_240 : f32 to vector<2x32xf32>
    %326 = arith.addf %325, %324 : vector<2x32xf32>
    %327 = tpu.reciprocal %326 {approx = true} : vector<2x32xf32> -> vector<2x32xf32>
    %328 = vector.extract_strided_slice %320 {offsets = [0, 32], sizes = [2, 32], strides = [1, 1]} : vector<2x128xf32> to vector<2x32xf32>
    %cst_241 = arith.constant 0.000000e+00 : f32
    %329 = vector.broadcast %cst_241 : f32 to vector<2x32xf32>
    %330 = arith.subf %329, %328 : vector<2x32xf32>
    %331 = math.exp %330 : vector<2x32xf32>
    %cst_242 = arith.constant 1.000000e+00 : f32
    %332 = vector.broadcast %cst_242 : f32 to vector<2x32xf32>
    %333 = arith.addf %332, %331 : vector<2x32xf32>
    %334 = tpu.reciprocal %333 {approx = true} : vector<2x32xf32> -> vector<2x32xf32>
    %335 = vector.extract_strided_slice %320 {offsets = [0, 64], sizes = [2, 32], strides = [1, 1]} : vector<2x128xf32> to vector<2x32xf32>
    %336 = math.tanh %335 : vector<2x32xf32>
    %337 = vector.extract_strided_slice %320 {offsets = [0, 96], sizes = [2, 32], strides = [1, 1]} : vector<2x128xf32> to vector<2x32xf32>
    %cst_243 = arith.constant 0.000000e+00 : f32
    %338 = vector.broadcast %cst_243 : f32 to vector<2x32xf32>
    %339 = arith.subf %338, %337 : vector<2x32xf32>
    %340 = math.exp %339 : vector<2x32xf32>
    %cst_244 = arith.constant 1.000000e+00 : f32
    %341 = vector.broadcast %cst_244 : f32 to vector<2x32xf32>
    %342 = arith.addf %341, %340 : vector<2x32xf32>
    %343 = tpu.reciprocal %342 {approx = true} : vector<2x32xf32> -> vector<2x32xf32>
    %344 = arith.mulf %334, %316 : vector<2x32xf32>
    %345 = arith.mulf %327, %336 : vector<2x32xf32>
    %346 = arith.addf %344, %345 : vector<2x32xf32>
    %347 = math.tanh %346 : vector<2x32xf32>
    %348 = arith.mulf %343, %347 : vector<2x32xf32>
    %349 = vector.extract_strided_slice %313 {offsets = [2, 0], sizes = [2, 128], strides = [1, 1]} : vector<16x128xf32> to vector<2x128xf32>
    %350 = arith.truncf %348 : vector<2x32xf32> to vector<2x32xbf16>
    %cst_245 = arith.constant dense<0.000000e+00> : vector<2x128xf32>
    %351 = tpu.matmul %350, %314, %cst_245 {dimension_numbers = #tpu.dot_dimension_numbers<[1], [0], [0], [1], [0, 0, 1, 1], [], []>} : vector<2x32xbf16>, vector<32x128xbf16>, vector<2x128xf32> -> vector<2x128xf32>
    %352 = arith.addf %349, %351 : vector<2x128xf32>
    %353 = vector.extract_strided_slice %352 {offsets = [0, 0], sizes = [2, 32], strides = [1, 1]} : vector<2x128xf32> to vector<2x32xf32>
    %cst_246 = arith.constant 0.000000e+00 : f32
    %354 = vector.broadcast %cst_246 : f32 to vector<2x32xf32>
    %355 = arith.subf %354, %353 : vector<2x32xf32>
    %356 = math.exp %355 : vector<2x32xf32>
    %cst_247 = arith.constant 1.000000e+00 : f32
    %357 = vector.broadcast %cst_247 : f32 to vector<2x32xf32>
    %358 = arith.addf %357, %356 : vector<2x32xf32>
    %359 = tpu.reciprocal %358 {approx = true} : vector<2x32xf32> -> vector<2x32xf32>
    %360 = vector.extract_strided_slice %352 {offsets = [0, 32], sizes = [2, 32], strides = [1, 1]} : vector<2x128xf32> to vector<2x32xf32>
    %cst_248 = arith.constant 0.000000e+00 : f32
    %361 = vector.broadcast %cst_248 : f32 to vector<2x32xf32>
    %362 = arith.subf %361, %360 : vector<2x32xf32>
    %363 = math.exp %362 : vector<2x32xf32>
    %cst_249 = arith.constant 1.000000e+00 : f32
    %364 = vector.broadcast %cst_249 : f32 to vector<2x32xf32>
    %365 = arith.addf %364, %363 : vector<2x32xf32>
    %366 = tpu.reciprocal %365 {approx = true} : vector<2x32xf32> -> vector<2x32xf32>
    %367 = vector.extract_strided_slice %352 {offsets = [0, 64], sizes = [2, 32], strides = [1, 1]} : vector<2x128xf32> to vector<2x32xf32>
    %368 = math.tanh %367 : vector<2x32xf32>
    %369 = vector.extract_strided_slice %352 {offsets = [0, 96], sizes = [2, 32], strides = [1, 1]} : vector<2x128xf32> to vector<2x32xf32>
    %cst_250 = arith.constant 0.000000e+00 : f32
    %370 = vector.broadcast %cst_250 : f32 to vector<2x32xf32>
    %371 = arith.subf %370, %369 : vector<2x32xf32>
    %372 = math.exp %371 : vector<2x32xf32>
    %cst_251 = arith.constant 1.000000e+00 : f32
    %373 = vector.broadcast %cst_251 : f32 to vector<2x32xf32>
    %374 = arith.addf %373, %372 : vector<2x32xf32>
    %375 = tpu.reciprocal %374 {approx = true} : vector<2x32xf32> -> vector<2x32xf32>
    %376 = arith.mulf %366, %346 : vector<2x32xf32>
    %377 = arith.mulf %359, %368 : vector<2x32xf32>
    %378 = arith.addf %376, %377 : vector<2x32xf32>
    %379 = math.tanh %378 : vector<2x32xf32>
    %380 = arith.mulf %375, %379 : vector<2x32xf32>
    %381 = vector.extract_strided_slice %313 {offsets = [4, 0], sizes = [2, 128], strides = [1, 1]} : vector<16x128xf32> to vector<2x128xf32>
    %382 = arith.truncf %380 : vector<2x32xf32> to vector<2x32xbf16>
    %cst_252 = arith.constant dense<0.000000e+00> : vector<2x128xf32>
    %383 = tpu.matmul %382, %314, %cst_252 {dimension_numbers = #tpu.dot_dimension_numbers<[1], [0], [0], [1], [0, 0, 1, 1], [], []>} : vector<2x32xbf16>, vector<32x128xbf16>, vector<2x128xf32> -> vector<2x128xf32>
    %384 = arith.addf %381, %383 : vector<2x128xf32>
    %385 = vector.extract_strided_slice %384 {offsets = [0, 0], sizes = [2, 32], strides = [1, 1]} : vector<2x128xf32> to vector<2x32xf32>
    %cst_253 = arith.constant 0.000000e+00 : f32
    %386 = vector.broadcast %cst_253 : f32 to vector<2x32xf32>
    %387 = arith.subf %386, %385 : vector<2x32xf32>
    %388 = math.exp %387 : vector<2x32xf32>
    %cst_254 = arith.constant 1.000000e+00 : f32
    %389 = vector.broadcast %cst_254 : f32 to vector<2x32xf32>
    %390 = arith.addf %389, %388 : vector<2x32xf32>
    %391 = tpu.reciprocal %390 {approx = true} : vector<2x32xf32> -> vector<2x32xf32>
    %392 = vector.extract_strided_slice %384 {offsets = [0, 32], sizes = [2, 32], strides = [1, 1]} : vector<2x128xf32> to vector<2x32xf32>
    %cst_255 = arith.constant 0.000000e+00 : f32
    %393 = vector.broadcast %cst_255 : f32 to vector<2x32xf32>
    %394 = arith.subf %393, %392 : vector<2x32xf32>
    %395 = math.exp %394 : vector<2x32xf32>
    %cst_256 = arith.constant 1.000000e+00 : f32
    %396 = vector.broadcast %cst_256 : f32 to vector<2x32xf32>
    %397 = arith.addf %396, %395 : vector<2x32xf32>
    %398 = tpu.reciprocal %397 {approx = true} : vector<2x32xf32> -> vector<2x32xf32>
    %399 = vector.extract_strided_slice %384 {offsets = [0, 64], sizes = [2, 32], strides = [1, 1]} : vector<2x128xf32> to vector<2x32xf32>
    %400 = math.tanh %399 : vector<2x32xf32>
    %401 = vector.extract_strided_slice %384 {offsets = [0, 96], sizes = [2, 32], strides = [1, 1]} : vector<2x128xf32> to vector<2x32xf32>
    %cst_257 = arith.constant 0.000000e+00 : f32
    %402 = vector.broadcast %cst_257 : f32 to vector<2x32xf32>
    %403 = arith.subf %402, %401 : vector<2x32xf32>
    %404 = math.exp %403 : vector<2x32xf32>
    %cst_258 = arith.constant 1.000000e+00 : f32
    %405 = vector.broadcast %cst_258 : f32 to vector<2x32xf32>
    %406 = arith.addf %405, %404 : vector<2x32xf32>
    %407 = tpu.reciprocal %406 {approx = true} : vector<2x32xf32> -> vector<2x32xf32>
    %408 = arith.mulf %398, %378 : vector<2x32xf32>
    %409 = arith.mulf %391, %400 : vector<2x32xf32>
    %410 = arith.addf %408, %409 : vector<2x32xf32>
    %411 = math.tanh %410 : vector<2x32xf32>
    %412 = arith.mulf %407, %411 : vector<2x32xf32>
    %413 = vector.extract_strided_slice %313 {offsets = [6, 0], sizes = [2, 128], strides = [1, 1]} : vector<16x128xf32> to vector<2x128xf32>
    %414 = arith.truncf %412 : vector<2x32xf32> to vector<2x32xbf16>
    %cst_259 = arith.constant dense<0.000000e+00> : vector<2x128xf32>
    %415 = tpu.matmul %414, %314, %cst_259 {dimension_numbers = #tpu.dot_dimension_numbers<[1], [0], [0], [1], [0, 0, 1, 1], [], []>} : vector<2x32xbf16>, vector<32x128xbf16>, vector<2x128xf32> -> vector<2x128xf32>
    %416 = arith.addf %413, %415 : vector<2x128xf32>
    %417 = vector.extract_strided_slice %416 {offsets = [0, 0], sizes = [2, 32], strides = [1, 1]} : vector<2x128xf32> to vector<2x32xf32>
    %cst_260 = arith.constant 0.000000e+00 : f32
    %418 = vector.broadcast %cst_260 : f32 to vector<2x32xf32>
    %419 = arith.subf %418, %417 : vector<2x32xf32>
    %420 = math.exp %419 : vector<2x32xf32>
    %cst_261 = arith.constant 1.000000e+00 : f32
    %421 = vector.broadcast %cst_261 : f32 to vector<2x32xf32>
    %422 = arith.addf %421, %420 : vector<2x32xf32>
    %423 = tpu.reciprocal %422 {approx = true} : vector<2x32xf32> -> vector<2x32xf32>
    %424 = vector.extract_strided_slice %416 {offsets = [0, 32], sizes = [2, 32], strides = [1, 1]} : vector<2x128xf32> to vector<2x32xf32>
    %cst_262 = arith.constant 0.000000e+00 : f32
    %425 = vector.broadcast %cst_262 : f32 to vector<2x32xf32>
    %426 = arith.subf %425, %424 : vector<2x32xf32>
    %427 = math.exp %426 : vector<2x32xf32>
    %cst_263 = arith.constant 1.000000e+00 : f32
    %428 = vector.broadcast %cst_263 : f32 to vector<2x32xf32>
    %429 = arith.addf %428, %427 : vector<2x32xf32>
    %430 = tpu.reciprocal %429 {approx = true} : vector<2x32xf32> -> vector<2x32xf32>
    %431 = vector.extract_strided_slice %416 {offsets = [0, 64], sizes = [2, 32], strides = [1, 1]} : vector<2x128xf32> to vector<2x32xf32>
    %432 = math.tanh %431 : vector<2x32xf32>
    %433 = vector.extract_strided_slice %416 {offsets = [0, 96], sizes = [2, 32], strides = [1, 1]} : vector<2x128xf32> to vector<2x32xf32>
    %cst_264 = arith.constant 0.000000e+00 : f32
    %434 = vector.broadcast %cst_264 : f32 to vector<2x32xf32>
    %435 = arith.subf %434, %433 : vector<2x32xf32>
    %436 = math.exp %435 : vector<2x32xf32>
    %cst_265 = arith.constant 1.000000e+00 : f32
    %437 = vector.broadcast %cst_265 : f32 to vector<2x32xf32>
    %438 = arith.addf %437, %436 : vector<2x32xf32>
    %439 = tpu.reciprocal %438 {approx = true} : vector<2x32xf32> -> vector<2x32xf32>
    %440 = arith.mulf %430, %410 : vector<2x32xf32>
    %441 = arith.mulf %423, %432 : vector<2x32xf32>
    %442 = arith.addf %440, %441 : vector<2x32xf32>
    %443 = math.tanh %442 : vector<2x32xf32>
    %444 = arith.mulf %439, %443 : vector<2x32xf32>
    %445 = vector.extract_strided_slice %313 {offsets = [8, 0], sizes = [2, 128], strides = [1, 1]} : vector<16x128xf32> to vector<2x128xf32>
    %446 = arith.truncf %444 : vector<2x32xf32> to vector<2x32xbf16>
    %cst_266 = arith.constant dense<0.000000e+00> : vector<2x128xf32>
    %447 = tpu.matmul %446, %314, %cst_266 {dimension_numbers = #tpu.dot_dimension_numbers<[1], [0], [0], [1], [0, 0, 1, 1], [], []>} : vector<2x32xbf16>, vector<32x128xbf16>, vector<2x128xf32> -> vector<2x128xf32>
    %448 = arith.addf %445, %447 : vector<2x128xf32>
    %449 = vector.extract_strided_slice %448 {offsets = [0, 0], sizes = [2, 32], strides = [1, 1]} : vector<2x128xf32> to vector<2x32xf32>
    %cst_267 = arith.constant 0.000000e+00 : f32
    %450 = vector.broadcast %cst_267 : f32 to vector<2x32xf32>
    %451 = arith.subf %450, %449 : vector<2x32xf32>
    %452 = math.exp %451 : vector<2x32xf32>
    %cst_268 = arith.constant 1.000000e+00 : f32
    %453 = vector.broadcast %cst_268 : f32 to vector<2x32xf32>
    %454 = arith.addf %453, %452 : vector<2x32xf32>
    %455 = tpu.reciprocal %454 {approx = true} : vector<2x32xf32> -> vector<2x32xf32>
    %456 = vector.extract_strided_slice %448 {offsets = [0, 32], sizes = [2, 32], strides = [1, 1]} : vector<2x128xf32> to vector<2x32xf32>
    %cst_269 = arith.constant 0.000000e+00 : f32
    %457 = vector.broadcast %cst_269 : f32 to vector<2x32xf32>
    %458 = arith.subf %457, %456 : vector<2x32xf32>
    %459 = math.exp %458 : vector<2x32xf32>
    %cst_270 = arith.constant 1.000000e+00 : f32
    %460 = vector.broadcast %cst_270 : f32 to vector<2x32xf32>
    %461 = arith.addf %460, %459 : vector<2x32xf32>
    %462 = tpu.reciprocal %461 {approx = true} : vector<2x32xf32> -> vector<2x32xf32>
    %463 = vector.extract_strided_slice %448 {offsets = [0, 64], sizes = [2, 32], strides = [1, 1]} : vector<2x128xf32> to vector<2x32xf32>
    %464 = math.tanh %463 : vector<2x32xf32>
    %465 = vector.extract_strided_slice %448 {offsets = [0, 96], sizes = [2, 32], strides = [1, 1]} : vector<2x128xf32> to vector<2x32xf32>
    %cst_271 = arith.constant 0.000000e+00 : f32
    %466 = vector.broadcast %cst_271 : f32 to vector<2x32xf32>
    %467 = arith.subf %466, %465 : vector<2x32xf32>
    %468 = math.exp %467 : vector<2x32xf32>
    %cst_272 = arith.constant 1.000000e+00 : f32
    %469 = vector.broadcast %cst_272 : f32 to vector<2x32xf32>
    %470 = arith.addf %469, %468 : vector<2x32xf32>
    %471 = tpu.reciprocal %470 {approx = true} : vector<2x32xf32> -> vector<2x32xf32>
    %472 = arith.mulf %462, %442 : vector<2x32xf32>
    %473 = arith.mulf %455, %464 : vector<2x32xf32>
    %474 = arith.addf %472, %473 : vector<2x32xf32>
    %475 = math.tanh %474 : vector<2x32xf32>
    %476 = arith.mulf %471, %475 : vector<2x32xf32>
    %477 = vector.extract_strided_slice %313 {offsets = [10, 0], sizes = [2, 128], strides = [1, 1]} : vector<16x128xf32> to vector<2x128xf32>
    %478 = arith.truncf %476 : vector<2x32xf32> to vector<2x32xbf16>
    %cst_273 = arith.constant dense<0.000000e+00> : vector<2x128xf32>
    %479 = tpu.matmul %478, %314, %cst_273 {dimension_numbers = #tpu.dot_dimension_numbers<[1], [0], [0], [1], [0, 0, 1, 1], [], []>} : vector<2x32xbf16>, vector<32x128xbf16>, vector<2x128xf32> -> vector<2x128xf32>
    %480 = arith.addf %477, %479 : vector<2x128xf32>
    %481 = vector.extract_strided_slice %480 {offsets = [0, 0], sizes = [2, 32], strides = [1, 1]} : vector<2x128xf32> to vector<2x32xf32>
    %cst_274 = arith.constant 0.000000e+00 : f32
    %482 = vector.broadcast %cst_274 : f32 to vector<2x32xf32>
    %483 = arith.subf %482, %481 : vector<2x32xf32>
    %484 = math.exp %483 : vector<2x32xf32>
    %cst_275 = arith.constant 1.000000e+00 : f32
    %485 = vector.broadcast %cst_275 : f32 to vector<2x32xf32>
    %486 = arith.addf %485, %484 : vector<2x32xf32>
    %487 = tpu.reciprocal %486 {approx = true} : vector<2x32xf32> -> vector<2x32xf32>
    %488 = vector.extract_strided_slice %480 {offsets = [0, 32], sizes = [2, 32], strides = [1, 1]} : vector<2x128xf32> to vector<2x32xf32>
    %cst_276 = arith.constant 0.000000e+00 : f32
    %489 = vector.broadcast %cst_276 : f32 to vector<2x32xf32>
    %490 = arith.subf %489, %488 : vector<2x32xf32>
    %491 = math.exp %490 : vector<2x32xf32>
    %cst_277 = arith.constant 1.000000e+00 : f32
    %492 = vector.broadcast %cst_277 : f32 to vector<2x32xf32>
    %493 = arith.addf %492, %491 : vector<2x32xf32>
    %494 = tpu.reciprocal %493 {approx = true} : vector<2x32xf32> -> vector<2x32xf32>
    %495 = vector.extract_strided_slice %480 {offsets = [0, 64], sizes = [2, 32], strides = [1, 1]} : vector<2x128xf32> to vector<2x32xf32>
    %496 = math.tanh %495 : vector<2x32xf32>
    %497 = vector.extract_strided_slice %480 {offsets = [0, 96], sizes = [2, 32], strides = [1, 1]} : vector<2x128xf32> to vector<2x32xf32>
    %cst_278 = arith.constant 0.000000e+00 : f32
    %498 = vector.broadcast %cst_278 : f32 to vector<2x32xf32>
    %499 = arith.subf %498, %497 : vector<2x32xf32>
    %500 = math.exp %499 : vector<2x32xf32>
    %cst_279 = arith.constant 1.000000e+00 : f32
    %501 = vector.broadcast %cst_279 : f32 to vector<2x32xf32>
    %502 = arith.addf %501, %500 : vector<2x32xf32>
    %503 = tpu.reciprocal %502 {approx = true} : vector<2x32xf32> -> vector<2x32xf32>
    %504 = arith.mulf %494, %474 : vector<2x32xf32>
    %505 = arith.mulf %487, %496 : vector<2x32xf32>
    %506 = arith.addf %504, %505 : vector<2x32xf32>
    %507 = math.tanh %506 : vector<2x32xf32>
    %508 = arith.mulf %503, %507 : vector<2x32xf32>
    %509 = vector.extract_strided_slice %313 {offsets = [12, 0], sizes = [2, 128], strides = [1, 1]} : vector<16x128xf32> to vector<2x128xf32>
    %510 = arith.truncf %508 : vector<2x32xf32> to vector<2x32xbf16>
    %cst_280 = arith.constant dense<0.000000e+00> : vector<2x128xf32>
    %511 = tpu.matmul %510, %314, %cst_280 {dimension_numbers = #tpu.dot_dimension_numbers<[1], [0], [0], [1], [0, 0, 1, 1], [], []>} : vector<2x32xbf16>, vector<32x128xbf16>, vector<2x128xf32> -> vector<2x128xf32>
    %512 = arith.addf %509, %511 : vector<2x128xf32>
    %513 = vector.extract_strided_slice %512 {offsets = [0, 0], sizes = [2, 32], strides = [1, 1]} : vector<2x128xf32> to vector<2x32xf32>
    %cst_281 = arith.constant 0.000000e+00 : f32
    %514 = vector.broadcast %cst_281 : f32 to vector<2x32xf32>
    %515 = arith.subf %514, %513 : vector<2x32xf32>
    %516 = math.exp %515 : vector<2x32xf32>
    %cst_282 = arith.constant 1.000000e+00 : f32
    %517 = vector.broadcast %cst_282 : f32 to vector<2x32xf32>
    %518 = arith.addf %517, %516 : vector<2x32xf32>
    %519 = tpu.reciprocal %518 {approx = true} : vector<2x32xf32> -> vector<2x32xf32>
    %520 = vector.extract_strided_slice %512 {offsets = [0, 32], sizes = [2, 32], strides = [1, 1]} : vector<2x128xf32> to vector<2x32xf32>
    %cst_283 = arith.constant 0.000000e+00 : f32
    %521 = vector.broadcast %cst_283 : f32 to vector<2x32xf32>
    %522 = arith.subf %521, %520 : vector<2x32xf32>
    %523 = math.exp %522 : vector<2x32xf32>
    %cst_284 = arith.constant 1.000000e+00 : f32
    %524 = vector.broadcast %cst_284 : f32 to vector<2x32xf32>
    %525 = arith.addf %524, %523 : vector<2x32xf32>
    %526 = tpu.reciprocal %525 {approx = true} : vector<2x32xf32> -> vector<2x32xf32>
    %527 = vector.extract_strided_slice %512 {offsets = [0, 64], sizes = [2, 32], strides = [1, 1]} : vector<2x128xf32> to vector<2x32xf32>
    %528 = math.tanh %527 : vector<2x32xf32>
    %529 = vector.extract_strided_slice %512 {offsets = [0, 96], sizes = [2, 32], strides = [1, 1]} : vector<2x128xf32> to vector<2x32xf32>
    %cst_285 = arith.constant 0.000000e+00 : f32
    %530 = vector.broadcast %cst_285 : f32 to vector<2x32xf32>
    %531 = arith.subf %530, %529 : vector<2x32xf32>
    %532 = math.exp %531 : vector<2x32xf32>
    %cst_286 = arith.constant 1.000000e+00 : f32
    %533 = vector.broadcast %cst_286 : f32 to vector<2x32xf32>
    %534 = arith.addf %533, %532 : vector<2x32xf32>
    %535 = tpu.reciprocal %534 {approx = true} : vector<2x32xf32> -> vector<2x32xf32>
    %536 = arith.mulf %526, %506 : vector<2x32xf32>
    %537 = arith.mulf %519, %528 : vector<2x32xf32>
    %538 = arith.addf %536, %537 : vector<2x32xf32>
    %539 = math.tanh %538 : vector<2x32xf32>
    %540 = arith.mulf %535, %539 : vector<2x32xf32>
    %541 = vector.extract_strided_slice %313 {offsets = [14, 0], sizes = [2, 128], strides = [1, 1]} : vector<16x128xf32> to vector<2x128xf32>
    %542 = arith.truncf %540 : vector<2x32xf32> to vector<2x32xbf16>
    %cst_287 = arith.constant dense<0.000000e+00> : vector<2x128xf32>
    %543 = tpu.matmul %542, %314, %cst_287 {dimension_numbers = #tpu.dot_dimension_numbers<[1], [0], [0], [1], [0, 0, 1, 1], [], []>} : vector<2x32xbf16>, vector<32x128xbf16>, vector<2x128xf32> -> vector<2x128xf32>
    %544 = arith.addf %541, %543 : vector<2x128xf32>
    %545 = vector.extract_strided_slice %544 {offsets = [0, 0], sizes = [2, 32], strides = [1, 1]} : vector<2x128xf32> to vector<2x32xf32>
    %cst_288 = arith.constant 0.000000e+00 : f32
    %546 = vector.broadcast %cst_288 : f32 to vector<2x32xf32>
    %547 = arith.subf %546, %545 : vector<2x32xf32>
    %548 = math.exp %547 : vector<2x32xf32>
    %cst_289 = arith.constant 1.000000e+00 : f32
    %549 = vector.broadcast %cst_289 : f32 to vector<2x32xf32>
    %550 = arith.addf %549, %548 : vector<2x32xf32>
    %551 = tpu.reciprocal %550 {approx = true} : vector<2x32xf32> -> vector<2x32xf32>
    %552 = vector.extract_strided_slice %544 {offsets = [0, 32], sizes = [2, 32], strides = [1, 1]} : vector<2x128xf32> to vector<2x32xf32>
    %cst_290 = arith.constant 0.000000e+00 : f32
    %553 = vector.broadcast %cst_290 : f32 to vector<2x32xf32>
    %554 = arith.subf %553, %552 : vector<2x32xf32>
    %555 = math.exp %554 : vector<2x32xf32>
    %cst_291 = arith.constant 1.000000e+00 : f32
    %556 = vector.broadcast %cst_291 : f32 to vector<2x32xf32>
    %557 = arith.addf %556, %555 : vector<2x32xf32>
    %558 = tpu.reciprocal %557 {approx = true} : vector<2x32xf32> -> vector<2x32xf32>
    %559 = vector.extract_strided_slice %544 {offsets = [0, 64], sizes = [2, 32], strides = [1, 1]} : vector<2x128xf32> to vector<2x32xf32>
    %560 = math.tanh %559 : vector<2x32xf32>
    %561 = vector.extract_strided_slice %544 {offsets = [0, 96], sizes = [2, 32], strides = [1, 1]} : vector<2x128xf32> to vector<2x32xf32>
    %cst_292 = arith.constant 0.000000e+00 : f32
    %562 = vector.broadcast %cst_292 : f32 to vector<2x32xf32>
    %563 = arith.subf %562, %561 : vector<2x32xf32>
    %564 = math.exp %563 : vector<2x32xf32>
    %cst_293 = arith.constant 1.000000e+00 : f32
    %565 = vector.broadcast %cst_293 : f32 to vector<2x32xf32>
    %566 = arith.addf %565, %564 : vector<2x32xf32>
    %567 = tpu.reciprocal %566 {approx = true} : vector<2x32xf32> -> vector<2x32xf32>
    %568 = arith.mulf %558, %538 : vector<2x32xf32>
    %569 = arith.mulf %551, %560 : vector<2x32xf32>
    %570 = arith.addf %568, %569 : vector<2x32xf32>
    %571 = math.tanh %570 : vector<2x32xf32>
    %572 = arith.mulf %567, %571 : vector<2x32xf32>
    %573 = arith.truncf %572 : vector<2x32xf32> to vector<2x32xbf16>
    %c0_294 = arith.constant 0 : index
    %c0_295 = arith.constant 0 : index
    %574 = vector.load %arg12[%c0_294, %c0_295] : memref<32x2xbf16, #tpu.memory_space<vmem>>, vector<32x2xbf16>
    %cst_296 = arith.constant dense<0.000000e+00> : vector<2x2xf32>
    %575 = tpu.matmul %573, %574, %cst_296 {dimension_numbers = #tpu.dot_dimension_numbers<[1], [0], [0], [1], [0, 0, 1, 1], [], []>} : vector<2x32xbf16>, vector<32x2xbf16>, vector<2x2xf32> -> vector<2x2xf32>
    %c0_297 = arith.constant 0 : index
    %c0_298 = arith.constant 0 : index
    %576 = vector.load %arg13[%c0_297, %c0_298] : memref<1x2xf32, #tpu.memory_space<vmem>>, vector<1x2xf32>
    %577 = vector.broadcast %576 : vector<1x2xf32> to vector<2x2xf32>
    %578 = arith.addf %575, %577 : vector<2x2xf32>
    %cst_299 = arith.constant dense<0xFF800000> : vector<2xf32>
    %579 = vector.multi_reduction <maximumf>, %578, %cst_299 [1] : vector<2x2xf32> to vector<2xf32>
    %580 = vector.shape_cast %579 : vector<2xf32> to vector<2x1xf32>
    %581 = vector.broadcast %580 : vector<2x1xf32> to vector<2x2xf32>
    %582 = arith.subf %578, %581 : vector<2x2xf32>
    %583 = math.exp %582 : vector<2x2xf32>
    %cst_300 = arith.constant dense<0.000000e+00> : vector<2xf32>
    %584 = vector.multi_reduction <add>, %583, %cst_300 [1] : vector<2x2xf32> to vector<2xf32>
    %585 = vector.shape_cast %584 : vector<2xf32> to vector<2x1xf32>
    %586 = math.log %585 : vector<2x1xf32>
    %587 = arith.addf %580, %586 : vector<2x1xf32>
    %588 = vector.broadcast %587 : vector<2x1xf32> to vector<2x2xf32>
    %589 = arith.subf %578, %588 : vector<2x2xf32>
    %c0_301 = arith.constant 0 : index
    %c0_302 = arith.constant 0 : index
    %590 = vector.load %arg14[%c0_301, %c0_302] : memref<2x2xf32, #tpu.memory_space<vmem>>, vector<2x2xf32>
    tpu.vector_store %arg14[%c0_301, %c0_302], %589 {strides = array<i32>} : memref<2x2xf32, #tpu.memory_space<vmem>>, vector<2x2xf32>,
    return
  }
}

</mosaic_0001>

<llo_original>
// kernel: forward.1
$region0: #{forward.1}
  #allocation0 [shape = 'u32[]', space=smem, size = 0x4, offset = 0x4, fixed_abs, tag = 'smem constant byte address 0x4 - core index']
  #allocation1 [shape = 'u32[144,128]{1,0:T(1,128)}', space=vmem, size = 0x12000, scoped, tag = 'internal scratch']
  #allocation2 [shape = 'bf16[3840,16]{1,0:T(8,128)(2,1)}', space=vmem, size = 0xf0000, scoped, tag = 'scratch operand']
  #allocation3 [shape = 'bf16[3072,16]{1,0:T(8,128)(2,1)}', space=vmem, size = 0xc0000, scoped, tag = 'scratch operand']
  #allocation4 [shape = 'bf16[256,144]{1,0:T(8,128)(2,1)}', space=vmem, size = 0x20000, scoped, tag = 'scratch operand']
  #allocation5 [shape = 'bf16[16,576]{1,0:T(8,128)(2,1)}', space=vmem, size = 0x5000, scoped, tag = 'scratch operand']
  %s0 = inlined_call_operand.vmem [shape: bf16[4384,4], index: 0, kind: input, shape index: {}]
  %s1 = inlined_call_operand.vmem [shape: bf16[36,16], index: 1, kind: input, shape index: {}]
  %s2 = inlined_call_operand.vmem [shape: f32[1,16], index: 2, kind: input, shape index: {}]
  %s3 = inlined_call_operand.vmem [shape: bf16[144,16], index: 3, kind: input, shape index: {}]
  %s4 = inlined_call_operand.vmem [shape: f32[1,16], index: 4, kind: input, shape index: {}]
  %s5 = inlined_call_operand.vmem [shape: bf16[576,200], index: 5, kind: input, shape index: {}]
  %s6 = inlined_call_operand.vmem [shape: f32[1,200], index: 6, kind: input, shape index: {}]
  %s7 = inlined_call_operand.vmem [shape: bf16[200,50], index: 7, kind: input, shape index: {}]
  %s8 = inlined_call_operand.vmem [shape: f32[1,50], index: 8, kind: input, shape index: {}]
  %s9 = inlined_call_operand.vmem [shape: bf16[50,128], index: 9, kind: input, shape index: {}]
  %s10 = inlined_call_operand.vmem [shape: bf16[32,128], index: 10, kind: input, shape index: {}]
  %s11 = inlined_call_operand.vmem [shape: f32[1,128], index: 11, kind: input, shape index: {}]
  %s12 = inlined_call_operand.vmem [shape: bf16[32,2], index: 12, kind: input, shape index: {}]
  %s13 = inlined_call_operand.vmem [shape: f32[1,2], index: 13, kind: input, shape index: {}]
  %s14 = inlined_call_operand.hbm [shape: f32[2,2], index: 14, kind: output, shape index: {}]
  %s15 = sld [smem:[#allocation0]]
  $region80: #{forward.1} parent=0
    _
  %s17 = ssub.s32 1, %s15
  %s18 = scalar_select 0, %s17, %s15
  $region1: #{forward.1} parent=0
    #allocation6 [shape = 'u8[1024]{0}', space=vmem, size = 0x400, scoped, tag = 'output window, operand 0, single buffered']
    #allocation7 [shape = 's32[1]{0}', space=sflag, size = 0x4, scoped, tag = 'scoped memory for forward.1']
    %19 = vsyncpa [#allocation7], 0
    // Predicated region
    $region2: #{forward.1} parent=1 // pred_check
      _
    $region3: #{forward.1} parent=1 // pred_check_branch
      %21 = sbr.rel (0) target = $region5
    $region4: #{forward.1} parent=1 // pred_region
      _
    $region5: #{forward.1} parent=1 // pred_fallthru
      _
    // Predicated region
    $region6: #{forward.1} parent=1 // pred_check
      _
    $region7: #{forward.1} parent=1 // pred_check_branch
      %23 = sbr.rel (0) target = $region9
    $region8: #{forward.1} parent=1 // pred_region
      _
    $region9: #{forward.1} parent=1 // pred_fallthru
      _
    // Predicated region
    $region10: #{forward.1} parent=1 // pred_check
      _
    $region11: #{forward.1} parent=1 // pred_check_branch
      %25 = sbr.rel (0) target = $region13
    $region12: #{forward.1} parent=1 // pred_region
      _
    $region13: #{forward.1} parent=1 // pred_fallthru
      _
    // Predicated region
    $region14: #{forward.1} parent=1 // pred_check
      _
    $region15: #{forward.1} parent=1 // pred_check_branch
      %27 = sbr.rel (0) target = $region17
    $region16: #{forward.1} parent=1 // pred_region
      _
    $region17: #{forward.1} parent=1 // pred_fallthru
      _
    // Predicated region
    $region18: #{forward.1} parent=1 // pred_check
      _
    $region19: #{forward.1} parent=1 // pred_check_branch
      %29 = sbr.rel (0) target = $region21
    $region20: #{forward.1} parent=1 // pred_region
      _
    $region21: #{forward.1} parent=1 // pred_fallthru
      _
    // Predicated region
    $region22: #{forward.1} parent=1 // pred_check
      _
    $region23: #{forward.1} parent=1 // pred_check_branch
      %31 = sbr.rel (0) target = $region25
    $region24: #{forward.1} parent=1 // pred_region
      _
    $region25: #{forward.1} parent=1 // pred_fallthru
      _
    // Predicated region
    $region26: #{forward.1} parent=1 // pred_check
      _
    $region27: #{forward.1} parent=1 // pred_check_branch
      %33 = sbr.rel (0) target = $region29
    $region28: #{forward.1} parent=1 // pred_region
      _
    $region29: #{forward.1} parent=1 // pred_fallthru
      _
    // Predicated region
    $region30: #{forward.1} parent=1 // pred_check
      _
    $region31: #{forward.1} parent=1 // pred_check_branch
      %35 = sbr.rel (0) target = $region33
    $region32: #{forward.1} parent=1 // pred_region
      _
    $region33: #{forward.1} parent=1 // pred_fallthru
      _
    // Predicated region
    $region34: #{forward.1} parent=1 // pred_check
      _
    $region35: #{forward.1} parent=1 // pred_check_branch
      %37 = sbr.rel (0) target = $region37
    $region36: #{forward.1} parent=1 // pred_region
      _
    $region37: #{forward.1} parent=1 // pred_fallthru
      _
    // Predicated region
    $region38: #{forward.1} parent=1 // pred_check
      _
    $region39: #{forward.1} parent=1 // pred_check_branch
      %39 = sbr.rel (0) target = $region41
    $region40: #{forward.1} parent=1 // pred_region
      _
    $region41: #{forward.1} parent=1 // pred_fallthru
      _
    // Predicated region
    $region42: #{forward.1} parent=1 // pred_check
      _
    $region43: #{forward.1} parent=1 // pred_check_branch
      %41 = sbr.rel (0) target = $region45
    $region44: #{forward.1} parent=1 // pred_region
      _
    $region45: #{forward.1} parent=1 // pred_fallthru
      _
    // Predicated region
    $region46: #{forward.1} parent=1 // pred_check
      _
    $region47: #{forward.1} parent=1 // pred_check_branch
      %43 = sbr.rel (0) target = $region49
    $region48: #{forward.1} parent=1 // pred_region
      _
    $region49: #{forward.1} parent=1 // pred_fallthru
      _
    // Predicated region
    $region50: #{forward.1} parent=1 // pred_check
      _
    $region51: #{forward.1} parent=1 // pred_check_branch
      %45 = sbr.rel (0) target = $region53
    $region52: #{forward.1} parent=1 // pred_region
      _
    $region53: #{forward.1} parent=1 // pred_fallthru
      _
    // Predicated region
    $region54: #{forward.1} parent=1 // pred_check
      _
    $region55: #{forward.1} parent=1 // pred_check_branch
      %47 = sbr.rel (0) target = $region57
    $region56: #{forward.1} parent=1 // pred_region
      _
    $region57: #{forward.1} parent=1 // pred_fallthru
      _
    %v49 = vld [vmem:[%s2] sm:$0x1]
    loop: start=0, step=1, limit=15
    $region58: #{forward.1} parent=1 // loop_pre_header
      _
    $region59: #{forward.1} parent=1 // loop_header
      %s51 = sphi 0, %s55
      %p52 = scmp.ge.s32.totalorder %s51, 15
    $region60: #{forward.1} parent=1 // loop_header_branch
      %54 = sbr.rel (%p52) target = $region64
    $region61: #{forward.1} parent=1 // loop_body
      %s56 = smul.u32 %s51, 256
      %s57 = sshra.s32 %s56, 3
      %s58 = sand.u32 %s56, 7
      %s59 = smul.addr %s57, 4
      %s60 = scalar_lea.vmem %s0, %s59
      %v61 = vld [vmem:[%s60] sm:$0xf]
      %v62 = vld [vmem:[%s60 + $0x4] sm:$0xf]
      %v63 = vld [vmem:[%s60 + $0x8] sm:$0xf]
      %v64 = vld [vmem:[%s60 + $0xc] sm:$0xf]
      %v65 = vld [vmem:[%s60 + $0x10] sm:$0xf]
      %v66 = vld [vmem:[%s60 + $0x14] sm:$0xf]
      %v67 = vld [vmem:[%s60 + $0x18] sm:$0xf]
      %v68 = vld [vmem:[%s60 + $0x1c] sm:$0xf]
      %v69 = vld [vmem:[%s60 + $0x20] sm:$0xf]
      %v70 = vld [vmem:[%s60 + $0x24] sm:$0xf]
      %v71 = vld [vmem:[%s60 + $0x28] sm:$0xf]
      %v72 = vld [vmem:[%s60 + $0x2c] sm:$0xf]
      %v73 = vld [vmem:[%s60 + $0x30] sm:$0xf]
      %v74 = vld [vmem:[%s60 + $0x34] sm:$0xf]
      %v75 = vld [vmem:[%s60 + $0x38] sm:$0xf]
      %v76 = vld [vmem:[%s60 + $0x3c] sm:$0xf]
      %v77 = vld [vmem:[%s60 + $0x40] sm:$0xf]
      %v78 = vld [vmem:[%s60 + $0x44] sm:$0xf]
      %v79 = vld [vmem:[%s60 + $0x48] sm:$0xf]
      %v80 = vld [vmem:[%s60 + $0x4c] sm:$0xf]
      %v81 = vld [vmem:[%s60 + $0x50] sm:$0xf]
      %v82 = vld [vmem:[%s60 + $0x54] sm:$0xf]
      %v83 = vld [vmem:[%s60 + $0x58] sm:$0xf]
      %v84 = vld [vmem:[%s60 + $0x5c] sm:$0xf]
      %v85 = vld [vmem:[%s60 + $0x60] sm:$0xf]
      %v86 = vld [vmem:[%s60 + $0x64] sm:$0xf]
      %v87 = vld [vmem:[%s60 + $0x68] sm:$0xf]
      %v88 = vld [vmem:[%s60 + $0x6c] sm:$0xf]
      %v89 = vld [vmem:[%s60 + $0x70] sm:$0xf]
      %v90 = vld [vmem:[%s60 + $0x74] sm:$0xf]
      %v91 = vld [vmem:[%s60 + $0x78] sm:$0xf]
      %v92 = vld [vmem:[%s60 + $0x7c] sm:$0xf]
      %vm93 = vcmask 27648
      %94 = vst.msk [vmem:[#allocation4] sm:$0xf] %vm93, %v61
      %95 = vst.msk [vmem:[#allocation4 + $0x8] sm:$0xf] %vm93, %v62
      %96 = vst.msk [vmem:[#allocation4 + $0x10] sm:$0xf] %vm93, %v63
      %97 = vst.msk [vmem:[#allocation4 + $0x18] sm:$0xf] %vm93, %v64
      %98 = vst.msk [vmem:[#allocation4 + $0x20] sm:$0xf] %vm93, %v65
      %99 = vst.msk [vmem:[#allocation4 + $0x28] sm:$0xf] %vm93, %v66
      %100 = vst.msk [vmem:[#allocation4 + $0x30] sm:$0xf] %vm93, %v67
      %101 = vst.msk [vmem:[#allocation4 + $0x38] sm:$0xf] %vm93, %v68
      %102 = vst.msk [vmem:[#allocation4 + $0x40] sm:$0xf] %vm93, %v69
      %103 = vst.msk [vmem:[#allocation4 + $0x48] sm:$0xf] %vm93, %v70
      %104 = vst.msk [vmem:[#allocation4 + $0x50] sm:$0xf] %vm93, %v71
      %105 = vst.msk [vmem:[#allocation4 + $0x58] sm:$0xf] %vm93, %v72
      %106 = vst.msk [vmem:[#allocation4 + $0x60] sm:$0xf] %vm93, %v73
      %107 = vst.msk [vmem:[#allocation4 + $0x68] sm:$0xf] %vm93, %v74
      %108 = vst.msk [vmem:[#allocation4 + $0x70] sm:$0xf] %vm93, %v75
      %109 = vst.msk [vmem:[#allocation4 + $0x78] sm:$0xf] %vm93, %v76
      %110 = vst.msk [vmem:[#allocation4 + $0x80] sm:$0xf] %vm93, %v77
      %111 = vst.msk [vmem:[#allocation4 + $0x88] sm:$0xf] %vm93, %v78
      %112 = vst.msk [vmem:[#allocation4 + $0x90] sm:$0xf] %vm93, %v79
      %113 = vst.msk [vmem:[#allocation4 + $0x98] sm:$0xf] %vm93, %v80
      %114 = vst.msk [vmem:[#allocation4 + $0xa0] sm:$0xf] %vm93, %v81
      %115 = vst.msk [vmem:[#allocation4 + $0xa8] sm:$0xf] %vm93, %v82
      %116 = vst.msk [vmem:[#allocation4 + $0xb0] sm:$0xf] %vm93, %v83
      %117 = vst.msk [vmem:[#allocation4 + $0xb8] sm:$0xf] %vm93, %v84
      %118 = vst.msk [vmem:[#allocation4 + $0xc0] sm:$0xf] %vm93, %v85
      %119 = vst.msk [vmem:[#allocation4 + $0xc8] sm:$0xf] %vm93, %v86
      %120 = vst.msk [vmem:[#allocation4 + $0xd0] sm:$0xf] %vm93, %v87
      %121 = vst.msk [vmem:[#allocation4 + $0xd8] sm:$0xf] %vm93, %v88
      %122 = vst.msk [vmem:[#allocation4 + $0xe0] sm:$0xf] %vm93, %v89
      %123 = vst.msk [vmem:[#allocation4 + $0xe8] sm:$0xf] %vm93, %v90
      %124 = vst.msk [vmem:[#allocation4 + $0xf0] sm:$0xf] %vm93, %v91
      %125 = vst.msk [vmem:[#allocation4 + $0xf8] sm:$0xf] %vm93, %v92
      %s126 = sadd.s32 %s56, 16
      %s127 = sshra.s32 %s126, 3
      %s128 = sand.u32 %s126, 7
      %s129 = smul.addr %s127, 4
      %s130 = scalar_lea.vmem %s0, %s129
      %v131 = vld [vmem:[%s130] sm:$0xf]
      %v132 = vld [vmem:[%s130 + $0x4] sm:$0xf]
      %v133 = vld [vmem:[%s130 + $0x8] sm:$0xf]
      %v134 = vld [vmem:[%s130 + $0xc] sm:$0xf]
      %v135 = vld [vmem:[%s130 + $0x10] sm:$0xf]
      %v136 = vld [vmem:[%s130 + $0x14] sm:$0xf]
      %v137 = vld [vmem:[%s130 + $0x18] sm:$0xf]
      %v138 = vld [vmem:[%s130 + $0x1c] sm:$0xf]
      %v139 = vld [vmem:[%s130 + $0x20] sm:$0xf]
      %v140 = vld [vmem:[%s130 + $0x24] sm:$0xf]
      %v141 = vld [vmem:[%s130 + $0x28] sm:$0xf]
      %v142 = vld [vmem:[%s130 + $0x2c] sm:$0xf]
      %v143 = vld [vmem:[%s130 + $0x30] sm:$0xf]
      %v144 = vld [vmem:[%s130 + $0x34] sm:$0xf]
      %v145 = vld [vmem:[%s130 + $0x38] sm:$0xf]
      %v146 = vld [vmem:[%s130 + $0x3c] sm:$0xf]
      %v147 = vld [vmem:[%s130 + $0x40] sm:$0xf]
      %v148 = vld [vmem:[%s130 + $0x44] sm:$0xf]
      %v149 = vld [vmem:[%s130 + $0x48] sm:$0xf]
      %v150 = vld [vmem:[%s130 + $0x4c] sm:$0xf]
      %v151 = vld [vmem:[%s130 + $0x50] sm:$0xf]
      %v152 = vld [vmem:[%s130 + $0x54] sm:$0xf]
      %v153 = vld [vmem:[%s130 + $0x58] sm:$0xf]
      %v154 = vld [vmem:[%s130 + $0x5c] sm:$0xf]
      %v155 = vld [vmem:[%s130 + $0x60] sm:$0xf]
      %v156 = vld [vmem:[%s130 + $0x64] sm:$0xf]
      %v157 = vld [vmem:[%s130 + $0x68] sm:$0xf]
      %v158 = vld [vmem:[%s130 + $0x6c] sm:$0xf]
      %v159 = vld [vmem:[%s130 + $0x70] sm:$0xf]
      %v160 = vld [vmem:[%s130 + $0x74] sm:$0xf]
      %v161 = vld [vmem:[%s130 + $0x78] sm:$0xf]
      %v162 = vld [vmem:[%s130 + $0x7c] sm:$0xf]
      %195 = vrot.lane.b32.xlu0 %v131, 4
      %v196 = vpop.permute.xlu0 %195
      %197 = vrot.lane.b32.xlu0 %v132, 4
      %v198 = vpop.permute.xlu0 %197
      %199 = vrot.lane.b32.xlu0 %v133, 4
      %v200 = vpop.permute.xlu0 %199
      %201 = vrot.lane.b32.xlu0 %v134, 4
      %v202 = vpop.permute.xlu0 %201
      %203 = vrot.lane.b32.xlu0 %v135, 4
      %v204 = vpop.permute.xlu0 %203
      %205 = vrot.lane.b32.xlu0 %v136, 4
      %v206 = vpop.permute.xlu0 %205
      %207 = vrot.lane.b32.xlu0 %v137, 4
      %v208 = vpop.permute.xlu0 %207
      %209 = vrot.lane.b32.xlu0 %v138, 4
      %v210 = vpop.permute.xlu0 %209
      %211 = vrot.lane.b32.xlu0 %v139, 4
      %v212 = vpop.permute.xlu0 %211
      %213 = vrot.lane.b32.xlu0 %v140, 4
      %v214 = vpop.permute.xlu0 %213
      %215 = vrot.lane.b32.xlu0 %v141, 4
      %v216 = vpop.permute.xlu0 %215
      %217 = vrot.lane.b32.xlu0 %v142, 4
      %v218 = vpop.permute.xlu0 %217
      %219 = vrot.lane.b32.xlu0 %v143, 4
      %v220 = vpop.permute.xlu0 %219
      %221 = vrot.lane.b32.xlu0 %v144, 4
      %v222 = vpop.permute.xlu0 %221
      %223 = vrot.lane.b32.xlu0 %v145, 4
      %v224 = vpop.permute.xlu0 %223
      %225 = vrot.lane.b32.xlu0 %v146, 4
      %v226 = vpop.permute.xlu0 %225
      %227 = vrot.lane.b32.xlu0 %v147, 4
      %v228 = vpop.permute.xlu0 %227
      %229 = vrot.lane.b32.xlu0 %v148, 4
      %v230 = vpop.permute.xlu0 %229
      %231 = vrot.lane.b32.xlu0 %v149, 4
      %v232 = vpop.permute.xlu0 %231
      %233 = vrot.lane.b32.xlu0 %v150, 4
      %v234 = vpop.permute.xlu0 %233
      %235 = vrot.lane.b32.xlu0 %v151, 4
      %v236 = vpop.permute.xlu0 %235
      %237 = vrot.lane.b32.xlu0 %v152, 4
      %v238 = vpop.permute.xlu0 %237
      %239 = vrot.lane.b32.xlu0 %v153, 4
      %v240 = vpop.permute.xlu0 %239
      %241 = vrot.lane.b32.xlu0 %v154, 4
      %v242 = vpop.permute.xlu0 %241
      %243 = vrot.lane.b32.xlu0 %v155, 4
      %v244 = vpop.permute.xlu0 %243
      %245 = vrot.lane.b32.xlu0 %v156, 4
      %v246 = vpop.permute.xlu0 %245
      %247 = vrot.lane.b32.xlu0 %v157, 4
      %v248 = vpop.permute.xlu0 %247
      %249 = vrot.lane.b32.xlu0 %v158, 4
      %v250 = vpop.permute.xlu0 %249
      %251 = vrot.lane.b32.xlu0 %v159, 4
      %v252 = vpop.permute.xlu0 %251
      %253 = vrot.lane.b32.xlu0 %v160, 4
      %v254 = vpop.permute.xlu0 %253
      %255 = vrot.lane.b32.xlu0 %v161, 4
      %v256 = vpop.permute.xlu0 %255
      %257 = vrot.lane.b32.xlu0 %v162, 4
      %v258 = vpop.permute.xlu0 %257
      %vm291 = vcmask 60448
      %292 = vst.msk [vmem:[#allocation4] sm:$0xf] %vm291, %v196
      %293 = vst.msk [vmem:[#allocation4 + $0x8] sm:$0xf] %vm291, %v198
      %294 = vst.msk [vmem:[#allocation4 + $0x10] sm:$0xf] %vm291, %v200
      %295 = vst.msk [vmem:[#allocation4 + $0x18] sm:$0xf] %vm291, %v202
      %296 = vst.msk [vmem:[#allocation4 + $0x20] sm:$0xf] %vm291, %v204
      %297 = vst.msk [vmem:[#allocation4 + $0x28] sm:$0xf] %vm291, %v206
      %298 = vst.msk [vmem:[#allocation4 + $0x30] sm:$0xf] %vm291, %v208
      %299 = vst.msk [vmem:[#allocation4 + $0x38] sm:$0xf] %vm291, %v210
      %300 = vst.msk [vmem:[#allocation4 + $0x40] sm:$0xf] %vm291, %v212
      %301 = vst.msk [vmem:[#allocation4 + $0x48] sm:$0xf] %vm291, %v214
      %302 = vst.msk [vmem:[#allocation4 + $0x50] sm:$0xf] %vm291, %v216
      %303 = vst.msk [vmem:[#allocation4 + $0x58] sm:$0xf] %vm291, %v218
      %304 = vst.msk [vmem:[#allocation4 + $0x60] sm:$0xf] %vm291, %v220
      %305 = vst.msk [vmem:[#allocation4 + $0x68] sm:$0xf] %vm291, %v222
      %306 = vst.msk [vmem:[#allocation4 + $0x70] sm:$0xf] %vm291, %v224
      %307 = vst.msk [vmem:[#allocation4 + $0x78] sm:$0xf] %vm291, %v226
      %308 = vst.msk [vmem:[#allocation4 + $0x80] sm:$0xf] %vm291, %v228
      %309 = vst.msk [vmem:[#allocation4 + $0x88] sm:$0xf] %vm291, %v230
      %310 = vst.msk [vmem:[#allocation4 + $0x90] sm:$0xf] %vm291, %v232
      %311 = vst.msk [vmem:[#allocation4 + $0x98] sm:$0xf] %vm291, %v234
      %312 = vst.msk [vmem:[#allocation4 + $0xa0] sm:$0xf] %vm291, %v236
      %313 = vst.msk [vmem:[#allocation4 + $0xa8] sm:$0xf] %vm291, %v238
      %314 = vst.msk [vmem:[#allocation4 + $0xb0] sm:$0xf] %vm291, %v240
      %315 = vst.msk [vmem:[#allocation4 + $0xb8] sm:$0xf] %vm291, %v242
      %316 = vst.msk [vmem:[#allocation4 + $0xc0] sm:$0xf] %vm291, %v244
      %317 = vst.msk [vmem:[#allocation4 + $0xc8] sm:$0xf] %vm291, %v246
      %318 = vst.msk [vmem:[#allocation4 + $0xd0] sm:$0xf] %vm291, %v248
      %319 = vst.msk [vmem:[#allocation4 + $0xd8] sm:$0xf] %vm291, %v250
      %320 = vst.msk [vmem:[#allocation4 + $0xe0] sm:$0xf] %vm291, %v252
      %321 = vst.msk [vmem:[#allocation4 + $0xe8] sm:$0xf] %vm291, %v254
      %322 = vst.msk [vmem:[#allocation4 + $0xf0] sm:$0xf] %vm291, %v256
      %323 = vst.msk [vmem:[#allocation4 + $0xf8] sm:$0xf] %vm291, %v258
      %s324 = sadd.s32 %s56, 32
      %s325 = sshra.s32 %s324, 3
      %s326 = sand.u32 %s324, 7
      %s327 = smul.addr %s325, 4
      %s328 = scalar_lea.vmem %s0, %s327
      %v329 = vld [vmem:[%s328] sm:$0xf]
      %v330 = vld [vmem:[%s328 + $0x4] sm:$0xf]
      %v331 = vld [vmem:[%s328 + $0x8] sm:$0xf]
      %v332 = vld [vmem:[%s328 + $0xc] sm:$0xf]
      %v333 = vld [vmem:[%s328 + $0x10] sm:$0xf]
      %v334 = vld [vmem:[%s328 + $0x14] sm:$0xf]
      %v335 = vld [vmem:[%s328 + $0x18] sm:$0xf]
      %v336 = vld [vmem:[%s328 + $0x1c] sm:$0xf]
      %v337 = vld [vmem:[%s328 + $0x20] sm:$0xf]
      %v338 = vld [vmem:[%s328 + $0x24] sm:$0xf]
      %v339 = vld [vmem:[%s328 + $0x28] sm:$0xf]
      %v340 = vld [vmem:[%s328 + $0x2c] sm:$0xf]
      %v341 = vld [vmem:[%s328 + $0x30] sm:$0xf]
      %v342 = vld [vmem:[%s328 + $0x34] sm:$0xf]
      %v343 = vld [vmem:[%s328 + $0x38] sm:$0xf]
      %v344 = vld [vmem:[%s328 + $0x3c] sm:$0xf]
      %v345 = vld [vmem:[%s328 + $0x40] sm:$0xf]
      %v346 = vld [vmem:[%s328 + $0x44] sm:$0xf]
      %v347 = vld [vmem:[%s328 + $0x48] sm:$0xf]
      %v348 = vld [vmem:[%s328 + $0x4c] sm:$0xf]
      %v349 = vld [vmem:[%s328 + $0x50] sm:$0xf]
      %v350 = vld [vmem:[%s328 + $0x54] sm:$0xf]
      %v351 = vld [vmem:[%s328 + $0x58] sm:$0xf]
      %v352 = vld [vmem:[%s328 + $0x5c] sm:$0xf]
      %v353 = vld [vmem:[%s328 + $0x60] sm:$0xf]
      %v354 = vld [vmem:[%s328 + $0x64] sm:$0xf]
      %v355 = vld [vmem:[%s328 + $0x68] sm:$0xf]
      %v356 = vld [vmem:[%s328 + $0x6c] sm:$0xf]
      %v357 = vld [vmem:[%s328 + $0x70] sm:$0xf]
      %v358 = vld [vmem:[%s328 + $0x74] sm:$0xf]
      %v359 = vld [vmem:[%s328 + $0x78] sm:$0xf]
      %v360 = vld [vmem:[%s328 + $0x7c] sm:$0xf]
      %393 = vrot.lane.b32.xlu0 %v329, 8
      %v394 = vpop.permute.xlu0 %393
      %395 = vrot.lane.b32.xlu0 %v330, 8
      %v396 = vpop.permute.xlu0 %395
      %397 = vrot.lane.b32.xlu0 %v331, 8
      %v398 = vpop.permute.xlu0 %397
      %399 = vrot.lane.b32.xlu0 %v332, 8
      %v400 = vpop.permute.xlu0 %399
      %401 = vrot.lane.b32.xlu0 %v333, 8
      %v402 = vpop.permute.xlu0 %401
      %403 = vrot.lane.b32.xlu0 %v334, 8
      %v404 = vpop.permute.xlu0 %403
      %405 = vrot.lane.b32.xlu0 %v335, 8
      %v406 = vpop.permute.xlu0 %405
      %407 = vrot.lane.b32.xlu0 %v336, 8
      %v408 = vpop.permute.xlu0 %407
      %409 = vrot.lane.b32.xlu0 %v337, 8
      %v410 = vpop.permute.xlu0 %409
      %411 = vrot.lane.b32.xlu0 %v338, 8
      %v412 = vpop.permute.xlu0 %411
      %413 = vrot.lane.b32.xlu0 %v339, 8
      %v414 = vpop.permute.xlu0 %413
      %415 = vrot.lane.b32.xlu0 %v340, 8
      %v416 = vpop.permute.xlu0 %415
      %417 = vrot.lane.b32.xlu0 %v341, 8
      %v418 = vpop.permute.xlu0 %417
      %419 = vrot.lane.b32.xlu0 %v342, 8
      %v420 = vpop.permute.xlu0 %419
      %421 = vrot.lane.b32.xlu0 %v343, 8
      %v422 = vpop.permute.xlu0 %421
      %423 = vrot.lane.b32.xlu0 %v344, 8
      %v424 = vpop.permute.xlu0 %423
      %425 = vrot.lane.b32.xlu0 %v345, 8
      %v426 = vpop.permute.xlu0 %425
      %427 = vrot.lane.b32.xlu0 %v346, 8
      %v428 = vpop.permute.xlu0 %427
      %429 = vrot.lane.b32.xlu0 %v347, 8
      %v430 = vpop.permute.xlu0 %429
      %431 = vrot.lane.b32.xlu0 %v348, 8
      %v432 = vpop.permute.xlu0 %431
      %433 = vrot.lane.b32.xlu0 %v349, 8
      %v434 = vpop.permute.xlu0 %433
      %435 = vrot.lane.b32.xlu0 %v350, 8
      %v436 = vpop.permute.xlu0 %435
      %437 = vrot.lane.b32.xlu0 %v351, 8
      %v438 = vpop.permute.xlu0 %437
      %439 = vrot.lane.b32.xlu0 %v352, 8
      %v440 = vpop.permute.xlu0 %439
      %441 = vrot.lane.b32.xlu0 %v353, 8
      %v442 = vpop.permute.xlu0 %441
      %443 = vrot.lane.b32.xlu0 %v354, 8
      %v444 = vpop.permute.xlu0 %443
      %445 = vrot.lane.b32.xlu0 %v355, 8
      %v446 = vpop.permute.xlu0 %445
      %447 = vrot.lane.b32.xlu0 %v356, 8
      %v448 = vpop.permute.xlu0 %447
      %449 = vrot.lane.b32.xlu0 %v357, 8
      %v450 = vpop.permute.xlu0 %449
      %451 = vrot.lane.b32.xlu0 %v358, 8
      %v452 = vpop.permute.xlu0 %451
      %453 = vrot.lane.b32.xlu0 %v359, 8
      %v454 = vpop.permute.xlu0 %453
      %455 = vrot.lane.b32.xlu0 %v360, 8
      %v456 = vpop.permute.xlu0 %455
      %vm489 = vcmask 93248
      %490 = vst.msk [vmem:[#allocation4] sm:$0xf] %vm489, %v394
      %491 = vst.msk [vmem:[#allocation4 + $0x8] sm:$0xf] %vm489, %v396
      %492 = vst.msk [vmem:[#allocation4 + $0x10] sm:$0xf] %vm489, %v398
      %493 = vst.msk [vmem:[#allocation4 + $0x18] sm:$0xf] %vm489, %v400
      %494 = vst.msk [vmem:[#allocation4 + $0x20] sm:$0xf] %vm489, %v402
      %495 = vst.msk [vmem:[#allocation4 + $0x28] sm:$0xf] %vm489, %v404
      %496 = vst.msk [vmem:[#allocation4 + $0x30] sm:$0xf] %vm489, %v406
      %497 = vst.msk [vmem:[#allocation4 + $0x38] sm:$0xf] %vm489, %v408
      %498 = vst.msk [vmem:[#allocation4 + $0x40] sm:$0xf] %vm489, %v410
      %499 = vst.msk [vmem:[#allocation4 + $0x48] sm:$0xf] %vm489, %v412
      %500 = vst.msk [vmem:[#allocation4 + $0x50] sm:$0xf] %vm489, %v414
      %501 = vst.msk [vmem:[#allocation4 + $0x58] sm:$0xf] %vm489, %v416
      %502 = vst.msk [vmem:[#allocation4 + $0x60] sm:$0xf] %vm489, %v418
      %503 = vst.msk [vmem:[#allocation4 + $0x68] sm:$0xf] %vm489, %v420
      %504 = vst.msk [vmem:[#allocation4 + $0x70] sm:$0xf] %vm489, %v422
      %505 = vst.msk [vmem:[#allocation4 + $0x78] sm:$0xf] %vm489, %v424
      %506 = vst.msk [vmem:[#allocation4 + $0x80] sm:$0xf] %vm489, %v426
      %507 = vst.msk [vmem:[#allocation4 + $0x88] sm:$0xf] %vm489, %v428
      %508 = vst.msk [vmem:[#allocation4 + $0x90] sm:$0xf] %vm489, %v430
      %509 = vst.msk [vmem:[#allocation4 + $0x98] sm:$0xf] %vm489, %v432
      %510 = vst.msk [vmem:[#allocation4 + $0xa0] sm:$0xf] %vm489, %v434
      %511 = vst.msk [vmem:[#allocation4 + $0xa8] sm:$0xf] %vm489, %v436
      %512 = vst.msk [vmem:[#allocation4 + $0xb0] sm:$0xf] %vm489, %v438
      %513 = vst.msk [vmem:[#allocation4 + $0xb8] sm:$0xf] %vm489, %v440
      %514 = vst.msk [vmem:[#allocation4 + $0xc0] sm:$0xf] %vm489, %v442
      %515 = vst.msk [vmem:[#allocation4 + $0xc8] sm:$0xf] %vm489, %v444
      %516 = vst.msk [vmem:[#allocation4 + $0xd0] sm:$0xf] %vm489, %v446
      %517 = vst.msk [vmem:[#allocation4 + $0xd8] sm:$0xf] %vm489, %v448
      %518 = vst.msk [vmem:[#allocation4 + $0xe0] sm:$0xf] %vm489, %v450
      %519 = vst.msk [vmem:[#allocation4 + $0xe8] sm:$0xf] %vm489, %v452
      %520 = vst.msk [vmem:[#allocation4 + $0xf0] sm:$0xf] %vm489, %v454
      %521 = vst.msk [vmem:[#allocation4 + $0xf8] sm:$0xf] %vm489, %v456
      %s522 = sadd.s32 %s56, 256
      %s523 = sshra.s32 %s522, 3
      %s524 = sand.u32 %s522, 7
      %s525 = smul.addr %s523, 4
      %s526 = scalar_lea.vmem %s0, %s525
      %v527 = vld [vmem:[%s526] sm:$0xf]
      %v528 = vld [vmem:[%s526 + $0x4] sm:$0xf]
      %v529 = vld [vmem:[%s526 + $0x8] sm:$0xf]
      %v530 = vld [vmem:[%s526 + $0xc] sm:$0xf]
      %v531 = vld [vmem:[%s526 + $0x10] sm:$0xf]
      %v532 = vld [vmem:[%s526 + $0x14] sm:$0xf]
      %v533 = vld [vmem:[%s526 + $0x18] sm:$0xf]
      %v534 = vld [vmem:[%s526 + $0x1c] sm:$0xf]
      %v535 = vld [vmem:[%s526 + $0x20] sm:$0xf]
      %v536 = vld [vmem:[%s526 + $0x24] sm:$0xf]
      %v537 = vld [vmem:[%s526 + $0x28] sm:$0xf]
      %v538 = vld [vmem:[%s526 + $0x2c] sm:$0xf]
      %v539 = vld [vmem:[%s526 + $0x30] sm:$0xf]
      %v540 = vld [vmem:[%s526 + $0x34] sm:$0xf]
      %v541 = vld [vmem:[%s526 + $0x38] sm:$0xf]
      %v542 = vld [vmem:[%s526 + $0x3c] sm:$0xf]
      %v543 = vld [vmem:[%s526 + $0x40] sm:$0xf]
      %v544 = vld [vmem:[%s526 + $0x44] sm:$0xf]
      %v545 = vld [vmem:[%s526 + $0x48] sm:$0xf]
      %v546 = vld [vmem:[%s526 + $0x4c] sm:$0xf]
      %v547 = vld [vmem:[%s526 + $0x50] sm:$0xf]
      %v548 = vld [vmem:[%s526 + $0x54] sm:$0xf]
      %v549 = vld [vmem:[%s526 + $0x58] sm:$0xf]
      %v550 = vld [vmem:[%s526 + $0x5c] sm:$0xf]
      %v551 = vld [vmem:[%s526 + $0x60] sm:$0xf]
      %v552 = vld [vmem:[%s526 + $0x64] sm:$0xf]
      %v553 = vld [vmem:[%s526 + $0x68] sm:$0xf]
      %v554 = vld [vmem:[%s526 + $0x6c] sm:$0xf]
      %v555 = vld [vmem:[%s526 + $0x70] sm:$0xf]
      %v556 = vld [vmem:[%s526 + $0x74] sm:$0xf]
      %v557 = vld [vmem:[%s526 + $0x78] sm:$0xf]
      %v558 = vld [vmem:[%s526 + $0x7c] sm:$0xf]
      %591 = vrot.lane.b32.xlu0 %v527, 12
      %v592 = vpop.permute.xlu0 %591
      %593 = vrot.lane.b32.xlu0 %v528, 12
      %v594 = vpop.permute.xlu0 %593
      %595 = vrot.lane.b32.xlu0 %v529, 12
      %v596 = vpop.permute.xlu0 %595
      %597 = vrot.lane.b32.xlu0 %v530, 12
      %v598 = vpop.permute.xlu0 %597
      %599 = vrot.lane.b32.xlu0 %v531, 12
      %v600 = vpop.permute.xlu0 %599
      %601 = vrot.lane.b32.xlu0 %v532, 12
      %v602 = vpop.permute.xlu0 %601
      %603 = vrot.lane.b32.xlu0 %v533, 12
      %v604 = vpop.permute.xlu0 %603
      %605 = vrot.lane.b32.xlu0 %v534, 12
      %v606 = vpop.permute.xlu0 %605
      %607 = vrot.lane.b32.xlu0 %v535, 12
      %v608 = vpop.permute.xlu0 %607
      %609 = vrot.lane.b32.xlu0 %v536, 12
      %v610 = vpop.permute.xlu0 %609
      %611 = vrot.lane.b32.xlu0 %v537, 12
      %v612 = vpop.permute.xlu0 %611
      %613 = vrot.lane.b32.xlu0 %v538, 12
      %v614 = vpop.permute.xlu0 %613
      %615 = vrot.lane.b32.xlu0 %v539, 12
      %v616 = vpop.permute.xlu0 %615
      %617 = vrot.lane.b32.xlu0 %v540, 12
      %v618 = vpop.permute.xlu0 %617
      %619 = vrot.lane.b32.xlu0 %v541, 12
      %v620 = vpop.permute.xlu0 %619
      %621 = vrot.lane.b32.xlu0 %v542, 12
      %v622 = vpop.permute.xlu0 %621
      %623 = vrot.lane.b32.xlu0 %v543, 12
      %v624 = vpop.permute.xlu0 %623
      %625 = vrot.lane.b32.xlu0 %v544, 12
      %v626 = vpop.permute.xlu0 %625
      %627 = vrot.lane.b32.xlu0 %v545, 12
      %v628 = vpop.permute.xlu0 %627
      %629 = vrot.lane.b32.xlu0 %v546, 12
      %v630 = vpop.permute.xlu0 %629
      %631 = vrot.lane.b32.xlu0 %v547, 12
      %v632 = vpop.permute.xlu0 %631
      %633 = vrot.lane.b32.xlu0 %v548, 12
      %v634 = vpop.permute.xlu0 %633
      %635 = vrot.lane.b32.xlu0 %v549, 12
      %v636 = vpop.permute.xlu0 %635
      %637 = vrot.lane.b32.xlu0 %v550, 12
      %v638 = vpop.permute.xlu0 %637
      %639 = vrot.lane.b32.xlu0 %v551, 12
      %v640 = vpop.permute.xlu0 %639
      %641 = vrot.lane.b32.xlu0 %v552, 12
      %v642 = vpop.permute.xlu0 %641
      %643 = vrot.lane.b32.xlu0 %v553, 12
      %v644 = vpop.permute.xlu0 %643
      %645 = vrot.lane.b32.xlu0 %v554, 12
      %v646 = vpop.permute.xlu0 %645
      %647 = vrot.lane.b32.xlu0 %v555, 12
      %v648 = vpop.permute.xlu0 %647
      %649 = vrot.lane.b32.xlu0 %v556, 12
      %v650 = vpop.permute.xlu0 %649
      %651 = vrot.lane.b32.xlu0 %v557, 12
      %v652 = vpop.permute.xlu0 %651
      %653 = vrot.lane.b32.xlu0 %v558, 12
      %v654 = vpop.permute.xlu0 %653
      %vm687 = vcmask 126048
      %688 = vst.msk [vmem:[#allocation4] sm:$0xf] %vm687, %v592
      %689 = vst.msk [vmem:[#allocation4 + $0x8] sm:$0xf] %vm687, %v594
      %690 = vst.msk [vmem:[#allocation4 + $0x10] sm:$0xf] %vm687, %v596
      %691 = vst.msk [vmem:[#allocation4 + $0x18] sm:$0xf] %vm687, %v598
      %692 = vst.msk [vmem:[#allocation4 + $0x20] sm:$0xf] %vm687, %v600
      %693 = vst.msk [vmem:[#allocation4 + $0x28] sm:$0xf] %vm687, %v602
      %694 = vst.msk [vmem:[#allocation4 + $0x30] sm:$0xf] %vm687, %v604
      %695 = vst.msk [vmem:[#allocation4 + $0x38] sm:$0xf] %vm687, %v606
      %696 = vst.msk [vmem:[#allocation4 + $0x40] sm:$0xf] %vm687, %v608
      %697 = vst.msk [vmem:[#allocation4 + $0x48] sm:$0xf] %vm687, %v610
      %698 = vst.msk [vmem:[#allocation4 + $0x50] sm:$0xf] %vm687, %v612
      %699 = vst.msk [vmem:[#allocation4 + $0x58] sm:$0xf] %vm687, %v614
      %700 = vst.msk [vmem:[#allocation4 + $0x60] sm:$0xf] %vm687, %v616
      %701 = vst.msk [vmem:[#allocation4 + $0x68] sm:$0xf] %vm687, %v618
      %702 = vst.msk [vmem:[#allocation4 + $0x70] sm:$0xf] %vm687, %v620
      %703 = vst.msk [vmem:[#allocation4 + $0x78] sm:$0xf] %vm687, %v622
      %704 = vst.msk [vmem:[#allocation4 + $0x80] sm:$0xf] %vm687, %v624
      %705 = vst.msk [vmem:[#allocation4 + $0x88] sm:$0xf] %vm687, %v626
      %706 = vst.msk [vmem:[#allocation4 + $0x90] sm:$0xf] %vm687, %v628
      %707 = vst.msk [vmem:[#allocation4 + $0x98] sm:$0xf] %vm687, %v630
      %708 = vst.msk [vmem:[#allocation4 + $0xa0] sm:$0xf] %vm687, %v632
      %709 = vst.msk [vmem:[#allocation4 + $0xa8] sm:$0xf] %vm687, %v634
      %710 = vst.msk [vmem:[#allocation4 + $0xb0] sm:$0xf] %vm687, %v636
      %711 = vst.msk [vmem:[#allocation4 + $0xb8] sm:$0xf] %vm687, %v638
      %712 = vst.msk [vmem:[#allocation4 + $0xc0] sm:$0xf] %vm687, %v640
      %713 = vst.msk [vmem:[#allocation4 + $0xc8] sm:$0xf] %vm687, %v642
      %714 = vst.msk [vmem:[#allocation4 + $0xd0] sm:$0xf] %vm687, %v644
      %715 = vst.msk [vmem:[#allocation4 + $0xd8] sm:$0xf] %vm687, %v646
      %716 = vst.msk [vmem:[#allocation4 + $0xe0] sm:$0xf] %vm687, %v648
      %717 = vst.msk [vmem:[#allocation4 + $0xe8] sm:$0xf] %vm687, %v650
      %718 = vst.msk [vmem:[#allocation4 + $0xf0] sm:$0xf] %vm687, %v652
      %719 = vst.msk [vmem:[#allocation4 + $0xf8] sm:$0xf] %vm687, %v654
      %s720 = sadd.s32 %s56, 272
      %s721 = sshra.s32 %s720, 3
      %s722 = sand.u32 %s720, 7
      %s723 = smul.addr %s721, 4
      %s724 = scalar_lea.vmem %s0, %s723
      %v725 = vld [vmem:[%s724] sm:$0xf]
      %v726 = vld [vmem:[%s724 + $0x4] sm:$0xf]
      %v727 = vld [vmem:[%s724 + $0x8] sm:$0xf]
      %v728 = vld [vmem:[%s724 + $0xc] sm:$0xf]
      %v729 = vld [vmem:[%s724 + $0x10] sm:$0xf]
      %v730 = vld [vmem:[%s724 + $0x14] sm:$0xf]
      %v731 = vld [vmem:[%s724 + $0x18] sm:$0xf]
      %v732 = vld [vmem:[%s724 + $0x1c] sm:$0xf]
      %v733 = vld [vmem:[%s724 + $0x20] sm:$0xf]
      %v734 = vld [vmem:[%s724 + $0x24] sm:$0xf]
      %v735 = vld [vmem:[%s724 + $0x28] sm:$0xf]
      %v736 = vld [vmem:[%s724 + $0x2c] sm:$0xf]
      %v737 = vld [vmem:[%s724 + $0x30] sm:$0xf]
      %v738 = vld [vmem:[%s724 + $0x34] sm:$0xf]
      %v739 = vld [vmem:[%s724 + $0x38] sm:$0xf]
      %v740 = vld [vmem:[%s724 + $0x3c] sm:$0xf]
      %v741 = vld [vmem:[%s724 + $0x40] sm:$0xf]
      %v742 = vld [vmem:[%s724 + $0x44] sm:$0xf]
      %v743 = vld [vmem:[%s724 + $0x48] sm:$0xf]
      %v744 = vld [vmem:[%s724 + $0x4c] sm:$0xf]
      %v745 = vld [vmem:[%s724 + $0x50] sm:$0xf]
      %v746 = vld [vmem:[%s724 + $0x54] sm:$0xf]
      %v747 = vld [vmem:[%s724 + $0x58] sm:$0xf]
      %v748 = vld [vmem:[%s724 + $0x5c] sm:$0xf]
      %v749 = vld [vmem:[%s724 + $0x60] sm:$0xf]
      %v750 = vld [vmem:[%s724 + $0x64] sm:$0xf]
      %v751 = vld [vmem:[%s724 + $0x68] sm:$0xf]
      %v752 = vld [vmem:[%s724 + $0x6c] sm:$0xf]
      %v753 = vld [vmem:[%s724 + $0x70] sm:$0xf]
      %v754 = vld [vmem:[%s724 + $0x74] sm:$0xf]
      %v755 = vld [vmem:[%s724 + $0x78] sm:$0xf]
      %v756 = vld [vmem:[%s724 + $0x7c] sm:$0xf]
      %789 = vrot.lane.b32.xlu0 %v725, 16
      %v790 = vpop.permute.xlu0 %789
      %791 = vrot.lane.b32.xlu0 %v726, 16
      %v792 = vpop.permute.xlu0 %791
      %793 = vrot.lane.b32.xlu0 %v727, 16
      %v794 = vpop.permute.xlu0 %793
      %795 = vrot.lane.b32.xlu0 %v728, 16
      %v796 = vpop.permute.xlu0 %795
      %797 = vrot.lane.b32.xlu0 %v729, 16
      %v798 = vpop.permute.xlu0 %797
      %799 = vrot.lane.b32.xlu0 %v730, 16
      %v800 = vpop.permute.xlu0 %799
      %801 = vrot.lane.b32.xlu0 %v731, 16
      %v802 = vpop.permute.xlu0 %801
      %803 = vrot.lane.b32.xlu0 %v732, 16
      %v804 = vpop.permute.xlu0 %803
      %805 = vrot.lane.b32.xlu0 %v733, 16
      %v806 = vpop.permute.xlu0 %805
      %807 = vrot.lane.b32.xlu0 %v734, 16
      %v808 = vpop.permute.xlu0 %807
      %809 = vrot.lane.b32.xlu0 %v735, 16
      %v810 = vpop.permute.xlu0 %809
      %811 = vrot.lane.b32.xlu0 %v736, 16
      %v812 = vpop.permute.xlu0 %811
      %813 = vrot.lane.b32.xlu0 %v737, 16
      %v814 = vpop.permute.xlu0 %813
      %815 = vrot.lane.b32.xlu0 %v738, 16
      %v816 = vpop.permute.xlu0 %815
      %817 = vrot.lane.b32.xlu0 %v739, 16
      %v818 = vpop.permute.xlu0 %817
      %819 = vrot.lane.b32.xlu0 %v740, 16
      %v820 = vpop.permute.xlu0 %819
      %821 = vrot.lane.b32.xlu0 %v741, 16
      %v822 = vpop.permute.xlu0 %821
      %823 = vrot.lane.b32.xlu0 %v742, 16
      %v824 = vpop.permute.xlu0 %823
      %825 = vrot.lane.b32.xlu0 %v743, 16
      %v826 = vpop.permute.xlu0 %825
      %827 = vrot.lane.b32.xlu0 %v744, 16
      %v828 = vpop.permute.xlu0 %827
      %829 = vrot.lane.b32.xlu0 %v745, 16
      %v830 = vpop.permute.xlu0 %829
      %831 = vrot.lane.b32.xlu0 %v746, 16
      %v832 = vpop.permute.xlu0 %831
      %833 = vrot.lane.b32.xlu0 %v747, 16
      %v834 = vpop.permute.xlu0 %833
      %835 = vrot.lane.b32.xlu0 %v748, 16
      %v836 = vpop.permute.xlu0 %835
      %837 = vrot.lane.b32.xlu0 %v749, 16
      %v838 = vpop.permute.xlu0 %837
      %839 = vrot.lane.b32.xlu0 %v750, 16
      %v840 = vpop.permute.xlu0 %839
      %841 = vrot.lane.b32.xlu0 %v751, 16
      %v842 = vpop.permute.xlu0 %841
      %843 = vrot.lane.b32.xlu0 %v752, 16
      %v844 = vpop.permute.xlu0 %843
      %845 = vrot.lane.b32.xlu0 %v753, 16
      %v846 = vpop.permute.xlu0 %845
      %847 = vrot.lane.b32.xlu0 %v754, 16
      %v848 = vpop.permute.xlu0 %847
      %849 = vrot.lane.b32.xlu0 %v755, 16
      %v850 = vpop.permute.xlu0 %849
      %851 = vrot.lane.b32.xlu0 %v756, 16
      %v852 = vpop.permute.xlu0 %851
      %vm885 = vcmask 158848
      %886 = vst.msk [vmem:[#allocation4] sm:$0xf] %vm885, %v790
      %887 = vst.msk [vmem:[#allocation4 + $0x8] sm:$0xf] %vm885, %v792
      %888 = vst.msk [vmem:[#allocation4 + $0x10] sm:$0xf] %vm885, %v794
      %889 = vst.msk [vmem:[#allocation4 + $0x18] sm:$0xf] %vm885, %v796
      %890 = vst.msk [vmem:[#allocation4 + $0x20] sm:$0xf] %vm885, %v798
      %891 = vst.msk [vmem:[#allocation4 + $0x28] sm:$0xf] %vm885, %v800
      %892 = vst.msk [vmem:[#allocation4 + $0x30] sm:$0xf] %vm885, %v802
      %893 = vst.msk [vmem:[#allocation4 + $0x38] sm:$0xf] %vm885, %v804
      %894 = vst.msk [vmem:[#allocation4 + $0x40] sm:$0xf] %vm885, %v806
      %895 = vst.msk [vmem:[#allocation4 + $0x48] sm:$0xf] %vm885, %v808
      %896 = vst.msk [vmem:[#allocation4 + $0x50] sm:$0xf] %vm885, %v810
      %897 = vst.msk [vmem:[#allocation4 + $0x58] sm:$0xf] %vm885, %v812
      %898 = vst.msk [vmem:[#allocation4 + $0x60] sm:$0xf] %vm885, %v814
      %899 = vst.msk [vmem:[#allocation4 + $0x68] sm:$0xf] %vm885, %v816
      %900 = vst.msk [vmem:[#allocation4 + $0x70] sm:$0xf] %vm885, %v818
      %901 = vst.msk [vmem:[#allocation4 + $0x78] sm:$0xf] %vm885, %v820
      %902 = vst.msk [vmem:[#allocation4 + $0x80] sm:$0xf] %vm885, %v822
      %903 = vst.msk [vmem:[#allocation4 + $0x88] sm:$0xf] %vm885, %v824
      %904 = vst.msk [vmem:[#allocation4 + $0x90] sm:$0xf] %vm885, %v826
      %905 = vst.msk [vmem:[#allocation4 + $0x98] sm:$0xf] %vm885, %v828
      %906 = vst.msk [vmem:[#allocation4 + $0xa0] sm:$0xf] %vm885, %v830
      %907 = vst.msk [vmem:[#allocation4 + $0xa8] sm:$0xf] %vm885, %v832
      %908 = vst.msk [vmem:[#allocation4 + $0xb0] sm:$0xf] %vm885, %v834
      %909 = vst.msk [vmem:[#allocation4 + $0xb8] sm:$0xf] %vm885, %v836
      %910 = vst.msk [vmem:[#allocation4 + $0xc0] sm:$0xf] %vm885, %v838
      %911 = vst.msk [vmem:[#allocation4 + $0xc8] sm:$0xf] %vm885, %v840
      %912 = vst.msk [vmem:[#allocation4 + $0xd0] sm:$0xf] %vm885, %v842
      %913 = vst.msk [vmem:[#allocation4 + $0xd8] sm:$0xf] %vm885, %v844
      %914 = vst.msk [vmem:[#allocation4 + $0xe0] sm:$0xf] %vm885, %v846
      %915 = vst.msk [vmem:[#allocation4 + $0xe8] sm:$0xf] %vm885, %v848
      %916 = vst.msk [vmem:[#allocation4 + $0xf0] sm:$0xf] %vm885, %v850
      %917 = vst.msk [vmem:[#allocation4 + $0xf8] sm:$0xf] %vm885, %v852
      %s918 = sadd.s32 %s56, 288
      %s919 = sshra.s32 %s918, 3
      %s920 = sand.u32 %s918, 7
      %s921 = smul.addr %s919, 4
      %s922 = scalar_lea.vmem %s0, %s921
      %v923 = vld [vmem:[%s922] sm:$0xf]
      %v924 = vld [vmem:[%s922 + $0x4] sm:$0xf]
      %v925 = vld [vmem:[%s922 + $0x8] sm:$0xf]
      %v926 = vld [vmem:[%s922 + $0xc] sm:$0xf]
      %v927 = vld [vmem:[%s922 + $0x10] sm:$0xf]
      %v928 = vld [vmem:[%s922 + $0x14] sm:$0xf]
      %v929 = vld [vmem:[%s922 + $0x18] sm:$0xf]
      %v930 = vld [vmem:[%s922 + $0x1c] sm:$0xf]
      %v931 = vld [vmem:[%s922 + $0x20] sm:$0xf]
      %v932 = vld [vmem:[%s922 + $0x24] sm:$0xf]
      %v933 = vld [vmem:[%s922 + $0x28] sm:$0xf]
      %v934 = vld [vmem:[%s922 + $0x2c] sm:$0xf]
      %v935 = vld [vmem:[%s922 + $0x30] sm:$0xf]
      %v936 = vld [vmem:[%s922 + $0x34] sm:$0xf]
      %v937 = vld [vmem:[%s922 + $0x38] sm:$0xf]
      %v938 = vld [vmem:[%s922 + $0x3c] sm:$0xf]
      %v939 = vld [vmem:[%s922 + $0x40] sm:$0xf]
      %v940 = vld [vmem:[%s922 + $0x44] sm:$0xf]
      %v941 = vld [vmem:[%s922 + $0x48] sm:$0xf]
      %v942 = vld [vmem:[%s922 + $0x4c] sm:$0xf]
      %v943 = vld [vmem:[%s922 + $0x50] sm:$0xf]
      %v944 = vld [vmem:[%s922 + $0x54] sm:$0xf]
      %v945 = vld [vmem:[%s922 + $0x58] sm:$0xf]
      %v946 = vld [vmem:[%s922 + $0x5c] sm:$0xf]
      %v947 = vld [vmem:[%s922 + $0x60] sm:$0xf]
      %v948 = vld [vmem:[%s922 + $0x64] sm:$0xf]
      %v949 = vld [vmem:[%s922 + $0x68] sm:$0xf]
      %v950 = vld [vmem:[%s922 + $0x6c] sm:$0xf]
      %v951 = vld [vmem:[%s922 + $0x70] sm:$0xf]
      %v952 = vld [vmem:[%s922 + $0x74] sm:$0xf]
      %v953 = vld [vmem:[%s922 + $0x78] sm:$0xf]
      %v954 = vld [vmem:[%s922 + $0x7c] sm:$0xf]
      %987 = vrot.lane.b32.xlu0 %v923, 20
      %v988 = vpop.permute.xlu0 %987
      %989 = vrot.lane.b32.xlu0 %v924, 20
      %v990 = vpop.permute.xlu0 %989
      %991 = vrot.lane.b32.xlu0 %v925, 20
      %v992 = vpop.permute.xlu0 %991
      %993 = vrot.lane.b32.xlu0 %v926, 20
      %v994 = vpop.permute.xlu0 %993
      %995 = vrot.lane.b32.xlu0 %v927, 20
      %v996 = vpop.permute.xlu0 %995
      %997 = vrot.lane.b32.xlu0 %v928, 20
      %v998 = vpop.permute.xlu0 %997
      %999 = vrot.lane.b32.xlu0 %v929, 20
      %v1000 = vpop.permute.xlu0 %999
      %1001 = vrot.lane.b32.xlu0 %v930, 20
      %v1002 = vpop.permute.xlu0 %1001
      %1003 = vrot.lane.b32.xlu0 %v931, 20
      %v1004 = vpop.permute.xlu0 %1003
      %1005 = vrot.lane.b32.xlu0 %v932, 20
      %v1006 = vpop.permute.xlu0 %1005
      %1007 = vrot.lane.b32.xlu0 %v933, 20
      %v1008 = vpop.permute.xlu0 %1007
      %1009 = vrot.lane.b32.xlu0 %v934, 20
      %v1010 = vpop.permute.xlu0 %1009
      %1011 = vrot.lane.b32.xlu0 %v935, 20
      %v1012 = vpop.permute.xlu0 %1011
      %1013 = vrot.lane.b32.xlu0 %v936, 20
      %v1014 = vpop.permute.xlu0 %1013
      %1015 = vrot.lane.b32.xlu0 %v937, 20
      %v1016 = vpop.permute.xlu0 %1015
      %1017 = vrot.lane.b32.xlu0 %v938, 20
      %v1018 = vpop.permute.xlu0 %1017
      %1019 = vrot.lane.b32.xlu0 %v939, 20
      %v1020 = vpop.permute.xlu0 %1019
      %1021 = vrot.lane.b32.xlu0 %v940, 20
      %v1022 = vpop.permute.xlu0 %1021
      %1023 = vrot.lane.b32.xlu0 %v941, 20
      %v1024 = vpop.permute.xlu0 %1023
      %1025 = vrot.lane.b32.xlu0 %v942, 20
      %v1026 = vpop.permute.xlu0 %1025
      %1027 = vrot.lane.b32.xlu0 %v943, 20
      %v1028 = vpop.permute.xlu0 %1027
      %1029 = vrot.lane.b32.xlu0 %v944, 20
      %v1030 = vpop.permute.xlu0 %1029
      %1031 = vrot.lane.b32.xlu0 %v945, 20
      %v1032 = vpop.permute.xlu0 %1031
      %1033 = vrot.lane.b32.xlu0 %v946, 20
      %v1034 = vpop.permute.xlu0 %1033
      %1035 = vrot.lane.b32.xlu0 %v947, 20
      %v1036 = vpop.permute.xlu0 %1035
      %1037 = vrot.lane.b32.xlu0 %v948, 20
      %v1038 = vpop.permute.xlu0 %1037
      %1039 = vrot.lane.b32.xlu0 %v949, 20
      %v1040 = vpop.permute.xlu0 %1039
      %1041 = vrot.lane.b32.xlu0 %v950, 20
      %v1042 = vpop.permute.xlu0 %1041
      %1043 = vrot.lane.b32.xlu0 %v951, 20
      %v1044 = vpop.permute.xlu0 %1043
      %1045 = vrot.lane.b32.xlu0 %v952, 20
      %v1046 = vpop.permute.xlu0 %1045
      %1047 = vrot.lane.b32.xlu0 %v953, 20
      %v1048 = vpop.permute.xlu0 %1047
      %1049 = vrot.lane.b32.xlu0 %v954, 20
      %v1050 = vpop.permute.xlu0 %1049
      %vm1083 = vcmask 191648
      %1084 = vst.msk [vmem:[#allocation4] sm:$0xf] %vm1083, %v988
      %1085 = vst.msk [vmem:[#allocation4 + $0x8] sm:$0xf] %vm1083, %v990
      %1086 = vst.msk [vmem:[#allocation4 + $0x10] sm:$0xf] %vm1083, %v992
      %1087 = vst.msk [vmem:[#allocation4 + $0x18] sm:$0xf] %vm1083, %v994
      %1088 = vst.msk [vmem:[#allocation4 + $0x20] sm:$0xf] %vm1083, %v996
      %1089 = vst.msk [vmem:[#allocation4 + $0x28] sm:$0xf] %vm1083, %v998
      %1090 = vst.msk [vmem:[#allocation4 + $0x30] sm:$0xf] %vm1083, %v1000
      %1091 = vst.msk [vmem:[#allocation4 + $0x38] sm:$0xf] %vm1083, %v1002
      %1092 = vst.msk [vmem:[#allocation4 + $0x40] sm:$0xf] %vm1083, %v1004
      %1093 = vst.msk [vmem:[#allocation4 + $0x48] sm:$0xf] %vm1083, %v1006
      %1094 = vst.msk [vmem:[#allocation4 + $0x50] sm:$0xf] %vm1083, %v1008
      %1095 = vst.msk [vmem:[#allocation4 + $0x58] sm:$0xf] %vm1083, %v1010
      %1096 = vst.msk [vmem:[#allocation4 + $0x60] sm:$0xf] %vm1083, %v1012
      %1097 = vst.msk [vmem:[#allocation4 + $0x68] sm:$0xf] %vm1083, %v1014
      %1098 = vst.msk [vmem:[#allocation4 + $0x70] sm:$0xf] %vm1083, %v1016
      %1099 = vst.msk [vmem:[#allocation4 + $0x78] sm:$0xf] %vm1083, %v1018
      %1100 = vst.msk [vmem:[#allocation4 + $0x80] sm:$0xf] %vm1083, %v1020
      %1101 = vst.msk [vmem:[#allocation4 + $0x88] sm:$0xf] %vm1083, %v1022
      %1102 = vst.msk [vmem:[#allocation4 + $0x90] sm:$0xf] %vm1083, %v1024
      %1103 = vst.msk [vmem:[#allocation4 + $0x98] sm:$0xf] %vm1083, %v1026
      %1104 = vst.msk [vmem:[#allocation4 + $0xa0] sm:$0xf] %vm1083, %v1028
      %1105 = vst.msk [vmem:[#allocation4 + $0xa8] sm:$0xf] %vm1083, %v1030
      %1106 = vst.msk [vmem:[#allocation4 + $0xb0] sm:$0xf] %vm1083, %v1032
      %1107 = vst.msk [vmem:[#allocation4 + $0xb8] sm:$0xf] %vm1083, %v1034
      %1108 = vst.msk [vmem:[#allocation4 + $0xc0] sm:$0xf] %vm1083, %v1036
      %1109 = vst.msk [vmem:[#allocation4 + $0xc8] sm:$0xf] %vm1083, %v1038
      %1110 = vst.msk [vmem:[#allocation4 + $0xd0] sm:$0xf] %vm1083, %v1040
      %1111 = vst.msk [vmem:[#allocation4 + $0xd8] sm:$0xf] %vm1083, %v1042
      %1112 = vst.msk [vmem:[#allocation4 + $0xe0] sm:$0xf] %vm1083, %v1044
      %1113 = vst.msk [vmem:[#allocation4 + $0xe8] sm:$0xf] %vm1083, %v1046
      %1114 = vst.msk [vmem:[#allocation4 + $0xf0] sm:$0xf] %vm1083, %v1048
      %1115 = vst.msk [vmem:[#allocation4 + $0xf8] sm:$0xf] %vm1083, %v1050
      %s1116 = sadd.s32 %s56, 512
      %s1117 = sshra.s32 %s1116, 3
      %s1118 = sand.u32 %s1116, 7
      %s1119 = smul.addr %s1117, 4
      %s1120 = scalar_lea.vmem %s0, %s1119
      %v1121 = vld [vmem:[%s1120] sm:$0xf]
      %v1122 = vld [vmem:[%s1120 + $0x4] sm:$0xf]
      %v1123 = vld [vmem:[%s1120 + $0x8] sm:$0xf]
      %v1124 = vld [vmem:[%s1120 + $0xc] sm:$0xf]
      %v1125 = vld [vmem:[%s1120 + $0x10] sm:$0xf]
      %v1126 = vld [vmem:[%s1120 + $0x14] sm:$0xf]
      %v1127 = vld [vmem:[%s1120 + $0x18] sm:$0xf]
      %v1128 = vld [vmem:[%s1120 + $0x1c] sm:$0xf]
      %v1129 = vld [vmem:[%s1120 + $0x20] sm:$0xf]
      %v1130 = vld [vmem:[%s1120 + $0x24] sm:$0xf]
      %v1131 = vld [vmem:[%s1120 + $0x28] sm:$0xf]
      %v1132 = vld [vmem:[%s1120 + $0x2c] sm:$0xf]
      %v1133 = vld [vmem:[%s1120 + $0x30] sm:$0xf]
      %v1134 = vld [vmem:[%s1120 + $0x34] sm:$0xf]
      %v1135 = vld [vmem:[%s1120 + $0x38] sm:$0xf]
      %v1136 = vld [vmem:[%s1120 + $0x3c] sm:$0xf]
      %v1137 = vld [vmem:[%s1120 + $0x40] sm:$0xf]
      %v1138 = vld [vmem:[%s1120 + $0x44] sm:$0xf]
      %v1139 = vld [vmem:[%s1120 + $0x48] sm:$0xf]
      %v1140 = vld [vmem:[%s1120 + $0x4c] sm:$0xf]
      %v1141 = vld [vmem:[%s1120 + $0x50] sm:$0xf]
      %v1142 = vld [vmem:[%s1120 + $0x54] sm:$0xf]
      %v1143 = vld [vmem:[%s1120 + $0x58] sm:$0xf]
      %v1144 = vld [vmem:[%s1120 + $0x5c] sm:$0xf]
      %v1145 = vld [vmem:[%s1120 + $0x60] sm:$0xf]
      %v1146 = vld [vmem:[%s1120 + $0x64] sm:$0xf]
      %v1147 = vld [vmem:[%s1120 + $0x68] sm:$0xf]
      %v1148 = vld [vmem:[%s1120 + $0x6c] sm:$0xf]
      %v1149 = vld [vmem:[%s1120 + $0x70] sm:$0xf]
      %v1150 = vld [vmem:[%s1120 + $0x74] sm:$0xf]
      %v1151 = vld [vmem:[%s1120 + $0x78] sm:$0xf]
      %v1152 = vld [vmem:[%s1120 + $0x7c] sm:$0xf]
      %1185 = vrot.lane.b32.xlu0 %v1121, 24
      %v1186 = vpop.permute.xlu0 %1185
      %1187 = vrot.lane.b32.xlu0 %v1122, 24
      %v1188 = vpop.permute.xlu0 %1187
      %1189 = vrot.lane.b32.xlu0 %v1123, 24
      %v1190 = vpop.permute.xlu0 %1189
      %1191 = vrot.lane.b32.xlu0 %v1124, 24
      %v1192 = vpop.permute.xlu0 %1191
      %1193 = vrot.lane.b32.xlu0 %v1125, 24
      %v1194 = vpop.permute.xlu0 %1193
      %1195 = vrot.lane.b32.xlu0 %v1126, 24
      %v1196 = vpop.permute.xlu0 %1195
      %1197 = vrot.lane.b32.xlu0 %v1127, 24
      %v1198 = vpop.permute.xlu0 %1197
      %1199 = vrot.lane.b32.xlu0 %v1128, 24
      %v1200 = vpop.permute.xlu0 %1199
      %1201 = vrot.lane.b32.xlu0 %v1129, 24
      %v1202 = vpop.permute.xlu0 %1201
      %1203 = vrot.lane.b32.xlu0 %v1130, 24
      %v1204 = vpop.permute.xlu0 %1203
      %1205 = vrot.lane.b32.xlu0 %v1131, 24
      %v1206 = vpop.permute.xlu0 %1205
      %1207 = vrot.lane.b32.xlu0 %v1132, 24
      %v1208 = vpop.permute.xlu0 %1207
      %1209 = vrot.lane.b32.xlu0 %v1133, 24
      %v1210 = vpop.permute.xlu0 %1209
      %1211 = vrot.lane.b32.xlu0 %v1134, 24
      %v1212 = vpop.permute.xlu0 %1211
      %1213 = vrot.lane.b32.xlu0 %v1135, 24
      %v1214 = vpop.permute.xlu0 %1213
      %1215 = vrot.lane.b32.xlu0 %v1136, 24
      %v1216 = vpop.permute.xlu0 %1215
      %1217 = vrot.lane.b32.xlu0 %v1137, 24
      %v1218 = vpop.permute.xlu0 %1217
      %1219 = vrot.lane.b32.xlu0 %v1138, 24
      %v1220 = vpop.permute.xlu0 %1219
      %1221 = vrot.lane.b32.xlu0 %v1139, 24
      %v1222 = vpop.permute.xlu0 %1221
      %1223 = vrot.lane.b32.xlu0 %v1140, 24
      %v1224 = vpop.permute.xlu0 %1223
      %1225 = vrot.lane.b32.xlu0 %v1141, 24
      %v1226 = vpop.permute.xlu0 %1225
      %1227 = vrot.lane.b32.xlu0 %v1142, 24
      %v1228 = vpop.permute.xlu0 %1227
      %1229 = vrot.lane.b32.xlu0 %v1143, 24
      %v1230 = vpop.permute.xlu0 %1229
      %1231 = vrot.lane.b32.xlu0 %v1144, 24
      %v1232 = vpop.permute.xlu0 %1231
      %1233 = vrot.lane.b32.xlu0 %v1145, 24
      %v1234 = vpop.permute.xlu0 %1233
      %1235 = vrot.lane.b32.xlu0 %v1146, 24
      %v1236 = vpop.permute.xlu0 %1235
      %1237 = vrot.lane.b32.xlu0 %v1147, 24
      %v1238 = vpop.permute.xlu0 %1237
      %1239 = vrot.lane.b32.xlu0 %v1148, 24
      %v1240 = vpop.permute.xlu0 %1239
      %1241 = vrot.lane.b32.xlu0 %v1149, 24
      %v1242 = vpop.permute.xlu0 %1241
      %1243 = vrot.lane.b32.xlu0 %v1150, 24
      %v1244 = vpop.permute.xlu0 %1243
      %1245 = vrot.lane.b32.xlu0 %v1151, 24
      %v1246 = vpop.permute.xlu0 %1245
      %1247 = vrot.lane.b32.xlu0 %v1152, 24
      %v1248 = vpop.permute.xlu0 %1247
      %vm1281 = vcmask 224448
      %1282 = vst.msk [vmem:[#allocation4] sm:$0xf] %vm1281, %v1186
      %1283 = vst.msk [vmem:[#allocation4 + $0x8] sm:$0xf] %vm1281, %v1188
      %1284 = vst.msk [vmem:[#allocation4 + $0x10] sm:$0xf] %vm1281, %v1190
      %1285 = vst.msk [vmem:[#allocation4 + $0x18] sm:$0xf] %vm1281, %v1192
      %1286 = vst.msk [vmem:[#allocation4 + $0x20] sm:$0xf] %vm1281, %v1194
      %1287 = vst.msk [vmem:[#allocation4 + $0x28] sm:$0xf] %vm1281, %v1196
      %1288 = vst.msk [vmem:[#allocation4 + $0x30] sm:$0xf] %vm1281, %v1198
      %1289 = vst.msk [vmem:[#allocation4 + $0x38] sm:$0xf] %vm1281, %v1200
      %1290 = vst.msk [vmem:[#allocation4 + $0x40] sm:$0xf] %vm1281, %v1202
      %1291 = vst.msk [vmem:[#allocation4 + $0x48] sm:$0xf] %vm1281, %v1204
      %1292 = vst.msk [vmem:[#allocation4 + $0x50] sm:$0xf] %vm1281, %v1206
      %1293 = vst.msk [vmem:[#allocation4 + $0x58] sm:$0xf] %vm1281, %v1208
      %1294 = vst.msk [vmem:[#allocation4 + $0x60] sm:$0xf] %vm1281, %v1210
      %1295 = vst.msk [vmem:[#allocation4 + $0x68] sm:$0xf] %vm1281, %v1212
      %1296 = vst.msk [vmem:[#allocation4 + $0x70] sm:$0xf] %vm1281, %v1214
      %1297 = vst.msk [vmem:[#allocation4 + $0x78] sm:$0xf] %vm1281, %v1216
      %1298 = vst.msk [vmem:[#allocation4 + $0x80] sm:$0xf] %vm1281, %v1218
      %1299 = vst.msk [vmem:[#allocation4 + $0x88] sm:$0xf] %vm1281, %v1220
      %1300 = vst.msk [vmem:[#allocation4 + $0x90] sm:$0xf] %vm1281, %v1222
      %1301 = vst.msk [vmem:[#allocation4 + $0x98] sm:$0xf] %vm1281, %v1224
      %1302 = vst.msk [vmem:[#allocation4 + $0xa0] sm:$0xf] %vm1281, %v1226
      %1303 = vst.msk [vmem:[#allocation4 + $0xa8] sm:$0xf] %vm1281, %v1228
      %1304 = vst.msk [vmem:[#allocation4 + $0xb0] sm:$0xf] %vm1281, %v1230
      %1305 = vst.msk [vmem:[#allocation4 + $0xb8] sm:$0xf] %vm1281, %v1232
      %1306 = vst.msk [vmem:[#allocation4 + $0xc0] sm:$0xf] %vm1281, %v1234
      %1307 = vst.msk [vmem:[#allocation4 + $0xc8] sm:$0xf] %vm1281, %v1236
      %1308 = vst.msk [vmem:[#allocation4 + $0xd0] sm:$0xf] %vm1281, %v1238
      %1309 = vst.msk [vmem:[#allocation4 + $0xd8] sm:$0xf] %vm1281, %v1240
      %1310 = vst.msk [vmem:[#allocation4 + $0xe0] sm:$0xf] %vm1281, %v1242
      %1311 = vst.msk [vmem:[#allocation4 + $0xe8] sm:$0xf] %vm1281, %v1244
      %1312 = vst.msk [vmem:[#allocation4 + $0xf0] sm:$0xf] %vm1281, %v1246
      %1313 = vst.msk [vmem:[#allocation4 + $0xf8] sm:$0xf] %vm1281, %v1248
      %s1314 = sadd.s32 %s56, 528
      %s1315 = sshra.s32 %s1314, 3
      %s1316 = sand.u32 %s1314, 7
      %s1317 = smul.addr %s1315, 4
      %s1318 = scalar_lea.vmem %s0, %s1317
      %v1319 = vld [vmem:[%s1318] sm:$0xf]
      %v1320 = vld [vmem:[%s1318 + $0x4] sm:$0xf]
      %v1321 = vld [vmem:[%s1318 + $0x8] sm:$0xf]
      %v1322 = vld [vmem:[%s1318 + $0xc] sm:$0xf]
      %v1323 = vld [vmem:[%s1318 + $0x10] sm:$0xf]
      %v1324 = vld [vmem:[%s1318 + $0x14] sm:$0xf]
      %v1325 = vld [vmem:[%s1318 + $0x18] sm:$0xf]
      %v1326 = vld [vmem:[%s1318 + $0x1c] sm:$0xf]
      %v1327 = vld [vmem:[%s1318 + $0x20] sm:$0xf]
      %v1328 = vld [vmem:[%s1318 + $0x24] sm:$0xf]
      %v1329 = vld [vmem:[%s1318 + $0x28] sm:$0xf]
      %v1330 = vld [vmem:[%s1318 + $0x2c] sm:$0xf]
      %v1331 = vld [vmem:[%s1318 + $0x30] sm:$0xf]
      %v1332 = vld [vmem:[%s1318 + $0x34] sm:$0xf]
      %v1333 = vld [vmem:[%s1318 + $0x38] sm:$0xf]
      %v1334 = vld [vmem:[%s1318 + $0x3c] sm:$0xf]
      %v1335 = vld [vmem:[%s1318 + $0x40] sm:$0xf]
      %v1336 = vld [vmem:[%s1318 + $0x44] sm:$0xf]
      %v1337 = vld [vmem:[%s1318 + $0x48] sm:$0xf]
      %v1338 = vld [vmem:[%s1318 + $0x4c] sm:$0xf]
      %v1339 = vld [vmem:[%s1318 + $0x50] sm:$0xf]
      %v1340 = vld [vmem:[%s1318 + $0x54] sm:$0xf]
      %v1341 = vld [vmem:[%s1318 + $0x58] sm:$0xf]
      %v1342 = vld [vmem:[%s1318 + $0x5c] sm:$0xf]
      %v1343 = vld [vmem:[%s1318 + $0x60] sm:$0xf]
      %v1344 = vld [vmem:[%s1318 + $0x64] sm:$0xf]
      %v1345 = vld [vmem:[%s1318 + $0x68] sm:$0xf]
      %v1346 = vld [vmem:[%s1318 + $0x6c] sm:$0xf]
      %v1347 = vld [vmem:[%s1318 + $0x70] sm:$0xf]
      %v1348 = vld [vmem:[%s1318 + $0x74] sm:$0xf]
      %v1349 = vld [vmem:[%s1318 + $0x78] sm:$0xf]
      %v1350 = vld [vmem:[%s1318 + $0x7c] sm:$0xf]
      %1383 = vrot.lane.b32.xlu0 %v1319, 28
      %v1384 = vpop.permute.xlu0 %1383
      %1385 = vrot.lane.b32.xlu0 %v1320, 28
      %v1386 = vpop.permute.xlu0 %1385
      %1387 = vrot.lane.b32.xlu0 %v1321, 28
      %v1388 = vpop.permute.xlu0 %1387
      %1389 = vrot.lane.b32.xlu0 %v1322, 28
      %v1390 = vpop.permute.xlu0 %1389
      %1391 = vrot.lane.b32.xlu0 %v1323, 28
      %v1392 = vpop.permute.xlu0 %1391
      %1393 = vrot.lane.b32.xlu0 %v1324, 28
      %v1394 = vpop.permute.xlu0 %1393
      %1395 = vrot.lane.b32.xlu0 %v1325, 28
      %v1396 = vpop.permute.xlu0 %1395
      %1397 = vrot.lane.b32.xlu0 %v1326, 28
      %v1398 = vpop.permute.xlu0 %1397
      %1399 = vrot.lane.b32.xlu0 %v1327, 28
      %v1400 = vpop.permute.xlu0 %1399
      %1401 = vrot.lane.b32.xlu0 %v1328, 28
      %v1402 = vpop.permute.xlu0 %1401
      %1403 = vrot.lane.b32.xlu0 %v1329, 28
      %v1404 = vpop.permute.xlu0 %1403
      %1405 = vrot.lane.b32.xlu0 %v1330, 28
      %v1406 = vpop.permute.xlu0 %1405
      %1407 = vrot.lane.b32.xlu0 %v1331, 28
      %v1408 = vpop.permute.xlu0 %1407
      %1409 = vrot.lane.b32.xlu0 %v1332, 28
      %v1410 = vpop.permute.xlu0 %1409
      %1411 = vrot.lane.b32.xlu0 %v1333, 28
      %v1412 = vpop.permute.xlu0 %1411
      %1413 = vrot.lane.b32.xlu0 %v1334, 28
      %v1414 = vpop.permute.xlu0 %1413
      %1415 = vrot.lane.b32.xlu0 %v1335, 28
      %v1416 = vpop.permute.xlu0 %1415
      %1417 = vrot.lane.b32.xlu0 %v1336, 28
      %v1418 = vpop.permute.xlu0 %1417
      %1419 = vrot.lane.b32.xlu0 %v1337, 28
      %v1420 = vpop.permute.xlu0 %1419
      %1421 = vrot.lane.b32.xlu0 %v1338, 28
      %v1422 = vpop.permute.xlu0 %1421
      %1423 = vrot.lane.b32.xlu0 %v1339, 28
      %v1424 = vpop.permute.xlu0 %1423
      %1425 = vrot.lane.b32.xlu0 %v1340, 28
      %v1426 = vpop.permute.xlu0 %1425
      %1427 = vrot.lane.b32.xlu0 %v1341, 28
      %v1428 = vpop.permute.xlu0 %1427
      %1429 = vrot.lane.b32.xlu0 %v1342, 28
      %v1430 = vpop.permute.xlu0 %1429
      %1431 = vrot.lane.b32.xlu0 %v1343, 28
      %v1432 = vpop.permute.xlu0 %1431
      %1433 = vrot.lane.b32.xlu0 %v1344, 28
      %v1434 = vpop.permute.xlu0 %1433
      %1435 = vrot.lane.b32.xlu0 %v1345, 28
      %v1436 = vpop.permute.xlu0 %1435
      %1437 = vrot.lane.b32.xlu0 %v1346, 28
      %v1438 = vpop.permute.xlu0 %1437
      %1439 = vrot.lane.b32.xlu0 %v1347, 28
      %v1440 = vpop.permute.xlu0 %1439
      %1441 = vrot.lane.b32.xlu0 %v1348, 28
      %v1442 = vpop.permute.xlu0 %1441
      %1443 = vrot.lane.b32.xlu0 %v1349, 28
      %v1444 = vpop.permute.xlu0 %1443
      %1445 = vrot.lane.b32.xlu0 %v1350, 28
      %v1446 = vpop.permute.xlu0 %1445
      %vm1479 = vcmask 257248
      %1480 = vst.msk [vmem:[#allocation4] sm:$0xf] %vm1479, %v1384
      %1481 = vst.msk [vmem:[#allocation4 + $0x8] sm:$0xf] %vm1479, %v1386
      %1482 = vst.msk [vmem:[#allocation4 + $0x10] sm:$0xf] %vm1479, %v1388
      %1483 = vst.msk [vmem:[#allocation4 + $0x18] sm:$0xf] %vm1479, %v1390
      %1484 = vst.msk [vmem:[#allocation4 + $0x20] sm:$0xf] %vm1479, %v1392
      %1485 = vst.msk [vmem:[#allocation4 + $0x28] sm:$0xf] %vm1479, %v1394
      %1486 = vst.msk [vmem:[#allocation4 + $0x30] sm:$0xf] %vm1479, %v1396
      %1487 = vst.msk [vmem:[#allocation4 + $0x38] sm:$0xf] %vm1479, %v1398
      %1488 = vst.msk [vmem:[#allocation4 + $0x40] sm:$0xf] %vm1479, %v1400
      %1489 = vst.msk [vmem:[#allocation4 + $0x48] sm:$0xf] %vm1479, %v1402
      %1490 = vst.msk [vmem:[#allocation4 + $0x50] sm:$0xf] %vm1479, %v1404
      %1491 = vst.msk [vmem:[#allocation4 + $0x58] sm:$0xf] %vm1479, %v1406
      %1492 = vst.msk [vmem:[#allocation4 + $0x60] sm:$0xf] %vm1479, %v1408
      %1493 = vst.msk [vmem:[#allocation4 + $0x68] sm:$0xf] %vm1479, %v1410
      %1494 = vst.msk [vmem:[#allocation4 + $0x70] sm:$0xf] %vm1479, %v1412
      %1495 = vst.msk [vmem:[#allocation4 + $0x78] sm:$0xf] %vm1479, %v1414
      %1496 = vst.msk [vmem:[#allocation4 + $0x80] sm:$0xf] %vm1479, %v1416
      %1497 = vst.msk [vmem:[#allocation4 + $0x88] sm:$0xf] %vm1479, %v1418
      %1498 = vst.msk [vmem:[#allocation4 + $0x90] sm:$0xf] %vm1479, %v1420
      %1499 = vst.msk [vmem:[#allocation4 + $0x98] sm:$0xf] %vm1479, %v1422
      %1500 = vst.msk [vmem:[#allocation4 + $0xa0] sm:$0xf] %vm1479, %v1424
      %1501 = vst.msk [vmem:[#allocation4 + $0xa8] sm:$0xf] %vm1479, %v1426
      %1502 = vst.msk [vmem:[#allocation4 + $0xb0] sm:$0xf] %vm1479, %v1428
      %1503 = vst.msk [vmem:[#allocation4 + $0xb8] sm:$0xf] %vm1479, %v1430
      %1504 = vst.msk [vmem:[#allocation4 + $0xc0] sm:$0xf] %vm1479, %v1432
      %1505 = vst.msk [vmem:[#allocation4 + $0xc8] sm:$0xf] %vm1479, %v1434
      %1506 = vst.msk [vmem:[#allocation4 + $0xd0] sm:$0xf] %vm1479, %v1436
      %1507 = vst.msk [vmem:[#allocation4 + $0xd8] sm:$0xf] %vm1479, %v1438
      %1508 = vst.msk [vmem:[#allocation4 + $0xe0] sm:$0xf] %vm1479, %v1440
      %1509 = vst.msk [vmem:[#allocation4 + $0xe8] sm:$0xf] %vm1479, %v1442
      %1510 = vst.msk [vmem:[#allocation4 + $0xf0] sm:$0xf] %vm1479, %v1444
      %1511 = vst.msk [vmem:[#allocation4 + $0xf8] sm:$0xf] %vm1479, %v1446
      %s1512 = sadd.s32 %s56, 544
      %s1513 = sshra.s32 %s1512, 3
      %s1514 = sand.u32 %s1512, 7
      %s1515 = smul.addr %s1513, 4
      %s1516 = scalar_lea.vmem %s0, %s1515
      %v1517 = vld [vmem:[%s1516] sm:$0xf]
      %v1518 = vld [vmem:[%s1516 + $0x4] sm:$0xf]
      %v1519 = vld [vmem:[%s1516 + $0x8] sm:$0xf]
      %v1520 = vld [vmem:[%s1516 + $0xc] sm:$0xf]
      %v1521 = vld [vmem:[%s1516 + $0x10] sm:$0xf]
      %v1522 = vld [vmem:[%s1516 + $0x14] sm:$0xf]
      %v1523 = vld [vmem:[%s1516 + $0x18] sm:$0xf]
      %v1524 = vld [vmem:[%s1516 + $0x1c] sm:$0xf]
      %v1525 = vld [vmem:[%s1516 + $0x20] sm:$0xf]
      %v1526 = vld [vmem:[%s1516 + $0x24] sm:$0xf]
      %v1527 = vld [vmem:[%s1516 + $0x28] sm:$0xf]
      %v1528 = vld [vmem:[%s1516 + $0x2c] sm:$0xf]
      %v1529 = vld [vmem:[%s1516 + $0x30] sm:$0xf]
      %v1530 = vld [vmem:[%s1516 + $0x34] sm:$0xf]
      %v1531 = vld [vmem:[%s1516 + $0x38] sm:$0xf]
      %v1532 = vld [vmem:[%s1516 + $0x3c] sm:$0xf]
      %v1533 = vld [vmem:[%s1516 + $0x40] sm:$0xf]
      %v1534 = vld [vmem:[%s1516 + $0x44] sm:$0xf]
      %v1535 = vld [vmem:[%s1516 + $0x48] sm:$0xf]
      %v1536 = vld [vmem:[%s1516 + $0x4c] sm:$0xf]
      %v1537 = vld [vmem:[%s1516 + $0x50] sm:$0xf]
      %v1538 = vld [vmem:[%s1516 + $0x54] sm:$0xf]
      %v1539 = vld [vmem:[%s1516 + $0x58] sm:$0xf]
      %v1540 = vld [vmem:[%s1516 + $0x5c] sm:$0xf]
      %v1541 = vld [vmem:[%s1516 + $0x60] sm:$0xf]
      %v1542 = vld [vmem:[%s1516 + $0x64] sm:$0xf]
      %v1543 = vld [vmem:[%s1516 + $0x68] sm:$0xf]
      %v1544 = vld [vmem:[%s1516 + $0x6c] sm:$0xf]
      %v1545 = vld [vmem:[%s1516 + $0x70] sm:$0xf]
      %v1546 = vld [vmem:[%s1516 + $0x74] sm:$0xf]
      %v1547 = vld [vmem:[%s1516 + $0x78] sm:$0xf]
      %v1548 = vld [vmem:[%s1516 + $0x7c] sm:$0xf]
      %1581 = vrot.lane.b32.xlu0 %v1517, 32
      %v1582 = vpop.permute.xlu0 %1581
      %1583 = vrot.lane.b32.xlu0 %v1518, 32
      %v1584 = vpop.permute.xlu0 %1583
      %1585 = vrot.lane.b32.xlu0 %v1519, 32
      %v1586 = vpop.permute.xlu0 %1585
      %1587 = vrot.lane.b32.xlu0 %v1520, 32
      %v1588 = vpop.permute.xlu0 %1587
      %1589 = vrot.lane.b32.xlu0 %v1521, 32
      %v1590 = vpop.permute.xlu0 %1589
      %1591 = vrot.lane.b32.xlu0 %v1522, 32
      %v1592 = vpop.permute.xlu0 %1591
      %1593 = vrot.lane.b32.xlu0 %v1523, 32
      %v1594 = vpop.permute.xlu0 %1593
      %1595 = vrot.lane.b32.xlu0 %v1524, 32
      %v1596 = vpop.permute.xlu0 %1595
      %1597 = vrot.lane.b32.xlu0 %v1525, 32
      %v1598 = vpop.permute.xlu0 %1597
      %1599 = vrot.lane.b32.xlu0 %v1526, 32
      %v1600 = vpop.permute.xlu0 %1599
      %1601 = vrot.lane.b32.xlu0 %v1527, 32
      %v1602 = vpop.permute.xlu0 %1601
      %1603 = vrot.lane.b32.xlu0 %v1528, 32
      %v1604 = vpop.permute.xlu0 %1603
      %1605 = vrot.lane.b32.xlu0 %v1529, 32
      %v1606 = vpop.permute.xlu0 %1605
      %1607 = vrot.lane.b32.xlu0 %v1530, 32
      %v1608 = vpop.permute.xlu0 %1607
      %1609 = vrot.lane.b32.xlu0 %v1531, 32
      %v1610 = vpop.permute.xlu0 %1609
      %1611 = vrot.lane.b32.xlu0 %v1532, 32
      %v1612 = vpop.permute.xlu0 %1611
      %1613 = vrot.lane.b32.xlu0 %v1533, 32
      %v1614 = vpop.permute.xlu0 %1613
      %1615 = vrot.lane.b32.xlu0 %v1534, 32
      %v1616 = vpop.permute.xlu0 %1615
      %1617 = vrot.lane.b32.xlu0 %v1535, 32
      %v1618 = vpop.permute.xlu0 %1617
      %1619 = vrot.lane.b32.xlu0 %v1536, 32
      %v1620 = vpop.permute.xlu0 %1619
      %1621 = vrot.lane.b32.xlu0 %v1537, 32
      %v1622 = vpop.permute.xlu0 %1621
      %1623 = vrot.lane.b32.xlu0 %v1538, 32
      %v1624 = vpop.permute.xlu0 %1623
      %1625 = vrot.lane.b32.xlu0 %v1539, 32
      %v1626 = vpop.permute.xlu0 %1625
      %1627 = vrot.lane.b32.xlu0 %v1540, 32
      %v1628 = vpop.permute.xlu0 %1627
      %1629 = vrot.lane.b32.xlu0 %v1541, 32
      %v1630 = vpop.permute.xlu0 %1629
      %1631 = vrot.lane.b32.xlu0 %v1542, 32
      %v1632 = vpop.permute.xlu0 %1631
      %1633 = vrot.lane.b32.xlu0 %v1543, 32
      %v1634 = vpop.permute.xlu0 %1633
      %1635 = vrot.lane.b32.xlu0 %v1544, 32
      %v1636 = vpop.permute.xlu0 %1635
      %1637 = vrot.lane.b32.xlu0 %v1545, 32
      %v1638 = vpop.permute.xlu0 %1637
      %1639 = vrot.lane.b32.xlu0 %v1546, 32
      %v1640 = vpop.permute.xlu0 %1639
      %1641 = vrot.lane.b32.xlu0 %v1547, 32
      %v1642 = vpop.permute.xlu0 %1641
      %1643 = vrot.lane.b32.xlu0 %v1548, 32
      %v1644 = vpop.permute.xlu0 %1643
      %vm1677 = vcmask 290048
      %1678 = vst.msk [vmem:[#allocation4] sm:$0xf] %vm1677, %v1582
      %1679 = vst.msk [vmem:[#allocation4 + $0x8] sm:$0xf] %vm1677, %v1584
      %1680 = vst.msk [vmem:[#allocation4 + $0x10] sm:$0xf] %vm1677, %v1586
      %1681 = vst.msk [vmem:[#allocation4 + $0x18] sm:$0xf] %vm1677, %v1588
      %1682 = vst.msk [vmem:[#allocation4 + $0x20] sm:$0xf] %vm1677, %v1590
      %1683 = vst.msk [vmem:[#allocation4 + $0x28] sm:$0xf] %vm1677, %v1592
      %1684 = vst.msk [vmem:[#allocation4 + $0x30] sm:$0xf] %vm1677, %v1594
      %1685 = vst.msk [vmem:[#allocation4 + $0x38] sm:$0xf] %vm1677, %v1596
      %1686 = vst.msk [vmem:[#allocation4 + $0x40] sm:$0xf] %vm1677, %v1598
      %1687 = vst.msk [vmem:[#allocation4 + $0x48] sm:$0xf] %vm1677, %v1600
      %1688 = vst.msk [vmem:[#allocation4 + $0x50] sm:$0xf] %vm1677, %v1602
      %1689 = vst.msk [vmem:[#allocation4 + $0x58] sm:$0xf] %vm1677, %v1604
      %1690 = vst.msk [vmem:[#allocation4 + $0x60] sm:$0xf] %vm1677, %v1606
      %1691 = vst.msk [vmem:[#allocation4 + $0x68] sm:$0xf] %vm1677, %v1608
      %1692 = vst.msk [vmem:[#allocation4 + $0x70] sm:$0xf] %vm1677, %v1610
      %1693 = vst.msk [vmem:[#allocation4 + $0x78] sm:$0xf] %vm1677, %v1612
      %1694 = vst.msk [vmem:[#allocation4 + $0x80] sm:$0xf] %vm1677, %v1614
      %1695 = vst.msk [vmem:[#allocation4 + $0x88] sm:$0xf] %vm1677, %v1616
      %1696 = vst.msk [vmem:[#allocation4 + $0x90] sm:$0xf] %vm1677, %v1618
      %1697 = vst.msk [vmem:[#allocation4 + $0x98] sm:$0xf] %vm1677, %v1620
      %1698 = vst.msk [vmem:[#allocation4 + $0xa0] sm:$0xf] %vm1677, %v1622
      %1699 = vst.msk [vmem:[#allocation4 + $0xa8] sm:$0xf] %vm1677, %v1624
      %1700 = vst.msk [vmem:[#allocation4 + $0xb0] sm:$0xf] %vm1677, %v1626
      %1701 = vst.msk [vmem:[#allocation4 + $0xb8] sm:$0xf] %vm1677, %v1628
      %1702 = vst.msk [vmem:[#allocation4 + $0xc0] sm:$0xf] %vm1677, %v1630
      %1703 = vst.msk [vmem:[#allocation4 + $0xc8] sm:$0xf] %vm1677, %v1632
      %1704 = vst.msk [vmem:[#allocation4 + $0xd0] sm:$0xf] %vm1677, %v1634
      %1705 = vst.msk [vmem:[#allocation4 + $0xd8] sm:$0xf] %vm1677, %v1636
      %1706 = vst.msk [vmem:[#allocation4 + $0xe0] sm:$0xf] %vm1677, %v1638
      %1707 = vst.msk [vmem:[#allocation4 + $0xe8] sm:$0xf] %vm1677, %v1640
      %1708 = vst.msk [vmem:[#allocation4 + $0xf0] sm:$0xf] %vm1677, %v1642
      %1709 = vst.msk [vmem:[#allocation4 + $0xf8] sm:$0xf] %vm1677, %v1644
      %v1710 = vld [vmem:[#allocation4] sm:$0xf]
      %v1711 = vld [vmem:[#allocation4 + $0x8] sm:$0xf]
      %v1712 = vld [vmem:[#allocation4 + $0x10] sm:$0xf]
      %v1713 = vld [vmem:[#allocation4 + $0x18] sm:$0xf]
      %v1714 = vld [vmem:[#allocation4 + $0x20] sm:$0xf]
      %v1715 = vld [vmem:[#allocation4 + $0x28] sm:$0xf]
      %v1716 = vld [vmem:[#allocation4 + $0x30] sm:$0xf]
      %v1717 = vld [vmem:[#allocation4 + $0x38] sm:$0xf]
      %v1718 = vld [vmem:[#allocation4 + $0x40] sm:$0xf]
      %v1719 = vld [vmem:[#allocation4 + $0x48] sm:$0xf]
      %v1720 = vld [vmem:[#allocation4 + $0x50] sm:$0xf]
      %v1721 = vld [vmem:[#allocation4 + $0x58] sm:$0xf]
      %v1722 = vld [vmem:[#allocation4 + $0x60] sm:$0xf]
      %v1723 = vld [vmem:[#allocation4 + $0x68] sm:$0xf]
      %v1724 = vld [vmem:[#allocation4 + $0x70] sm:$0xf]
      %v1725 = vld [vmem:[#allocation4 + $0x78] sm:$0xf]
      %v1726 = vld [vmem:[#allocation4 + $0x80] sm:$0xf]
      %v1727 = vld [vmem:[#allocation4 + $0x88] sm:$0xf]
      %v1728 = vld [vmem:[#allocation4 + $0x90] sm:$0xf]
      %v1729 = vld [vmem:[#allocation4 + $0x98] sm:$0xf]
      %v1730 = vld [vmem:[#allocation4 + $0xa0] sm:$0xf]
      %v1731 = vld [vmem:[#allocation4 + $0xa8] sm:$0xf]
      %v1732 = vld [vmem:[#allocation4 + $0xb0] sm:$0xf]
      %v1733 = vld [vmem:[#allocation4 + $0xb8] sm:$0xf]
      %v1734 = vld [vmem:[#allocation4 + $0xc0] sm:$0xf]
      %v1735 = vld [vmem:[#allocation4 + $0xc8] sm:$0xf]
      %v1736 = vld [vmem:[#allocation4 + $0xd0] sm:$0xf]
      %v1737 = vld [vmem:[#allocation4 + $0xd8] sm:$0xf]
      %v1738 = vld [vmem:[#allocation4 + $0xe0] sm:$0xf]
      %v1739 = vld [vmem:[#allocation4 + $0xe8] sm:$0xf]
      %v1740 = vld [vmem:[#allocation4 + $0xf0] sm:$0xf]
      %v1741 = vld [vmem:[#allocation4 + $0xf8] sm:$0xf]
      %v1742 = vld [vmem:[%s1] sm:$0xf]
      %v1743 = vld [vmem:[%s1 + $0x4] sm:$0xf]
      %v1744 = vld [vmem:[%s1 + $0x8] sm:$0xf]
      %v1745 = vld [vmem:[%s1 + $0xc] sm:$0xf]
      %v1746 = vld [vmem:[%s1 + $0x10] sm:$0x3]
      %v1748 = vlaneseq
      %v1749 = vshrl.u32 %v1748, 7
      %v1750 = vsub.s32 0, %v1749
      %v1751 = vrot.slane %v49, %v1750
      %v1785 = vunpack.c.l.b16 %v1710
      %v1786 = vunpack.c.l.b16 %v1711
      %v1787 = vunpack.c.l.b16 %v1712
      %v1788 = vunpack.c.l.b16 %v1713
      %v1789 = vunpack.c.l.b16 %v1714
      %v1790 = vunpack.c.l.b16 %v1715
      %v1791 = vunpack.c.l.b16 %v1716
      %v1792 = vunpack.c.l.b16 %v1717
      %v1793 = vunpack.c.l.b16 %v1718
      %v1794 = vunpack.c.l.b16 %v1719
      %v1795 = vunpack.c.l.b16 %v1720
      %v1796 = vunpack.c.l.b16 %v1721
      %v1797 = vunpack.c.l.b16 %v1722
      %v1798 = vunpack.c.l.b16 %v1723
      %v1799 = vunpack.c.l.b16 %v1724
      %v1800 = vunpack.c.l.b16 %v1725
      %v1801 = vunpack.c.l.b16 %v1726
      %v1802 = vunpack.c.l.b16 %v1727
      %v1803 = vunpack.c.l.b16 %v1728
      %v1804 = vunpack.c.l.b16 %v1729
      %v1805 = vunpack.c.l.b16 %v1730
      %v1806 = vunpack.c.l.b16 %v1731
      %v1807 = vunpack.c.l.b16 %v1732
      %v1808 = vunpack.c.l.b16 %v1733
      %v1809 = vunpack.c.l.b16 %v1734
      %v1810 = vunpack.c.l.b16 %v1735
      %v1811 = vunpack.c.l.b16 %v1736
      %v1812 = vunpack.c.l.b16 %v1737
      %v1813 = vunpack.c.l.b16 %v1738
      %v1814 = vunpack.c.l.b16 %v1739
      %v1815 = vunpack.c.l.b16 %v1740
      %v1816 = vunpack.c.l.b16 %v1741
      %v1817 = vpack.c.b16 %v1786, %v1785
      %v1818 = vpack.c.b16 %v1788, %v1787
      %v1819 = vpack.c.b16 %v1790, %v1789
      %v1820 = vpack.c.b16 %v1792, %v1791
      %v1821 = vpack.c.b16 %v1794, %v1793
      %v1822 = vpack.c.b16 %v1796, %v1795
      %v1823 = vpack.c.b16 %v1798, %v1797
      %v1824 = vpack.c.b16 %v1800, %v1799
      %v1825 = vpack.c.b16 %v1802, %v1801
      %v1826 = vpack.c.b16 %v1804, %v1803
      %v1827 = vpack.c.b16 %v1806, %v1805
      %v1828 = vpack.c.b16 %v1808, %v1807
      %v1829 = vpack.c.b16 %v1810, %v1809
      %v1830 = vpack.c.b16 %v1812, %v1811
      %v1831 = vpack.c.b16 %v1814, %v1813
      %v1832 = vpack.c.b16 %v1816, %v1815
      %v1838 = vunpack.c.l.b16 %v1742
      %v1839 = vunpack.c.l.b16 %v1743
      %v1840 = vunpack.c.l.b16 %v1744
      %v1841 = vunpack.c.l.b16 %v1745
      %v1842 = vunpack.c.l.b16 %v1746
      %v1843 = vpack.c.b16 %v1839, %v1838
      %v1844 = vpack.c.b16 %v1841, %v1840
      %v1845 = vpack.c.b16 %v1842, %v1842
      %vm1848 = vcmask 293888
      %v1850 = vsel %vm1848, %v1817, 0
      %v1853 = vsel %vm1848, %v1818, 0
      %v1856 = vsel %vm1848, %v1819, 0
      %v1859 = vsel %vm1848, %v1820, 0
      %v1862 = vsel %vm1848, %v1821, 0
      %v1865 = vsel %vm1848, %v1822, 0
      %v1868 = vsel %vm1848, %v1823, 0
      %v1871 = vsel %vm1848, %v1824, 0
      %v1874 = vsel %vm1848, %v1825, 0
      %v1877 = vsel %vm1848, %v1826, 0
      %v1880 = vsel %vm1848, %v1827, 0
      %v1883 = vsel %vm1848, %v1828, 0
      %v1886 = vsel %vm1848, %v1829, 0
      %v1889 = vsel %vm1848, %v1830, 0
      %v1892 = vsel %vm1848, %v1831, 0
      %v1895 = vsel %vm1848, %v1832, 0
      %vm1897 = vcmask 1041408
      %v1899 = vsel %vm1897, %v1845, 0
      %1901 = vmatprep.subr.bf16.mxu0 0
      %1902 = vmatpush1.bf16.msra.mxu0 0
      %1903 = vmatprep.subr.bf16.mxu0 0
      %1904 = vmatpush1.bf16.msra.mxu0 0
      %1905 = vmatprep.subr.bf16.mxu0 0
      %1906 = vmatpush1.bf16.msra.mxu0 0
      %1907 = vmatprep.subr.bf16.mxu0 0
      %1908 = vmatpush1.bf16.msra.mxu0 0
      %1909 = vmatprep.subr.bf16.mxu0 0
      %1910 = vmatpush1.bf16.msra.mxu0 0
      %1911 = vmatprep.subr.bf16.mxu0 0
      %1912 = vmatpush1.bf16.msra.mxu0 %v1899
      %1913 = vmatprep.subr.bf16.mxu0 0
      %1914 = vmatpush1.bf16.msra.mxu0 %v1844
      %1915 = vmatprep.subr.bf16.mxu0 0
      %1916 = vmatpush1.bf16.msra.mxu0 %v1843
      %1917 = vmatprep.subr.bf16.mxu0 0
      %1918 = vmatpush2.bf16.msra.mxu0 0
      %1919 = vmatprep.subr.bf16.mxu0 0
      %1920 = vmatpush2.bf16.msra.mxu0 0
      %1921 = vmatprep.subr.bf16.mxu0 0
      %1922 = vmatpush2.bf16.msra.mxu0 0
      %1923 = vmatprep.subr.bf16.mxu0 0
      %1924 = vmatpush2.bf16.msra.mxu0 0
      %1925 = vmatprep.subr.bf16.mxu0 0
      %1926 = vmatpush2.bf16.msra.mxu0 0
      %1927 = vmatprep.subr.bf16.mxu0 0
      %1928 = vmatpush2.bf16.msra.mxu0 0
      %1929 = vmatprep.subr.bf16.mxu0 0
      %1930 = vmatpush2.bf16.msra.mxu0 0
      %1931 = vmatprep.subr.bf16.mxu0 0
      %1932 = vmatpush2.bf16.msra.mxu0 0
      %1933 = vmatprep.mubr.bf16.mxu0 0
      %1934 = vmatmul.mubr.bf16.gmra.mxu0 %v1850
      %v1935 = vpop.f32.mrf.mxu0
      %v1936 = vadd.f32 %v1751, %v1935
      %v1937 = vpop.f32.mrf.mxu0
      %v1938 = vpop.f32.mrf.mxu0
      %v1939 = vadd.f32 %v1751, %v1938
      %v1940 = vpop.f32.mrf.mxu0
      %1941 = vmatprep.mubr.bf16.mxu0 0
      %1942 = vmatmul.mubr.bf16.gmra.mxu0 %v1853
      %v1943 = vpop.f32.mrf.mxu0
      %v1944 = vadd.f32 %v1751, %v1943
      %v1945 = vpop.f32.mrf.mxu0
      %v1946 = vpop.f32.mrf.mxu0
      %v1947 = vadd.f32 %v1751, %v1946
      %v1948 = vpop.f32.mrf.mxu0
      %1949 = vmatprep.mubr.bf16.mxu0 0
      %1950 = vmatmul.mubr.bf16.gmra.mxu0 %v1856
      %v1951 = vpop.f32.mrf.mxu0
      %v1952 = vadd.f32 %v1751, %v1951
      %v1953 = vpop.f32.mrf.mxu0
      %v1954 = vpop.f32.mrf.mxu0
      %v1955 = vadd.f32 %v1751, %v1954
      %v1956 = vpop.f32.mrf.mxu0
      %1957 = vmatprep.mubr.bf16.mxu0 0
      %1958 = vmatmul.mubr.bf16.gmra.mxu0 %v1859
      %v1959 = vpop.f32.mrf.mxu0
      %v1960 = vadd.f32 %v1751, %v1959
      %v1961 = vpop.f32.mrf.mxu0
      %v1962 = vpop.f32.mrf.mxu0
      %v1963 = vadd.f32 %v1751, %v1962
      %v1964 = vpop.f32.mrf.mxu0
      %1965 = vmatprep.mubr.bf16.mxu0 0
      %1966 = vmatmul.mubr.bf16.gmra.mxu0 %v1862
      %v1967 = vpop.f32.mrf.mxu0
      %v1968 = vadd.f32 %v1751, %v1967
      %v1969 = vpop.f32.mrf.mxu0
      %v1970 = vpop.f32.mrf.mxu0
      %v1971 = vadd.f32 %v1751, %v1970
      %v1972 = vpop.f32.mrf.mxu0
      %1973 = vmatprep.mubr.bf16.mxu0 0
      %1974 = vmatmul.mubr.bf16.gmra.mxu0 %v1865
      %v1975 = vpop.f32.mrf.mxu0
      %v1976 = vadd.f32 %v1751, %v1975
      %v1977 = vpop.f32.mrf.mxu0
      %v1978 = vpop.f32.mrf.mxu0
      %v1979 = vadd.f32 %v1751, %v1978
      %v1980 = vpop.f32.mrf.mxu0
      %1981 = vmatprep.mubr.bf16.mxu0 0
      %1982 = vmatmul.mubr.bf16.gmra.mxu0 %v1868
      %v1983 = vpop.f32.mrf.mxu0
      %v1984 = vadd.f32 %v1751, %v1983
      %v1985 = vpop.f32.mrf.mxu0
      %v1986 = vpop.f32.mrf.mxu0
      %v1987 = vadd.f32 %v1751, %v1986
      %v1988 = vpop.f32.mrf.mxu0
      %1989 = vmatprep.mubr.bf16.mxu0 0
      %1990 = vmatmul.mubr.bf16.gmra.mxu0 %v1871
      %v1991 = vpop.f32.mrf.mxu0
      %v1992 = vadd.f32 %v1751, %v1991
      %v1993 = vpop.f32.mrf.mxu0
      %v1994 = vpop.f32.mrf.mxu0
      %v1995 = vadd.f32 %v1751, %v1994
      %v1996 = vpop.f32.mrf.mxu0
      %1997 = vmatprep.mubr.bf16.mxu0 0
      %1998 = vmatmul.mubr.bf16.gmra.mxu0 %v1874
      %v1999 = vpop.f32.mrf.mxu0
      %v2000 = vadd.f32 %v1751, %v1999
      %v2001 = vpop.f32.mrf.mxu0
      %v2002 = vpop.f32.mrf.mxu0
      %v2003 = vadd.f32 %v1751, %v2002
      %v2004 = vpop.f32.mrf.mxu0
      %2005 = vmatprep.mubr.bf16.mxu0 0
      %2006 = vmatmul.mubr.bf16.gmra.mxu0 %v1877
      %v2007 = vpop.f32.mrf.mxu0
      %v2008 = vadd.f32 %v1751, %v2007
      %v2009 = vpop.f32.mrf.mxu0
      %v2010 = vpop.f32.mrf.mxu0
      %v2011 = vadd.f32 %v1751, %v2010
      %v2012 = vpop.f32.mrf.mxu0
      %2013 = vmatprep.mubr.bf16.mxu0 0
      %2014 = vmatmul.mubr.bf16.gmra.mxu0 %v1880
      %v2015 = vpop.f32.mrf.mxu0
      %v2016 = vadd.f32 %v1751, %v2015
      %v2017 = vpop.f32.mrf.mxu0
      %v2018 = vpop.f32.mrf.mxu0
      %v2019 = vadd.f32 %v1751, %v2018
      %v2020 = vpop.f32.mrf.mxu0
      %2021 = vmatprep.mubr.bf16.mxu0 0
      %2022 = vmatmul.mubr.bf16.gmra.mxu0 %v1883
      %v2023 = vpop.f32.mrf.mxu0
      %v2024 = vadd.f32 %v1751, %v2023
      %v2025 = vpop.f32.mrf.mxu0
      %v2026 = vpop.f32.mrf.mxu0
      %v2027 = vadd.f32 %v1751, %v2026
      %v2028 = vpop.f32.mrf.mxu0
      %2029 = vmatprep.mubr.bf16.mxu0 0
      %2030 = vmatmul.mubr.bf16.gmra.mxu0 %v1886
      %v2031 = vpop.f32.mrf.mxu0
      %v2032 = vadd.f32 %v1751, %v2031
      %v2033 = vpop.f32.mrf.mxu0
      %v2034 = vpop.f32.mrf.mxu0
      %v2035 = vadd.f32 %v1751, %v2034
      %v2036 = vpop.f32.mrf.mxu0
      %2037 = vmatprep.mubr.bf16.mxu0 0
      %2038 = vmatmul.mubr.bf16.gmra.mxu0 %v1889
      %v2039 = vpop.f32.mrf.mxu0
      %v2040 = vadd.f32 %v1751, %v2039
      %v2041 = vpop.f32.mrf.mxu0
      %v2042 = vpop.f32.mrf.mxu0
      %v2043 = vadd.f32 %v1751, %v2042
      %v2044 = vpop.f32.mrf.mxu0
      %2045 = vmatprep.mubr.bf16.mxu0 0
      %2046 = vmatmul.mubr.bf16.gmra.mxu0 %v1892
      %v2047 = vpop.f32.mrf.mxu0
      %v2048 = vadd.f32 %v1751, %v2047
      %v2049 = vpop.f32.mrf.mxu0
      %v2050 = vpop.f32.mrf.mxu0
      %v2051 = vadd.f32 %v1751, %v2050
      %v2052 = vpop.f32.mrf.mxu0
      %2053 = vmatprep.mubr.bf16.mxu0 0
      %2054 = vmatmul.mubr.bf16.gmra.mxu0 %v1895
      %v2055 = vpop.f32.mrf.mxu0
      %v2056 = vadd.f32 %v1751, %v2055
      %v2057 = vpop.f32.mrf.mxu0
      %v2058 = vpop.f32.mrf.mxu0
      %v2059 = vadd.f32 %v1751, %v2058
      %v2060 = vpop.f32.mrf.mxu0
      %2061 = vdwg.mxu0
      %v2062 = vmax.f32 %v1936, 0.0
      %v2063 = vmax.f32 %v1939, 0.0
      %v2064 = vmax.f32 %v1944, 0.0
      %v2065 = vmax.f32 %v1947, 0.0
      %v2066 = vmax.f32 %v1952, 0.0
      %v2067 = vmax.f32 %v1955, 0.0
      %v2068 = vmax.f32 %v1960, 0.0
      %v2069 = vmax.f32 %v1963, 0.0
      %v2070 = vmax.f32 %v1968, 0.0
      %v2071 = vmax.f32 %v1971, 0.0
      %v2072 = vmax.f32 %v1976, 0.0
      %v2073 = vmax.f32 %v1979, 0.0
      %v2074 = vmax.f32 %v1984, 0.0
      %v2075 = vmax.f32 %v1987, 0.0
      %v2076 = vmax.f32 %v1992, 0.0
      %v2077 = vmax.f32 %v1995, 0.0
      %v2078 = vmax.f32 %v2000, 0.0
      %v2079 = vmax.f32 %v2003, 0.0
      %v2080 = vmax.f32 %v2008, 0.0
      %v2081 = vmax.f32 %v2011, 0.0
      %v2082 = vmax.f32 %v2016, 0.0
      %v2083 = vmax.f32 %v2019, 0.0
      %v2084 = vmax.f32 %v2024, 0.0
      %v2085 = vmax.f32 %v2027, 0.0
      %v2086 = vmax.f32 %v2032, 0.0
      %v2087 = vmax.f32 %v2035, 0.0
      %v2088 = vmax.f32 %v2040, 0.0
      %v2089 = vmax.f32 %v2043, 0.0
      %v2090 = vmax.f32 %v2048, 0.0
      %v2091 = vmax.f32 %v2051, 0.0
      %v2092 = vmax.f32 %v2056, 0.0
      %v2093 = vmax.f32 %v2059, 0.0
      %v2094 = vpack.c.bf16 %v2063, %v2062
      %v2095 = vpack.c.bf16 %v2065, %v2064
      %v2096 = vpack.c.bf16 %v2067, %v2066
      %v2097 = vpack.c.bf16 %v2069, %v2068
      %v2098 = vpack.c.bf16 %v2071, %v2070
      %v2099 = vpack.c.bf16 %v2073, %v2072
      %v2100 = vpack.c.bf16 %v2075, %v2074
      %v2101 = vpack.c.bf16 %v2077, %v2076
      %v2102 = vpack.c.bf16 %v2079, %v2078
      %v2103 = vpack.c.bf16 %v2081, %v2080
      %v2104 = vpack.c.bf16 %v2083, %v2082
      %v2105 = vpack.c.bf16 %v2085, %v2084
      %v2106 = vpack.c.bf16 %v2087, %v2086
      %v2107 = vpack.c.bf16 %v2089, %v2088
      %v2108 = vpack.c.bf16 %v2091, %v2090
      %v2109 = vpack.c.bf16 %v2093, %v2092
      %v2126 = vunpack.c.l.b16 %v2094
      %v2127 = vunpack.c.h.b16 %v2094
      %v2128 = vunpack.c.l.b16 %v2095
      %v2129 = vunpack.c.h.b16 %v2095
      %v2130 = vunpack.c.l.b16 %v2096
      %v2131 = vunpack.c.h.b16 %v2096
      %v2132 = vunpack.c.l.b16 %v2097
      %v2133 = vunpack.c.h.b16 %v2097
      %v2134 = vunpack.c.l.b16 %v2098
      %v2135 = vunpack.c.h.b16 %v2098
      %v2136 = vunpack.c.l.b16 %v2099
      %v2137 = vunpack.c.h.b16 %v2099
      %v2138 = vunpack.c.l.b16 %v2100
      %v2139 = vunpack.c.h.b16 %v2100
      %v2140 = vunpack.c.l.b16 %v2101
      %v2141 = vunpack.c.h.b16 %v2101
      %v2142 = vunpack.c.l.b16 %v2102
      %v2143 = vunpack.c.h.b16 %v2102
      %v2144 = vunpack.c.l.b16 %v2103
      %v2145 = vunpack.c.h.b16 %v2103
      %v2146 = vunpack.c.l.b16 %v2104
      %v2147 = vunpack.c.h.b16 %v2104
      %v2148 = vunpack.c.l.b16 %v2105
      %v2149 = vunpack.c.h.b16 %v2105
      %v2150 = vunpack.c.l.b16 %v2106
      %v2151 = vunpack.c.h.b16 %v2106
      %v2152 = vunpack.c.l.b16 %v2107
      %v2153 = vunpack.c.h.b16 %v2107
      %v2154 = vunpack.c.l.b16 %v2108
      %v2155 = vunpack.c.h.b16 %v2108
      %v2156 = vunpack.c.l.b16 %v2109
      %v2157 = vunpack.c.h.b16 %v2109
      %v2158 = vpack.c.b16 %v2126, %v2126
      %v2159 = vpack.c.b16 %v2127, %v2127
      %v2160 = vpack.c.b16 %v2128, %v2128
      %v2161 = vpack.c.b16 %v2129, %v2129
      %v2162 = vpack.c.b16 %v2130, %v2130
      %v2163 = vpack.c.b16 %v2131, %v2131
      %v2164 = vpack.c.b16 %v2132, %v2132
      %v2165 = vpack.c.b16 %v2133, %v2133
      %v2166 = vpack.c.b16 %v2134, %v2134
      %v2167 = vpack.c.b16 %v2135, %v2135
      %v2168 = vpack.c.b16 %v2136, %v2136
      %v2169 = vpack.c.b16 %v2137, %v2137
      %v2170 = vpack.c.b16 %v2138, %v2138
      %v2171 = vpack.c.b16 %v2139, %v2139
      %v2172 = vpack.c.b16 %v2140, %v2140
      %v2173 = vpack.c.b16 %v2141, %v2141
      %v2174 = vpack.c.b16 %v2142, %v2142
      %v2175 = vpack.c.b16 %v2143, %v2143
      %v2176 = vpack.c.b16 %v2144, %v2144
      %v2177 = vpack.c.b16 %v2145, %v2145
      %v2178 = vpack.c.b16 %v2146, %v2146
      %v2179 = vpack.c.b16 %v2147, %v2147
      %v2180 = vpack.c.b16 %v2148, %v2148
      %v2181 = vpack.c.b16 %v2149, %v2149
      %v2182 = vpack.c.b16 %v2150, %v2150
      %v2183 = vpack.c.b16 %v2151, %v2151
      %v2184 = vpack.c.b16 %v2152, %v2152
      %v2185 = vpack.c.b16 %v2153, %v2153
      %v2186 = vpack.c.b16 %v2154, %v2154
      %v2187 = vpack.c.b16 %v2155, %v2155
      %v2188 = vpack.c.b16 %v2156, %v2156
      %v2189 = vpack.c.b16 %v2157, %v2157
      %s2222 = smul.addr %s57, 4
      %s2223 = scalar_lea.vmem [#allocation2], %s2222
      %vm2224 = vcmask 125952
      %2225 = vst.msk [vmem:[%s2223] sm:$0xf] %vm2224, %v2158
      %2226 = vst.msk [vmem:[%s2223 + $0x4] sm:$0xf] %vm2224, %v2159
      %2227 = vst.msk [vmem:[%s2223 + $0x8] sm:$0xf] %vm2224, %v2160
      %2228 = vst.msk [vmem:[%s2223 + $0xc] sm:$0xf] %vm2224, %v2161
      %2229 = vst.msk [vmem:[%s2223 + $0x10] sm:$0xf] %vm2224, %v2162
      %2230 = vst.msk [vmem:[%s2223 + $0x14] sm:$0xf] %vm2224, %v2163
      %2231 = vst.msk [vmem:[%s2223 + $0x18] sm:$0xf] %vm2224, %v2164
      %2232 = vst.msk [vmem:[%s2223 + $0x1c] sm:$0xf] %vm2224, %v2165
      %2233 = vst.msk [vmem:[%s2223 + $0x20] sm:$0xf] %vm2224, %v2166
      %2234 = vst.msk [vmem:[%s2223 + $0x24] sm:$0xf] %vm2224, %v2167
      %2235 = vst.msk [vmem:[%s2223 + $0x28] sm:$0xf] %vm2224, %v2168
      %2236 = vst.msk [vmem:[%s2223 + $0x2c] sm:$0xf] %vm2224, %v2169
      %2237 = vst.msk [vmem:[%s2223 + $0x30] sm:$0xf] %vm2224, %v2170
      %2238 = vst.msk [vmem:[%s2223 + $0x34] sm:$0xf] %vm2224, %v2171
      %2239 = vst.msk [vmem:[%s2223 + $0x38] sm:$0xf] %vm2224, %v2172
      %2240 = vst.msk [vmem:[%s2223 + $0x3c] sm:$0xf] %vm2224, %v2173
      %2241 = vst.msk [vmem:[%s2223 + $0x40] sm:$0xf] %vm2224, %v2174
      %2242 = vst.msk [vmem:[%s2223 + $0x44] sm:$0xf] %vm2224, %v2175
      %2243 = vst.msk [vmem:[%s2223 + $0x48] sm:$0xf] %vm2224, %v2176
      %2244 = vst.msk [vmem:[%s2223 + $0x4c] sm:$0xf] %vm2224, %v2177
      %2245 = vst.msk [vmem:[%s2223 + $0x50] sm:$0xf] %vm2224, %v2178
      %2246 = vst.msk [vmem:[%s2223 + $0x54] sm:$0xf] %vm2224, %v2179
      %2247 = vst.msk [vmem:[%s2223 + $0x58] sm:$0xf] %vm2224, %v2180
      %2248 = vst.msk [vmem:[%s2223 + $0x5c] sm:$0xf] %vm2224, %v2181
      %2249 = vst.msk [vmem:[%s2223 + $0x60] sm:$0xf] %vm2224, %v2182
      %2250 = vst.msk [vmem:[%s2223 + $0x64] sm:$0xf] %vm2224, %v2183
      %2251 = vst.msk [vmem:[%s2223 + $0x68] sm:$0xf] %vm2224, %v2184
      %2252 = vst.msk [vmem:[%s2223 + $0x6c] sm:$0xf] %vm2224, %v2185
      %2253 = vst.msk [vmem:[%s2223 + $0x70] sm:$0xf] %vm2224, %v2186
      %2254 = vst.msk [vmem:[%s2223 + $0x74] sm:$0xf] %vm2224, %v2187
      %2255 = vst.msk [vmem:[%s2223 + $0x78] sm:$0xf] %vm2224, %v2188
      %2256 = vst.msk [vmem:[%s2223 + $0x7c] sm:$0xf] %vm2224, %v2189
    $region62: #{forward.1} parent=1 // loop_footer
      %s55 = sadd.s32 1, %s51
    $region63: #{forward.1} parent=1 // loop_footer_branch
      %50 = sbr.rel target = $region59
    $region64: #{forward.1} parent=1 // loop_exit
      _
    %v2257 = vld [vmem:[%s4] sm:$0x1]
    loop: start=0, step=1, limit=12
    $region65: #{forward.1} parent=1 // loop_pre_header
      _
    $region66: #{forward.1} parent=1 // loop_header
      %s2259 = sphi 0, %s2263
      %p2260 = scmp.ge.s32.totalorder %s2259, 12
    $region67: #{forward.1} parent=1 // loop_header_branch
      %2262 = sbr.rel (%p2260) target = $region71
    $region68: #{forward.1} parent=1 // loop_body
      %s2264 = smul.u32 %s2259, 256
      %s2265 = sshra.s32 %s2264, 3
      %s2266 = sand.u32 %s2264, 7
      %s2267 = smul.addr %s2265, 4
      %s2268 = scalar_lea.vmem [#allocation2], %s2267
      %v2269 = vld [vmem:[%s2268] sm:$0xf]
      %v2270 = vld [vmem:[%s2268 + $0x4] sm:$0xf]
      %v2271 = vld [vmem:[%s2268 + $0x8] sm:$0xf]
      %v2272 = vld [vmem:[%s2268 + $0xc] sm:$0xf]
      %v2273 = vld [vmem:[%s2268 + $0x10] sm:$0xf]
      %v2274 = vld [vmem:[%s2268 + $0x14] sm:$0xf]
      %v2275 = vld [vmem:[%s2268 + $0x18] sm:$0xf]
      %v2276 = vld [vmem:[%s2268 + $0x1c] sm:$0xf]
      %v2277 = vld [vmem:[%s2268 + $0x20] sm:$0xf]
      %v2278 = vld [vmem:[%s2268 + $0x24] sm:$0xf]
      %v2279 = vld [vmem:[%s2268 + $0x28] sm:$0xf]
      %v2280 = vld [vmem:[%s2268 + $0x2c] sm:$0xf]
      %v2281 = vld [vmem:[%s2268 + $0x30] sm:$0xf]
      %v2282 = vld [vmem:[%s2268 + $0x34] sm:$0xf]
      %v2283 = vld [vmem:[%s2268 + $0x38] sm:$0xf]
      %v2284 = vld [vmem:[%s2268 + $0x3c] sm:$0xf]
      %v2285 = vld [vmem:[%s2268 + $0x40] sm:$0xf]
      %v2286 = vld [vmem:[%s2268 + $0x44] sm:$0xf]
      %v2287 = vld [vmem:[%s2268 + $0x48] sm:$0xf]
      %v2288 = vld [vmem:[%s2268 + $0x4c] sm:$0xf]
      %v2289 = vld [vmem:[%s2268 + $0x50] sm:$0xf]
      %v2290 = vld [vmem:[%s2268 + $0x54] sm:$0xf]
      %v2291 = vld [vmem:[%s2268 + $0x58] sm:$0xf]
      %v2292 = vld [vmem:[%s2268 + $0x5c] sm:$0xf]
      %v2293 = vld [vmem:[%s2268 + $0x60] sm:$0xf]
      %v2294 = vld [vmem:[%s2268 + $0x64] sm:$0xf]
      %v2295 = vld [vmem:[%s2268 + $0x68] sm:$0xf]
      %v2296 = vld [vmem:[%s2268 + $0x6c] sm:$0xf]
      %v2297 = vld [vmem:[%s2268 + $0x70] sm:$0xf]
      %v2298 = vld [vmem:[%s2268 + $0x74] sm:$0xf]
      %v2299 = vld [vmem:[%s2268 + $0x78] sm:$0xf]
      %v2300 = vld [vmem:[%s2268 + $0x7c] sm:$0xf]
      %vm2301 = vcmask 125952
      %2302 = vst.msk [vmem:[#allocation4] sm:$0xf] %vm2301, %v2269
      %2303 = vst.msk [vmem:[#allocation4 + $0x8] sm:$0xf] %vm2301, %v2270
      %2304 = vst.msk [vmem:[#allocation4 + $0x10] sm:$0xf] %vm2301, %v2271
      %2305 = vst.msk [vmem:[#allocation4 + $0x18] sm:$0xf] %vm2301, %v2272
      %2306 = vst.msk [vmem:[#allocation4 + $0x20] sm:$0xf] %vm2301, %v2273
      %2307 = vst.msk [vmem:[#allocation4 + $0x28] sm:$0xf] %vm2301, %v2274
      %2308 = vst.msk [vmem:[#allocation4 + $0x30] sm:$0xf] %vm2301, %v2275
      %2309 = vst.msk [vmem:[#allocation4 + $0x38] sm:$0xf] %vm2301, %v2276
      %2310 = vst.msk [vmem:[#allocation4 + $0x40] sm:$0xf] %vm2301, %v2277
      %2311 = vst.msk [vmem:[#allocation4 + $0x48] sm:$0xf] %vm2301, %v2278
      %2312 = vst.msk [vmem:[#allocation4 + $0x50] sm:$0xf] %vm2301, %v2279
      %2313 = vst.msk [vmem:[#allocation4 + $0x58] sm:$0xf] %vm2301, %v2280
      %2314 = vst.msk [vmem:[#allocation4 + $0x60] sm:$0xf] %vm2301, %v2281
      %2315 = vst.msk [vmem:[#allocation4 + $0x68] sm:$0xf] %vm2301, %v2282
      %2316 = vst.msk [vmem:[#allocation4 + $0x70] sm:$0xf] %vm2301, %v2283
      %2317 = vst.msk [vmem:[#allocation4 + $0x78] sm:$0xf] %vm2301, %v2284
      %2318 = vst.msk [vmem:[#allocation4 + $0x80] sm:$0xf] %vm2301, %v2285
      %2319 = vst.msk [vmem:[#allocation4 + $0x88] sm:$0xf] %vm2301, %v2286
      %2320 = vst.msk [vmem:[#allocation4 + $0x90] sm:$0xf] %vm2301, %v2287
      %2321 = vst.msk [vmem:[#allocation4 + $0x98] sm:$0xf] %vm2301, %v2288
      %2322 = vst.msk [vmem:[#allocation4 + $0xa0] sm:$0xf] %vm2301, %v2289
      %2323 = vst.msk [vmem:[#allocation4 + $0xa8] sm:$0xf] %vm2301, %v2290
      %2324 = vst.msk [vmem:[#allocation4 + $0xb0] sm:$0xf] %vm2301, %v2291
      %2325 = vst.msk [vmem:[#allocation4 + $0xb8] sm:$0xf] %vm2301, %v2292
      %2326 = vst.msk [vmem:[#allocation4 + $0xc0] sm:$0xf] %vm2301, %v2293
      %2327 = vst.msk [vmem:[#allocation4 + $0xc8] sm:$0xf] %vm2301, %v2294
      %2328 = vst.msk [vmem:[#allocation4 + $0xd0] sm:$0xf] %vm2301, %v2295
      %2329 = vst.msk [vmem:[#allocation4 + $0xd8] sm:$0xf] %vm2301, %v2296
      %2330 = vst.msk [vmem:[#allocation4 + $0xe0] sm:$0xf] %vm2301, %v2297
      %2331 = vst.msk [vmem:[#allocation4 + $0xe8] sm:$0xf] %vm2301, %v2298
      %2332 = vst.msk [vmem:[#allocation4 + $0xf0] sm:$0xf] %vm2301, %v2299
      %2333 = vst.msk [vmem:[#allocation4 + $0xf8] sm:$0xf] %vm2301, %v2300
      %s2334 = sadd.s32 %s2264, 16
      %s2335 = sshra.s32 %s2334, 3
      %s2336 = sand.u32 %s2334, 7
      %s2337 = smul.addr %s2335, 4
      %s2338 = scalar_lea.vmem [#allocation2], %s2337
      %v2339 = vld [vmem:[%s2338] sm:$0xf]
      %v2340 = vld [vmem:[%s2338 + $0x4] sm:$0xf]
      %v2341 = vld [vmem:[%s2338 + $0x8] sm:$0xf]
      %v2342 = vld [vmem:[%s2338 + $0xc] sm:$0xf]
      %v2343 = vld [vmem:[%s2338 + $0x10] sm:$0xf]
      %v2344 = vld [vmem:[%s2338 + $0x14] sm:$0xf]
      %v2345 = vld [vmem:[%s2338 + $0x18] sm:$0xf]
      %v2346 = vld [vmem:[%s2338 + $0x1c] sm:$0xf]
      %v2347 = vld [vmem:[%s2338 + $0x20] sm:$0xf]
      %v2348 = vld [vmem:[%s2338 + $0x24] sm:$0xf]
      %v2349 = vld [vmem:[%s2338 + $0x28] sm:$0xf]
      %v2350 = vld [vmem:[%s2338 + $0x2c] sm:$0xf]
      %v2351 = vld [vmem:[%s2338 + $0x30] sm:$0xf]
      %v2352 = vld [vmem:[%s2338 + $0x34] sm:$0xf]
      %v2353 = vld [vmem:[%s2338 + $0x38] sm:$0xf]
      %v2354 = vld [vmem:[%s2338 + $0x3c] sm:$0xf]
      %v2355 = vld [vmem:[%s2338 + $0x40] sm:$0xf]
      %v2356 = vld [vmem:[%s2338 + $0x44] sm:$0xf]
      %v2357 = vld [vmem:[%s2338 + $0x48] sm:$0xf]
      %v2358 = vld [vmem:[%s2338 + $0x4c] sm:$0xf]
      %v2359 = vld [vmem:[%s2338 + $0x50] sm:$0xf]
      %v2360 = vld [vmem:[%s2338 + $0x54] sm:$0xf]
      %v2361 = vld [vmem:[%s2338 + $0x58] sm:$0xf]
      %v2362 = vld [vmem:[%s2338 + $0x5c] sm:$0xf]
      %v2363 = vld [vmem:[%s2338 + $0x60] sm:$0xf]
      %v2364 = vld [vmem:[%s2338 + $0x64] sm:$0xf]
      %v2365 = vld [vmem:[%s2338 + $0x68] sm:$0xf]
      %v2366 = vld [vmem:[%s2338 + $0x6c] sm:$0xf]
      %v2367 = vld [vmem:[%s2338 + $0x70] sm:$0xf]
      %v2368 = vld [vmem:[%s2338 + $0x74] sm:$0xf]
      %v2369 = vld [vmem:[%s2338 + $0x78] sm:$0xf]
      %v2370 = vld [vmem:[%s2338 + $0x7c] sm:$0xf]
      %2403 = vrot.lane.b32.xlu0 %v2339, 16
      %v2404 = vpop.permute.xlu0 %2403
      %2405 = vrot.lane.b32.xlu0 %v2340, 16
      %v2406 = vpop.permute.xlu0 %2405
      %2407 = vrot.lane.b32.xlu0 %v2341, 16
      %v2408 = vpop.permute.xlu0 %2407
      %2409 = vrot.lane.b32.xlu0 %v2342, 16
      %v2410 = vpop.permute.xlu0 %2409
      %2411 = vrot.lane.b32.xlu0 %v2343, 16
      %v2412 = vpop.permute.xlu0 %2411
      %2413 = vrot.lane.b32.xlu0 %v2344, 16
      %v2414 = vpop.permute.xlu0 %2413
      %2415 = vrot.lane.b32.xlu0 %v2345, 16
      %v2416 = vpop.permute.xlu0 %2415
      %2417 = vrot.lane.b32.xlu0 %v2346, 16
      %v2418 = vpop.permute.xlu0 %2417
      %2419 = vrot.lane.b32.xlu0 %v2347, 16
      %v2420 = vpop.permute.xlu0 %2419
      %2421 = vrot.lane.b32.xlu0 %v2348, 16
      %v2422 = vpop.permute.xlu0 %2421
      %2423 = vrot.lane.b32.xlu0 %v2349, 16
      %v2424 = vpop.permute.xlu0 %2423
      %2425 = vrot.lane.b32.xlu0 %v2350, 16
      %v2426 = vpop.permute.xlu0 %2425
      %2427 = vrot.lane.b32.xlu0 %v2351, 16
      %v2428 = vpop.permute.xlu0 %2427
      %2429 = vrot.lane.b32.xlu0 %v2352, 16
      %v2430 = vpop.permute.xlu0 %2429
      %2431 = vrot.lane.b32.xlu0 %v2353, 16
      %v2432 = vpop.permute.xlu0 %2431
      %2433 = vrot.lane.b32.xlu0 %v2354, 16
      %v2434 = vpop.permute.xlu0 %2433
      %2435 = vrot.lane.b32.xlu0 %v2355, 16
      %v2436 = vpop.permute.xlu0 %2435
      %2437 = vrot.lane.b32.xlu0 %v2356, 16
      %v2438 = vpop.permute.xlu0 %2437
      %2439 = vrot.lane.b32.xlu0 %v2357, 16
      %v2440 = vpop.permute.xlu0 %2439
      %2441 = vrot.lane.b32.xlu0 %v2358, 16
      %v2442 = vpop.permute.xlu0 %2441
      %2443 = vrot.lane.b32.xlu0 %v2359, 16
      %v2444 = vpop.permute.xlu0 %2443
      %2445 = vrot.lane.b32.xlu0 %v2360, 16
      %v2446 = vpop.permute.xlu0 %2445
      %2447 = vrot.lane.b32.xlu0 %v2361, 16
      %v2448 = vpop.permute.xlu0 %2447
      %2449 = vrot.lane.b32.xlu0 %v2362, 16
      %v2450 = vpop.permute.xlu0 %2449
      %2451 = vrot.lane.b32.xlu0 %v2363, 16
      %v2452 = vpop.permute.xlu0 %2451
      %2453 = vrot.lane.b32.xlu0 %v2364, 16
      %v2454 = vpop.permute.xlu0 %2453
      %2455 = vrot.lane.b32.xlu0 %v2365, 16
      %v2456 = vpop.permute.xlu0 %2455
      %2457 = vrot.lane.b32.xlu0 %v2366, 16
      %v2458 = vpop.permute.xlu0 %2457
      %2459 = vrot.lane.b32.xlu0 %v2367, 16
      %v2460 = vpop.permute.xlu0 %2459
      %2461 = vrot.lane.b32.xlu0 %v2368, 16
      %v2462 = vpop.permute.xlu0 %2461
      %2463 = vrot.lane.b32.xlu0 %v2369, 16
      %v2464 = vpop.permute.xlu0 %2463
      %2465 = vrot.lane.b32.xlu0 %v2370, 16
      %v2466 = vpop.permute.xlu0 %2465
      %vm2499 = vcmask 257152
      %2500 = vst.msk [vmem:[#allocation4] sm:$0xf] %vm2499, %v2404
      %2501 = vst.msk [vmem:[#allocation4 + $0x8] sm:$0xf] %vm2499, %v2406
      %2502 = vst.msk [vmem:[#allocation4 + $0x10] sm:$0xf] %vm2499, %v2408
      %2503 = vst.msk [vmem:[#allocation4 + $0x18] sm:$0xf] %vm2499, %v2410
      %2504 = vst.msk [vmem:[#allocation4 + $0x20] sm:$0xf] %vm2499, %v2412
      %2505 = vst.msk [vmem:[#allocation4 + $0x28] sm:$0xf] %vm2499, %v2414
      %2506 = vst.msk [vmem:[#allocation4 + $0x30] sm:$0xf] %vm2499, %v2416
      %2507 = vst.msk [vmem:[#allocation4 + $0x38] sm:$0xf] %vm2499, %v2418
      %2508 = vst.msk [vmem:[#allocation4 + $0x40] sm:$0xf] %vm2499, %v2420
      %2509 = vst.msk [vmem:[#allocation4 + $0x48] sm:$0xf] %vm2499, %v2422
      %2510 = vst.msk [vmem:[#allocation4 + $0x50] sm:$0xf] %vm2499, %v2424
      %2511 = vst.msk [vmem:[#allocation4 + $0x58] sm:$0xf] %vm2499, %v2426
      %2512 = vst.msk [vmem:[#allocation4 + $0x60] sm:$0xf] %vm2499, %v2428
      %2513 = vst.msk [vmem:[#allocation4 + $0x68] sm:$0xf] %vm2499, %v2430
      %2514 = vst.msk [vmem:[#allocation4 + $0x70] sm:$0xf] %vm2499, %v2432
      %2515 = vst.msk [vmem:[#allocation4 + $0x78] sm:$0xf] %vm2499, %v2434
      %2516 = vst.msk [vmem:[#allocation4 + $0x80] sm:$0xf] %vm2499, %v2436
      %2517 = vst.msk [vmem:[#allocation4 + $0x88] sm:$0xf] %vm2499, %v2438
      %2518 = vst.msk [vmem:[#allocation4 + $0x90] sm:$0xf] %vm2499, %v2440
      %2519 = vst.msk [vmem:[#allocation4 + $0x98] sm:$0xf] %vm2499, %v2442
      %2520 = vst.msk [vmem:[#allocation4 + $0xa0] sm:$0xf] %vm2499, %v2444
      %2521 = vst.msk [vmem:[#allocation4 + $0xa8] sm:$0xf] %vm2499, %v2446
      %2522 = vst.msk [vmem:[#allocation4 + $0xb0] sm:$0xf] %vm2499, %v2448
      %2523 = vst.msk [vmem:[#allocation4 + $0xb8] sm:$0xf] %vm2499, %v2450
      %2524 = vst.msk [vmem:[#allocation4 + $0xc0] sm:$0xf] %vm2499, %v2452
      %2525 = vst.msk [vmem:[#allocation4 + $0xc8] sm:$0xf] %vm2499, %v2454
      %2526 = vst.msk [vmem:[#allocation4 + $0xd0] sm:$0xf] %vm2499, %v2456
      %2527 = vst.msk [vmem:[#allocation4 + $0xd8] sm:$0xf] %vm2499, %v2458
      %2528 = vst.msk [vmem:[#allocation4 + $0xe0] sm:$0xf] %vm2499, %v2460
      %2529 = vst.msk [vmem:[#allocation4 + $0xe8] sm:$0xf] %vm2499, %v2462
      %2530 = vst.msk [vmem:[#allocation4 + $0xf0] sm:$0xf] %vm2499, %v2464
      %2531 = vst.msk [vmem:[#allocation4 + $0xf8] sm:$0xf] %vm2499, %v2466
      %s2532 = sadd.s32 %s2264, 32
      %s2533 = sshra.s32 %s2532, 3
      %s2534 = sand.u32 %s2532, 7
      %s2535 = smul.addr %s2533, 4
      %s2536 = scalar_lea.vmem [#allocation2], %s2535
      %v2537 = vld [vmem:[%s2536] sm:$0xf]
      %v2538 = vld [vmem:[%s2536 + $0x4] sm:$0xf]
      %v2539 = vld [vmem:[%s2536 + $0x8] sm:$0xf]
      %v2540 = vld [vmem:[%s2536 + $0xc] sm:$0xf]
      %v2541 = vld [vmem:[%s2536 + $0x10] sm:$0xf]
      %v2542 = vld [vmem:[%s2536 + $0x14] sm:$0xf]
      %v2543 = vld [vmem:[%s2536 + $0x18] sm:$0xf]
      %v2544 = vld [vmem:[%s2536 + $0x1c] sm:$0xf]
      %v2545 = vld [vmem:[%s2536 + $0x20] sm:$0xf]
      %v2546 = vld [vmem:[%s2536 + $0x24] sm:$0xf]
      %v2547 = vld [vmem:[%s2536 + $0x28] sm:$0xf]
      %v2548 = vld [vmem:[%s2536 + $0x2c] sm:$0xf]
      %v2549 = vld [vmem:[%s2536 + $0x30] sm:$0xf]
      %v2550 = vld [vmem:[%s2536 + $0x34] sm:$0xf]
      %v2551 = vld [vmem:[%s2536 + $0x38] sm:$0xf]
      %v2552 = vld [vmem:[%s2536 + $0x3c] sm:$0xf]
      %v2553 = vld [vmem:[%s2536 + $0x40] sm:$0xf]
      %v2554 = vld [vmem:[%s2536 + $0x44] sm:$0xf]
      %v2555 = vld [vmem:[%s2536 + $0x48] sm:$0xf]
      %v2556 = vld [vmem:[%s2536 + $0x4c] sm:$0xf]
      %v2557 = vld [vmem:[%s2536 + $0x50] sm:$0xf]
      %v2558 = vld [vmem:[%s2536 + $0x54] sm:$0xf]
      %v2559 = vld [vmem:[%s2536 + $0x58] sm:$0xf]
      %v2560 = vld [vmem:[%s2536 + $0x5c] sm:$0xf]
      %v2561 = vld [vmem:[%s2536 + $0x60] sm:$0xf]
      %v2562 = vld [vmem:[%s2536 + $0x64] sm:$0xf]
      %v2563 = vld [vmem:[%s2536 + $0x68] sm:$0xf]
      %v2564 = vld [vmem:[%s2536 + $0x6c] sm:$0xf]
      %v2565 = vld [vmem:[%s2536 + $0x70] sm:$0xf]
      %v2566 = vld [vmem:[%s2536 + $0x74] sm:$0xf]
      %v2567 = vld [vmem:[%s2536 + $0x78] sm:$0xf]
      %v2568 = vld [vmem:[%s2536 + $0x7c] sm:$0xf]
      %2601 = vrot.lane.b32.xlu0 %v2537, 32
      %v2602 = vpop.permute.xlu0 %2601
      %2603 = vrot.lane.b32.xlu0 %v2538, 32
      %v2604 = vpop.permute.xlu0 %2603
      %2605 = vrot.lane.b32.xlu0 %v2539, 32
      %v2606 = vpop.permute.xlu0 %2605
      %2607 = vrot.lane.b32.xlu0 %v2540, 32
      %v2608 = vpop.permute.xlu0 %2607
      %2609 = vrot.lane.b32.xlu0 %v2541, 32
      %v2610 = vpop.permute.xlu0 %2609
      %2611 = vrot.lane.b32.xlu0 %v2542, 32
      %v2612 = vpop.permute.xlu0 %2611
      %2613 = vrot.lane.b32.xlu0 %v2543, 32
      %v2614 = vpop.permute.xlu0 %2613
      %2615 = vrot.lane.b32.xlu0 %v2544, 32
      %v2616 = vpop.permute.xlu0 %2615
      %2617 = vrot.lane.b32.xlu0 %v2545, 32
      %v2618 = vpop.permute.xlu0 %2617
      %2619 = vrot.lane.b32.xlu0 %v2546, 32
      %v2620 = vpop.permute.xlu0 %2619
      %2621 = vrot.lane.b32.xlu0 %v2547, 32
      %v2622 = vpop.permute.xlu0 %2621
      %2623 = vrot.lane.b32.xlu0 %v2548, 32
      %v2624 = vpop.permute.xlu0 %2623
      %2625 = vrot.lane.b32.xlu0 %v2549, 32
      %v2626 = vpop.permute.xlu0 %2625
      %2627 = vrot.lane.b32.xlu0 %v2550, 32
      %v2628 = vpop.permute.xlu0 %2627
      %2629 = vrot.lane.b32.xlu0 %v2551, 32
      %v2630 = vpop.permute.xlu0 %2629
      %2631 = vrot.lane.b32.xlu0 %v2552, 32
      %v2632 = vpop.permute.xlu0 %2631
      %2633 = vrot.lane.b32.xlu0 %v2553, 32
      %v2634 = vpop.permute.xlu0 %2633
      %2635 = vrot.lane.b32.xlu0 %v2554, 32
      %v2636 = vpop.permute.xlu0 %2635
      %2637 = vrot.lane.b32.xlu0 %v2555, 32
      %v2638 = vpop.permute.xlu0 %2637
      %2639 = vrot.lane.b32.xlu0 %v2556, 32
      %v2640 = vpop.permute.xlu0 %2639
      %2641 = vrot.lane.b32.xlu0 %v2557, 32
      %v2642 = vpop.permute.xlu0 %2641
      %2643 = vrot.lane.b32.xlu0 %v2558, 32
      %v2644 = vpop.permute.xlu0 %2643
      %2645 = vrot.lane.b32.xlu0 %v2559, 32
      %v2646 = vpop.permute.xlu0 %2645
      %2647 = vrot.lane.b32.xlu0 %v2560, 32
      %v2648 = vpop.permute.xlu0 %2647
      %2649 = vrot.lane.b32.xlu0 %v2561, 32
      %v2650 = vpop.permute.xlu0 %2649
      %2651 = vrot.lane.b32.xlu0 %v2562, 32
      %v2652 = vpop.permute.xlu0 %2651
      %2653 = vrot.lane.b32.xlu0 %v2563, 32
      %v2654 = vpop.permute.xlu0 %2653
      %2655 = vrot.lane.b32.xlu0 %v2564, 32
      %v2656 = vpop.permute.xlu0 %2655
      %2657 = vrot.lane.b32.xlu0 %v2565, 32
      %v2658 = vpop.permute.xlu0 %2657
      %2659 = vrot.lane.b32.xlu0 %v2566, 32
      %v2660 = vpop.permute.xlu0 %2659
      %2661 = vrot.lane.b32.xlu0 %v2567, 32
      %v2662 = vpop.permute.xlu0 %2661
      %2663 = vrot.lane.b32.xlu0 %v2568, 32
      %v2664 = vpop.permute.xlu0 %2663
      %vm2697 = vcmask 388352
      %2698 = vst.msk [vmem:[#allocation4] sm:$0xf] %vm2697, %v2602
      %2699 = vst.msk [vmem:[#allocation4 + $0x8] sm:$0xf] %vm2697, %v2604
      %2700 = vst.msk [vmem:[#allocation4 + $0x10] sm:$0xf] %vm2697, %v2606
      %2701 = vst.msk [vmem:[#allocation4 + $0x18] sm:$0xf] %vm2697, %v2608
      %2702 = vst.msk [vmem:[#allocation4 + $0x20] sm:$0xf] %vm2697, %v2610
      %2703 = vst.msk [vmem:[#allocation4 + $0x28] sm:$0xf] %vm2697, %v2612
      %2704 = vst.msk [vmem:[#allocation4 + $0x30] sm:$0xf] %vm2697, %v2614
      %2705 = vst.msk [vmem:[#allocation4 + $0x38] sm:$0xf] %vm2697, %v2616
      %2706 = vst.msk [vmem:[#allocation4 + $0x40] sm:$0xf] %vm2697, %v2618
      %2707 = vst.msk [vmem:[#allocation4 + $0x48] sm:$0xf] %vm2697, %v2620
      %2708 = vst.msk [vmem:[#allocation4 + $0x50] sm:$0xf] %vm2697, %v2622
      %2709 = vst.msk [vmem:[#allocation4 + $0x58] sm:$0xf] %vm2697, %v2624
      %2710 = vst.msk [vmem:[#allocation4 + $0x60] sm:$0xf] %vm2697, %v2626
      %2711 = vst.msk [vmem:[#allocation4 + $0x68] sm:$0xf] %vm2697, %v2628
      %2712 = vst.msk [vmem:[#allocation4 + $0x70] sm:$0xf] %vm2697, %v2630
      %2713 = vst.msk [vmem:[#allocation4 + $0x78] sm:$0xf] %vm2697, %v2632
      %2714 = vst.msk [vmem:[#allocation4 + $0x80] sm:$0xf] %vm2697, %v2634
      %2715 = vst.msk [vmem:[#allocation4 + $0x88] sm:$0xf] %vm2697, %v2636
      %2716 = vst.msk [vmem:[#allocation4 + $0x90] sm:$0xf] %vm2697, %v2638
      %2717 = vst.msk [vmem:[#allocation4 + $0x98] sm:$0xf] %vm2697, %v2640
      %2718 = vst.msk [vmem:[#allocation4 + $0xa0] sm:$0xf] %vm2697, %v2642
      %2719 = vst.msk [vmem:[#allocation4 + $0xa8] sm:$0xf] %vm2697, %v2644
      %2720 = vst.msk [vmem:[#allocation4 + $0xb0] sm:$0xf] %vm2697, %v2646
      %2721 = vst.msk [vmem:[#allocation4 + $0xb8] sm:$0xf] %vm2697, %v2648
      %2722 = vst.msk [vmem:[#allocation4 + $0xc0] sm:$0xf] %vm2697, %v2650
      %2723 = vst.msk [vmem:[#allocation4 + $0xc8] sm:$0xf] %vm2697, %v2652
      %2724 = vst.msk [vmem:[#allocation4 + $0xd0] sm:$0xf] %vm2697, %v2654
      %2725 = vst.msk [vmem:[#allocation4 + $0xd8] sm:$0xf] %vm2697, %v2656
      %2726 = vst.msk [vmem:[#allocation4 + $0xe0] sm:$0xf] %vm2697, %v2658
      %2727 = vst.msk [vmem:[#allocation4 + $0xe8] sm:$0xf] %vm2697, %v2660
      %2728 = vst.msk [vmem:[#allocation4 + $0xf0] sm:$0xf] %vm2697, %v2662
      %2729 = vst.msk [vmem:[#allocation4 + $0xf8] sm:$0xf] %vm2697, %v2664
      %s2730 = sadd.s32 %s2264, 256
      %s2731 = sshra.s32 %s2730, 3
      %s2732 = sand.u32 %s2730, 7
      %s2733 = smul.addr %s2731, 4
      %s2734 = scalar_lea.vmem [#allocation2], %s2733
      %v2735 = vld [vmem:[%s2734] sm:$0xf]
      %v2736 = vld [vmem:[%s2734 + $0x4] sm:$0xf]
      %v2737 = vld [vmem:[%s2734 + $0x8] sm:$0xf]
      %v2738 = vld [vmem:[%s2734 + $0xc] sm:$0xf]
      %v2739 = vld [vmem:[%s2734 + $0x10] sm:$0xf]
      %v2740 = vld [vmem:[%s2734 + $0x14] sm:$0xf]
      %v2741 = vld [vmem:[%s2734 + $0x18] sm:$0xf]
      %v2742 = vld [vmem:[%s2734 + $0x1c] sm:$0xf]
      %v2743 = vld [vmem:[%s2734 + $0x20] sm:$0xf]
      %v2744 = vld [vmem:[%s2734 + $0x24] sm:$0xf]
      %v2745 = vld [vmem:[%s2734 + $0x28] sm:$0xf]
      %v2746 = vld [vmem:[%s2734 + $0x2c] sm:$0xf]
      %v2747 = vld [vmem:[%s2734 + $0x30] sm:$0xf]
      %v2748 = vld [vmem:[%s2734 + $0x34] sm:$0xf]
      %v2749 = vld [vmem:[%s2734 + $0x38] sm:$0xf]
      %v2750 = vld [vmem:[%s2734 + $0x3c] sm:$0xf]
      %v2751 = vld [vmem:[%s2734 + $0x40] sm:$0xf]
      %v2752 = vld [vmem:[%s2734 + $0x44] sm:$0xf]
      %v2753 = vld [vmem:[%s2734 + $0x48] sm:$0xf]
      %v2754 = vld [vmem:[%s2734 + $0x4c] sm:$0xf]
      %v2755 = vld [vmem:[%s2734 + $0x50] sm:$0xf]
      %v2756 = vld [vmem:[%s2734 + $0x54] sm:$0xf]
      %v2757 = vld [vmem:[%s2734 + $0x58] sm:$0xf]
      %v2758 = vld [vmem:[%s2734 + $0x5c] sm:$0xf]
      %v2759 = vld [vmem:[%s2734 + $0x60] sm:$0xf]
      %v2760 = vld [vmem:[%s2734 + $0x64] sm:$0xf]
      %v2761 = vld [vmem:[%s2734 + $0x68] sm:$0xf]
      %v2762 = vld [vmem:[%s2734 + $0x6c] sm:$0xf]
      %v2763 = vld [vmem:[%s2734 + $0x70] sm:$0xf]
      %v2764 = vld [vmem:[%s2734 + $0x74] sm:$0xf]
      %v2765 = vld [vmem:[%s2734 + $0x78] sm:$0xf]
      %v2766 = vld [vmem:[%s2734 + $0x7c] sm:$0xf]
      %2799 = vrot.lane.b32.xlu0 %v2735, 48
      %v2800 = vpop.permute.xlu0 %2799
      %2801 = vrot.lane.b32.xlu0 %v2736, 48
      %v2802 = vpop.permute.xlu0 %2801
      %2803 = vrot.lane.b32.xlu0 %v2737, 48
      %v2804 = vpop.permute.xlu0 %2803
      %2805 = vrot.lane.b32.xlu0 %v2738, 48
      %v2806 = vpop.permute.xlu0 %2805
      %2807 = vrot.lane.b32.xlu0 %v2739, 48
      %v2808 = vpop.permute.xlu0 %2807
      %2809 = vrot.lane.b32.xlu0 %v2740, 48
      %v2810 = vpop.permute.xlu0 %2809
      %2811 = vrot.lane.b32.xlu0 %v2741, 48
      %v2812 = vpop.permute.xlu0 %2811
      %2813 = vrot.lane.b32.xlu0 %v2742, 48
      %v2814 = vpop.permute.xlu0 %2813
      %2815 = vrot.lane.b32.xlu0 %v2743, 48
      %v2816 = vpop.permute.xlu0 %2815
      %2817 = vrot.lane.b32.xlu0 %v2744, 48
      %v2818 = vpop.permute.xlu0 %2817
      %2819 = vrot.lane.b32.xlu0 %v2745, 48
      %v2820 = vpop.permute.xlu0 %2819
      %2821 = vrot.lane.b32.xlu0 %v2746, 48
      %v2822 = vpop.permute.xlu0 %2821
      %2823 = vrot.lane.b32.xlu0 %v2747, 48
      %v2824 = vpop.permute.xlu0 %2823
      %2825 = vrot.lane.b32.xlu0 %v2748, 48
      %v2826 = vpop.permute.xlu0 %2825
      %2827 = vrot.lane.b32.xlu0 %v2749, 48
      %v2828 = vpop.permute.xlu0 %2827
      %2829 = vrot.lane.b32.xlu0 %v2750, 48
      %v2830 = vpop.permute.xlu0 %2829
      %2831 = vrot.lane.b32.xlu0 %v2751, 48
      %v2832 = vpop.permute.xlu0 %2831
      %2833 = vrot.lane.b32.xlu0 %v2752, 48
      %v2834 = vpop.permute.xlu0 %2833
      %2835 = vrot.lane.b32.xlu0 %v2753, 48
      %v2836 = vpop.permute.xlu0 %2835
      %2837 = vrot.lane.b32.xlu0 %v2754, 48
      %v2838 = vpop.permute.xlu0 %2837
      %2839 = vrot.lane.b32.xlu0 %v2755, 48
      %v2840 = vpop.permute.xlu0 %2839
      %2841 = vrot.lane.b32.xlu0 %v2756, 48
      %v2842 = vpop.permute.xlu0 %2841
      %2843 = vrot.lane.b32.xlu0 %v2757, 48
      %v2844 = vpop.permute.xlu0 %2843
      %2845 = vrot.lane.b32.xlu0 %v2758, 48
      %v2846 = vpop.permute.xlu0 %2845
      %2847 = vrot.lane.b32.xlu0 %v2759, 48
      %v2848 = vpop.permute.xlu0 %2847
      %2849 = vrot.lane.b32.xlu0 %v2760, 48
      %v2850 = vpop.permute.xlu0 %2849
      %2851 = vrot.lane.b32.xlu0 %v2761, 48
      %v2852 = vpop.permute.xlu0 %2851
      %2853 = vrot.lane.b32.xlu0 %v2762, 48
      %v2854 = vpop.permute.xlu0 %2853
      %2855 = vrot.lane.b32.xlu0 %v2763, 48
      %v2856 = vpop.permute.xlu0 %2855
      %2857 = vrot.lane.b32.xlu0 %v2764, 48
      %v2858 = vpop.permute.xlu0 %2857
      %2859 = vrot.lane.b32.xlu0 %v2765, 48
      %v2860 = vpop.permute.xlu0 %2859
      %2861 = vrot.lane.b32.xlu0 %v2766, 48
      %v2862 = vpop.permute.xlu0 %2861
      %vm2895 = vcmask 519552
      %2896 = vst.msk [vmem:[#allocation4] sm:$0xf] %vm2895, %v2800
      %2897 = vst.msk [vmem:[#allocation4 + $0x8] sm:$0xf] %vm2895, %v2802
      %2898 = vst.msk [vmem:[#allocation4 + $0x10] sm:$0xf] %vm2895, %v2804
      %2899 = vst.msk [vmem:[#allocation4 + $0x18] sm:$0xf] %vm2895, %v2806
      %2900 = vst.msk [vmem:[#allocation4 + $0x20] sm:$0xf] %vm2895, %v2808
      %2901 = vst.msk [vmem:[#allocation4 + $0x28] sm:$0xf] %vm2895, %v2810
      %2902 = vst.msk [vmem:[#allocation4 + $0x30] sm:$0xf] %vm2895, %v2812
      %2903 = vst.msk [vmem:[#allocation4 + $0x38] sm:$0xf] %vm2895, %v2814
      %2904 = vst.msk [vmem:[#allocation4 + $0x40] sm:$0xf] %vm2895, %v2816
      %2905 = vst.msk [vmem:[#allocation4 + $0x48] sm:$0xf] %vm2895, %v2818
      %2906 = vst.msk [vmem:[#allocation4 + $0x50] sm:$0xf] %vm2895, %v2820
      %2907 = vst.msk [vmem:[#allocation4 + $0x58] sm:$0xf] %vm2895, %v2822
      %2908 = vst.msk [vmem:[#allocation4 + $0x60] sm:$0xf] %vm2895, %v2824
      %2909 = vst.msk [vmem:[#allocation4 + $0x68] sm:$0xf] %vm2895, %v2826
      %2910 = vst.msk [vmem:[#allocation4 + $0x70] sm:$0xf] %vm2895, %v2828
      %2911 = vst.msk [vmem:[#allocation4 + $0x78] sm:$0xf] %vm2895, %v2830
      %2912 = vst.msk [vmem:[#allocation4 + $0x80] sm:$0xf] %vm2895, %v2832
      %2913 = vst.msk [vmem:[#allocation4 + $0x88] sm:$0xf] %vm2895, %v2834
      %2914 = vst.msk [vmem:[#allocation4 + $0x90] sm:$0xf] %vm2895, %v2836
      %2915 = vst.msk [vmem:[#allocation4 + $0x98] sm:$0xf] %vm2895, %v2838
      %2916 = vst.msk [vmem:[#allocation4 + $0xa0] sm:$0xf] %vm2895, %v2840
      %2917 = vst.msk [vmem:[#allocation4 + $0xa8] sm:$0xf] %vm2895, %v2842
      %2918 = vst.msk [vmem:[#allocation4 + $0xb0] sm:$0xf] %vm2895, %v2844
      %2919 = vst.msk [vmem:[#allocation4 + $0xb8] sm:$0xf] %vm2895, %v2846
      %2920 = vst.msk [vmem:[#allocation4 + $0xc0] sm:$0xf] %vm2895, %v2848
      %2921 = vst.msk [vmem:[#allocation4 + $0xc8] sm:$0xf] %vm2895, %v2850
      %2922 = vst.msk [vmem:[#allocation4 + $0xd0] sm:$0xf] %vm2895, %v2852
      %2923 = vst.msk [vmem:[#allocation4 + $0xd8] sm:$0xf] %vm2895, %v2854
      %2924 = vst.msk [vmem:[#allocation4 + $0xe0] sm:$0xf] %vm2895, %v2856
      %2925 = vst.msk [vmem:[#allocation4 + $0xe8] sm:$0xf] %vm2895, %v2858
      %2926 = vst.msk [vmem:[#allocation4 + $0xf0] sm:$0xf] %vm2895, %v2860
      %2927 = vst.msk [vmem:[#allocation4 + $0xf8] sm:$0xf] %vm2895, %v2862
      %s2928 = sadd.s32 %s2264, 272
      %s2929 = sshra.s32 %s2928, 3
      %s2930 = sand.u32 %s2928, 7
      %s2931 = smul.addr %s2929, 4
      %s2932 = scalar_lea.vmem [#allocation2], %s2931
      %v2933 = vld [vmem:[%s2932] sm:$0xf]
      %v2934 = vld [vmem:[%s2932 + $0x4] sm:$0xf]
      %v2935 = vld [vmem:[%s2932 + $0x8] sm:$0xf]
      %v2936 = vld [vmem:[%s2932 + $0xc] sm:$0xf]
      %v2937 = vld [vmem:[%s2932 + $0x10] sm:$0xf]
      %v2938 = vld [vmem:[%s2932 + $0x14] sm:$0xf]
      %v2939 = vld [vmem:[%s2932 + $0x18] sm:$0xf]
      %v2940 = vld [vmem:[%s2932 + $0x1c] sm:$0xf]
      %v2941 = vld [vmem:[%s2932 + $0x20] sm:$0xf]
      %v2942 = vld [vmem:[%s2932 + $0x24] sm:$0xf]
      %v2943 = vld [vmem:[%s2932 + $0x28] sm:$0xf]
      %v2944 = vld [vmem:[%s2932 + $0x2c] sm:$0xf]
      %v2945 = vld [vmem:[%s2932 + $0x30] sm:$0xf]
      %v2946 = vld [vmem:[%s2932 + $0x34] sm:$0xf]
      %v2947 = vld [vmem:[%s2932 + $0x38] sm:$0xf]
      %v2948 = vld [vmem:[%s2932 + $0x3c] sm:$0xf]
      %v2949 = vld [vmem:[%s2932 + $0x40] sm:$0xf]
      %v2950 = vld [vmem:[%s2932 + $0x44] sm:$0xf]
      %v2951 = vld [vmem:[%s2932 + $0x48] sm:$0xf]
      %v2952 = vld [vmem:[%s2932 + $0x4c] sm:$0xf]
      %v2953 = vld [vmem:[%s2932 + $0x50] sm:$0xf]
      %v2954 = vld [vmem:[%s2932 + $0x54] sm:$0xf]
      %v2955 = vld [vmem:[%s2932 + $0x58] sm:$0xf]
      %v2956 = vld [vmem:[%s2932 + $0x5c] sm:$0xf]
      %v2957 = vld [vmem:[%s2932 + $0x60] sm:$0xf]
      %v2958 = vld [vmem:[%s2932 + $0x64] sm:$0xf]
      %v2959 = vld [vmem:[%s2932 + $0x68] sm:$0xf]
      %v2960 = vld [vmem:[%s2932 + $0x6c] sm:$0xf]
      %v2961 = vld [vmem:[%s2932 + $0x70] sm:$0xf]
      %v2962 = vld [vmem:[%s2932 + $0x74] sm:$0xf]
      %v2963 = vld [vmem:[%s2932 + $0x78] sm:$0xf]
      %v2964 = vld [vmem:[%s2932 + $0x7c] sm:$0xf]
      %2997 = vrot.lane.b32.xlu0 %v2933, 64
      %v2998 = vpop.permute.xlu0 %2997
      %2999 = vrot.lane.b32.xlu0 %v2934, 64
      %v3000 = vpop.permute.xlu0 %2999
      %3001 = vrot.lane.b32.xlu0 %v2935, 64
      %v3002 = vpop.permute.xlu0 %3001
      %3003 = vrot.lane.b32.xlu0 %v2936, 64
      %v3004 = vpop.permute.xlu0 %3003
      %3005 = vrot.lane.b32.xlu0 %v2937, 64
      %v3006 = vpop.permute.xlu0 %3005
      %3007 = vrot.lane.b32.xlu0 %v2938, 64
      %v3008 = vpop.permute.xlu0 %3007
      %3009 = vrot.lane.b32.xlu0 %v2939, 64
      %v3010 = vpop.permute.xlu0 %3009
      %3011 = vrot.lane.b32.xlu0 %v2940, 64
      %v3012 = vpop.permute.xlu0 %3011
      %3013 = vrot.lane.b32.xlu0 %v2941, 64
      %v3014 = vpop.permute.xlu0 %3013
      %3015 = vrot.lane.b32.xlu0 %v2942, 64
      %v3016 = vpop.permute.xlu0 %3015
      %3017 = vrot.lane.b32.xlu0 %v2943, 64
      %v3018 = vpop.permute.xlu0 %3017
      %3019 = vrot.lane.b32.xlu0 %v2944, 64
      %v3020 = vpop.permute.xlu0 %3019
      %3021 = vrot.lane.b32.xlu0 %v2945, 64
      %v3022 = vpop.permute.xlu0 %3021
      %3023 = vrot.lane.b32.xlu0 %v2946, 64
      %v3024 = vpop.permute.xlu0 %3023
      %3025 = vrot.lane.b32.xlu0 %v2947, 64
      %v3026 = vpop.permute.xlu0 %3025
      %3027 = vrot.lane.b32.xlu0 %v2948, 64
      %v3028 = vpop.permute.xlu0 %3027
      %3029 = vrot.lane.b32.xlu0 %v2949, 64
      %v3030 = vpop.permute.xlu0 %3029
      %3031 = vrot.lane.b32.xlu0 %v2950, 64
      %v3032 = vpop.permute.xlu0 %3031
      %3033 = vrot.lane.b32.xlu0 %v2951, 64
      %v3034 = vpop.permute.xlu0 %3033
      %3035 = vrot.lane.b32.xlu0 %v2952, 64
      %v3036 = vpop.permute.xlu0 %3035
      %3037 = vrot.lane.b32.xlu0 %v2953, 64
      %v3038 = vpop.permute.xlu0 %3037
      %3039 = vrot.lane.b32.xlu0 %v2954, 64
      %v3040 = vpop.permute.xlu0 %3039
      %3041 = vrot.lane.b32.xlu0 %v2955, 64
      %v3042 = vpop.permute.xlu0 %3041
      %3043 = vrot.lane.b32.xlu0 %v2956, 64
      %v3044 = vpop.permute.xlu0 %3043
      %3045 = vrot.lane.b32.xlu0 %v2957, 64
      %v3046 = vpop.permute.xlu0 %3045
      %3047 = vrot.lane.b32.xlu0 %v2958, 64
      %v3048 = vpop.permute.xlu0 %3047
      %3049 = vrot.lane.b32.xlu0 %v2959, 64
      %v3050 = vpop.permute.xlu0 %3049
      %3051 = vrot.lane.b32.xlu0 %v2960, 64
      %v3052 = vpop.permute.xlu0 %3051
      %3053 = vrot.lane.b32.xlu0 %v2961, 64
      %v3054 = vpop.permute.xlu0 %3053
      %3055 = vrot.lane.b32.xlu0 %v2962, 64
      %v3056 = vpop.permute.xlu0 %3055
      %3057 = vrot.lane.b32.xlu0 %v2963, 64
      %v3058 = vpop.permute.xlu0 %3057
      %3059 = vrot.lane.b32.xlu0 %v2964, 64
      %v3060 = vpop.permute.xlu0 %3059
      %vm3093 = vcmask 650752
      %3094 = vst.msk [vmem:[#allocation4] sm:$0xf] %vm3093, %v2998
      %3095 = vst.msk [vmem:[#allocation4 + $0x8] sm:$0xf] %vm3093, %v3000
      %3096 = vst.msk [vmem:[#allocation4 + $0x10] sm:$0xf] %vm3093, %v3002
      %3097 = vst.msk [vmem:[#allocation4 + $0x18] sm:$0xf] %vm3093, %v3004
      %3098 = vst.msk [vmem:[#allocation4 + $0x20] sm:$0xf] %vm3093, %v3006
      %3099 = vst.msk [vmem:[#allocation4 + $0x28] sm:$0xf] %vm3093, %v3008
      %3100 = vst.msk [vmem:[#allocation4 + $0x30] sm:$0xf] %vm3093, %v3010
      %3101 = vst.msk [vmem:[#allocation4 + $0x38] sm:$0xf] %vm3093, %v3012
      %3102 = vst.msk [vmem:[#allocation4 + $0x40] sm:$0xf] %vm3093, %v3014
      %3103 = vst.msk [vmem:[#allocation4 + $0x48] sm:$0xf] %vm3093, %v3016
      %3104 = vst.msk [vmem:[#allocation4 + $0x50] sm:$0xf] %vm3093, %v3018
      %3105 = vst.msk [vmem:[#allocation4 + $0x58] sm:$0xf] %vm3093, %v3020
      %3106 = vst.msk [vmem:[#allocation4 + $0x60] sm:$0xf] %vm3093, %v3022
      %3107 = vst.msk [vmem:[#allocation4 + $0x68] sm:$0xf] %vm3093, %v3024
      %3108 = vst.msk [vmem:[#allocation4 + $0x70] sm:$0xf] %vm3093, %v3026
      %3109 = vst.msk [vmem:[#allocation4 + $0x78] sm:$0xf] %vm3093, %v3028
      %3110 = vst.msk [vmem:[#allocation4 + $0x80] sm:$0xf] %vm3093, %v3030
      %3111 = vst.msk [vmem:[#allocation4 + $0x88] sm:$0xf] %vm3093, %v3032
      %3112 = vst.msk [vmem:[#allocation4 + $0x90] sm:$0xf] %vm3093, %v3034
      %3113 = vst.msk [vmem:[#allocation4 + $0x98] sm:$0xf] %vm3093, %v3036
      %3114 = vst.msk [vmem:[#allocation4 + $0xa0] sm:$0xf] %vm3093, %v3038
      %3115 = vst.msk [vmem:[#allocation4 + $0xa8] sm:$0xf] %vm3093, %v3040
      %3116 = vst.msk [vmem:[#allocation4 + $0xb0] sm:$0xf] %vm3093, %v3042
      %3117 = vst.msk [vmem:[#allocation4 + $0xb8] sm:$0xf] %vm3093, %v3044
      %3118 = vst.msk [vmem:[#allocation4 + $0xc0] sm:$0xf] %vm3093, %v3046
      %3119 = vst.msk [vmem:[#allocation4 + $0xc8] sm:$0xf] %vm3093, %v3048
      %3120 = vst.msk [vmem:[#allocation4 + $0xd0] sm:$0xf] %vm3093, %v3050
      %3121 = vst.msk [vmem:[#allocation4 + $0xd8] sm:$0xf] %vm3093, %v3052
      %3122 = vst.msk [vmem:[#allocation4 + $0xe0] sm:$0xf] %vm3093, %v3054
      %3123 = vst.msk [vmem:[#allocation4 + $0xe8] sm:$0xf] %vm3093, %v3056
      %3124 = vst.msk [vmem:[#allocation4 + $0xf0] sm:$0xf] %vm3093, %v3058
      %3125 = vst.msk [vmem:[#allocation4 + $0xf8] sm:$0xf] %vm3093, %v3060
      %s3126 = sadd.s32 %s2264, 288
      %s3127 = sshra.s32 %s3126, 3
      %s3128 = sand.u32 %s3126, 7
      %s3129 = smul.addr %s3127, 4
      %s3130 = scalar_lea.vmem [#allocation2], %s3129
      %v3131 = vld [vmem:[%s3130] sm:$0xf]
      %v3132 = vld [vmem:[%s3130 + $0x4] sm:$0xf]
      %v3133 = vld [vmem:[%s3130 + $0x8] sm:$0xf]
      %v3134 = vld [vmem:[%s3130 + $0xc] sm:$0xf]
      %v3135 = vld [vmem:[%s3130 + $0x10] sm:$0xf]
      %v3136 = vld [vmem:[%s3130 + $0x14] sm:$0xf]
      %v3137 = vld [vmem:[%s3130 + $0x18] sm:$0xf]
      %v3138 = vld [vmem:[%s3130 + $0x1c] sm:$0xf]
      %v3139 = vld [vmem:[%s3130 + $0x20] sm:$0xf]
      %v3140 = vld [vmem:[%s3130 + $0x24] sm:$0xf]
      %v3141 = vld [vmem:[%s3130 + $0x28] sm:$0xf]
      %v3142 = vld [vmem:[%s3130 + $0x2c] sm:$0xf]
      %v3143 = vld [vmem:[%s3130 + $0x30] sm:$0xf]
      %v3144 = vld [vmem:[%s3130 + $0x34] sm:$0xf]
      %v3145 = vld [vmem:[%s3130 + $0x38] sm:$0xf]
      %v3146 = vld [vmem:[%s3130 + $0x3c] sm:$0xf]
      %v3147 = vld [vmem:[%s3130 + $0x40] sm:$0xf]
      %v3148 = vld [vmem:[%s3130 + $0x44] sm:$0xf]
      %v3149 = vld [vmem:[%s3130 + $0x48] sm:$0xf]
      %v3150 = vld [vmem:[%s3130 + $0x4c] sm:$0xf]
      %v3151 = vld [vmem:[%s3130 + $0x50] sm:$0xf]
      %v3152 = vld [vmem:[%s3130 + $0x54] sm:$0xf]
      %v3153 = vld [vmem:[%s3130 + $0x58] sm:$0xf]
      %v3154 = vld [vmem:[%s3130 + $0x5c] sm:$0xf]
      %v3155 = vld [vmem:[%s3130 + $0x60] sm:$0xf]
      %v3156 = vld [vmem:[%s3130 + $0x64] sm:$0xf]
      %v3157 = vld [vmem:[%s3130 + $0x68] sm:$0xf]
      %v3158 = vld [vmem:[%s3130 + $0x6c] sm:$0xf]
      %v3159 = vld [vmem:[%s3130 + $0x70] sm:$0xf]
      %v3160 = vld [vmem:[%s3130 + $0x74] sm:$0xf]
      %v3161 = vld [vmem:[%s3130 + $0x78] sm:$0xf]
      %v3162 = vld [vmem:[%s3130 + $0x7c] sm:$0xf]
      %3195 = vrot.lane.b32.xlu0 %v3131, 80
      %v3196 = vpop.permute.xlu0 %3195
      %3197 = vrot.lane.b32.xlu0 %v3132, 80
      %v3198 = vpop.permute.xlu0 %3197
      %3199 = vrot.lane.b32.xlu0 %v3133, 80
      %v3200 = vpop.permute.xlu0 %3199
      %3201 = vrot.lane.b32.xlu0 %v3134, 80
      %v3202 = vpop.permute.xlu0 %3201
      %3203 = vrot.lane.b32.xlu0 %v3135, 80
      %v3204 = vpop.permute.xlu0 %3203
      %3205 = vrot.lane.b32.xlu0 %v3136, 80
      %v3206 = vpop.permute.xlu0 %3205
      %3207 = vrot.lane.b32.xlu0 %v3137, 80
      %v3208 = vpop.permute.xlu0 %3207
      %3209 = vrot.lane.b32.xlu0 %v3138, 80
      %v3210 = vpop.permute.xlu0 %3209
      %3211 = vrot.lane.b32.xlu0 %v3139, 80
      %v3212 = vpop.permute.xlu0 %3211
      %3213 = vrot.lane.b32.xlu0 %v3140, 80
      %v3214 = vpop.permute.xlu0 %3213
      %3215 = vrot.lane.b32.xlu0 %v3141, 80
      %v3216 = vpop.permute.xlu0 %3215
      %3217 = vrot.lane.b32.xlu0 %v3142, 80
      %v3218 = vpop.permute.xlu0 %3217
      %3219 = vrot.lane.b32.xlu0 %v3143, 80
      %v3220 = vpop.permute.xlu0 %3219
      %3221 = vrot.lane.b32.xlu0 %v3144, 80
      %v3222 = vpop.permute.xlu0 %3221
      %3223 = vrot.lane.b32.xlu0 %v3145, 80
      %v3224 = vpop.permute.xlu0 %3223
      %3225 = vrot.lane.b32.xlu0 %v3146, 80
      %v3226 = vpop.permute.xlu0 %3225
      %3227 = vrot.lane.b32.xlu0 %v3147, 80
      %v3228 = vpop.permute.xlu0 %3227
      %3229 = vrot.lane.b32.xlu0 %v3148, 80
      %v3230 = vpop.permute.xlu0 %3229
      %3231 = vrot.lane.b32.xlu0 %v3149, 80
      %v3232 = vpop.permute.xlu0 %3231
      %3233 = vrot.lane.b32.xlu0 %v3150, 80
      %v3234 = vpop.permute.xlu0 %3233
      %3235 = vrot.lane.b32.xlu0 %v3151, 80
      %v3236 = vpop.permute.xlu0 %3235
      %3237 = vrot.lane.b32.xlu0 %v3152, 80
      %v3238 = vpop.permute.xlu0 %3237
      %3239 = vrot.lane.b32.xlu0 %v3153, 80
      %v3240 = vpop.permute.xlu0 %3239
      %3241 = vrot.lane.b32.xlu0 %v3154, 80
      %v3242 = vpop.permute.xlu0 %3241
      %3243 = vrot.lane.b32.xlu0 %v3155, 80
      %v3244 = vpop.permute.xlu0 %3243
      %3245 = vrot.lane.b32.xlu0 %v3156, 80
      %v3246 = vpop.permute.xlu0 %3245
      %3247 = vrot.lane.b32.xlu0 %v3157, 80
      %v3248 = vpop.permute.xlu0 %3247
      %3249 = vrot.lane.b32.xlu0 %v3158, 80
      %v3250 = vpop.permute.xlu0 %3249
      %3251 = vrot.lane.b32.xlu0 %v3159, 80
      %v3252 = vpop.permute.xlu0 %3251
      %3253 = vrot.lane.b32.xlu0 %v3160, 80
      %v3254 = vpop.permute.xlu0 %3253
      %3255 = vrot.lane.b32.xlu0 %v3161, 80
      %v3256 = vpop.permute.xlu0 %3255
      %3257 = vrot.lane.b32.xlu0 %v3162, 80
      %v3258 = vpop.permute.xlu0 %3257
      %vm3291 = vcmask 781952
      %3292 = vst.msk [vmem:[#allocation4] sm:$0xf] %vm3291, %v3196
      %3293 = vst.msk [vmem:[#allocation4 + $0x8] sm:$0xf] %vm3291, %v3198
      %3294 = vst.msk [vmem:[#allocation4 + $0x10] sm:$0xf] %vm3291, %v3200
      %3295 = vst.msk [vmem:[#allocation4 + $0x18] sm:$0xf] %vm3291, %v3202
      %3296 = vst.msk [vmem:[#allocation4 + $0x20] sm:$0xf] %vm3291, %v3204
      %3297 = vst.msk [vmem:[#allocation4 + $0x28] sm:$0xf] %vm3291, %v3206
      %3298 = vst.msk [vmem:[#allocation4 + $0x30] sm:$0xf] %vm3291, %v3208
      %3299 = vst.msk [vmem:[#allocation4 + $0x38] sm:$0xf] %vm3291, %v3210
      %3300 = vst.msk [vmem:[#allocation4 + $0x40] sm:$0xf] %vm3291, %v3212
      %3301 = vst.msk [vmem:[#allocation4 + $0x48] sm:$0xf] %vm3291, %v3214
      %3302 = vst.msk [vmem:[#allocation4 + $0x50] sm:$0xf] %vm3291, %v3216
      %3303 = vst.msk [vmem:[#allocation4 + $0x58] sm:$0xf] %vm3291, %v3218
      %3304 = vst.msk [vmem:[#allocation4 + $0x60] sm:$0xf] %vm3291, %v3220
      %3305 = vst.msk [vmem:[#allocation4 + $0x68] sm:$0xf] %vm3291, %v3222
      %3306 = vst.msk [vmem:[#allocation4 + $0x70] sm:$0xf] %vm3291, %v3224
      %3307 = vst.msk [vmem:[#allocation4 + $0x78] sm:$0xf] %vm3291, %v3226
      %3308 = vst.msk [vmem:[#allocation4 + $0x80] sm:$0xf] %vm3291, %v3228
      %3309 = vst.msk [vmem:[#allocation4 + $0x88] sm:$0xf] %vm3291, %v3230
      %3310 = vst.msk [vmem:[#allocation4 + $0x90] sm:$0xf] %vm3291, %v3232
      %3311 = vst.msk [vmem:[#allocation4 + $0x98] sm:$0xf] %vm3291, %v3234
      %3312 = vst.msk [vmem:[#allocation4 + $0xa0] sm:$0xf] %vm3291, %v3236
      %3313 = vst.msk [vmem:[#allocation4 + $0xa8] sm:$0xf] %vm3291, %v3238
      %3314 = vst.msk [vmem:[#allocation4 + $0xb0] sm:$0xf] %vm3291, %v3240
      %3315 = vst.msk [vmem:[#allocation4 + $0xb8] sm:$0xf] %vm3291, %v3242
      %3316 = vst.msk [vmem:[#allocation4 + $0xc0] sm:$0xf] %vm3291, %v3244
      %3317 = vst.msk [vmem:[#allocation4 + $0xc8] sm:$0xf] %vm3291, %v3246
      %3318 = vst.msk [vmem:[#allocation4 + $0xd0] sm:$0xf] %vm3291, %v3248
      %3319 = vst.msk [vmem:[#allocation4 + $0xd8] sm:$0xf] %vm3291, %v3250
      %3320 = vst.msk [vmem:[#allocation4 + $0xe0] sm:$0xf] %vm3291, %v3252
      %3321 = vst.msk [vmem:[#allocation4 + $0xe8] sm:$0xf] %vm3291, %v3254
      %3322 = vst.msk [vmem:[#allocation4 + $0xf0] sm:$0xf] %vm3291, %v3256
      %3323 = vst.msk [vmem:[#allocation4 + $0xf8] sm:$0xf] %vm3291, %v3258
      %s3324 = sadd.s32 %s2264, 512
      %s3325 = sshra.s32 %s3324, 3
      %s3326 = sand.u32 %s3324, 7
      %s3327 = smul.addr %s3325, 4
      %s3328 = scalar_lea.vmem [#allocation2], %s3327
      %v3329 = vld [vmem:[%s3328] sm:$0xf]
      %v3330 = vld [vmem:[%s3328 + $0x4] sm:$0xf]
      %v3331 = vld [vmem:[%s3328 + $0x8] sm:$0xf]
      %v3332 = vld [vmem:[%s3328 + $0xc] sm:$0xf]
      %v3333 = vld [vmem:[%s3328 + $0x10] sm:$0xf]
      %v3334 = vld [vmem:[%s3328 + $0x14] sm:$0xf]
      %v3335 = vld [vmem:[%s3328 + $0x18] sm:$0xf]
      %v3336 = vld [vmem:[%s3328 + $0x1c] sm:$0xf]
      %v3337 = vld [vmem:[%s3328 + $0x20] sm:$0xf]
      %v3338 = vld [vmem:[%s3328 + $0x24] sm:$0xf]
      %v3339 = vld [vmem:[%s3328 + $0x28] sm:$0xf]
      %v3340 = vld [vmem:[%s3328 + $0x2c] sm:$0xf]
      %v3341 = vld [vmem:[%s3328 + $0x30] sm:$0xf]
      %v3342 = vld [vmem:[%s3328 + $0x34] sm:$0xf]
      %v3343 = vld [vmem:[%s3328 + $0x38] sm:$0xf]
      %v3344 = vld [vmem:[%s3328 + $0x3c] sm:$0xf]
      %v3345 = vld [vmem:[%s3328 + $0x40] sm:$0xf]
      %v3346 = vld [vmem:[%s3328 + $0x44] sm:$0xf]
      %v3347 = vld [vmem:[%s3328 + $0x48] sm:$0xf]
      %v3348 = vld [vmem:[%s3328 + $0x4c] sm:$0xf]
      %v3349 = vld [vmem:[%s3328 + $0x50] sm:$0xf]
      %v3350 = vld [vmem:[%s3328 + $0x54] sm:$0xf]
      %v3351 = vld [vmem:[%s3328 + $0x58] sm:$0xf]
      %v3352 = vld [vmem:[%s3328 + $0x5c] sm:$0xf]
      %v3353 = vld [vmem:[%s3328 + $0x60] sm:$0xf]
      %v3354 = vld [vmem:[%s3328 + $0x64] sm:$0xf]
      %v3355 = vld [vmem:[%s3328 + $0x68] sm:$0xf]
      %v3356 = vld [vmem:[%s3328 + $0x6c] sm:$0xf]
      %v3357 = vld [vmem:[%s3328 + $0x70] sm:$0xf]
      %v3358 = vld [vmem:[%s3328 + $0x74] sm:$0xf]
      %v3359 = vld [vmem:[%s3328 + $0x78] sm:$0xf]
      %v3360 = vld [vmem:[%s3328 + $0x7c] sm:$0xf]
      %3393 = vrot.lane.b32.xlu0 %v3329, 96
      %v3394 = vpop.permute.xlu0 %3393
      %3395 = vrot.lane.b32.xlu0 %v3330, 96
      %v3396 = vpop.permute.xlu0 %3395
      %3397 = vrot.lane.b32.xlu0 %v3331, 96
      %v3398 = vpop.permute.xlu0 %3397
      %3399 = vrot.lane.b32.xlu0 %v3332, 96
      %v3400 = vpop.permute.xlu0 %3399
      %3401 = vrot.lane.b32.xlu0 %v3333, 96
      %v3402 = vpop.permute.xlu0 %3401
      %3403 = vrot.lane.b32.xlu0 %v3334, 96
      %v3404 = vpop.permute.xlu0 %3403
      %3405 = vrot.lane.b32.xlu0 %v3335, 96
      %v3406 = vpop.permute.xlu0 %3405
      %3407 = vrot.lane.b32.xlu0 %v3336, 96
      %v3408 = vpop.permute.xlu0 %3407
      %3409 = vrot.lane.b32.xlu0 %v3337, 96
      %v3410 = vpop.permute.xlu0 %3409
      %3411 = vrot.lane.b32.xlu0 %v3338, 96
      %v3412 = vpop.permute.xlu0 %3411
      %3413 = vrot.lane.b32.xlu0 %v3339, 96
      %v3414 = vpop.permute.xlu0 %3413
      %3415 = vrot.lane.b32.xlu0 %v3340, 96
      %v3416 = vpop.permute.xlu0 %3415
      %3417 = vrot.lane.b32.xlu0 %v3341, 96
      %v3418 = vpop.permute.xlu0 %3417
      %3419 = vrot.lane.b32.xlu0 %v3342, 96
      %v3420 = vpop.permute.xlu0 %3419
      %3421 = vrot.lane.b32.xlu0 %v3343, 96
      %v3422 = vpop.permute.xlu0 %3421
      %3423 = vrot.lane.b32.xlu0 %v3344, 96
      %v3424 = vpop.permute.xlu0 %3423
      %3425 = vrot.lane.b32.xlu0 %v3345, 96
      %v3426 = vpop.permute.xlu0 %3425
      %3427 = vrot.lane.b32.xlu0 %v3346, 96
      %v3428 = vpop.permute.xlu0 %3427
      %3429 = vrot.lane.b32.xlu0 %v3347, 96
      %v3430 = vpop.permute.xlu0 %3429
      %3431 = vrot.lane.b32.xlu0 %v3348, 96
      %v3432 = vpop.permute.xlu0 %3431
      %3433 = vrot.lane.b32.xlu0 %v3349, 96
      %v3434 = vpop.permute.xlu0 %3433
      %3435 = vrot.lane.b32.xlu0 %v3350, 96
      %v3436 = vpop.permute.xlu0 %3435
      %3437 = vrot.lane.b32.xlu0 %v3351, 96
      %v3438 = vpop.permute.xlu0 %3437
      %3439 = vrot.lane.b32.xlu0 %v3352, 96
      %v3440 = vpop.permute.xlu0 %3439
      %3441 = vrot.lane.b32.xlu0 %v3353, 96
      %v3442 = vpop.permute.xlu0 %3441
      %3443 = vrot.lane.b32.xlu0 %v3354, 96
      %v3444 = vpop.permute.xlu0 %3443
      %3445 = vrot.lane.b32.xlu0 %v3355, 96
      %v3446 = vpop.permute.xlu0 %3445
      %3447 = vrot.lane.b32.xlu0 %v3356, 96
      %v3448 = vpop.permute.xlu0 %3447
      %3449 = vrot.lane.b32.xlu0 %v3357, 96
      %v3450 = vpop.permute.xlu0 %3449
      %3451 = vrot.lane.b32.xlu0 %v3358, 96
      %v3452 = vpop.permute.xlu0 %3451
      %3453 = vrot.lane.b32.xlu0 %v3359, 96
      %v3454 = vpop.permute.xlu0 %3453
      %3455 = vrot.lane.b32.xlu0 %v3360, 96
      %v3456 = vpop.permute.xlu0 %3455
      %vm3489 = vcmask 913152
      %3490 = vst.msk [vmem:[#allocation4] sm:$0xf] %vm3489, %v3394
      %3491 = vst.msk [vmem:[#allocation4 + $0x8] sm:$0xf] %vm3489, %v3396
      %3492 = vst.msk [vmem:[#allocation4 + $0x10] sm:$0xf] %vm3489, %v3398
      %3493 = vst.msk [vmem:[#allocation4 + $0x18] sm:$0xf] %vm3489, %v3400
      %3494 = vst.msk [vmem:[#allocation4 + $0x20] sm:$0xf] %vm3489, %v3402
      %3495 = vst.msk [vmem:[#allocation4 + $0x28] sm:$0xf] %vm3489, %v3404
      %3496 = vst.msk [vmem:[#allocation4 + $0x30] sm:$0xf] %vm3489, %v3406
      %3497 = vst.msk [vmem:[#allocation4 + $0x38] sm:$0xf] %vm3489, %v3408
      %3498 = vst.msk [vmem:[#allocation4 + $0x40] sm:$0xf] %vm3489, %v3410
      %3499 = vst.msk [vmem:[#allocation4 + $0x48] sm:$0xf] %vm3489, %v3412
      %3500 = vst.msk [vmem:[#allocation4 + $0x50] sm:$0xf] %vm3489, %v3414
      %3501 = vst.msk [vmem:[#allocation4 + $0x58] sm:$0xf] %vm3489, %v3416
      %3502 = vst.msk [vmem:[#allocation4 + $0x60] sm:$0xf] %vm3489, %v3418
      %3503 = vst.msk [vmem:[#allocation4 + $0x68] sm:$0xf] %vm3489, %v3420
      %3504 = vst.msk [vmem:[#allocation4 + $0x70] sm:$0xf] %vm3489, %v3422
      %3505 = vst.msk [vmem:[#allocation4 + $0x78] sm:$0xf] %vm3489, %v3424
      %3506 = vst.msk [vmem:[#allocation4 + $0x80] sm:$0xf] %vm3489, %v3426
      %3507 = vst.msk [vmem:[#allocation4 + $0x88] sm:$0xf] %vm3489, %v3428
      %3508 = vst.msk [vmem:[#allocation4 + $0x90] sm:$0xf] %vm3489, %v3430
      %3509 = vst.msk [vmem:[#allocation4 + $0x98] sm:$0xf] %vm3489, %v3432
      %3510 = vst.msk [vmem:[#allocation4 + $0xa0] sm:$0xf] %vm3489, %v3434
      %3511 = vst.msk [vmem:[#allocation4 + $0xa8] sm:$0xf] %vm3489, %v3436
      %3512 = vst.msk [vmem:[#allocation4 + $0xb0] sm:$0xf] %vm3489, %v3438
      %3513 = vst.msk [vmem:[#allocation4 + $0xb8] sm:$0xf] %vm3489, %v3440
      %3514 = vst.msk [vmem:[#allocation4 + $0xc0] sm:$0xf] %vm3489, %v3442
      %3515 = vst.msk [vmem:[#allocation4 + $0xc8] sm:$0xf] %vm3489, %v3444
      %3516 = vst.msk [vmem:[#allocation4 + $0xd0] sm:$0xf] %vm3489, %v3446
      %3517 = vst.msk [vmem:[#allocation4 + $0xd8] sm:$0xf] %vm3489, %v3448
      %3518 = vst.msk [vmem:[#allocation4 + $0xe0] sm:$0xf] %vm3489, %v3450
      %3519 = vst.msk [vmem:[#allocation4 + $0xe8] sm:$0xf] %vm3489, %v3452
      %3520 = vst.msk [vmem:[#allocation4 + $0xf0] sm:$0xf] %vm3489, %v3454
      %3521 = vst.msk [vmem:[#allocation4 + $0xf8] sm:$0xf] %vm3489, %v3456
      %s3522 = sadd.s32 %s2264, 528
      %s3523 = sshra.s32 %s3522, 3
      %s3524 = sand.u32 %s3522, 7
      %s3525 = smul.addr %s3523, 4
      %s3526 = scalar_lea.vmem [#allocation2], %s3525
      %v3527 = vld [vmem:[%s3526] sm:$0xf]
      %v3528 = vld [vmem:[%s3526 + $0x4] sm:$0xf]
      %v3529 = vld [vmem:[%s3526 + $0x8] sm:$0xf]
      %v3530 = vld [vmem:[%s3526 + $0xc] sm:$0xf]
      %v3531 = vld [vmem:[%s3526 + $0x10] sm:$0xf]
      %v3532 = vld [vmem:[%s3526 + $0x14] sm:$0xf]
      %v3533 = vld [vmem:[%s3526 + $0x18] sm:$0xf]
      %v3534 = vld [vmem:[%s3526 + $0x1c] sm:$0xf]
      %v3535 = vld [vmem:[%s3526 + $0x20] sm:$0xf]
      %v3536 = vld [vmem:[%s3526 + $0x24] sm:$0xf]
      %v3537 = vld [vmem:[%s3526 + $0x28] sm:$0xf]
      %v3538 = vld [vmem:[%s3526 + $0x2c] sm:$0xf]
      %v3539 = vld [vmem:[%s3526 + $0x30] sm:$0xf]
      %v3540 = vld [vmem:[%s3526 + $0x34] sm:$0xf]
      %v3541 = vld [vmem:[%s3526 + $0x38] sm:$0xf]
      %v3542 = vld [vmem:[%s3526 + $0x3c] sm:$0xf]
      %v3543 = vld [vmem:[%s3526 + $0x40] sm:$0xf]
      %v3544 = vld [vmem:[%s3526 + $0x44] sm:$0xf]
      %v3545 = vld [vmem:[%s3526 + $0x48] sm:$0xf]
      %v3546 = vld [vmem:[%s3526 + $0x4c] sm:$0xf]
      %v3547 = vld [vmem:[%s3526 + $0x50] sm:$0xf]
      %v3548 = vld [vmem:[%s3526 + $0x54] sm:$0xf]
      %v3549 = vld [vmem:[%s3526 + $0x58] sm:$0xf]
      %v3550 = vld [vmem:[%s3526 + $0x5c] sm:$0xf]
      %v3551 = vld [vmem:[%s3526 + $0x60] sm:$0xf]
      %v3552 = vld [vmem:[%s3526 + $0x64] sm:$0xf]
      %v3553 = vld [vmem:[%s3526 + $0x68] sm:$0xf]
      %v3554 = vld [vmem:[%s3526 + $0x6c] sm:$0xf]
      %v3555 = vld [vmem:[%s3526 + $0x70] sm:$0xf]
      %v3556 = vld [vmem:[%s3526 + $0x74] sm:$0xf]
      %v3557 = vld [vmem:[%s3526 + $0x78] sm:$0xf]
      %v3558 = vld [vmem:[%s3526 + $0x7c] sm:$0xf]
      %3591 = vrot.lane.b32.xlu0 %v3527, 112
      %v3592 = vpop.permute.xlu0 %3591
      %3593 = vrot.lane.b32.xlu0 %v3528, 112
      %v3594 = vpop.permute.xlu0 %3593
      %3595 = vrot.lane.b32.xlu0 %v3529, 112
      %v3596 = vpop.permute.xlu0 %3595
      %3597 = vrot.lane.b32.xlu0 %v3530, 112
      %v3598 = vpop.permute.xlu0 %3597
      %3599 = vrot.lane.b32.xlu0 %v3531, 112
      %v3600 = vpop.permute.xlu0 %3599
      %3601 = vrot.lane.b32.xlu0 %v3532, 112
      %v3602 = vpop.permute.xlu0 %3601
      %3603 = vrot.lane.b32.xlu0 %v3533, 112
      %v3604 = vpop.permute.xlu0 %3603
      %3605 = vrot.lane.b32.xlu0 %v3534, 112
      %v3606 = vpop.permute.xlu0 %3605
      %3607 = vrot.lane.b32.xlu0 %v3535, 112
      %v3608 = vpop.permute.xlu0 %3607
      %3609 = vrot.lane.b32.xlu0 %v3536, 112
      %v3610 = vpop.permute.xlu0 %3609
      %3611 = vrot.lane.b32.xlu0 %v3537, 112
      %v3612 = vpop.permute.xlu0 %3611
      %3613 = vrot.lane.b32.xlu0 %v3538, 112
      %v3614 = vpop.permute.xlu0 %3613
      %3615 = vrot.lane.b32.xlu0 %v3539, 112
      %v3616 = vpop.permute.xlu0 %3615
      %3617 = vrot.lane.b32.xlu0 %v3540, 112
      %v3618 = vpop.permute.xlu0 %3617
      %3619 = vrot.lane.b32.xlu0 %v3541, 112
      %v3620 = vpop.permute.xlu0 %3619
      %3621 = vrot.lane.b32.xlu0 %v3542, 112
      %v3622 = vpop.permute.xlu0 %3621
      %3623 = vrot.lane.b32.xlu0 %v3543, 112
      %v3624 = vpop.permute.xlu0 %3623
      %3625 = vrot.lane.b32.xlu0 %v3544, 112
      %v3626 = vpop.permute.xlu0 %3625
      %3627 = vrot.lane.b32.xlu0 %v3545, 112
      %v3628 = vpop.permute.xlu0 %3627
      %3629 = vrot.lane.b32.xlu0 %v3546, 112
      %v3630 = vpop.permute.xlu0 %3629
      %3631 = vrot.lane.b32.xlu0 %v3547, 112
      %v3632 = vpop.permute.xlu0 %3631
      %3633 = vrot.lane.b32.xlu0 %v3548, 112
      %v3634 = vpop.permute.xlu0 %3633
      %3635 = vrot.lane.b32.xlu0 %v3549, 112
      %v3636 = vpop.permute.xlu0 %3635
      %3637 = vrot.lane.b32.xlu0 %v3550, 112
      %v3638 = vpop.permute.xlu0 %3637
      %3639 = vrot.lane.b32.xlu0 %v3551, 112
      %v3640 = vpop.permute.xlu0 %3639
      %3641 = vrot.lane.b32.xlu0 %v3552, 112
      %v3642 = vpop.permute.xlu0 %3641
      %3643 = vrot.lane.b32.xlu0 %v3553, 112
      %v3644 = vpop.permute.xlu0 %3643
      %3645 = vrot.lane.b32.xlu0 %v3554, 112
      %v3646 = vpop.permute.xlu0 %3645
      %3647 = vrot.lane.b32.xlu0 %v3555, 112
      %v3648 = vpop.permute.xlu0 %3647
      %3649 = vrot.lane.b32.xlu0 %v3556, 112
      %v3650 = vpop.permute.xlu0 %3649
      %3651 = vrot.lane.b32.xlu0 %v3557, 112
      %v3652 = vpop.permute.xlu0 %3651
      %3653 = vrot.lane.b32.xlu0 %v3558, 112
      %v3654 = vpop.permute.xlu0 %3653
      %vm3687 = vcmask 1044352
      %3688 = vst.msk [vmem:[#allocation4] sm:$0xf] %vm3687, %v3592
      %3689 = vst.msk [vmem:[#allocation4 + $0x8] sm:$0xf] %vm3687, %v3594
      %3690 = vst.msk [vmem:[#allocation4 + $0x10] sm:$0xf] %vm3687, %v3596
      %3691 = vst.msk [vmem:[#allocation4 + $0x18] sm:$0xf] %vm3687, %v3598
      %3692 = vst.msk [vmem:[#allocation4 + $0x20] sm:$0xf] %vm3687, %v3600
      %3693 = vst.msk [vmem:[#allocation4 + $0x28] sm:$0xf] %vm3687, %v3602
      %3694 = vst.msk [vmem:[#allocation4 + $0x30] sm:$0xf] %vm3687, %v3604
      %3695 = vst.msk [vmem:[#allocation4 + $0x38] sm:$0xf] %vm3687, %v3606
      %3696 = vst.msk [vmem:[#allocation4 + $0x40] sm:$0xf] %vm3687, %v3608
      %3697 = vst.msk [vmem:[#allocation4 + $0x48] sm:$0xf] %vm3687, %v3610
      %3698 = vst.msk [vmem:[#allocation4 + $0x50] sm:$0xf] %vm3687, %v3612
      %3699 = vst.msk [vmem:[#allocation4 + $0x58] sm:$0xf] %vm3687, %v3614
      %3700 = vst.msk [vmem:[#allocation4 + $0x60] sm:$0xf] %vm3687, %v3616
      %3701 = vst.msk [vmem:[#allocation4 + $0x68] sm:$0xf] %vm3687, %v3618
      %3702 = vst.msk [vmem:[#allocation4 + $0x70] sm:$0xf] %vm3687, %v3620
      %3703 = vst.msk [vmem:[#allocation4 + $0x78] sm:$0xf] %vm3687, %v3622
      %3704 = vst.msk [vmem:[#allocation4 + $0x80] sm:$0xf] %vm3687, %v3624
      %3705 = vst.msk [vmem:[#allocation4 + $0x88] sm:$0xf] %vm3687, %v3626
      %3706 = vst.msk [vmem:[#allocation4 + $0x90] sm:$0xf] %vm3687, %v3628
      %3707 = vst.msk [vmem:[#allocation4 + $0x98] sm:$0xf] %vm3687, %v3630
      %3708 = vst.msk [vmem:[#allocation4 + $0xa0] sm:$0xf] %vm3687, %v3632
      %3709 = vst.msk [vmem:[#allocation4 + $0xa8] sm:$0xf] %vm3687, %v3634
      %3710 = vst.msk [vmem:[#allocation4 + $0xb0] sm:$0xf] %vm3687, %v3636
      %3711 = vst.msk [vmem:[#allocation4 + $0xb8] sm:$0xf] %vm3687, %v3638
      %3712 = vst.msk [vmem:[#allocation4 + $0xc0] sm:$0xf] %vm3687, %v3640
      %3713 = vst.msk [vmem:[#allocation4 + $0xc8] sm:$0xf] %vm3687, %v3642
      %3714 = vst.msk [vmem:[#allocation4 + $0xd0] sm:$0xf] %vm3687, %v3644
      %3715 = vst.msk [vmem:[#allocation4 + $0xd8] sm:$0xf] %vm3687, %v3646
      %3716 = vst.msk [vmem:[#allocation4 + $0xe0] sm:$0xf] %vm3687, %v3648
      %3717 = vst.msk [vmem:[#allocation4 + $0xe8] sm:$0xf] %vm3687, %v3650
      %3718 = vst.msk [vmem:[#allocation4 + $0xf0] sm:$0xf] %vm3687, %v3652
      %3719 = vst.msk [vmem:[#allocation4 + $0xf8] sm:$0xf] %vm3687, %v3654
      %s3720 = sadd.s32 %s2264, 544
      %s3721 = sshra.s32 %s3720, 3
      %s3722 = sand.u32 %s3720, 7
      %s3723 = smul.addr %s3721, 4
      %s3724 = scalar_lea.vmem [#allocation2], %s3723
      %v3725 = vld [vmem:[%s3724] sm:$0xf]
      %v3726 = vld [vmem:[%s3724 + $0x4] sm:$0xf]
      %v3727 = vld [vmem:[%s3724 + $0x8] sm:$0xf]
      %v3728 = vld [vmem:[%s3724 + $0xc] sm:$0xf]
      %v3729 = vld [vmem:[%s3724 + $0x10] sm:$0xf]
      %v3730 = vld [vmem:[%s3724 + $0x14] sm:$0xf]
      %v3731 = vld [vmem:[%s3724 + $0x18] sm:$0xf]
      %v3732 = vld [vmem:[%s3724 + $0x1c] sm:$0xf]
      %v3733 = vld [vmem:[%s3724 + $0x20] sm:$0xf]
      %v3734 = vld [vmem:[%s3724 + $0x24] sm:$0xf]
      %v3735 = vld [vmem:[%s3724 + $0x28] sm:$0xf]
      %v3736 = vld [vmem:[%s3724 + $0x2c] sm:$0xf]
      %v3737 = vld [vmem:[%s3724 + $0x30] sm:$0xf]
      %v3738 = vld [vmem:[%s3724 + $0x34] sm:$0xf]
      %v3739 = vld [vmem:[%s3724 + $0x38] sm:$0xf]
      %v3740 = vld [vmem:[%s3724 + $0x3c] sm:$0xf]
      %v3741 = vld [vmem:[%s3724 + $0x40] sm:$0xf]
      %v3742 = vld [vmem:[%s3724 + $0x44] sm:$0xf]
      %v3743 = vld [vmem:[%s3724 + $0x48] sm:$0xf]
      %v3744 = vld [vmem:[%s3724 + $0x4c] sm:$0xf]
      %v3745 = vld [vmem:[%s3724 + $0x50] sm:$0xf]
      %v3746 = vld [vmem:[%s3724 + $0x54] sm:$0xf]
      %v3747 = vld [vmem:[%s3724 + $0x58] sm:$0xf]
      %v3748 = vld [vmem:[%s3724 + $0x5c] sm:$0xf]
      %v3749 = vld [vmem:[%s3724 + $0x60] sm:$0xf]
      %v3750 = vld [vmem:[%s3724 + $0x64] sm:$0xf]
      %v3751 = vld [vmem:[%s3724 + $0x68] sm:$0xf]
      %v3752 = vld [vmem:[%s3724 + $0x6c] sm:$0xf]
      %v3753 = vld [vmem:[%s3724 + $0x70] sm:$0xf]
      %v3754 = vld [vmem:[%s3724 + $0x74] sm:$0xf]
      %v3755 = vld [vmem:[%s3724 + $0x78] sm:$0xf]
      %v3756 = vld [vmem:[%s3724 + $0x7c] sm:$0xf]
      %3757 = vst.msk [vmem:[#allocation4 + $0x4] sm:$0xf] %vm2301, %v3725
      %3758 = vst.msk [vmem:[#allocation4 + $0xc] sm:$0xf] %vm2301, %v3726
      %3759 = vst.msk [vmem:[#allocation4 + $0x14] sm:$0xf] %vm2301, %v3727
      %3760 = vst.msk [vmem:[#allocation4 + $0x1c] sm:$0xf] %vm2301, %v3728
      %3761 = vst.msk [vmem:[#allocation4 + $0x24] sm:$0xf] %vm2301, %v3729
      %3762 = vst.msk [vmem:[#allocation4 + $0x2c] sm:$0xf] %vm2301, %v3730
      %3763 = vst.msk [vmem:[#allocation4 + $0x34] sm:$0xf] %vm2301, %v3731
      %3764 = vst.msk [vmem:[#allocation4 + $0x3c] sm:$0xf] %vm2301, %v3732
      %3765 = vst.msk [vmem:[#allocation4 + $0x44] sm:$0xf] %vm2301, %v3733
      %3766 = vst.msk [vmem:[#allocation4 + $0x4c] sm:$0xf] %vm2301, %v3734
      %3767 = vst.msk [vmem:[#allocation4 + $0x54] sm:$0xf] %vm2301, %v3735
      %3768 = vst.msk [vmem:[#allocation4 + $0x5c] sm:$0xf] %vm2301, %v3736
      %3769 = vst.msk [vmem:[#allocation4 + $0x64] sm:$0xf] %vm2301, %v3737
      %3770 = vst.msk [vmem:[#allocation4 + $0x6c] sm:$0xf] %vm2301, %v3738
      %3771 = vst.msk [vmem:[#allocation4 + $0x74] sm:$0xf] %vm2301, %v3739
      %3772 = vst.msk [vmem:[#allocation4 + $0x7c] sm:$0xf] %vm2301, %v3740
      %3773 = vst.msk [vmem:[#allocation4 + $0x84] sm:$0xf] %vm2301, %v3741
      %3774 = vst.msk [vmem:[#allocation4 + $0x8c] sm:$0xf] %vm2301, %v3742
      %3775 = vst.msk [vmem:[#allocation4 + $0x94] sm:$0xf] %vm2301, %v3743
      %3776 = vst.msk [vmem:[#allocation4 + $0x9c] sm:$0xf] %vm2301, %v3744
      %3777 = vst.msk [vmem:[#allocation4 + $0xa4] sm:$0xf] %vm2301, %v3745
      %3778 = vst.msk [vmem:[#allocation4 + $0xac] sm:$0xf] %vm2301, %v3746
      %3779 = vst.msk [vmem:[#allocation4 + $0xb4] sm:$0xf] %vm2301, %v3747
      %3780 = vst.msk [vmem:[#allocation4 + $0xbc] sm:$0xf] %vm2301, %v3748
      %3781 = vst.msk [vmem:[#allocation4 + $0xc4] sm:$0xf] %vm2301, %v3749
      %3782 = vst.msk [vmem:[#allocation4 + $0xcc] sm:$0xf] %vm2301, %v3750
      %3783 = vst.msk [vmem:[#allocation4 + $0xd4] sm:$0xf] %vm2301, %v3751
      %3784 = vst.msk [vmem:[#allocation4 + $0xdc] sm:$0xf] %vm2301, %v3752
      %3785 = vst.msk [vmem:[#allocation4 + $0xe4] sm:$0xf] %vm2301, %v3753
      %3786 = vst.msk [vmem:[#allocation4 + $0xec] sm:$0xf] %vm2301, %v3754
      %3787 = vst.msk [vmem:[#allocation4 + $0xf4] sm:$0xf] %vm2301, %v3755
      %3788 = vst.msk [vmem:[#allocation4 + $0xfc] sm:$0xf] %vm2301, %v3756
      %v3789 = vld [vmem:[#allocation4] sm:$0xff]
      %v3790 = vld [vmem:[#allocation4 + $0x8] sm:$0xff]
      %v3791 = vld [vmem:[#allocation4 + $0x10] sm:$0xff]
      %v3792 = vld [vmem:[#allocation4 + $0x18] sm:$0xff]
      %v3793 = vld [vmem:[#allocation4 + $0x20] sm:$0xff]
      %v3794 = vld [vmem:[#allocation4 + $0x28] sm:$0xff]
      %v3795 = vld [vmem:[#allocation4 + $0x30] sm:$0xff]
      %v3796 = vld [vmem:[#allocation4 + $0x38] sm:$0xff]
      %v3797 = vld [vmem:[#allocation4 + $0x40] sm:$0xff]
      %v3798 = vld [vmem:[#allocation4 + $0x48] sm:$0xff]
      %v3799 = vld [vmem:[#allocation4 + $0x50] sm:$0xff]
      %v3800 = vld [vmem:[#allocation4 + $0x58] sm:$0xff]
      %v3801 = vld [vmem:[#allocation4 + $0x60] sm:$0xff]
      %v3802 = vld [vmem:[#allocation4 + $0x68] sm:$0xff]
      %v3803 = vld [vmem:[#allocation4 + $0x70] sm:$0xff]
      %v3804 = vld [vmem:[#allocation4 + $0x78] sm:$0xff]
      %v3805 = vld [vmem:[#allocation4 + $0x80] sm:$0xff]
      %v3806 = vld [vmem:[#allocation4 + $0x88] sm:$0xff]
      %v3807 = vld [vmem:[#allocation4 + $0x90] sm:$0xff]
      %v3808 = vld [vmem:[#allocation4 + $0x98] sm:$0xff]
      %v3809 = vld [vmem:[#allocation4 + $0xa0] sm:$0xff]
      %v3810 = vld [vmem:[#allocation4 + $0xa8] sm:$0xff]
      %v3811 = vld [vmem:[#allocation4 + $0xb0] sm:$0xff]
      %v3812 = vld [vmem:[#allocation4 + $0xb8] sm:$0xff]
      %v3813 = vld [vmem:[#allocation4 + $0xc0] sm:$0xff]
      %v3814 = vld [vmem:[#allocation4 + $0xc8] sm:$0xff]
      %v3815 = vld [vmem:[#allocation4 + $0xd0] sm:$0xff]
      %v3816 = vld [vmem:[#allocation4 + $0xd8] sm:$0xff]
      %v3817 = vld [vmem:[#allocation4 + $0xe0] sm:$0xff]
      %v3818 = vld [vmem:[#allocation4 + $0xe8] sm:$0xff]
      %v3819 = vld [vmem:[#allocation4 + $0xf0] sm:$0xff]
      %v3820 = vld [vmem:[#allocation4 + $0xf8] sm:$0xff]
      %v3821 = vld [vmem:[%s3] sm:$0xf]
      %v3822 = vld [vmem:[%s3 + $0x4] sm:$0xf]
      %v3823 = vld [vmem:[%s3 + $0x8] sm:$0xf]
      %v3824 = vld [vmem:[%s3 + $0xc] sm:$0xf]
      %v3825 = vld [vmem:[%s3 + $0x10] sm:$0xf]
      %v3826 = vld [vmem:[%s3 + $0x14] sm:$0xf]
      %v3827 = vld [vmem:[%s3 + $0x18] sm:$0xf]
      %v3828 = vld [vmem:[%s3 + $0x1c] sm:$0xf]
      %v3829 = vld [vmem:[%s3 + $0x20] sm:$0xf]
      %v3830 = vld [vmem:[%s3 + $0x24] sm:$0xf]
      %v3831 = vld [vmem:[%s3 + $0x28] sm:$0xf]
      %v3832 = vld [vmem:[%s3 + $0x2c] sm:$0xf]
      %v3833 = vld [vmem:[%s3 + $0x30] sm:$0xf]
      %v3834 = vld [vmem:[%s3 + $0x34] sm:$0xf]
      %v3835 = vld [vmem:[%s3 + $0x38] sm:$0xf]
      %v3836 = vld [vmem:[%s3 + $0x3c] sm:$0xf]
      %v3837 = vld [vmem:[%s3 + $0x40] sm:$0xf]
      %v3838 = vld [vmem:[%s3 + $0x44] sm:$0xf]
      %v3840 = vlaneseq
      %v3841 = vshrl.u32 %v3840, 7
      %v3842 = vsub.s32 0, %v3841
      %v3843 = vrot.slane %v2257, %v3842
      %v3877 = vunpack.c.l.b16 %v3789
      %v3878 = vunpack.c.h.b16 %v3789
      %v3879 = vunpack.c.l.b16 %v3790
      %v3880 = vunpack.c.h.b16 %v3790
      %v3881 = vunpack.c.l.b16 %v3791
      %v3882 = vunpack.c.h.b16 %v3791
      %v3883 = vunpack.c.l.b16 %v3792
      %v3884 = vunpack.c.h.b16 %v3792
      %v3885 = vunpack.c.l.b16 %v3793
      %v3886 = vunpack.c.h.b16 %v3793
      %v3887 = vunpack.c.l.b16 %v3794
      %v3888 = vunpack.c.h.b16 %v3794
      %v3889 = vunpack.c.l.b16 %v3795
      %v3890 = vunpack.c.h.b16 %v3795
      %v3891 = vunpack.c.l.b16 %v3796
      %v3892 = vunpack.c.h.b16 %v3796
      %v3893 = vunpack.c.l.b16 %v3797
      %v3894 = vunpack.c.h.b16 %v3797
      %v3895 = vunpack.c.l.b16 %v3798
      %v3896 = vunpack.c.h.b16 %v3798
      %v3897 = vunpack.c.l.b16 %v3799
      %v3898 = vunpack.c.h.b16 %v3799
      %v3899 = vunpack.c.l.b16 %v3800
      %v3900 = vunpack.c.h.b16 %v3800
      %v3901 = vunpack.c.l.b16 %v3801
      %v3902 = vunpack.c.h.b16 %v3801
      %v3903 = vunpack.c.l.b16 %v3802
      %v3904 = vunpack.c.h.b16 %v3802
      %v3905 = vunpack.c.l.b16 %v3803
      %v3906 = vunpack.c.h.b16 %v3803
      %v3907 = vunpack.c.l.b16 %v3804
      %v3908 = vunpack.c.h.b16 %v3804
      %v3909 = vunpack.c.l.b16 %v3805
      %v3910 = vunpack.c.h.b16 %v3805
      %v3911 = vunpack.c.l.b16 %v3806
      %v3912 = vunpack.c.h.b16 %v3806
      %v3913 = vunpack.c.l.b16 %v3807
      %v3914 = vunpack.c.h.b16 %v3807
      %v3915 = vunpack.c.l.b16 %v3808
      %v3916 = vunpack.c.h.b16 %v3808
      %v3917 = vunpack.c.l.b16 %v3809
      %v3918 = vunpack.c.h.b16 %v3809
      %v3919 = vunpack.c.l.b16 %v3810
      %v3920 = vunpack.c.h.b16 %v3810
      %v3921 = vunpack.c.l.b16 %v3811
      %v3922 = vunpack.c.h.b16 %v3811
      %v3923 = vunpack.c.l.b16 %v3812
      %v3924 = vunpack.c.h.b16 %v3812
      %v3925 = vunpack.c.l.b16 %v3813
      %v3926 = vunpack.c.h.b16 %v3813
      %v3927 = vunpack.c.l.b16 %v3814
      %v3928 = vunpack.c.h.b16 %v3814
      %v3929 = vunpack.c.l.b16 %v3815
      %v3930 = vunpack.c.h.b16 %v3815
      %v3931 = vunpack.c.l.b16 %v3816
      %v3932 = vunpack.c.h.b16 %v3816
      %v3933 = vunpack.c.l.b16 %v3817
      %v3934 = vunpack.c.h.b16 %v3817
      %v3935 = vunpack.c.l.b16 %v3818
      %v3936 = vunpack.c.h.b16 %v3818
      %v3937 = vunpack.c.l.b16 %v3819
      %v3938 = vunpack.c.h.b16 %v3819
      %v3939 = vunpack.c.l.b16 %v3820
      %v3940 = vunpack.c.h.b16 %v3820
      %v3941 = vpack.c.b16 %v3879, %v3877
      %v3942 = vpack.c.b16 %v3880, %v3878
      %v3943 = vpack.c.b16 %v3883, %v3881
      %v3944 = vpack.c.b16 %v3884, %v3882
      %v3945 = vpack.c.b16 %v3887, %v3885
      %v3946 = vpack.c.b16 %v3888, %v3886
      %v3947 = vpack.c.b16 %v3891, %v3889
      %v3948 = vpack.c.b16 %v3892, %v3890
      %v3949 = vpack.c.b16 %v3895, %v3893
      %v3950 = vpack.c.b16 %v3896, %v3894
      %v3951 = vpack.c.b16 %v3899, %v3897
      %v3952 = vpack.c.b16 %v3900, %v3898
      %v3953 = vpack.c.b16 %v3903, %v3901
      %v3954 = vpack.c.b16 %v3904, %v3902
      %v3955 = vpack.c.b16 %v3907, %v3905
      %v3956 = vpack.c.b16 %v3908, %v3906
      %v3957 = vpack.c.b16 %v3911, %v3909
      %v3958 = vpack.c.b16 %v3912, %v3910
      %v3959 = vpack.c.b16 %v3915, %v3913
      %v3960 = vpack.c.b16 %v3916, %v3914
      %v3961 = vpack.c.b16 %v3919, %v3917
      %v3962 = vpack.c.b16 %v3920, %v3918
      %v3963 = vpack.c.b16 %v3923, %v3921
      %v3964 = vpack.c.b16 %v3924, %v3922
      %v3965 = vpack.c.b16 %v3927, %v3925
      %v3966 = vpack.c.b16 %v3928, %v3926
      %v3967 = vpack.c.b16 %v3931, %v3929
      %v3968 = vpack.c.b16 %v3932, %v3930
      %v3969 = vpack.c.b16 %v3935, %v3933
      %v3970 = vpack.c.b16 %v3936, %v3934
      %v3971 = vpack.c.b16 %v3939, %v3937
      %v3972 = vpack.c.b16 %v3940, %v3938
      %v4007 = vunpack.c.l.b16 %v3821
      %v4008 = vunpack.c.l.b16 %v3822
      %v4009 = vunpack.c.l.b16 %v3823
      %v4010 = vunpack.c.l.b16 %v3824
      %v4011 = vunpack.c.l.b16 %v3825
      %v4012 = vunpack.c.l.b16 %v3826
      %v4013 = vunpack.c.l.b16 %v3827
      %v4014 = vunpack.c.l.b16 %v3828
      %v4015 = vunpack.c.l.b16 %v3829
      %v4016 = vunpack.c.l.b16 %v3830
      %v4017 = vunpack.c.l.b16 %v3831
      %v4018 = vunpack.c.l.b16 %v3832
      %v4019 = vunpack.c.l.b16 %v3833
      %v4020 = vunpack.c.l.b16 %v3834
      %v4021 = vunpack.c.l.b16 %v3835
      %v4022 = vunpack.c.l.b16 %v3836
      %v4023 = vunpack.c.l.b16 %v3837
      %v4024 = vunpack.c.l.b16 %v3838
      %v4025 = vpack.c.b16 %v4008, %v4007
      %v4026 = vpack.c.b16 %v4010, %v4009
      %v4027 = vpack.c.b16 %v4012, %v4011
      %v4028 = vpack.c.b16 %v4014, %v4013
      %v4029 = vpack.c.b16 %v4016, %v4015
      %v4030 = vpack.c.b16 %v4018, %v4017
      %v4031 = vpack.c.b16 %v4020, %v4019
      %v4032 = vpack.c.b16 %v4022, %v4021
      %v4033 = vpack.c.b16 %v4024, %v4023
      %vm4043 = vcmask 130048
      %v4045 = vsel %vm4043, %v3942, 0
      %v4048 = vsel %vm4043, %v3944, 0
      %v4051 = vsel %vm4043, %v3946, 0
      %v4054 = vsel %vm4043, %v3948, 0
      %v4057 = vsel %vm4043, %v3950, 0
      %v4060 = vsel %vm4043, %v3952, 0
      %v4063 = vsel %vm4043, %v3954, 0
      %v4066 = vsel %vm4043, %v3956, 0
      %v4069 = vsel %vm4043, %v3958, 0
      %v4072 = vsel %vm4043, %v3960, 0
      %v4075 = vsel %vm4043, %v3962, 0
      %v4078 = vsel %vm4043, %v3964, 0
      %v4081 = vsel %vm4043, %v3966, 0
      %v4084 = vsel %vm4043, %v3968, 0
      %v4087 = vsel %vm4043, %v3970, 0
      %v4090 = vsel %vm4043, %v3972, 0
      %4092 = vmatprep.subr.bf16.mxu0 0
      %4093 = vmatpush1.bf16.msra.mxu0 %v4032
      %4094 = vmatprep.subr.bf16.mxu0 0
      %4095 = vmatpush1.bf16.msra.mxu0 %v4031
      %4096 = vmatprep.subr.bf16.mxu0 0
      %4097 = vmatpush1.bf16.msra.mxu0 %v4030
      %4098 = vmatprep.subr.bf16.mxu0 0
      %4099 = vmatpush1.bf16.msra.mxu0 %v4029
      %4100 = vmatprep.subr.bf16.mxu0 0
      %4101 = vmatpush1.bf16.msra.mxu0 %v4028
      %4102 = vmatprep.subr.bf16.mxu0 0
      %4103 = vmatpush1.bf16.msra.mxu0 %v4027
      %4104 = vmatprep.subr.bf16.mxu0 0
      %4105 = vmatpush1.bf16.msra.mxu0 %v4026
      %4106 = vmatprep.subr.bf16.mxu0 0
      %4107 = vmatpush1.bf16.msra.mxu0 %v4025
      %4108 = vmatprep.subr.bf16.mxu0 0
      %4109 = vmatpush2.bf16.msra.mxu0 0
      %4110 = vmatprep.subr.bf16.mxu0 0
      %4111 = vmatpush2.bf16.msra.mxu0 0
      %4112 = vmatprep.subr.bf16.mxu0 0
      %4113 = vmatpush2.bf16.msra.mxu0 0
      %4114 = vmatprep.subr.bf16.mxu0 0
      %4115 = vmatpush2.bf16.msra.mxu0 0
      %4116 = vmatprep.subr.bf16.mxu0 0
      %4117 = vmatpush2.bf16.msra.mxu0 0
      %4118 = vmatprep.subr.bf16.mxu0 0
      %4119 = vmatpush2.bf16.msra.mxu0 0
      %4120 = vmatprep.subr.bf16.mxu0 0
      %4121 = vmatpush2.bf16.msra.mxu0 0
      %4122 = vmatprep.subr.bf16.mxu0 0
      %4123 = vmatpush2.bf16.msra.mxu0 %v4033
      %4124 = vmatprep.mubr.bf16.mxu0 %v4045
      %4125 = vmatmul.mubr.bf16.gmra.mxu0 %v3941
      %v4126 = vpop.f32.mrf.mxu0
      %v4127 = vadd.f32 %v3843, %v4126
      %v4128 = vpop.f32.mrf.mxu0
      %v4129 = vpop.f32.mrf.mxu0
      %v4130 = vadd.f32 %v3843, %v4129
      %v4131 = vpop.f32.mrf.mxu0
      %4132 = vmatprep.mubr.bf16.mxu0 %v4048
      %4133 = vmatmul.mubr.bf16.gmra.mxu0 %v3943
      %v4134 = vpop.f32.mrf.mxu0
      %v4135 = vadd.f32 %v3843, %v4134
      %v4136 = vpop.f32.mrf.mxu0
      %v4137 = vpop.f32.mrf.mxu0
      %v4138 = vadd.f32 %v3843, %v4137
      %v4139 = vpop.f32.mrf.mxu0
      %4140 = vmatprep.mubr.bf16.mxu0 %v4051
      %4141 = vmatmul.mubr.bf16.gmra.mxu0 %v3945
      %v4142 = vpop.f32.mrf.mxu0
      %v4143 = vadd.f32 %v3843, %v4142
      %v4144 = vpop.f32.mrf.mxu0
      %v4145 = vpop.f32.mrf.mxu0
      %v4146 = vadd.f32 %v3843, %v4145
      %v4147 = vpop.f32.mrf.mxu0
      %4148 = vmatprep.mubr.bf16.mxu0 %v4054
      %4149 = vmatmul.mubr.bf16.gmra.mxu0 %v3947
      %v4150 = vpop.f32.mrf.mxu0
      %v4151 = vadd.f32 %v3843, %v4150
      %v4152 = vpop.f32.mrf.mxu0
      %v4153 = vpop.f32.mrf.mxu0
      %v4154 = vadd.f32 %v3843, %v4153
      %v4155 = vpop.f32.mrf.mxu0
      %4156 = vmatprep.mubr.bf16.mxu0 %v4057
      %4157 = vmatmul.mubr.bf16.gmra.mxu0 %v3949
      %v4158 = vpop.f32.mrf.mxu0
      %v4159 = vadd.f32 %v3843, %v4158
      %v4160 = vpop.f32.mrf.mxu0
      %v4161 = vpop.f32.mrf.mxu0
      %v4162 = vadd.f32 %v3843, %v4161
      %v4163 = vpop.f32.mrf.mxu0
      %4164 = vmatprep.mubr.bf16.mxu0 %v4060
      %4165 = vmatmul.mubr.bf16.gmra.mxu0 %v3951
      %v4166 = vpop.f32.mrf.mxu0
      %v4167 = vadd.f32 %v3843, %v4166
      %v4168 = vpop.f32.mrf.mxu0
      %v4169 = vpop.f32.mrf.mxu0
      %v4170 = vadd.f32 %v3843, %v4169
      %v4171 = vpop.f32.mrf.mxu0
      %4172 = vmatprep.mubr.bf16.mxu0 %v4063
      %4173 = vmatmul.mubr.bf16.gmra.mxu0 %v3953
      %v4174 = vpop.f32.mrf.mxu0
      %v4175 = vadd.f32 %v3843, %v4174
      %v4176 = vpop.f32.mrf.mxu0
      %v4177 = vpop.f32.mrf.mxu0
      %v4178 = vadd.f32 %v3843, %v4177
      %v4179 = vpop.f32.mrf.mxu0
      %4180 = vmatprep.mubr.bf16.mxu0 %v4066
      %4181 = vmatmul.mubr.bf16.gmra.mxu0 %v3955
      %v4182 = vpop.f32.mrf.mxu0
      %v4183 = vadd.f32 %v3843, %v4182
      %v4184 = vpop.f32.mrf.mxu0
      %v4185 = vpop.f32.mrf.mxu0
      %v4186 = vadd.f32 %v3843, %v4185
      %v4187 = vpop.f32.mrf.mxu0
      %4188 = vmatprep.mubr.bf16.mxu0 %v4069
      %4189 = vmatmul.mubr.bf16.gmra.mxu0 %v3957
      %v4190 = vpop.f32.mrf.mxu0
      %v4191 = vadd.f32 %v3843, %v4190
      %v4192 = vpop.f32.mrf.mxu0
      %v4193 = vpop.f32.mrf.mxu0
      %v4194 = vadd.f32 %v3843, %v4193
      %v4195 = vpop.f32.mrf.mxu0
      %4196 = vmatprep.mubr.bf16.mxu0 %v4072
      %4197 = vmatmul.mubr.bf16.gmra.mxu0 %v3959
      %v4198 = vpop.f32.mrf.mxu0
      %v4199 = vadd.f32 %v3843, %v4198
      %v4200 = vpop.f32.mrf.mxu0
      %v4201 = vpop.f32.mrf.mxu0
      %v4202 = vadd.f32 %v3843, %v4201
      %v4203 = vpop.f32.mrf.mxu0
      %4204 = vmatprep.mubr.bf16.mxu0 %v4075
      %4205 = vmatmul.mubr.bf16.gmra.mxu0 %v3961
      %v4206 = vpop.f32.mrf.mxu0
      %v4207 = vadd.f32 %v3843, %v4206
      %v4208 = vpop.f32.mrf.mxu0
      %v4209 = vpop.f32.mrf.mxu0
      %v4210 = vadd.f32 %v3843, %v4209
      %v4211 = vpop.f32.mrf.mxu0
      %4212 = vmatprep.mubr.bf16.mxu0 %v4078
      %4213 = vmatmul.mubr.bf16.gmra.mxu0 %v3963
      %v4214 = vpop.f32.mrf.mxu0
      %v4215 = vadd.f32 %v3843, %v4214
      %v4216 = vpop.f32.mrf.mxu0
      %v4217 = vpop.f32.mrf.mxu0
      %v4218 = vadd.f32 %v3843, %v4217
      %v4219 = vpop.f32.mrf.mxu0
      %4220 = vmatprep.mubr.bf16.mxu0 %v4081
      %4221 = vmatmul.mubr.bf16.gmra.mxu0 %v3965
      %v4222 = vpop.f32.mrf.mxu0
      %v4223 = vadd.f32 %v3843, %v4222
      %v4224 = vpop.f32.mrf.mxu0
      %v4225 = vpop.f32.mrf.mxu0
      %v4226 = vadd.f32 %v3843, %v4225
      %v4227 = vpop.f32.mrf.mxu0
      %4228 = vmatprep.mubr.bf16.mxu0 %v4084
      %4229 = vmatmul.mubr.bf16.gmra.mxu0 %v3967
      %v4230 = vpop.f32.mrf.mxu0
      %v4231 = vadd.f32 %v3843, %v4230
      %v4232 = vpop.f32.mrf.mxu0
      %v4233 = vpop.f32.mrf.mxu0
      %v4234 = vadd.f32 %v3843, %v4233
      %v4235 = vpop.f32.mrf.mxu0
      %4236 = vmatprep.mubr.bf16.mxu0 %v4087
      %4237 = vmatmul.mubr.bf16.gmra.mxu0 %v3969
      %v4238 = vpop.f32.mrf.mxu0
      %v4239 = vadd.f32 %v3843, %v4238
      %v4240 = vpop.f32.mrf.mxu0
      %v4241 = vpop.f32.mrf.mxu0
      %v4242 = vadd.f32 %v3843, %v4241
      %v4243 = vpop.f32.mrf.mxu0
      %4244 = vmatprep.mubr.bf16.mxu0 %v4090
      %4245 = vmatmul.mubr.bf16.gmra.mxu0 %v3971
      %v4246 = vpop.f32.mrf.mxu0
      %v4247 = vadd.f32 %v3843, %v4246
      %v4248 = vpop.f32.mrf.mxu0
      %v4249 = vpop.f32.mrf.mxu0
      %v4250 = vadd.f32 %v3843, %v4249
      %v4251 = vpop.f32.mrf.mxu0
      %4252 = vdwg.mxu0
      %v4253 = vmax.f32 %v4127, 0.0
      %v4254 = vmax.f32 %v4130, 0.0
      %v4255 = vmax.f32 %v4135, 0.0
      %v4256 = vmax.f32 %v4138, 0.0
      %v4257 = vmax.f32 %v4143, 0.0
      %v4258 = vmax.f32 %v4146, 0.0
      %v4259 = vmax.f32 %v4151, 0.0
      %v4260 = vmax.f32 %v4154, 0.0
      %v4261 = vmax.f32 %v4159, 0.0
      %v4262 = vmax.f32 %v4162, 0.0
      %v4263 = vmax.f32 %v4167, 0.0
      %v4264 = vmax.f32 %v4170, 0.0
      %v4265 = vmax.f32 %v4175, 0.0
      %v4266 = vmax.f32 %v4178, 0.0
      %v4267 = vmax.f32 %v4183, 0.0
      %v4268 = vmax.f32 %v4186, 0.0
      %v4269 = vmax.f32 %v4191, 0.0
      %v4270 = vmax.f32 %v4194, 0.0
      %v4271 = vmax.f32 %v4199, 0.0
      %v4272 = vmax.f32 %v4202, 0.0
      %v4273 = vmax.f32 %v4207, 0.0
      %v4274 = vmax.f32 %v4210, 0.0
      %v4275 = vmax.f32 %v4215, 0.0
      %v4276 = vmax.f32 %v4218, 0.0
      %v4277 = vmax.f32 %v4223, 0.0
      %v4278 = vmax.f32 %v4226, 0.0
      %v4279 = vmax.f32 %v4231, 0.0
      %v4280 = vmax.f32 %v4234, 0.0
      %v4281 = vmax.f32 %v4239, 0.0
      %v4282 = vmax.f32 %v4242, 0.0
      %v4283 = vmax.f32 %v4247, 0.0
      %v4284 = vmax.f32 %v4250, 0.0
      %v4285 = vpack.c.bf16 %v4254, %v4253
      %v4286 = vpack.c.bf16 %v4256, %v4255
      %v4287 = vpack.c.bf16 %v4258, %v4257
      %v4288 = vpack.c.bf16 %v4260, %v4259
      %v4289 = vpack.c.bf16 %v4262, %v4261
      %v4290 = vpack.c.bf16 %v4264, %v4263
      %v4291 = vpack.c.bf16 %v4266, %v4265
      %v4292 = vpack.c.bf16 %v4268, %v4267
      %v4293 = vpack.c.bf16 %v4270, %v4269
      %v4294 = vpack.c.bf16 %v4272, %v4271
      %v4295 = vpack.c.bf16 %v4274, %v4273
      %v4296 = vpack.c.bf16 %v4276, %v4275
      %v4297 = vpack.c.bf16 %v4278, %v4277
      %v4298 = vpack.c.bf16 %v4280, %v4279
      %v4299 = vpack.c.bf16 %v4282, %v4281
      %v4300 = vpack.c.bf16 %v4284, %v4283
      %v4317 = vunpack.c.l.b16 %v4285
      %v4318 = vunpack.c.h.b16 %v4285
      %v4319 = vunpack.c.l.b16 %v4286
      %v4320 = vunpack.c.h.b16 %v4286
      %v4321 = vunpack.c.l.b16 %v4287
      %v4322 = vunpack.c.h.b16 %v4287
      %v4323 = vunpack.c.l.b16 %v4288
      %v4324 = vunpack.c.h.b16 %v4288
      %v4325 = vunpack.c.l.b16 %v4289
      %v4326 = vunpack.c.h.b16 %v4289
      %v4327 = vunpack.c.l.b16 %v4290
      %v4328 = vunpack.c.h.b16 %v4290
      %v4329 = vunpack.c.l.b16 %v4291
      %v4330 = vunpack.c.h.b16 %v4291
      %v4331 = vunpack.c.l.b16 %v4292
      %v4332 = vunpack.c.h.b16 %v4292
      %v4333 = vunpack.c.l.b16 %v4293
      %v4334 = vunpack.c.h.b16 %v4293
      %v4335 = vunpack.c.l.b16 %v4294
      %v4336 = vunpack.c.h.b16 %v4294
      %v4337 = vunpack.c.l.b16 %v4295
      %v4338 = vunpack.c.h.b16 %v4295
      %v4339 = vunpack.c.l.b16 %v4296
      %v4340 = vunpack.c.h.b16 %v4296
      %v4341 = vunpack.c.l.b16 %v4297
      %v4342 = vunpack.c.h.b16 %v4297
      %v4343 = vunpack.c.l.b16 %v4298
      %v4344 = vunpack.c.h.b16 %v4298
      %v4345 = vunpack.c.l.b16 %v4299
      %v4346 = vunpack.c.h.b16 %v4299
      %v4347 = vunpack.c.l.b16 %v4300
      %v4348 = vunpack.c.h.b16 %v4300
      %v4349 = vpack.c.b16 %v4317, %v4317
      %v4350 = vpack.c.b16 %v4318, %v4318
      %v4351 = vpack.c.b16 %v4319, %v4319
      %v4352 = vpack.c.b16 %v4320, %v4320
      %v4353 = vpack.c.b16 %v4321, %v4321
      %v4354 = vpack.c.b16 %v4322, %v4322
      %v4355 = vpack.c.b16 %v4323, %v4323
      %v4356 = vpack.c.b16 %v4324, %v4324
      %v4357 = vpack.c.b16 %v4325, %v4325
      %v4358 = vpack.c.b16 %v4326, %v4326
      %v4359 = vpack.c.b16 %v4327, %v4327
      %v4360 = vpack.c.b16 %v4328, %v4328
      %v4361 = vpack.c.b16 %v4329, %v4329
      %v4362 = vpack.c.b16 %v4330, %v4330
      %v4363 = vpack.c.b16 %v4331, %v4331
      %v4364 = vpack.c.b16 %v4332, %v4332
      %v4365 = vpack.c.b16 %v4333, %v4333
      %v4366 = vpack.c.b16 %v4334, %v4334
      %v4367 = vpack.c.b16 %v4335, %v4335
      %v4368 = vpack.c.b16 %v4336, %v4336
      %v4369 = vpack.c.b16 %v4337, %v4337
      %v4370 = vpack.c.b16 %v4338, %v4338
      %v4371 = vpack.c.b16 %v4339, %v4339
      %v4372 = vpack.c.b16 %v4340, %v4340
      %v4373 = vpack.c.b16 %v4341, %v4341
      %v4374 = vpack.c.b16 %v4342, %v4342
      %v4375 = vpack.c.b16 %v4343, %v4343
      %v4376 = vpack.c.b16 %v4344, %v4344
      %v4377 = vpack.c.b16 %v4345, %v4345
      %v4378 = vpack.c.b16 %v4346, %v4346
      %v4379 = vpack.c.b16 %v4347, %v4347
      %v4380 = vpack.c.b16 %v4348, %v4348
      %s4413 = smul.addr %s2265, 4
      %s4414 = scalar_lea.vmem [#allocation3], %s4413
      %4415 = vst.msk [vmem:[%s4414] sm:$0xf] %vm2301, %v4349
      %4416 = vst.msk [vmem:[%s4414 + $0x4] sm:$0xf] %vm2301, %v4350
      %4417 = vst.msk [vmem:[%s4414 + $0x8] sm:$0xf] %vm2301, %v4351
      %4418 = vst.msk [vmem:[%s4414 + $0xc] sm:$0xf] %vm2301, %v4352
      %4419 = vst.msk [vmem:[%s4414 + $0x10] sm:$0xf] %vm2301, %v4353
      %4420 = vst.msk [vmem:[%s4414 + $0x14] sm:$0xf] %vm2301, %v4354
      %4421 = vst.msk [vmem:[%s4414 + $0x18] sm:$0xf] %vm2301, %v4355
      %4422 = vst.msk [vmem:[%s4414 + $0x1c] sm:$0xf] %vm2301, %v4356
      %4423 = vst.msk [vmem:[%s4414 + $0x20] sm:$0xf] %vm2301, %v4357
      %4424 = vst.msk [vmem:[%s4414 + $0x24] sm:$0xf] %vm2301, %v4358
      %4425 = vst.msk [vmem:[%s4414 + $0x28] sm:$0xf] %vm2301, %v4359
      %4426 = vst.msk [vmem:[%s4414 + $0x2c] sm:$0xf] %vm2301, %v4360
      %4427 = vst.msk [vmem:[%s4414 + $0x30] sm:$0xf] %vm2301, %v4361
      %4428 = vst.msk [vmem:[%s4414 + $0x34] sm:$0xf] %vm2301, %v4362
      %4429 = vst.msk [vmem:[%s4414 + $0x38] sm:$0xf] %vm2301, %v4363
      %4430 = vst.msk [vmem:[%s4414 + $0x3c] sm:$0xf] %vm2301, %v4364
      %4431 = vst.msk [vmem:[%s4414 + $0x40] sm:$0xf] %vm2301, %v4365
      %4432 = vst.msk [vmem:[%s4414 + $0x44] sm:$0xf] %vm2301, %v4366
      %4433 = vst.msk [vmem:[%s4414 + $0x48] sm:$0xf] %vm2301, %v4367
      %4434 = vst.msk [vmem:[%s4414 + $0x4c] sm:$0xf] %vm2301, %v4368
      %4435 = vst.msk [vmem:[%s4414 + $0x50] sm:$0xf] %vm2301, %v4369
      %4436 = vst.msk [vmem:[%s4414 + $0x54] sm:$0xf] %vm2301, %v4370
      %4437 = vst.msk [vmem:[%s4414 + $0x58] sm:$0xf] %vm2301, %v4371
      %4438 = vst.msk [vmem:[%s4414 + $0x5c] sm:$0xf] %vm2301, %v4372
      %4439 = vst.msk [vmem:[%s4414 + $0x60] sm:$0xf] %vm2301, %v4373
      %4440 = vst.msk [vmem:[%s4414 + $0x64] sm:$0xf] %vm2301, %v4374
      %4441 = vst.msk [vmem:[%s4414 + $0x68] sm:$0xf] %vm2301, %v4375
      %4442 = vst.msk [vmem:[%s4414 + $0x6c] sm:$0xf] %vm2301, %v4376
      %4443 = vst.msk [vmem:[%s4414 + $0x70] sm:$0xf] %vm2301, %v4377
      %4444 = vst.msk [vmem:[%s4414 + $0x74] sm:$0xf] %vm2301, %v4378
      %4445 = vst.msk [vmem:[%s4414 + $0x78] sm:$0xf] %vm2301, %v4379
      %4446 = vst.msk [vmem:[%s4414 + $0x7c] sm:$0xf] %vm2301, %v4380
    $region69: #{forward.1} parent=1 // loop_footer
      %s2263 = sadd.s32 1, %s2259
    $region70: #{forward.1} parent=1 // loop_footer_branch
      %2258 = sbr.rel target = $region66
    $region71: #{forward.1} parent=1 // loop_exit
      _
    %v4447 = vld [vmem:[#allocation3] sm:$0xf]
    %v4448 = vld [vmem:[#allocation3 + $0x4] sm:$0xf]
    %v4449 = vld [vmem:[#allocation3 + $0x8] sm:$0xf]
    %v4450 = vld [vmem:[#allocation3 + $0xc] sm:$0xf]
    %v4451 = vld [vmem:[#allocation3 + $0x80] sm:$0xf]
    %v4452 = vld [vmem:[#allocation3 + $0x84] sm:$0xf]
    %v4453 = vld [vmem:[#allocation3 + $0x88] sm:$0xf]
    %v4454 = vld [vmem:[#allocation3 + $0x8c] sm:$0xf]
    %v4455 = vmax.bf16 %v4447, %v4449
    %v4456 = vmax.bf16 %v4448, %v4450
    %v4457 = vmax.bf16 %v4451, %v4453
    %v4458 = vmax.bf16 %v4452, %v4454
    %v4459 = vmax.bf16 %v4455, %v4457
    %v4460 = vmax.bf16 %v4456, %v4458
    %vm4461 = vcmask 125952
    %4462 = vst.msk [vmem:[#allocation5] sm:$0xf] %vm4461, %v4459
    %4463 = vst.msk [vmem:[#allocation5 + $0x14] sm:$0xf] %vm4461, %v4460
    %v4464 = vld [vmem:[#allocation3 + $0x10] sm:$0xf]
    %v4465 = vld [vmem:[#allocation3 + $0x14] sm:$0xf]
    %v4466 = vld [vmem:[#allocation3 + $0x18] sm:$0xf]
    %v4467 = vld [vmem:[#allocation3 + $0x1c] sm:$0xf]
    %v4468 = vld [vmem:[#allocation3 + $0x90] sm:$0xf]
    %v4469 = vld [vmem:[#allocation3 + $0x94] sm:$0xf]
    %v4470 = vld [vmem:[#allocation3 + $0x98] sm:$0xf]
    %v4471 = vld [vmem:[#allocation3 + $0x9c] sm:$0xf]
    %v4472 = vmax.bf16 %v4464, %v4466
    %v4473 = vmax.bf16 %v4465, %v4467
    %v4474 = vmax.bf16 %v4468, %v4470
    %v4475 = vmax.bf16 %v4469, %v4471
    %v4476 = vmax.bf16 %v4472, %v4474
    %v4477 = vmax.bf16 %v4473, %v4475
    %4480 = vrot.lane.b32.xlu0 %v4476, 16
    %v4481 = vpop.permute.xlu0 %4480
    %4482 = vrot.lane.b32.xlu0 %v4477, 16
    %v4483 = vpop.permute.xlu0 %4482
    %vm4486 = vcmask 257152
    %4487 = vst.msk [vmem:[#allocation5] sm:$0xf] %vm4486, %v4481
    %4488 = vst.msk [vmem:[#allocation5 + $0x14] sm:$0xf] %vm4486, %v4483
    %v4489 = vld [vmem:[#allocation3 + $0x20] sm:$0xf]
    %v4490 = vld [vmem:[#allocation3 + $0x24] sm:$0xf]
    %v4491 = vld [vmem:[#allocation3 + $0x28] sm:$0xf]
    %v4492 = vld [vmem:[#allocation3 + $0x2c] sm:$0xf]
    %v4493 = vld [vmem:[#allocation3 + $0xa0] sm:$0xf]
    %v4494 = vld [vmem:[#allocation3 + $0xa4] sm:$0xf]
    %v4495 = vld [vmem:[#allocation3 + $0xa8] sm:$0xf]
    %v4496 = vld [vmem:[#allocation3 + $0xac] sm:$0xf]
    %v4497 = vmax.bf16 %v4489, %v4491
    %v4498 = vmax.bf16 %v4490, %v4492
    %v4499 = vmax.bf16 %v4493, %v4495
    %v4500 = vmax.bf16 %v4494, %v4496
    %v4501 = vmax.bf16 %v4497, %v4499
    %v4502 = vmax.bf16 %v4498, %v4500
    %4505 = vrot.lane.b32.xlu0 %v4501, 32
    %v4506 = vpop.permute.xlu0 %4505
    %4507 = vrot.lane.b32.xlu0 %v4502, 32
    %v4508 = vpop.permute.xlu0 %4507
    %vm4511 = vcmask 388352
    %4512 = vst.msk [vmem:[#allocation5] sm:$0xf] %vm4511, %v4506
    %4513 = vst.msk [vmem:[#allocation5 + $0x14] sm:$0xf] %vm4511, %v4508
    %v4514 = vld [vmem:[#allocation3 + $0x30] sm:$0xf]
    %v4515 = vld [vmem:[#allocation3 + $0x34] sm:$0xf]
    %v4516 = vld [vmem:[#allocation3 + $0x38] sm:$0xf]
    %v4517 = vld [vmem:[#allocation3 + $0x3c] sm:$0xf]
    %v4518 = vld [vmem:[#allocation3 + $0xb0] sm:$0xf]
    %v4519 = vld [vmem:[#allocation3 + $0xb4] sm:$0xf]
    %v4520 = vld [vmem:[#allocation3 + $0xb8] sm:$0xf]
    %v4521 = vld [vmem:[#allocation3 + $0xbc] sm:$0xf]
    %v4522 = vmax.bf16 %v4514, %v4516
    %v4523 = vmax.bf16 %v4515, %v4517
    %v4524 = vmax.bf16 %v4518, %v4520
    %v4525 = vmax.bf16 %v4519, %v4521
    %v4526 = vmax.bf16 %v4522, %v4524
    %v4527 = vmax.bf16 %v4523, %v4525
    %4530 = vrot.lane.b32.xlu0 %v4526, 48
    %v4531 = vpop.permute.xlu0 %4530
    %4532 = vrot.lane.b32.xlu0 %v4527, 48
    %v4533 = vpop.permute.xlu0 %4532
    %vm4536 = vcmask 519552
    %4537 = vst.msk [vmem:[#allocation5] sm:$0xf] %vm4536, %v4531
    %4538 = vst.msk [vmem:[#allocation5 + $0x14] sm:$0xf] %vm4536, %v4533
    %v4539 = vld [vmem:[#allocation3 + $0x40] sm:$0xf]
    %v4540 = vld [vmem:[#allocation3 + $0x44] sm:$0xf]
    %v4541 = vld [vmem:[#allocation3 + $0x48] sm:$0xf]
    %v4542 = vld [vmem:[#allocation3 + $0x4c] sm:$0xf]
    %v4543 = vld [vmem:[#allocation3 + $0xc0] sm:$0xf]
    %v4544 = vld [vmem:[#allocation3 + $0xc4] sm:$0xf]
    %v4545 = vld [vmem:[#allocation3 + $0xc8] sm:$0xf]
    %v4546 = vld [vmem:[#allocation3 + $0xcc] sm:$0xf]
    %v4547 = vmax.bf16 %v4539, %v4541
    %v4548 = vmax.bf16 %v4540, %v4542
    %v4549 = vmax.bf16 %v4543, %v4545
    %v4550 = vmax.bf16 %v4544, %v4546
    %v4551 = vmax.bf16 %v4547, %v4549
    %v4552 = vmax.bf16 %v4548, %v4550
    %4555 = vrot.lane.b32.xlu0 %v4551, 64
    %v4556 = vpop.permute.xlu0 %4555
    %4557 = vrot.lane.b32.xlu0 %v4552, 64
    %v4558 = vpop.permute.xlu0 %4557
    %vm4561 = vcmask 650752
    %4562 = vst.msk [vmem:[#allocation5] sm:$0xf] %vm4561, %v4556
    %4563 = vst.msk [vmem:[#allocation5 + $0x14] sm:$0xf] %vm4561, %v4558
    %v4564 = vld [vmem:[#allocation3 + $0x50] sm:$0xf]
    %v4565 = vld [vmem:[#allocation3 + $0x54] sm:$0xf]
    %v4566 = vld [vmem:[#allocation3 + $0x58] sm:$0xf]
    %v4567 = vld [vmem:[#allocation3 + $0x5c] sm:$0xf]
    %v4568 = vld [vmem:[#allocation3 + $0xd0] sm:$0xf]
    %v4569 = vld [vmem:[#allocation3 + $0xd4] sm:$0xf]
    %v4570 = vld [vmem:[#allocation3 + $0xd8] sm:$0xf]
    %v4571 = vld [vmem:[#allocation3 + $0xdc] sm:$0xf]
    %v4572 = vmax.bf16 %v4564, %v4566
    %v4573 = vmax.bf16 %v4565, %v4567
    %v4574 = vmax.bf16 %v4568, %v4570
    %v4575 = vmax.bf16 %v4569, %v4571
    %v4576 = vmax.bf16 %v4572, %v4574
    %v4577 = vmax.bf16 %v4573, %v4575
    %4580 = vrot.lane.b32.xlu0 %v4576, 80
    %v4581 = vpop.permute.xlu0 %4580
    %4582 = vrot.lane.b32.xlu0 %v4577, 80
    %v4583 = vpop.permute.xlu0 %4582
    %vm4586 = vcmask 781952
    %4587 = vst.msk [vmem:[#allocation5] sm:$0xf] %vm4586, %v4581
    %4588 = vst.msk [vmem:[#allocation5 + $0x14] sm:$0xf] %vm4586, %v4583
    %v4589 = vld [vmem:[#allocation3 + $0x100] sm:$0xf]
    %v4590 = vld [vmem:[#allocation3 + $0x104] sm:$0xf]
    %v4591 = vld [vmem:[#allocation3 + $0x108] sm:$0xf]
    %v4592 = vld [vmem:[#allocation3 + $0x10c] sm:$0xf]
    %v4593 = vld [vmem:[#allocation3 + $0x180] sm:$0xf]
    %v4594 = vld [vmem:[#allocation3 + $0x184] sm:$0xf]
    %v4595 = vld [vmem:[#allocation3 + $0x188] sm:$0xf]
    %v4596 = vld [vmem:[#allocation3 + $0x18c] sm:$0xf]
    %v4597 = vmax.bf16 %v4589, %v4591
    %v4598 = vmax.bf16 %v4590, %v4592
    %v4599 = vmax.bf16 %v4593, %v4595
    %v4600 = vmax.bf16 %v4594, %v4596
    %v4601 = vmax.bf16 %v4597, %v4599
    %v4602 = vmax.bf16 %v4598, %v4600
    %4605 = vrot.lane.b32.xlu0 %v4601, 96
    %v4606 = vpop.permute.xlu0 %4605
    %4607 = vrot.lane.b32.xlu0 %v4602, 96
    %v4608 = vpop.permute.xlu0 %4607
    %vm4611 = vcmask 913152
    %4612 = vst.msk [vmem:[#allocation5] sm:$0xf] %vm4611, %v4606
    %4613 = vst.msk [vmem:[#allocation5 + $0x14] sm:$0xf] %vm4611, %v4608
    %v4614 = vld [vmem:[#allocation3 + $0x110] sm:$0xf]
    %v4615 = vld [vmem:[#allocation3 + $0x114] sm:$0xf]
    %v4616 = vld [vmem:[#allocation3 + $0x118] sm:$0xf]
    %v4617 = vld [vmem:[#allocation3 + $0x11c] sm:$0xf]
    %v4618 = vld [vmem:[#allocation3 + $0x190] sm:$0xf]
    %v4619 = vld [vmem:[#allocation3 + $0x194] sm:$0xf]
    %v4620 = vld [vmem:[#allocation3 + $0x198] sm:$0xf]
    %v4621 = vld [vmem:[#allocation3 + $0x19c] sm:$0xf]
    %v4622 = vmax.bf16 %v4614, %v4616
    %v4623 = vmax.bf16 %v4615, %v4617
    %v4624 = vmax.bf16 %v4618, %v4620
    %v4625 = vmax.bf16 %v4619, %v4621
    %v4626 = vmax.bf16 %v4622, %v4624
    %v4627 = vmax.bf16 %v4623, %v4625
    %4630 = vrot.lane.b32.xlu0 %v4626, 112
    %v4631 = vpop.permute.xlu0 %4630
    %4632 = vrot.lane.b32.xlu0 %v4627, 112
    %v4633 = vpop.permute.xlu0 %4632
    %vm4636 = vcmask 1044352
    %4637 = vst.msk [vmem:[#allocation5] sm:$0xf] %vm4636, %v4631
    %4638 = vst.msk [vmem:[#allocation5 + $0x14] sm:$0xf] %vm4636, %v4633
    %v4639 = vld [vmem:[#allocation3 + $0x120] sm:$0xf]
    %v4640 = vld [vmem:[#allocation3 + $0x124] sm:$0xf]
    %v4641 = vld [vmem:[#allocation3 + $0x128] sm:$0xf]
    %v4642 = vld [vmem:[#allocation3 + $0x12c] sm:$0xf]
    %v4643 = vld [vmem:[#allocation3 + $0x1a0] sm:$0xf]
    %v4644 = vld [vmem:[#allocation3 + $0x1a4] sm:$0xf]
    %v4645 = vld [vmem:[#allocation3 + $0x1a8] sm:$0xf]
    %v4646 = vld [vmem:[#allocation3 + $0x1ac] sm:$0xf]
    %v4647 = vmax.bf16 %v4639, %v4641
    %v4648 = vmax.bf16 %v4640, %v4642
    %v4649 = vmax.bf16 %v4643, %v4645
    %v4650 = vmax.bf16 %v4644, %v4646
    %v4651 = vmax.bf16 %v4647, %v4649
    %v4652 = vmax.bf16 %v4648, %v4650
    %4653 = vst.msk [vmem:[#allocation5 + $0x4] sm:$0xf] %vm4461, %v4651
    %4654 = vst.msk [vmem:[#allocation5 + $0x18] sm:$0xf] %vm4461, %v4652
    %v4655 = vld [vmem:[#allocation3 + $0x130] sm:$0xf]
    %v4656 = vld [vmem:[#allocation3 + $0x134] sm:$0xf]
    %v4657 = vld [vmem:[#allocation3 + $0x138] sm:$0xf]
    %v4658 = vld [vmem:[#allocation3 + $0x13c] sm:$0xf]
    %v4659 = vld [vmem:[#allocation3 + $0x1b0] sm:$0xf]
    %v4660 = vld [vmem:[#allocation3 + $0x1b4] sm:$0xf]
    %v4661 = vld [vmem:[#allocation3 + $0x1b8] sm:$0xf]
    %v4662 = vld [vmem:[#allocation3 + $0x1bc] sm:$0xf]
    %v4663 = vmax.bf16 %v4655, %v4657
    %v4664 = vmax.bf16 %v4656, %v4658
    %v4665 = vmax.bf16 %v4659, %v4661
    %v4666 = vmax.bf16 %v4660, %v4662
    %v4667 = vmax.bf16 %v4663, %v4665
    %v4668 = vmax.bf16 %v4664, %v4666
    %4671 = vrot.lane.b32.xlu0 %v4667, 16
    %v4672 = vpop.permute.xlu0 %4671
    %4673 = vrot.lane.b32.xlu0 %v4668, 16
    %v4674 = vpop.permute.xlu0 %4673
    %4677 = vst.msk [vmem:[#allocation5 + $0x4] sm:$0xf] %vm4486, %v4672
    %4678 = vst.msk [vmem:[#allocation5 + $0x18] sm:$0xf] %vm4486, %v4674
    %v4679 = vld [vmem:[#allocation3 + $0x140] sm:$0xf]
    %v4680 = vld [vmem:[#allocation3 + $0x144] sm:$0xf]
    %v4681 = vld [vmem:[#allocation3 + $0x148] sm:$0xf]
    %v4682 = vld [vmem:[#allocation3 + $0x14c] sm:$0xf]
    %v4683 = vld [vmem:[#allocation3 + $0x1c0] sm:$0xf]
    %v4684 = vld [vmem:[#allocation3 + $0x1c4] sm:$0xf]
    %v4685 = vld [vmem:[#allocation3 + $0x1c8] sm:$0xf]
    %v4686 = vld [vmem:[#allocation3 + $0x1cc] sm:$0xf]
    %v4687 = vmax.bf16 %v4679, %v4681
    %v4688 = vmax.bf16 %v4680, %v4682
    %v4689 = vmax.bf16 %v4683, %v4685
    %v4690 = vmax.bf16 %v4684, %v4686
    %v4691 = vmax.bf16 %v4687, %v4689
    %v4692 = vmax.bf16 %v4688, %v4690
    %4695 = vrot.lane.b32.xlu0 %v4691, 32
    %v4696 = vpop.permute.xlu0 %4695
    %4697 = vrot.lane.b32.xlu0 %v4692, 32
    %v4698 = vpop.permute.xlu0 %4697
    %4701 = vst.msk [vmem:[#allocation5 + $0x4] sm:$0xf] %vm4511, %v4696
    %4702 = vst.msk [vmem:[#allocation5 + $0x18] sm:$0xf] %vm4511, %v4698
    %v4703 = vld [vmem:[#allocation3 + $0x150] sm:$0xf]
    %v4704 = vld [vmem:[#allocation3 + $0x154] sm:$0xf]
    %v4705 = vld [vmem:[#allocation3 + $0x158] sm:$0xf]
    %v4706 = vld [vmem:[#allocation3 + $0x15c] sm:$0xf]
    %v4707 = vld [vmem:[#allocation3 + $0x1d0] sm:$0xf]
    %v4708 = vld [vmem:[#allocation3 + $0x1d4] sm:$0xf]
    %v4709 = vld [vmem:[#allocation3 + $0x1d8] sm:$0xf]
    %v4710 = vld [vmem:[#allocation3 + $0x1dc] sm:$0xf]
    %v4711 = vmax.bf16 %v4703, %v4705
    %v4712 = vmax.bf16 %v4704, %v4706
    %v4713 = vmax.bf16 %v4707, %v4709
    %v4714 = vmax.bf16 %v4708, %v4710
    %v4715 = vmax.bf16 %v4711, %v4713
    %v4716 = vmax.bf16 %v4712, %v4714
    %4719 = vrot.lane.b32.xlu0 %v4715, 48
    %v4720 = vpop.permute.xlu0 %4719
    %4721 = vrot.lane.b32.xlu0 %v4716, 48
    %v4722 = vpop.permute.xlu0 %4721
    %4725 = vst.msk [vmem:[#allocation5 + $0x4] sm:$0xf] %vm4536, %v4720
    %4726 = vst.msk [vmem:[#allocation5 + $0x18] sm:$0xf] %vm4536, %v4722
    %v4727 = vld [vmem:[#allocation3 + $0x200] sm:$0xf]
    %v4728 = vld [vmem:[#allocation3 + $0x204] sm:$0xf]
    %v4729 = vld [vmem:[#allocation3 + $0x208] sm:$0xf]
    %v4730 = vld [vmem:[#allocation3 + $0x20c] sm:$0xf]
    %v4731 = vld [vmem:[#allocation3 + $0x280] sm:$0xf]
    %v4732 = vld [vmem:[#allocation3 + $0x284] sm:$0xf]
    %v4733 = vld [vmem:[#allocation3 + $0x288] sm:$0xf]
    %v4734 = vld [vmem:[#allocation3 + $0x28c] sm:$0xf]
    %v4735 = vmax.bf16 %v4727, %v4729
    %v4736 = vmax.bf16 %v4728, %v4730
    %v4737 = vmax.bf16 %v4731, %v4733
    %v4738 = vmax.bf16 %v4732, %v4734
    %v4739 = vmax.bf16 %v4735, %v4737
    %v4740 = vmax.bf16 %v4736, %v4738
    %4743 = vrot.lane.b32.xlu0 %v4739, 64
    %v4744 = vpop.permute.xlu0 %4743
    %4745 = vrot.lane.b32.xlu0 %v4740, 64
    %v4746 = vpop.permute.xlu0 %4745
    %4749 = vst.msk [vmem:[#allocation5 + $0x4] sm:$0xf] %vm4561, %v4744
    %4750 = vst.msk [vmem:[#allocation5 + $0x18] sm:$0xf] %vm4561, %v4746
    %v4751 = vld [vmem:[#allocation3 + $0x210] sm:$0xf]
    %v4752 = vld [vmem:[#allocation3 + $0x214] sm:$0xf]
    %v4753 = vld [vmem:[#allocation3 + $0x218] sm:$0xf]
    %v4754 = vld [vmem:[#allocation3 + $0x21c] sm:$0xf]
    %v4755 = vld [vmem:[#allocation3 + $0x290] sm:$0xf]
    %v4756 = vld [vmem:[#allocation3 + $0x294] sm:$0xf]
    %v4757 = vld [vmem:[#allocation3 + $0x298] sm:$0xf]
    %v4758 = vld [vmem:[#allocation3 + $0x29c] sm:$0xf]
    %v4759 = vmax.bf16 %v4751, %v4753
    %v4760 = vmax.bf16 %v4752, %v4754
    %v4761 = vmax.bf16 %v4755, %v4757
    %v4762 = vmax.bf16 %v4756, %v4758
    %v4763 = vmax.bf16 %v4759, %v4761
    %v4764 = vmax.bf16 %v4760, %v4762
    %4767 = vrot.lane.b32.xlu0 %v4763, 80
    %v4768 = vpop.permute.xlu0 %4767
    %4769 = vrot.lane.b32.xlu0 %v4764, 80
    %v4770 = vpop.permute.xlu0 %4769
    %4773 = vst.msk [vmem:[#allocation5 + $0x4] sm:$0xf] %vm4586, %v4768
    %4774 = vst.msk [vmem:[#allocation5 + $0x18] sm:$0xf] %vm4586, %v4770
    %v4775 = vld [vmem:[#allocation3 + $0x220] sm:$0xf]
    %v4776 = vld [vmem:[#allocation3 + $0x224] sm:$0xf]
    %v4777 = vld [vmem:[#allocation3 + $0x228] sm:$0xf]
    %v4778 = vld [vmem:[#allocation3 + $0x22c] sm:$0xf]
    %v4779 = vld [vmem:[#allocation3 + $0x2a0] sm:$0xf]
    %v4780 = vld [vmem:[#allocation3 + $0x2a4] sm:$0xf]
    %v4781 = vld [vmem:[#allocation3 + $0x2a8] sm:$0xf]
    %v4782 = vld [vmem:[#allocation3 + $0x2ac] sm:$0xf]
    %v4783 = vmax.bf16 %v4775, %v4777
    %v4784 = vmax.bf16 %v4776, %v4778
    %v4785 = vmax.bf16 %v4779, %v4781
    %v4786 = vmax.bf16 %v4780, %v4782
    %v4787 = vmax.bf16 %v4783, %v4785
    %v4788 = vmax.bf16 %v4784, %v4786
    %4791 = vrot.lane.b32.xlu0 %v4787, 96
    %v4792 = vpop.permute.xlu0 %4791
    %4793 = vrot.lane.b32.xlu0 %v4788, 96
    %v4794 = vpop.permute.xlu0 %4793
    %4797 = vst.msk [vmem:[#allocation5 + $0x4] sm:$0xf] %vm4611, %v4792
    %4798 = vst.msk [vmem:[#allocation5 + $0x18] sm:$0xf] %vm4611, %v4794
    %v4799 = vld [vmem:[#allocation3 + $0x230] sm:$0xf]
    %v4800 = vld [vmem:[#allocation3 + $0x234] sm:$0xf]
    %v4801 = vld [vmem:[#allocation3 + $0x238] sm:$0xf]
    %v4802 = vld [vmem:[#allocation3 + $0x23c] sm:$0xf]
    %v4803 = vld [vmem:[#allocation3 + $0x2b0] sm:$0xf]
    %v4804 = vld [vmem:[#allocation3 + $0x2b4] sm:$0xf]
    %v4805 = vld [vmem:[#allocation3 + $0x2b8] sm:$0xf]
    %v4806 = vld [vmem:[#allocation3 + $0x2bc] sm:$0xf]
    %v4807 = vmax.bf16 %v4799, %v4801
    %v4808 = vmax.bf16 %v4800, %v4802
    %v4809 = vmax.bf16 %v4803, %v4805
    %v4810 = vmax.bf16 %v4804, %v4806
    %v4811 = vmax.bf16 %v4807, %v4809
    %v4812 = vmax.bf16 %v4808, %v4810
    %4815 = vrot.lane.b32.xlu0 %v4811, 112
    %v4816 = vpop.permute.xlu0 %4815
    %4817 = vrot.lane.b32.xlu0 %v4812, 112
    %v4818 = vpop.permute.xlu0 %4817
    %4821 = vst.msk [vmem:[#allocation5 + $0x4] sm:$0xf] %vm4636, %v4816
    %4822 = vst.msk [vmem:[#allocation5 + $0x18] sm:$0xf] %vm4636, %v4818
    %v4823 = vld [vmem:[#allocation3 + $0x240] sm:$0xf]
    %v4824 = vld [vmem:[#allocation3 + $0x244] sm:$0xf]
    %v4825 = vld [vmem:[#allocation3 + $0x248] sm:$0xf]
    %v4826 = vld [vmem:[#allocation3 + $0x24c] sm:$0xf]
    %v4827 = vld [vmem:[#allocation3 + $0x2c0] sm:$0xf]
    %v4828 = vld [vmem:[#allocation3 + $0x2c4] sm:$0xf]
    %v4829 = vld [vmem:[#allocation3 + $0x2c8] sm:$0xf]
    %v4830 = vld [vmem:[#allocation3 + $0x2cc] sm:$0xf]
    %v4831 = vmax.bf16 %v4823, %v4825
    %v4832 = vmax.bf16 %v4824, %v4826
    %v4833 = vmax.bf16 %v4827, %v4829
    %v4834 = vmax.bf16 %v4828, %v4830
    %v4835 = vmax.bf16 %v4831, %v4833
    %v4836 = vmax.bf16 %v4832, %v4834
    %4837 = vst.msk [vmem:[#allocation5 + $0x8] sm:$0xf] %vm4461, %v4835
    %4838 = vst.msk [vmem:[#allocation5 + $0x1c] sm:$0xf] %vm4461, %v4836
    %v4839 = vld [vmem:[#allocation3 + $0x250] sm:$0xf]
    %v4840 = vld [vmem:[#allocation3 + $0x254] sm:$0xf]
    %v4841 = vld [vmem:[#allocation3 + $0x258] sm:$0xf]
    %v4842 = vld [vmem:[#allocation3 + $0x25c] sm:$0xf]
    %v4843 = vld [vmem:[#allocation3 + $0x2d0] sm:$0xf]
    %v4844 = vld [vmem:[#allocation3 + $0x2d4] sm:$0xf]
    %v4845 = vld [vmem:[#allocation3 + $0x2d8] sm:$0xf]
    %v4846 = vld [vmem:[#allocation3 + $0x2dc] sm:$0xf]
    %v4847 = vmax.bf16 %v4839, %v4841
    %v4848 = vmax.bf16 %v4840, %v4842
    %v4849 = vmax.bf16 %v4843, %v4845
    %v4850 = vmax.bf16 %v4844, %v4846
    %v4851 = vmax.bf16 %v4847, %v4849
    %v4852 = vmax.bf16 %v4848, %v4850
    %4855 = vrot.lane.b32.xlu0 %v4851, 16
    %v4856 = vpop.permute.xlu0 %4855
    %4857 = vrot.lane.b32.xlu0 %v4852, 16
    %v4858 = vpop.permute.xlu0 %4857
    %4861 = vst.msk [vmem:[#allocation5 + $0x8] sm:$0xf] %vm4486, %v4856
    %4862 = vst.msk [vmem:[#allocation5 + $0x1c] sm:$0xf] %vm4486, %v4858
    %v4863 = vld [vmem:[#allocation3 + $0x300] sm:$0xf]
    %v4864 = vld [vmem:[#allocation3 + $0x304] sm:$0xf]
    %v4865 = vld [vmem:[#allocation3 + $0x308] sm:$0xf]
    %v4866 = vld [vmem:[#allocation3 + $0x30c] sm:$0xf]
    %v4867 = vld [vmem:[#allocation3 + $0x380] sm:$0xf]
    %v4868 = vld [vmem:[#allocation3 + $0x384] sm:$0xf]
    %v4869 = vld [vmem:[#allocation3 + $0x388] sm:$0xf]
    %v4870 = vld [vmem:[#allocation3 + $0x38c] sm:$0xf]
    %v4871 = vmax.bf16 %v4863, %v4865
    %v4872 = vmax.bf16 %v4864, %v4866
    %v4873 = vmax.bf16 %v4867, %v4869
    %v4874 = vmax.bf16 %v4868, %v4870
    %v4875 = vmax.bf16 %v4871, %v4873
    %v4876 = vmax.bf16 %v4872, %v4874
    %4879 = vrot.lane.b32.xlu0 %v4875, 32
    %v4880 = vpop.permute.xlu0 %4879
    %4881 = vrot.lane.b32.xlu0 %v4876, 32
    %v4882 = vpop.permute.xlu0 %4881
    %4885 = vst.msk [vmem:[#allocation5 + $0x8] sm:$0xf] %vm4511, %v4880
    %4886 = vst.msk [vmem:[#allocation5 + $0x1c] sm:$0xf] %vm4511, %v4882
    %v4887 = vld [vmem:[#allocation3 + $0x310] sm:$0xf]
    %v4888 = vld [vmem:[#allocation3 + $0x314] sm:$0xf]
    %v4889 = vld [vmem:[#allocation3 + $0x318] sm:$0xf]
    %v4890 = vld [vmem:[#allocation3 + $0x31c] sm:$0xf]
    %v4891 = vld [vmem:[#allocation3 + $0x390] sm:$0xf]
    %v4892 = vld [vmem:[#allocation3 + $0x394] sm:$0xf]
    %v4893 = vld [vmem:[#allocation3 + $0x398] sm:$0xf]
    %v4894 = vld [vmem:[#allocation3 + $0x39c] sm:$0xf]
    %v4895 = vmax.bf16 %v4887, %v4889
    %v4896 = vmax.bf16 %v4888, %v4890
    %v4897 = vmax.bf16 %v4891, %v4893
    %v4898 = vmax.bf16 %v4892, %v4894
    %v4899 = vmax.bf16 %v4895, %v4897
    %v4900 = vmax.bf16 %v4896, %v4898
    %4903 = vrot.lane.b32.xlu0 %v4899, 48
    %v4904 = vpop.permute.xlu0 %4903
    %4905 = vrot.lane.b32.xlu0 %v4900, 48
    %v4906 = vpop.permute.xlu0 %4905
    %4909 = vst.msk [vmem:[#allocation5 + $0x8] sm:$0xf] %vm4536, %v4904
    %4910 = vst.msk [vmem:[#allocation5 + $0x1c] sm:$0xf] %vm4536, %v4906
    %v4911 = vld [vmem:[#allocation3 + $0x320] sm:$0xf]
    %v4912 = vld [vmem:[#allocation3 + $0x324] sm:$0xf]
    %v4913 = vld [vmem:[#allocation3 + $0x328] sm:$0xf]
    %v4914 = vld [vmem:[#allocation3 + $0x32c] sm:$0xf]
    %v4915 = vld [vmem:[#allocation3 + $0x3a0] sm:$0xf]
    %v4916 = vld [vmem:[#allocation3 + $0x3a4] sm:$0xf]
    %v4917 = vld [vmem:[#allocation3 + $0x3a8] sm:$0xf]
    %v4918 = vld [vmem:[#allocation3 + $0x3ac] sm:$0xf]
    %v4919 = vmax.bf16 %v4911, %v4913
    %v4920 = vmax.bf16 %v4912, %v4914
    %v4921 = vmax.bf16 %v4915, %v4917
    %v4922 = vmax.bf16 %v4916, %v4918
    %v4923 = vmax.bf16 %v4919, %v4921
    %v4924 = vmax.bf16 %v4920, %v4922
    %4927 = vrot.lane.b32.xlu0 %v4923, 64
    %v4928 = vpop.permute.xlu0 %4927
    %4929 = vrot.lane.b32.xlu0 %v4924, 64
    %v4930 = vpop.permute.xlu0 %4929
    %4933 = vst.msk [vmem:[#allocation5 + $0x8] sm:$0xf] %vm4561, %v4928
    %4934 = vst.msk [vmem:[#allocation5 + $0x1c] sm:$0xf] %vm4561, %v4930
    %v4935 = vld [vmem:[#allocation3 + $0x330] sm:$0xf]
    %v4936 = vld [vmem:[#allocation3 + $0x334] sm:$0xf]
    %v4937 = vld [vmem:[#allocation3 + $0x338] sm:$0xf]
    %v4938 = vld [vmem:[#allocation3 + $0x33c] sm:$0xf]
    %v4939 = vld [vmem:[#allocation3 + $0x3b0] sm:$0xf]
    %v4940 = vld [vmem:[#allocation3 + $0x3b4] sm:$0xf]
    %v4941 = vld [vmem:[#allocation3 + $0x3b8] sm:$0xf]
    %v4942 = vld [vmem:[#allocation3 + $0x3bc] sm:$0xf]
    %v4943 = vmax.bf16 %v4935, %v4937
    %v4944 = vmax.bf16 %v4936, %v4938
    %v4945 = vmax.bf16 %v4939, %v4941
    %v4946 = vmax.bf16 %v4940, %v4942
    %v4947 = vmax.bf16 %v4943, %v4945
    %v4948 = vmax.bf16 %v4944, %v4946
    %4951 = vrot.lane.b32.xlu0 %v4947, 80
    %v4952 = vpop.permute.xlu0 %4951
    %4953 = vrot.lane.b32.xlu0 %v4948, 80
    %v4954 = vpop.permute.xlu0 %4953
    %4957 = vst.msk [vmem:[#allocation5 + $0x8] sm:$0xf] %vm4586, %v4952
    %4958 = vst.msk [vmem:[#allocation5 + $0x1c] sm:$0xf] %vm4586, %v4954
    %v4959 = vld [vmem:[#allocation3 + $0x340] sm:$0xf]
    %v4960 = vld [vmem:[#allocation3 + $0x344] sm:$0xf]
    %v4961 = vld [vmem:[#allocation3 + $0x348] sm:$0xf]
    %v4962 = vld [vmem:[#allocation3 + $0x34c] sm:$0xf]
    %v4963 = vld [vmem:[#allocation3 + $0x3c0] sm:$0xf]
    %v4964 = vld [vmem:[#allocation3 + $0x3c4] sm:$0xf]
    %v4965 = vld [vmem:[#allocation3 + $0x3c8] sm:$0xf]
    %v4966 = vld [vmem:[#allocation3 + $0x3cc] sm:$0xf]
    %v4967 = vmax.bf16 %v4959, %v4961
    %v4968 = vmax.bf16 %v4960, %v4962
    %v4969 = vmax.bf16 %v4963, %v4965
    %v4970 = vmax.bf16 %v4964, %v4966
    %v4971 = vmax.bf16 %v4967, %v4969
    %v4972 = vmax.bf16 %v4968, %v4970
    %4975 = vrot.lane.b32.xlu0 %v4971, 96
    %v4976 = vpop.permute.xlu0 %4975
    %4977 = vrot.lane.b32.xlu0 %v4972, 96
    %v4978 = vpop.permute.xlu0 %4977
    %4981 = vst.msk [vmem:[#allocation5 + $0x8] sm:$0xf] %vm4611, %v4976
    %4982 = vst.msk [vmem:[#allocation5 + $0x1c] sm:$0xf] %vm4611, %v4978
    %v4983 = vld [vmem:[#allocation3 + $0x350] sm:$0xf]
    %v4984 = vld [vmem:[#allocation3 + $0x354] sm:$0xf]
    %v4985 = vld [vmem:[#allocation3 + $0x358] sm:$0xf]
    %v4986 = vld [vmem:[#allocation3 + $0x35c] sm:$0xf]
    %v4987 = vld [vmem:[#allocation3 + $0x3d0] sm:$0xf]
    %v4988 = vld [vmem:[#allocation3 + $0x3d4] sm:$0xf]
    %v4989 = vld [vmem:[#allocation3 + $0x3d8] sm:$0xf]
    %v4990 = vld [vmem:[#allocation3 + $0x3dc] sm:$0xf]
    %v4991 = vmax.bf16 %v4983, %v4985
    %v4992 = vmax.bf16 %v4984, %v4986
    %v4993 = vmax.bf16 %v4987, %v4989
    %v4994 = vmax.bf16 %v4988, %v4990
    %v4995 = vmax.bf16 %v4991, %v4993
    %v4996 = vmax.bf16 %v4992, %v4994
    %4999 = vrot.lane.b32.xlu0 %v4995, 112
    %v5000 = vpop.permute.xlu0 %4999
    %5001 = vrot.lane.b32.xlu0 %v4996, 112
    %v5002 = vpop.permute.xlu0 %5001
    %5005 = vst.msk [vmem:[#allocation5 + $0x8] sm:$0xf] %vm4636, %v5000
    %5006 = vst.msk [vmem:[#allocation5 + $0x1c] sm:$0xf] %vm4636, %v5002
    %v5007 = vld [vmem:[#allocation3 + $0x400] sm:$0xf]
    %v5008 = vld [vmem:[#allocation3 + $0x404] sm:$0xf]
    %v5009 = vld [vmem:[#allocation3 + $0x408] sm:$0xf]
    %v5010 = vld [vmem:[#allocation3 + $0x40c] sm:$0xf]
    %v5011 = vld [vmem:[#allocation3 + $0x480] sm:$0xf]
    %v5012 = vld [vmem:[#allocation3 + $0x484] sm:$0xf]
    %v5013 = vld [vmem:[#allocation3 + $0x488] sm:$0xf]
    %v5014 = vld [vmem:[#allocation3 + $0x48c] sm:$0xf]
    %v5015 = vmax.bf16 %v5007, %v5009
    %v5016 = vmax.bf16 %v5008, %v5010
    %v5017 = vmax.bf16 %v5011, %v5013
    %v5018 = vmax.bf16 %v5012, %v5014
    %v5019 = vmax.bf16 %v5015, %v5017
    %v5020 = vmax.bf16 %v5016, %v5018
    %5021 = vst.msk [vmem:[#allocation5 + $0xc] sm:$0xf] %vm4461, %v5019
    %5022 = vst.msk [vmem:[#allocation5 + $0x20] sm:$0xf] %vm4461, %v5020
    %v5023 = vld [vmem:[#allocation3 + $0x410] sm:$0xf]
    %v5024 = vld [vmem:[#allocation3 + $0x414] sm:$0xf]
    %v5025 = vld [vmem:[#allocation3 + $0x418] sm:$0xf]
    %v5026 = vld [vmem:[#allocation3 + $0x41c] sm:$0xf]
    %v5027 = vld [vmem:[#allocation3 + $0x490] sm:$0xf]
    %v5028 = vld [vmem:[#allocation3 + $0x494] sm:$0xf]
    %v5029 = vld [vmem:[#allocation3 + $0x498] sm:$0xf]
    %v5030 = vld [vmem:[#allocation3 + $0x49c] sm:$0xf]
    %v5031 = vmax.bf16 %v5023, %v5025
    %v5032 = vmax.bf16 %v5024, %v5026
    %v5033 = vmax.bf16 %v5027, %v5029
    %v5034 = vmax.bf16 %v5028, %v5030
    %v5035 = vmax.bf16 %v5031, %v5033
    %v5036 = vmax.bf16 %v5032, %v5034
    %5039 = vrot.lane.b32.xlu0 %v5035, 16
    %v5040 = vpop.permute.xlu0 %5039
    %5041 = vrot.lane.b32.xlu0 %v5036, 16
    %v5042 = vpop.permute.xlu0 %5041
    %5045 = vst.msk [vmem:[#allocation5 + $0xc] sm:$0xf] %vm4486, %v5040
    %5046 = vst.msk [vmem:[#allocation5 + $0x20] sm:$0xf] %vm4486, %v5042
    %v5047 = vld [vmem:[#allocation3 + $0x420] sm:$0xf]
    %v5048 = vld [vmem:[#allocation3 + $0x424] sm:$0xf]
    %v5049 = vld [vmem:[#allocation3 + $0x428] sm:$0xf]
    %v5050 = vld [vmem:[#allocation3 + $0x42c] sm:$0xf]
    %v5051 = vld [vmem:[#allocation3 + $0x4a0] sm:$0xf]
    %v5052 = vld [vmem:[#allocation3 + $0x4a4] sm:$0xf]
    %v5053 = vld [vmem:[#allocation3 + $0x4a8] sm:$0xf]
    %v5054 = vld [vmem:[#allocation3 + $0x4ac] sm:$0xf]
    %v5055 = vmax.bf16 %v5047, %v5049
    %v5056 = vmax.bf16 %v5048, %v5050
    %v5057 = vmax.bf16 %v5051, %v5053
    %v5058 = vmax.bf16 %v5052, %v5054
    %v5059 = vmax.bf16 %v5055, %v5057
    %v5060 = vmax.bf16 %v5056, %v5058
    %5063 = vrot.lane.b32.xlu0 %v5059, 32
    %v5064 = vpop.permute.xlu0 %5063
    %5065 = vrot.lane.b32.xlu0 %v5060, 32
    %v5066 = vpop.permute.xlu0 %5065
    %5069 = vst.msk [vmem:[#allocation5 + $0xc] sm:$0xf] %vm4511, %v5064
    %5070 = vst.msk [vmem:[#allocation5 + $0x20] sm:$0xf] %vm4511, %v5066
    %v5071 = vld [vmem:[#allocation3 + $0x430] sm:$0xf]
    %v5072 = vld [vmem:[#allocation3 + $0x434] sm:$0xf]
    %v5073 = vld [vmem:[#allocation3 + $0x438] sm:$0xf]
    %v5074 = vld [vmem:[#allocation3 + $0x43c] sm:$0xf]
    %v5075 = vld [vmem:[#allocation3 + $0x4b0] sm:$0xf]
    %v5076 = vld [vmem:[#allocation3 + $0x4b4] sm:$0xf]
    %v5077 = vld [vmem:[#allocation3 + $0x4b8] sm:$0xf]
    %v5078 = vld [vmem:[#allocation3 + $0x4bc] sm:$0xf]
    %v5079 = vmax.bf16 %v5071, %v5073
    %v5080 = vmax.bf16 %v5072, %v5074
    %v5081 = vmax.bf16 %v5075, %v5077
    %v5082 = vmax.bf16 %v5076, %v5078
    %v5083 = vmax.bf16 %v5079, %v5081
    %v5084 = vmax.bf16 %v5080, %v5082
    %5087 = vrot.lane.b32.xlu0 %v5083, 48
    %v5088 = vpop.permute.xlu0 %5087
    %5089 = vrot.lane.b32.xlu0 %v5084, 48
    %v5090 = vpop.permute.xlu0 %5089
    %5093 = vst.msk [vmem:[#allocation5 + $0xc] sm:$0xf] %vm4536, %v5088
    %5094 = vst.msk [vmem:[#allocation5 + $0x20] sm:$0xf] %vm4536, %v5090
    %v5095 = vld [vmem:[#allocation3 + $0x440] sm:$0xf]
    %v5096 = vld [vmem:[#allocation3 + $0x444] sm:$0xf]
    %v5097 = vld [vmem:[#allocation3 + $0x448] sm:$0xf]
    %v5098 = vld [vmem:[#allocation3 + $0x44c] sm:$0xf]
    %v5099 = vld [vmem:[#allocation3 + $0x4c0] sm:$0xf]
    %v5100 = vld [vmem:[#allocation3 + $0x4c4] sm:$0xf]
    %v5101 = vld [vmem:[#allocation3 + $0x4c8] sm:$0xf]
    %v5102 = vld [vmem:[#allocation3 + $0x4cc] sm:$0xf]
    %v5103 = vmax.bf16 %v5095, %v5097
    %v5104 = vmax.bf16 %v5096, %v5098
    %v5105 = vmax.bf16 %v5099, %v5101
    %v5106 = vmax.bf16 %v5100, %v5102
    %v5107 = vmax.bf16 %v5103, %v5105
    %v5108 = vmax.bf16 %v5104, %v5106
    %5111 = vrot.lane.b32.xlu0 %v5107, 64
    %v5112 = vpop.permute.xlu0 %5111
    %5113 = vrot.lane.b32.xlu0 %v5108, 64
    %v5114 = vpop.permute.xlu0 %5113
    %5117 = vst.msk [vmem:[#allocation5 + $0xc] sm:$0xf] %vm4561, %v5112
    %5118 = vst.msk [vmem:[#allocation5 + $0x20] sm:$0xf] %vm4561, %v5114
    %v5119 = vld [vmem:[#allocation3 + $0x450] sm:$0xf]
    %v5120 = vld [vmem:[#allocation3 + $0x454] sm:$0xf]
    %v5121 = vld [vmem:[#allocation3 + $0x458] sm:$0xf]
    %v5122 = vld [vmem:[#allocation3 + $0x45c] sm:$0xf]
    %v5123 = vld [vmem:[#allocation3 + $0x4d0] sm:$0xf]
    %v5124 = vld [vmem:[#allocation3 + $0x4d4] sm:$0xf]
    %v5125 = vld [vmem:[#allocation3 + $0x4d8] sm:$0xf]
    %v5126 = vld [vmem:[#allocation3 + $0x4dc] sm:$0xf]
    %v5127 = vmax.bf16 %v5119, %v5121
    %v5128 = vmax.bf16 %v5120, %v5122
    %v5129 = vmax.bf16 %v5123, %v5125
    %v5130 = vmax.bf16 %v5124, %v5126
    %v5131 = vmax.bf16 %v5127, %v5129
    %v5132 = vmax.bf16 %v5128, %v5130
    %5135 = vrot.lane.b32.xlu0 %v5131, 80
    %v5136 = vpop.permute.xlu0 %5135
    %5137 = vrot.lane.b32.xlu0 %v5132, 80
    %v5138 = vpop.permute.xlu0 %5137
    %5141 = vst.msk [vmem:[#allocation5 + $0xc] sm:$0xf] %vm4586, %v5136
    %5142 = vst.msk [vmem:[#allocation5 + $0x20] sm:$0xf] %vm4586, %v5138
    %v5143 = vld [vmem:[#allocation3 + $0x500] sm:$0xf]
    %v5144 = vld [vmem:[#allocation3 + $0x504] sm:$0xf]
    %v5145 = vld [vmem:[#allocation3 + $0x508] sm:$0xf]
    %v5146 = vld [vmem:[#allocation3 + $0x50c] sm:$0xf]
    %v5147 = vld [vmem:[#allocation3 + $0x580] sm:$0xf]
    %v5148 = vld [vmem:[#allocation3 + $0x584] sm:$0xf]
    %v5149 = vld [vmem:[#allocation3 + $0x588] sm:$0xf]
    %v5150 = vld [vmem:[#allocation3 + $0x58c] sm:$0xf]
    %v5151 = vmax.bf16 %v5143, %v5145
    %v5152 = vmax.bf16 %v5144, %v5146
    %v5153 = vmax.bf16 %v5147, %v5149
    %v5154 = vmax.bf16 %v5148, %v5150
    %v5155 = vmax.bf16 %v5151, %v5153
    %v5156 = vmax.bf16 %v5152, %v5154
    %5159 = vrot.lane.b32.xlu0 %v5155, 96
    %v5160 = vpop.permute.xlu0 %5159
    %5161 = vrot.lane.b32.xlu0 %v5156, 96
    %v5162 = vpop.permute.xlu0 %5161
    %5165 = vst.msk [vmem:[#allocation5 + $0xc] sm:$0xf] %vm4611, %v5160
    %5166 = vst.msk [vmem:[#allocation5 + $0x20] sm:$0xf] %vm4611, %v5162
    %v5167 = vld [vmem:[#allocation3 + $0x510] sm:$0xf]
    %v5168 = vld [vmem:[#allocation3 + $0x514] sm:$0xf]
    %v5169 = vld [vmem:[#allocation3 + $0x518] sm:$0xf]
    %v5170 = vld [vmem:[#allocation3 + $0x51c] sm:$0xf]
    %v5171 = vld [vmem:[#allocation3 + $0x590] sm:$0xf]
    %v5172 = vld [vmem:[#allocation3 + $0x594] sm:$0xf]
    %v5173 = vld [vmem:[#allocation3 + $0x598] sm:$0xf]
    %v5174 = vld [vmem:[#allocation3 + $0x59c] sm:$0xf]
    %v5175 = vmax.bf16 %v5167, %v5169
    %v5176 = vmax.bf16 %v5168, %v5170
    %v5177 = vmax.bf16 %v5171, %v5173
    %v5178 = vmax.bf16 %v5172, %v5174
    %v5179 = vmax.bf16 %v5175, %v5177
    %v5180 = vmax.bf16 %v5176, %v5178
    %5183 = vrot.lane.b32.xlu0 %v5179, 112
    %v5184 = vpop.permute.xlu0 %5183
    %5185 = vrot.lane.b32.xlu0 %v5180, 112
    %v5186 = vpop.permute.xlu0 %5185
    %5189 = vst.msk [vmem:[#allocation5 + $0xc] sm:$0xf] %vm4636, %v5184
    %5190 = vst.msk [vmem:[#allocation5 + $0x20] sm:$0xf] %vm4636, %v5186
    %v5191 = vld [vmem:[#allocation3 + $0x520] sm:$0xf]
    %v5192 = vld [vmem:[#allocation3 + $0x524] sm:$0xf]
    %v5193 = vld [vmem:[#allocation3 + $0x528] sm:$0xf]
    %v5194 = vld [vmem:[#allocation3 + $0x52c] sm:$0xf]
    %v5195 = vld [vmem:[#allocation3 + $0x5a0] sm:$0xf]
    %v5196 = vld [vmem:[#allocation3 + $0x5a4] sm:$0xf]
    %v5197 = vld [vmem:[#allocation3 + $0x5a8] sm:$0xf]
    %v5198 = vld [vmem:[#allocation3 + $0x5ac] sm:$0xf]
    %v5199 = vmax.bf16 %v5191, %v5193
    %v5200 = vmax.bf16 %v5192, %v5194
    %v5201 = vmax.bf16 %v5195, %v5197
    %v5202 = vmax.bf16 %v5196, %v5198
    %v5203 = vmax.bf16 %v5199, %v5201
    %v5204 = vmax.bf16 %v5200, %v5202
    %5205 = vst.msk [vmem:[#allocation5 + $0x10] sm:$0xf] %vm4461, %v5203
    %5206 = vst.msk [vmem:[#allocation5 + $0x24] sm:$0xf] %vm4461, %v5204
    %v5207 = vld [vmem:[#allocation3 + $0x530] sm:$0xf]
    %v5208 = vld [vmem:[#allocation3 + $0x534] sm:$0xf]
    %v5209 = vld [vmem:[#allocation3 + $0x538] sm:$0xf]
    %v5210 = vld [vmem:[#allocation3 + $0x53c] sm:$0xf]
    %v5211 = vld [vmem:[#allocation3 + $0x5b0] sm:$0xf]
    %v5212 = vld [vmem:[#allocation3 + $0x5b4] sm:$0xf]
    %v5213 = vld [vmem:[#allocation3 + $0x5b8] sm:$0xf]
    %v5214 = vld [vmem:[#allocation3 + $0x5bc] sm:$0xf]
    %v5215 = vmax.bf16 %v5207, %v5209
    %v5216 = vmax.bf16 %v5208, %v5210
    %v5217 = vmax.bf16 %v5211, %v5213
    %v5218 = vmax.bf16 %v5212, %v5214
    %v5219 = vmax.bf16 %v5215, %v5217
    %v5220 = vmax.bf16 %v5216, %v5218
    %5223 = vrot.lane.b32.xlu0 %v5219, 16
    %v5224 = vpop.permute.xlu0 %5223
    %5225 = vrot.lane.b32.xlu0 %v5220, 16
    %v5226 = vpop.permute.xlu0 %5225
    %5229 = vst.msk [vmem:[#allocation5 + $0x10] sm:$0xf] %vm4486, %v5224
    %5230 = vst.msk [vmem:[#allocation5 + $0x24] sm:$0xf] %vm4486, %v5226
    %v5231 = vld [vmem:[#allocation3 + $0x540] sm:$0xf]
    %v5232 = vld [vmem:[#allocation3 + $0x544] sm:$0xf]
    %v5233 = vld [vmem:[#allocation3 + $0x548] sm:$0xf]
    %v5234 = vld [vmem:[#allocation3 + $0x54c] sm:$0xf]
    %v5235 = vld [vmem:[#allocation3 + $0x5c0] sm:$0xf]
    %v5236 = vld [vmem:[#allocation3 + $0x5c4] sm:$0xf]
    %v5237 = vld [vmem:[#allocation3 + $0x5c8] sm:$0xf]
    %v5238 = vld [vmem:[#allocation3 + $0x5cc] sm:$0xf]
    %v5239 = vmax.bf16 %v5231, %v5233
    %v5240 = vmax.bf16 %v5232, %v5234
    %v5241 = vmax.bf16 %v5235, %v5237
    %v5242 = vmax.bf16 %v5236, %v5238
    %v5243 = vmax.bf16 %v5239, %v5241
    %v5244 = vmax.bf16 %v5240, %v5242
    %5247 = vrot.lane.b32.xlu0 %v5243, 32
    %v5248 = vpop.permute.xlu0 %5247
    %5249 = vrot.lane.b32.xlu0 %v5244, 32
    %v5250 = vpop.permute.xlu0 %5249
    %5253 = vst.msk [vmem:[#allocation5 + $0x10] sm:$0xf] %vm4511, %v5248
    %5254 = vst.msk [vmem:[#allocation5 + $0x24] sm:$0xf] %vm4511, %v5250
    %v5255 = vld [vmem:[#allocation3 + $0x550] sm:$0xf]
    %v5256 = vld [vmem:[#allocation3 + $0x554] sm:$0xf]
    %v5257 = vld [vmem:[#allocation3 + $0x558] sm:$0xf]
    %v5258 = vld [vmem:[#allocation3 + $0x55c] sm:$0xf]
    %v5259 = vld [vmem:[#allocation3 + $0x5d0] sm:$0xf]
    %v5260 = vld [vmem:[#allocation3 + $0x5d4] sm:$0xf]
    %v5261 = vld [vmem:[#allocation3 + $0x5d8] sm:$0xf]
    %v5262 = vld [vmem:[#allocation3 + $0x5dc] sm:$0xf]
    %v5263 = vmax.bf16 %v5255, %v5257
    %v5264 = vmax.bf16 %v5256, %v5258
    %v5265 = vmax.bf16 %v5259, %v5261
    %v5266 = vmax.bf16 %v5260, %v5262
    %v5267 = vmax.bf16 %v5263, %v5265
    %v5268 = vmax.bf16 %v5264, %v5266
    %5271 = vrot.lane.b32.xlu0 %v5267, 48
    %v5272 = vpop.permute.xlu0 %5271
    %5273 = vrot.lane.b32.xlu0 %v5268, 48
    %v5274 = vpop.permute.xlu0 %5273
    %5277 = vst.msk [vmem:[#allocation5 + $0x10] sm:$0xf] %vm4536, %v5272
    %5278 = vst.msk [vmem:[#allocation5 + $0x24] sm:$0xf] %vm4536, %v5274
    %v5279 = vld [vmem:[#allocation5] sm:$0xff]
    %v5280 = vld [vmem:[#allocation5 + $0x8] sm:$0xff]
    %v5281 = vld [vmem:[#allocation5 + $0x10] sm:$0xf]
    %v5282 = vld [vmem:[#allocation5 + $0x14] sm:$0xff]
    %v5283 = vld [vmem:[#allocation5 + $0x1c] sm:$0xff]
    %v5284 = vld [vmem:[#allocation5 + $0x24] sm:$0xf]
    %v5285 = vld [vmem:[%s5] sm:$0xff]
    %v5286 = vld [vmem:[%s5 + $0x8] sm:$0xff]
    %v5287 = vld [vmem:[%s5 + $0x10] sm:$0xff]
    %v5288 = vld [vmem:[%s5 + $0x18] sm:$0xff]
    %v5289 = vld [vmem:[%s5 + $0x20] sm:$0xff]
    %v5290 = vld [vmem:[%s5 + $0x28] sm:$0xff]
    %v5291 = vld [vmem:[%s5 + $0x30] sm:$0xff]
    %v5292 = vld [vmem:[%s5 + $0x38] sm:$0xff]
    %v5293 = vld [vmem:[%s5 + $0x40] sm:$0xff]
    %v5294 = vld [vmem:[%s5 + $0x48] sm:$0xff]
    %v5295 = vld [vmem:[%s5 + $0x50] sm:$0xff]
    %v5296 = vld [vmem:[%s5 + $0x58] sm:$0xff]
    %v5297 = vld [vmem:[%s5 + $0x60] sm:$0xff]
    %v5298 = vld [vmem:[%s5 + $0x68] sm:$0xff]
    %v5299 = vld [vmem:[%s5 + $0x70] sm:$0xff]
    %v5300 = vld [vmem:[%s5 + $0x78] sm:$0xff]
    %v5301 = vld [vmem:[%s5 + $0x80] sm:$0xff]
    %v5302 = vld [vmem:[%s5 + $0x88] sm:$0xff]
    %v5303 = vld [vmem:[%s5 + $0x90] sm:$0xff]
    %v5304 = vld [vmem:[%s5 + $0x98] sm:$0xff]
    %v5305 = vld [vmem:[%s5 + $0xa0] sm:$0xff]
    %v5306 = vld [vmem:[%s5 + $0xa8] sm:$0xff]
    %v5307 = vld [vmem:[%s5 + $0xb0] sm:$0xff]
    %v5308 = vld [vmem:[%s5 + $0xb8] sm:$0xff]
    %v5309 = vld [vmem:[%s5 + $0xc0] sm:$0xff]
    %v5310 = vld [vmem:[%s5 + $0xc8] sm:$0xff]
    %v5311 = vld [vmem:[%s5 + $0xd0] sm:$0xff]
    %v5312 = vld [vmem:[%s5 + $0xd8] sm:$0xff]
    %v5313 = vld [vmem:[%s5 + $0xe0] sm:$0xff]
    %v5314 = vld [vmem:[%s5 + $0xe8] sm:$0xff]
    %v5315 = vld [vmem:[%s5 + $0xf0] sm:$0xff]
    %v5316 = vld [vmem:[%s5 + $0xf8] sm:$0xff]
    %v5317 = vld [vmem:[%s5 + $0x100] sm:$0xff]
    %v5318 = vld [vmem:[%s5 + $0x108] sm:$0xff]
    %v5319 = vld [vmem:[%s5 + $0x110] sm:$0xff]
    %v5320 = vld [vmem:[%s5 + $0x118] sm:$0xff]
    %v5321 = vld [vmem:[%s5 + $0x120] sm:$0xff]
    %v5322 = vld [vmem:[%s5 + $0x128] sm:$0xff]
    %v5323 = vld [vmem:[%s5 + $0x130] sm:$0xff]
    %v5324 = vld [vmem:[%s5 + $0x138] sm:$0xff]
    %v5325 = vld [vmem:[%s5 + $0x140] sm:$0xff]
    %v5326 = vld [vmem:[%s5 + $0x148] sm:$0xff]
    %v5327 = vld [vmem:[%s5 + $0x150] sm:$0xff]
    %v5328 = vld [vmem:[%s5 + $0x158] sm:$0xff]
    %v5329 = vld [vmem:[%s5 + $0x160] sm:$0xff]
    %v5330 = vld [vmem:[%s5 + $0x168] sm:$0xff]
    %v5331 = vld [vmem:[%s5 + $0x170] sm:$0xff]
    %v5332 = vld [vmem:[%s5 + $0x178] sm:$0xff]
    %v5333 = vld [vmem:[%s5 + $0x180] sm:$0xff]
    %v5334 = vld [vmem:[%s5 + $0x188] sm:$0xff]
    %v5335 = vld [vmem:[%s5 + $0x190] sm:$0xff]
    %v5336 = vld [vmem:[%s5 + $0x198] sm:$0xff]
    %v5337 = vld [vmem:[%s5 + $0x1a0] sm:$0xff]
    %v5338 = vld [vmem:[%s5 + $0x1a8] sm:$0xff]
    %v5339 = vld [vmem:[%s5 + $0x1b0] sm:$0xff]
    %v5340 = vld [vmem:[%s5 + $0x1b8] sm:$0xff]
    %v5341 = vld [vmem:[%s5 + $0x1c0] sm:$0xff]
    %v5342 = vld [vmem:[%s5 + $0x1c8] sm:$0xff]
    %v5343 = vld [vmem:[%s5 + $0x1d0] sm:$0xff]
    %v5344 = vld [vmem:[%s5 + $0x1d8] sm:$0xff]
    %v5345 = vld [vmem:[%s5 + $0x1e0] sm:$0xff]
    %v5346 = vld [vmem:[%s5 + $0x1e8] sm:$0xff]
    %v5347 = vld [vmem:[%s5 + $0x1f0] sm:$0xff]
    %v5348 = vld [vmem:[%s5 + $0x1f8] sm:$0xff]
    %v5349 = vld [vmem:[%s5 + $0x200] sm:$0xff]
    %v5350 = vld [vmem:[%s5 + $0x208] sm:$0xff]
    %v5351 = vld [vmem:[%s5 + $0x210] sm:$0xff]
    %v5352 = vld [vmem:[%s5 + $0x218] sm:$0xff]
    %v5353 = vld [vmem:[%s5 + $0x220] sm:$0xff]
    %v5354 = vld [vmem:[%s5 + $0x228] sm:$0xff]
    %v5355 = vld [vmem:[%s5 + $0x230] sm:$0xff]
    %v5356 = vld [vmem:[%s5 + $0x238] sm:$0xff]
    %v5357 = vld [vmem:[%s6] sm:$0x3]
    %v5359 = vlaneseq
    %v5360 = vshrl.u32 %v5359, 7
    %v5361 = vsub.s32 0, %v5360
    %v5362 = vrot.slane %v5357, %v5361
    %v5363 = vlaneseq
    %v5364 = vshrl.u32 %v5363, 7
    %v5365 = vsub.s32 1, %v5364
    %v5366 = vrot.slane %v5357, %v5365
    %v5375 = vunpack.c.l.b16 %v5279
    %v5376 = vunpack.c.h.b16 %v5279
    %v5377 = vunpack.c.l.b16 %v5280
    %v5378 = vunpack.c.h.b16 %v5280
    %v5379 = vunpack.c.l.b16 %v5281
    %v5380 = vunpack.c.l.b16 %v5282
    %v5381 = vunpack.c.h.b16 %v5282
    %v5382 = vunpack.c.l.b16 %v5283
    %v5383 = vunpack.c.h.b16 %v5283
    %v5384 = vunpack.c.l.b16 %v5284
    %v5385 = vpack.c.b16 %v5380, %v5375
    %v5386 = vpack.c.b16 %v5381, %v5376
    %v5387 = vpack.c.b16 %v5382, %v5377
    %v5388 = vpack.c.b16 %v5383, %v5378
    %v5389 = vpack.c.b16 %v5384, %v5379
    %v5466 = vunpack.c.l.b16 %v5285
    %v5467 = vunpack.c.h.b16 %v5285
    %v5468 = vunpack.c.l.b16 %v5286
    %v5469 = vunpack.c.h.b16 %v5286
    %v5470 = vunpack.c.l.b16 %v5287
    %v5471 = vunpack.c.h.b16 %v5287
    %v5472 = vunpack.c.l.b16 %v5288
    %v5473 = vunpack.c.h.b16 %v5288
    %v5474 = vunpack.c.l.b16 %v5289
    %v5475 = vunpack.c.h.b16 %v5289
    %v5476 = vunpack.c.l.b16 %v5290
    %v5477 = vunpack.c.h.b16 %v5290
    %v5478 = vunpack.c.l.b16 %v5291
    %v5479 = vunpack.c.h.b16 %v5291
    %v5480 = vunpack.c.l.b16 %v5292
    %v5481 = vunpack.c.h.b16 %v5292
    %v5482 = vunpack.c.l.b16 %v5293
    %v5483 = vunpack.c.h.b16 %v5293
    %v5484 = vunpack.c.l.b16 %v5294
    %v5485 = vunpack.c.h.b16 %v5294
    %v5486 = vunpack.c.l.b16 %v5295
    %v5487 = vunpack.c.h.b16 %v5295
    %v5488 = vunpack.c.l.b16 %v5296
    %v5489 = vunpack.c.h.b16 %v5296
    %v5490 = vunpack.c.l.b16 %v5297
    %v5491 = vunpack.c.h.b16 %v5297
    %v5492 = vunpack.c.l.b16 %v5298
    %v5493 = vunpack.c.h.b16 %v5298
    %v5494 = vunpack.c.l.b16 %v5299
    %v5495 = vunpack.c.h.b16 %v5299
    %v5496 = vunpack.c.l.b16 %v5300
    %v5497 = vunpack.c.h.b16 %v5300
    %v5498 = vunpack.c.l.b16 %v5301
    %v5499 = vunpack.c.h.b16 %v5301
    %v5500 = vunpack.c.l.b16 %v5302
    %v5501 = vunpack.c.h.b16 %v5302
    %v5502 = vunpack.c.l.b16 %v5303
    %v5503 = vunpack.c.h.b16 %v5303
    %v5504 = vunpack.c.l.b16 %v5304
    %v5505 = vunpack.c.h.b16 %v5304
    %v5506 = vunpack.c.l.b16 %v5305
    %v5507 = vunpack.c.h.b16 %v5305
    %v5508 = vunpack.c.l.b16 %v5306
    %v5509 = vunpack.c.h.b16 %v5306
    %v5510 = vunpack.c.l.b16 %v5307
    %v5511 = vunpack.c.h.b16 %v5307
    %v5512 = vunpack.c.l.b16 %v5308
    %v5513 = vunpack.c.h.b16 %v5308
    %v5514 = vunpack.c.l.b16 %v5309
    %v5515 = vunpack.c.h.b16 %v5309
    %v5516 = vunpack.c.l.b16 %v5310
    %v5517 = vunpack.c.h.b16 %v5310
    %v5518 = vunpack.c.l.b16 %v5311
    %v5519 = vunpack.c.h.b16 %v5311
    %v5520 = vunpack.c.l.b16 %v5312
    %v5521 = vunpack.c.h.b16 %v5312
    %v5522 = vunpack.c.l.b16 %v5313
    %v5523 = vunpack.c.h.b16 %v5313
    %v5524 = vunpack.c.l.b16 %v5314
    %v5525 = vunpack.c.h.b16 %v5314
    %v5526 = vunpack.c.l.b16 %v5315
    %v5527 = vunpack.c.h.b16 %v5315
    %v5528 = vunpack.c.l.b16 %v5316
    %v5529 = vunpack.c.h.b16 %v5316
    %v5530 = vunpack.c.l.b16 %v5317
    %v5531 = vunpack.c.h.b16 %v5317
    %v5532 = vunpack.c.l.b16 %v5318
    %v5533 = vunpack.c.h.b16 %v5318
    %v5534 = vunpack.c.l.b16 %v5319
    %v5535 = vunpack.c.h.b16 %v5319
    %v5536 = vunpack.c.l.b16 %v5320
    %v5537 = vunpack.c.h.b16 %v5320
    %v5538 = vunpack.c.l.b16 %v5321
    %v5539 = vunpack.c.h.b16 %v5321
    %v5540 = vunpack.c.l.b16 %v5322
    %v5541 = vunpack.c.h.b16 %v5322
    %v5542 = vunpack.c.l.b16 %v5323
    %v5543 = vunpack.c.h.b16 %v5323
    %v5544 = vunpack.c.l.b16 %v5324
    %v5545 = vunpack.c.h.b16 %v5324
    %v5546 = vunpack.c.l.b16 %v5325
    %v5547 = vunpack.c.h.b16 %v5325
    %v5548 = vunpack.c.l.b16 %v5326
    %v5549 = vunpack.c.h.b16 %v5326
    %v5550 = vunpack.c.l.b16 %v5327
    %v5551 = vunpack.c.h.b16 %v5327
    %v5552 = vunpack.c.l.b16 %v5328
    %v5553 = vunpack.c.h.b16 %v5328
    %v5554 = vunpack.c.l.b16 %v5329
    %v5555 = vunpack.c.h.b16 %v5329
    %v5556 = vunpack.c.l.b16 %v5330
    %v5557 = vunpack.c.h.b16 %v5330
    %v5558 = vunpack.c.l.b16 %v5331
    %v5559 = vunpack.c.h.b16 %v5331
    %v5560 = vunpack.c.l.b16 %v5332
    %v5561 = vunpack.c.h.b16 %v5332
    %v5562 = vunpack.c.l.b16 %v5333
    %v5563 = vunpack.c.h.b16 %v5333
    %v5564 = vunpack.c.l.b16 %v5334
    %v5565 = vunpack.c.h.b16 %v5334
    %v5566 = vunpack.c.l.b16 %v5335
    %v5567 = vunpack.c.h.b16 %v5335
    %v5568 = vunpack.c.l.b16 %v5336
    %v5569 = vunpack.c.h.b16 %v5336
    %v5570 = vunpack.c.l.b16 %v5337
    %v5571 = vunpack.c.h.b16 %v5337
    %v5572 = vunpack.c.l.b16 %v5338
    %v5573 = vunpack.c.h.b16 %v5338
    %v5574 = vunpack.c.l.b16 %v5339
    %v5575 = vunpack.c.h.b16 %v5339
    %v5576 = vunpack.c.l.b16 %v5340
    %v5577 = vunpack.c.h.b16 %v5340
    %v5578 = vunpack.c.l.b16 %v5341
    %v5579 = vunpack.c.h.b16 %v5341
    %v5580 = vunpack.c.l.b16 %v5342
    %v5581 = vunpack.c.h.b16 %v5342
    %v5582 = vunpack.c.l.b16 %v5343
    %v5583 = vunpack.c.h.b16 %v5343
    %v5584 = vunpack.c.l.b16 %v5344
    %v5585 = vunpack.c.h.b16 %v5344
    %v5586 = vunpack.c.l.b16 %v5345
    %v5587 = vunpack.c.h.b16 %v5345
    %v5588 = vunpack.c.l.b16 %v5346
    %v5589 = vunpack.c.h.b16 %v5346
    %v5590 = vunpack.c.l.b16 %v5347
    %v5591 = vunpack.c.h.b16 %v5347
    %v5592 = vunpack.c.l.b16 %v5348
    %v5593 = vunpack.c.h.b16 %v5348
    %v5594 = vunpack.c.l.b16 %v5349
    %v5595 = vunpack.c.h.b16 %v5349
    %v5596 = vunpack.c.l.b16 %v5350
    %v5597 = vunpack.c.h.b16 %v5350
    %v5598 = vunpack.c.l.b16 %v5351
    %v5599 = vunpack.c.h.b16 %v5351
    %v5600 = vunpack.c.l.b16 %v5352
    %v5601 = vunpack.c.h.b16 %v5352
    %v5602 = vunpack.c.l.b16 %v5353
    %v5603 = vunpack.c.h.b16 %v5353
    %v5604 = vunpack.c.l.b16 %v5354
    %v5605 = vunpack.c.h.b16 %v5354
    %v5606 = vunpack.c.l.b16 %v5355
    %v5607 = vunpack.c.h.b16 %v5355
    %v5608 = vunpack.c.l.b16 %v5356
    %v5609 = vunpack.c.h.b16 %v5356
    %v5610 = vpack.c.b16 %v5468, %v5466
    %v5611 = vpack.c.b16 %v5469, %v5467
    %v5612 = vpack.c.b16 %v5472, %v5470
    %v5613 = vpack.c.b16 %v5473, %v5471
    %v5614 = vpack.c.b16 %v5476, %v5474
    %v5615 = vpack.c.b16 %v5477, %v5475
    %v5616 = vpack.c.b16 %v5480, %v5478
    %v5617 = vpack.c.b16 %v5481, %v5479
    %v5618 = vpack.c.b16 %v5484, %v5482
    %v5619 = vpack.c.b16 %v5485, %v5483
    %v5620 = vpack.c.b16 %v5488, %v5486
    %v5621 = vpack.c.b16 %v5489, %v5487
    %v5622 = vpack.c.b16 %v5492, %v5490
    %v5623 = vpack.c.b16 %v5493, %v5491
    %v5624 = vpack.c.b16 %v5496, %v5494
    %v5625 = vpack.c.b16 %v5497, %v5495
    %v5626 = vpack.c.b16 %v5500, %v5498
    %v5627 = vpack.c.b16 %v5501, %v5499
    %v5628 = vpack.c.b16 %v5504, %v5502
    %v5629 = vpack.c.b16 %v5505, %v5503
    %v5630 = vpack.c.b16 %v5508, %v5506
    %v5631 = vpack.c.b16 %v5509, %v5507
    %v5632 = vpack.c.b16 %v5512, %v5510
    %v5633 = vpack.c.b16 %v5513, %v5511
    %v5634 = vpack.c.b16 %v5516, %v5514
    %v5635 = vpack.c.b16 %v5517, %v5515
    %v5636 = vpack.c.b16 %v5520, %v5518
    %v5637 = vpack.c.b16 %v5521, %v5519
    %v5638 = vpack.c.b16 %v5524, %v5522
    %v5639 = vpack.c.b16 %v5525, %v5523
    %v5640 = vpack.c.b16 %v5528, %v5526
    %v5641 = vpack.c.b16 %v5529, %v5527
    %v5642 = vpack.c.b16 %v5532, %v5530
    %v5643 = vpack.c.b16 %v5533, %v5531
    %v5644 = vpack.c.b16 %v5536, %v5534
    %v5645 = vpack.c.b16 %v5537, %v5535
    %v5646 = vpack.c.b16 %v5540, %v5538
    %v5647 = vpack.c.b16 %v5541, %v5539
    %v5648 = vpack.c.b16 %v5544, %v5542
    %v5649 = vpack.c.b16 %v5545, %v5543
    %v5650 = vpack.c.b16 %v5548, %v5546
    %v5651 = vpack.c.b16 %v5549, %v5547
    %v5652 = vpack.c.b16 %v5552, %v5550
    %v5653 = vpack.c.b16 %v5553, %v5551
    %v5654 = vpack.c.b16 %v5556, %v5554
    %v5655 = vpack.c.b16 %v5557, %v5555
    %v5656 = vpack.c.b16 %v5560, %v5558
    %v5657 = vpack.c.b16 %v5561, %v5559
    %v5658 = vpack.c.b16 %v5564, %v5562
    %v5659 = vpack.c.b16 %v5565, %v5563
    %v5660 = vpack.c.b16 %v5568, %v5566
    %v5661 = vpack.c.b16 %v5569, %v5567
    %v5662 = vpack.c.b16 %v5572, %v5570
    %v5663 = vpack.c.b16 %v5573, %v5571
    %v5664 = vpack.c.b16 %v5576, %v5574
    %v5665 = vpack.c.b16 %v5577, %v5575
    %v5666 = vpack.c.b16 %v5580, %v5578
    %v5667 = vpack.c.b16 %v5581, %v5579
    %v5668 = vpack.c.b16 %v5584, %v5582
    %v5669 = vpack.c.b16 %v5585, %v5583
    %v5670 = vpack.c.b16 %v5588, %v5586
    %v5671 = vpack.c.b16 %v5589, %v5587
    %v5672 = vpack.c.b16 %v5592, %v5590
    %v5673 = vpack.c.b16 %v5593, %v5591
    %v5674 = vpack.c.b16 %v5596, %v5594
    %v5675 = vpack.c.b16 %v5597, %v5595
    %v5676 = vpack.c.b16 %v5600, %v5598
    %v5677 = vpack.c.b16 %v5601, %v5599
    %v5678 = vpack.c.b16 %v5604, %v5602
    %v5679 = vpack.c.b16 %v5605, %v5603
    %v5680 = vpack.c.b16 %v5608, %v5606
    %v5681 = vpack.c.b16 %v5609, %v5607
    %vm5754 = vcmask 523264
    %v5756 = vsel %vm5754, %v5389, 0
    %5758 = vmatprep.subr.bf16.mxu0 %v5625
    %5759 = vmatpush1.bf16.msra.mxu0 %v5624
    %5760 = vmatprep.subr.bf16.mxu0 %v5623
    %5761 = vmatpush1.bf16.msra.mxu0 %v5622
    %5762 = vmatprep.subr.bf16.mxu0 %v5621
    %5763 = vmatpush1.bf16.msra.mxu0 %v5620
    %5764 = vmatprep.subr.bf16.mxu0 %v5619
    %5765 = vmatpush1.bf16.msra.mxu0 %v5618
    %5766 = vmatprep.subr.bf16.mxu0 %v5617
    %5767 = vmatpush1.bf16.msra.mxu0 %v5616
    %5768 = vmatprep.subr.bf16.mxu0 %v5615
    %5769 = vmatpush1.bf16.msra.mxu0 %v5614
    %5770 = vmatprep.subr.bf16.mxu0 %v5613
    %5771 = vmatpush1.bf16.msra.mxu0 %v5612
    %5772 = vmatprep.subr.bf16.mxu0 %v5611
    %5773 = vmatpush1.bf16.msra.mxu0 %v5610
    %5774 = vmatprep.subr.bf16.mxu0 %v5641
    %5775 = vmatpush2.bf16.msra.mxu0 %v5640
    %5776 = vmatprep.subr.bf16.mxu0 %v5639
    %5777 = vmatpush2.bf16.msra.mxu0 %v5638
    %5778 = vmatprep.subr.bf16.mxu0 %v5637
    %5779 = vmatpush2.bf16.msra.mxu0 %v5636
    %5780 = vmatprep.subr.bf16.mxu0 %v5635
    %5781 = vmatpush2.bf16.msra.mxu0 %v5634
    %5782 = vmatprep.subr.bf16.mxu0 %v5633
    %5783 = vmatpush2.bf16.msra.mxu0 %v5632
    %5784 = vmatprep.subr.bf16.mxu0 %v5631
    %5785 = vmatpush2.bf16.msra.mxu0 %v5630
    %5786 = vmatprep.subr.bf16.mxu0 %v5629
    %5787 = vmatpush2.bf16.msra.mxu0 %v5628
    %5788 = vmatprep.subr.bf16.mxu0 %v5627
    %5789 = vmatpush2.bf16.msra.mxu0 %v5626
    %5790 = vmatprep.mubr.bf16.mxu0 %v5386
    %5791 = vmatmul.mubr.bf16.gmra.mxu0 %v5385
    %v5792 = vpop.f32.mrf.mxu0
    %v5793 = vadd.f32 %v5362, %v5792
    %v5794 = vpop.f32.mrf.mxu0
    %v5795 = vadd.f32 %v5366, %v5794
    %v5796 = vpop.f32.mrf.mxu0
    %v5797 = vadd.f32 %v5362, %v5796
    %v5798 = vpop.f32.mrf.mxu0
    %v5799 = vadd.f32 %v5366, %v5798
    %5800 = vdwg.mxu0
    %5801 = vmatprep.subr.bf16.mxu0 %v5657
    %5802 = vmatpush1.bf16.msra.mxu0 %v5656
    %5803 = vmatprep.subr.bf16.mxu0 %v5655
    %5804 = vmatpush1.bf16.msra.mxu0 %v5654
    %5805 = vmatprep.subr.bf16.mxu0 %v5653
    %5806 = vmatpush1.bf16.msra.mxu0 %v5652
    %5807 = vmatprep.subr.bf16.mxu0 %v5651
    %5808 = vmatpush1.bf16.msra.mxu0 %v5650
    %5809 = vmatprep.subr.bf16.mxu0 %v5649
    %5810 = vmatpush1.bf16.msra.mxu0 %v5648
    %5811 = vmatprep.subr.bf16.mxu0 %v5647
    %5812 = vmatpush1.bf16.msra.mxu0 %v5646
    %5813 = vmatprep.subr.bf16.mxu0 %v5645
    %5814 = vmatpush1.bf16.msra.mxu0 %v5644
    %5815 = vmatprep.subr.bf16.mxu0 %v5643
    %5816 = vmatpush1.bf16.msra.mxu0 %v5642
    %5817 = vmatprep.subr.bf16.mxu0 %v5673
    %5818 = vmatpush2.bf16.msra.mxu0 %v5672
    %5819 = vmatprep.subr.bf16.mxu0 %v5671
    %5820 = vmatpush2.bf16.msra.mxu0 %v5670
    %5821 = vmatprep.subr.bf16.mxu0 %v5669
    %5822 = vmatpush2.bf16.msra.mxu0 %v5668
    %5823 = vmatprep.subr.bf16.mxu0 %v5667
    %5824 = vmatpush2.bf16.msra.mxu0 %v5666
    %5825 = vmatprep.subr.bf16.mxu0 %v5665
    %5826 = vmatpush2.bf16.msra.mxu0 %v5664
    %5827 = vmatprep.subr.bf16.mxu0 %v5663
    %5828 = vmatpush2.bf16.msra.mxu0 %v5662
    %5829 = vmatprep.subr.bf16.mxu0 %v5661
    %5830 = vmatpush2.bf16.msra.mxu0 %v5660
    %5831 = vmatprep.subr.bf16.mxu0 %v5659
    %5832 = vmatpush2.bf16.msra.mxu0 %v5658
    %5833 = vmatprep.mubr.bf16.mxu0 %v5388
    %5834 = vmatmul.mubr.bf16.gmra.mxu0 %v5387
    %v5835 = vpop.f32.mrf.mxu0
    %v5836 = vadd.f32 %v5793, %v5835
    %v5837 = vpop.f32.mrf.mxu0
    %v5838 = vadd.f32 %v5795, %v5837
    %v5839 = vpop.f32.mrf.mxu0
    %v5840 = vadd.f32 %v5797, %v5839
    %v5841 = vpop.f32.mrf.mxu0
    %v5842 = vadd.f32 %v5799, %v5841
    %5843 = vdwg.mxu0
    %5844 = vmatprep.subr.bf16.mxu0 0
    %5845 = vmatpush1.bf16.msra.mxu0 0
    %5846 = vmatprep.subr.bf16.mxu0 0
    %5847 = vmatpush1.bf16.msra.mxu0 0
    %5848 = vmatprep.subr.bf16.mxu0 0
    %5849 = vmatpush1.bf16.msra.mxu0 0
    %5850 = vmatprep.subr.bf16.mxu0 0
    %5851 = vmatpush1.bf16.msra.mxu0 0
    %5852 = vmatprep.subr.bf16.mxu0 %v5681
    %5853 = vmatpush1.bf16.msra.mxu0 %v5680
    %5854 = vmatprep.subr.bf16.mxu0 %v5679
    %5855 = vmatpush1.bf16.msra.mxu0 %v5678
    %5856 = vmatprep.subr.bf16.mxu0 %v5677
    %5857 = vmatpush1.bf16.msra.mxu0 %v5676
    %5858 = vmatprep.subr.bf16.mxu0 %v5675
    %5859 = vmatpush1.bf16.msra.mxu0 %v5674
    %5860 = vmatprep.subr.bf16.mxu0 0
    %5861 = vmatpush2.bf16.msra.mxu0 0
    %5862 = vmatprep.subr.bf16.mxu0 0
    %5863 = vmatpush2.bf16.msra.mxu0 0
    %5864 = vmatprep.subr.bf16.mxu0 0
    %5865 = vmatpush2.bf16.msra.mxu0 0
    %5866 = vmatprep.subr.bf16.mxu0 0
    %5867 = vmatpush2.bf16.msra.mxu0 0
    %5868 = vmatprep.subr.bf16.mxu0 0
    %5869 = vmatpush2.bf16.msra.mxu0 0
    %5870 = vmatprep.subr.bf16.mxu0 0
    %5871 = vmatpush2.bf16.msra.mxu0 0
    %5872 = vmatprep.subr.bf16.mxu0 0
    %5873 = vmatpush2.bf16.msra.mxu0 0
    %5874 = vmatprep.subr.bf16.mxu0 0
    %5875 = vmatpush2.bf16.msra.mxu0 0
    %5876 = vmatprep.mubr.bf16.mxu0 0
    %5877 = vmatmul.mubr.bf16.gmra.mxu0 %v5756
    %v5878 = vpop.f32.mrf.mxu0
    %v5879 = vadd.f32 %v5836, %v5878
    %v5880 = vpop.f32.mrf.mxu0
    %v5881 = vadd.f32 %v5838, %v5880
    %v5882 = vpop.f32.mrf.mxu0
    %v5883 = vadd.f32 %v5840, %v5882
    %v5884 = vpop.f32.mrf.mxu0
    %v5885 = vadd.f32 %v5842, %v5884
    %5886 = vdwg.mxu0
    %v5887 = vmax.f32 %v5879, 0.0
    %v5888 = vmax.f32 %v5881, 0.0
    %v5889 = vmax.f32 %v5883, 0.0
    %v5890 = vmax.f32 %v5885, 0.0
    %v5891 = vpack.c.bf16 %v5889, %v5887
    %v5892 = vpack.c.bf16 %v5890, %v5888
    %v5893 = vld [vmem:[%s7] sm:$0xf]
    %v5894 = vld [vmem:[%s7 + $0x4] sm:$0xf]
    %v5895 = vld [vmem:[%s7 + $0x8] sm:$0xf]
    %v5896 = vld [vmem:[%s7 + $0xc] sm:$0xf]
    %v5897 = vld [vmem:[%s7 + $0x10] sm:$0xf]
    %v5898 = vld [vmem:[%s7 + $0x14] sm:$0xf]
    %v5899 = vld [vmem:[%s7 + $0x18] sm:$0xf]
    %v5900 = vld [vmem:[%s7 + $0x1c] sm:$0xf]
    %v5901 = vld [vmem:[%s7 + $0x20] sm:$0xf]
    %v5902 = vld [vmem:[%s7 + $0x24] sm:$0xf]
    %v5903 = vld [vmem:[%s7 + $0x28] sm:$0xf]
    %v5904 = vld [vmem:[%s7 + $0x2c] sm:$0xf]
    %v5905 = vld [vmem:[%s7 + $0x30] sm:$0xf]
    %v5906 = vld [vmem:[%s7 + $0x34] sm:$0xf]
    %v5907 = vld [vmem:[%s7 + $0x38] sm:$0xf]
    %v5908 = vld [vmem:[%s7 + $0x3c] sm:$0xf]
    %v5909 = vld [vmem:[%s7 + $0x40] sm:$0xf]
    %v5910 = vld [vmem:[%s7 + $0x44] sm:$0xf]
    %v5911 = vld [vmem:[%s7 + $0x48] sm:$0xf]
    %v5912 = vld [vmem:[%s7 + $0x4c] sm:$0xf]
    %v5913 = vld [vmem:[%s7 + $0x50] sm:$0xf]
    %v5914 = vld [vmem:[%s7 + $0x54] sm:$0xf]
    %v5915 = vld [vmem:[%s7 + $0x58] sm:$0xf]
    %v5916 = vld [vmem:[%s7 + $0x5c] sm:$0xf]
    %v5917 = vld [vmem:[%s7 + $0x60] sm:$0xf]
    %v5918 = vld [vmem:[%s8] sm:$0x1]
    %v5920 = vlaneseq
    %v5921 = vshrl.u32 %v5920, 7
    %v5922 = vsub.s32 0, %v5921
    %v5923 = vrot.slane %v5918, %v5922
    %v5950 = vunpack.c.l.b16 %v5893
    %v5951 = vunpack.c.l.b16 %v5894
    %v5952 = vunpack.c.l.b16 %v5895
    %v5953 = vunpack.c.l.b16 %v5896
    %v5954 = vunpack.c.l.b16 %v5897
    %v5955 = vunpack.c.l.b16 %v5898
    %v5956 = vunpack.c.l.b16 %v5899
    %v5957 = vunpack.c.l.b16 %v5900
    %v5958 = vunpack.c.l.b16 %v5901
    %v5959 = vunpack.c.l.b16 %v5902
    %v5960 = vunpack.c.l.b16 %v5903
    %v5961 = vunpack.c.l.b16 %v5904
    %v5962 = vunpack.c.l.b16 %v5905
    %v5963 = vunpack.c.l.b16 %v5906
    %v5964 = vunpack.c.l.b16 %v5907
    %v5965 = vunpack.c.l.b16 %v5908
    %v5966 = vunpack.c.l.b16 %v5909
    %v5967 = vunpack.c.l.b16 %v5910
    %v5968 = vunpack.c.l.b16 %v5911
    %v5969 = vunpack.c.l.b16 %v5912
    %v5970 = vunpack.c.l.b16 %v5913
    %v5971 = vunpack.c.l.b16 %v5914
    %v5972 = vunpack.c.l.b16 %v5915
    %v5973 = vunpack.c.l.b16 %v5916
    %v5974 = vunpack.c.l.b16 %v5917
    %v5975 = vpack.c.b16 %v5951, %v5950
    %v5976 = vpack.c.b16 %v5953, %v5952
    %v5977 = vpack.c.b16 %v5955, %v5954
    %v5978 = vpack.c.b16 %v5957, %v5956
    %v5979 = vpack.c.b16 %v5959, %v5958
    %v5980 = vpack.c.b16 %v5961, %v5960
    %v5981 = vpack.c.b16 %v5963, %v5962
    %v5982 = vpack.c.b16 %v5965, %v5964
    %v5983 = vpack.c.b16 %v5967, %v5966
    %v5984 = vpack.c.b16 %v5969, %v5968
    %v5985 = vpack.c.b16 %v5971, %v5970
    %v5986 = vpack.c.b16 %v5973, %v5972
    %v5987 = vpack.c.b16 %v5974, %v5974
    %vm6000 = vcmask 588800
    %v6002 = vsel %vm6000, %v5892, 0
    %vm6004 = vcmask 1043456
    %v6006 = vsel %vm6004, %v5987, 0
    %6008 = vmatprep.subr.bf16.mxu0 0
    %6009 = vmatpush1.bf16.msra.mxu0 %v5982
    %6010 = vmatprep.subr.bf16.mxu0 0
    %6011 = vmatpush1.bf16.msra.mxu0 %v5981
    %6012 = vmatprep.subr.bf16.mxu0 0
    %6013 = vmatpush1.bf16.msra.mxu0 %v5980
    %6014 = vmatprep.subr.bf16.mxu0 0
    %6015 = vmatpush1.bf16.msra.mxu0 %v5979
    %6016 = vmatprep.subr.bf16.mxu0 0
    %6017 = vmatpush1.bf16.msra.mxu0 %v5978
    %6018 = vmatprep.subr.bf16.mxu0 0
    %6019 = vmatpush1.bf16.msra.mxu0 %v5977
    %6020 = vmatprep.subr.bf16.mxu0 0
    %6021 = vmatpush1.bf16.msra.mxu0 %v5976
    %6022 = vmatprep.subr.bf16.mxu0 0
    %6023 = vmatpush1.bf16.msra.mxu0 %v5975
    %6024 = vmatprep.subr.bf16.mxu0 0
    %6025 = vmatpush2.bf16.msra.mxu0 0
    %6026 = vmatprep.subr.bf16.mxu0 0
    %6027 = vmatpush2.bf16.msra.mxu0 0
    %6028 = vmatprep.subr.bf16.mxu0 0
    %6029 = vmatpush2.bf16.msra.mxu0 0
    %6030 = vmatprep.subr.bf16.mxu0 0
    %6031 = vmatpush2.bf16.msra.mxu0 %v6006
    %6032 = vmatprep.subr.bf16.mxu0 0
    %6033 = vmatpush2.bf16.msra.mxu0 %v5986
    %6034 = vmatprep.subr.bf16.mxu0 0
    %6035 = vmatpush2.bf16.msra.mxu0 %v5985
    %6036 = vmatprep.subr.bf16.mxu0 0
    %6037 = vmatpush2.bf16.msra.mxu0 %v5984
    %6038 = vmatprep.subr.bf16.mxu0 0
    %6039 = vmatpush2.bf16.msra.mxu0 %v5983
    %6040 = vmatprep.mubr.bf16.mxu0 %v6002
    %6041 = vmatmul.mubr.bf16.gmra.mxu0 %v5891
    %v6042 = vpop.f32.mrf.mxu0
    %v6043 = vadd.f32 %v5923, %v6042
    %v6044 = vpop.f32.mrf.mxu0
    %v6045 = vpop.f32.mrf.mxu0
    %v6046 = vadd.f32 %v5923, %v6045
    %v6047 = vpop.f32.mrf.mxu0
    %6048 = vdwg.mxu0
    %v6049 = vmax.f32 %v6043, 0.0
    %v6050 = vmax.f32 %v6046, 0.0
    %v6051 = vpack.c.bf16 %v6050, %v6049
    %v6052 = vld [vmem:[%s9] sm:$0xf]
    %v6053 = vld [vmem:[%s9 + $0x4] sm:$0xf]
    %v6054 = vld [vmem:[%s9 + $0x8] sm:$0xf]
    %v6055 = vld [vmem:[%s9 + $0xc] sm:$0xf]
    %v6056 = vld [vmem:[%s9 + $0x10] sm:$0xf]
    %v6057 = vld [vmem:[%s9 + $0x14] sm:$0xf]
    %v6058 = vld [vmem:[%s9 + $0x18] sm:$0x1]
    %v6059 = vld [vmem:[%s11] sm:$0x1]
    %v6061 = vlaneseq
    %v6062 = vshrl.u32 %v6061, 7
    %v6063 = vsub.s32 0, %v6062
    %v6064 = vrot.slane %v6059, %v6063
    %v6073 = vunpack.c.l.b16 %v6052
    %v6074 = vunpack.c.l.b16 %v6053
    %v6075 = vunpack.c.l.b16 %v6054
    %v6076 = vunpack.c.l.b16 %v6055
    %v6077 = vunpack.c.l.b16 %v6056
    %v6078 = vunpack.c.l.b16 %v6057
    %v6079 = vunpack.c.l.b16 %v6058
    %v6080 = vpack.c.b16 %v6074, %v6073
    %v6081 = vpack.c.b16 %v6076, %v6075
    %v6082 = vpack.c.b16 %v6078, %v6077
    %v6083 = vpack.c.b16 %v6079, %v6079
    %vm6087 = vcmask 408576
    %v6089 = vsel %vm6087, %v6051, 0
    %vm6091 = vcmask 1040384
    %v6093 = vsel %vm6091, %v6083, 0
    %6095 = vmatprep.subr.bf16.mxu0 0
    %6096 = vmatpush1.bf16.msra.mxu0 0
    %6097 = vmatprep.subr.bf16.mxu0 0
    %6098 = vmatpush1.bf16.msra.mxu0 0
    %6099 = vmatprep.subr.bf16.mxu0 0
    %6100 = vmatpush1.bf16.msra.mxu0 0
    %6101 = vmatprep.subr.bf16.mxu0 0
    %6102 = vmatpush1.bf16.msra.mxu0 0
    %6103 = vmatprep.subr.bf16.mxu0 0
    %6104 = vmatpush1.bf16.msra.mxu0 %v6093
    %6105 = vmatprep.subr.bf16.mxu0 0
    %6106 = vmatpush1.bf16.msra.mxu0 %v6082
    %6107 = vmatprep.subr.bf16.mxu0 0
    %6108 = vmatpush1.bf16.msra.mxu0 %v6081
    %6109 = vmatprep.subr.bf16.mxu0 0
    %6110 = vmatpush1.bf16.msra.mxu0 %v6080
    %6111 = vmatprep.subr.bf16.mxu0 0
    %6112 = vmatpush2.bf16.msra.mxu0 0
    %6113 = vmatprep.subr.bf16.mxu0 0
    %6114 = vmatpush2.bf16.msra.mxu0 0
    %6115 = vmatprep.subr.bf16.mxu0 0
    %6116 = vmatpush2.bf16.msra.mxu0 0
    %6117 = vmatprep.subr.bf16.mxu0 0
    %6118 = vmatpush2.bf16.msra.mxu0 0
    %6119 = vmatprep.subr.bf16.mxu0 0
    %6120 = vmatpush2.bf16.msra.mxu0 0
    %6121 = vmatprep.subr.bf16.mxu0 0
    %6122 = vmatpush2.bf16.msra.mxu0 0
    %6123 = vmatprep.subr.bf16.mxu0 0
    %6124 = vmatpush2.bf16.msra.mxu0 0
    %6125 = vmatprep.subr.bf16.mxu0 0
    %6126 = vmatpush2.bf16.msra.mxu0 0
    %6127 = vmatprep.mubr.bf16.mxu0 0
    %6128 = vmatmul.mubr.bf16.gmra.mxu0 %v6089
    %v6129 = vpop.f32.mrf.mxu0
    %v6130 = vadd.f32 %v6064, %v6129
    %v6131 = vpop.f32.mrf.mxu0
    %v6132 = vpop.f32.mrf.mxu0
    %v6133 = vadd.f32 %v6064, %v6132
    %v6134 = vpop.f32.mrf.mxu0
    %6135 = vdwg.mxu0
    %v6136 = vld [vmem:[%s10] sm:$0xf]
    %v6137 = vld [vmem:[%s10 + $0x4] sm:$0xf]
    %v6138 = vld [vmem:[%s10 + $0x8] sm:$0xf]
    %v6139 = vld [vmem:[%s10 + $0xc] sm:$0xf]
    %v6144 = vunpack.c.l.b16 %v6136
    %v6145 = vunpack.c.l.b16 %v6137
    %v6146 = vunpack.c.l.b16 %v6138
    %v6147 = vunpack.c.l.b16 %v6139
    %v6148 = vpack.c.b16 %v6145, %v6144
    %v6149 = vpack.c.b16 %v6147, %v6146
    %vm6152 = vcmask 261120
    %v6154 = vsel %vm6152, 0, 0
    %6156 = vmatprep.subr.bf16.mxu0 0
    %6157 = vmatpush1.bf16.msra.mxu0 0
    %6158 = vmatprep.subr.bf16.mxu0 0
    %6159 = vmatpush1.bf16.msra.mxu0 0
    %6160 = vmatprep.subr.bf16.mxu0 0
    %6161 = vmatpush1.bf16.msra.mxu0 0
    %6162 = vmatprep.subr.bf16.mxu0 0
    %6163 = vmatpush1.bf16.msra.mxu0 0
    %6164 = vmatprep.subr.bf16.mxu0 0
    %6165 = vmatpush1.bf16.msra.mxu0 0
    %6166 = vmatprep.subr.bf16.mxu0 0
    %6167 = vmatpush1.bf16.msra.mxu0 0
    %6168 = vmatprep.subr.bf16.mxu0 0
    %6169 = vmatpush1.bf16.msra.mxu0 %v6149
    %6170 = vmatprep.subr.bf16.mxu0 0
    %6171 = vmatpush1.bf16.msra.mxu0 %v6148
    %6172 = vmatprep.subr.bf16.mxu0 0
    %6173 = vmatpush2.bf16.msra.mxu0 0
    %6174 = vmatprep.subr.bf16.mxu0 0
    %6175 = vmatpush2.bf16.msra.mxu0 0
    %6176 = vmatprep.subr.bf16.mxu0 0
    %6177 = vmatpush2.bf16.msra.mxu0 0
    %6178 = vmatprep.subr.bf16.mxu0 0
    %6179 = vmatpush2.bf16.msra.mxu0 0
    %6180 = vmatprep.subr.bf16.mxu0 0
    %6181 = vmatpush2.bf16.msra.mxu0 0
    %6182 = vmatprep.subr.bf16.mxu0 0
    %6183 = vmatpush2.bf16.msra.mxu0 0
    %6184 = vmatprep.subr.bf16.mxu0 0
    %6185 = vmatpush2.bf16.msra.mxu0 0
    %6186 = vmatprep.subr.bf16.mxu0 0
    %6187 = vmatpush2.bf16.msra.mxu0 0
    %6188 = vmatprep.mubr.bf16.mxu0 0
    %6189 = vmatmul.mubr.bf16.gmra.mxu0 %v6154
    %v6190 = vpop.f32.mrf.mxu0
    %v6191 = vadd.f32 0.0, %v6190
    %v6192 = vpop.f32.mrf.mxu0
    %v6193 = vpop.f32.mrf.mxu0
    %v6194 = vpop.f32.mrf.mxu0
    %6195 = vdwg.mxu0
    %v6196 = vadd.f32 %v6130, %v6191
    %v6197 = vsub.f32 0.0, %v6196
    %v6198 = vmul.f32 %v6197, 1.442695
    %v6199 = vpow.pop %v6198
    %v6200 = vadd.f32 %v6199, 1.0
    %v6201 = vrcp.pop %v6200
    %v6202 = vtanh.pop %v6196
    %v6203 = vmul.f32 %v6201, 0.0
    %6205 = vrot.lane.b32.xlu0 %v6202, 64
    %v6206 = vpop.permute.xlu0 %6205
    %v6208 = vmul.f32 %v6201, %v6206
    %6210 = vrot.lane.b32.xlu0 %v6208, 32
    %v6211 = vpop.permute.xlu0 %6210
    %v6213 = vadd.f32 %v6203, %v6211
    %v6214 = vtanh.pop %v6213
    %6216 = vrot.lane.b32.xlu0 %v6214, 64
    %v6217 = vpop.permute.xlu0 %6216
    %v6219 = vmul.f32 %v6201, %v6217
    %v6220 = vpack.c.bf16 %v6219, %v6219
    %6222 = vrot.lane.b32.xlu0 %v6220, 32
    %v6223 = vpop.permute.xlu0 %6222
    %v6225 = vsel %vm6152, %v6223, 0
    %6227 = vmatprep.subr.bf16.mxu0 0
    %6228 = vmatpush1.bf16.msra.mxu0 0
    %6229 = vmatprep.subr.bf16.mxu0 0
    %6230 = vmatpush1.bf16.msra.mxu0 0
    %6231 = vmatprep.subr.bf16.mxu0 0
    %6232 = vmatpush1.bf16.msra.mxu0 0
    %6233 = vmatprep.subr.bf16.mxu0 0
    %6234 = vmatpush1.bf16.msra.mxu0 0
    %6235 = vmatprep.subr.bf16.mxu0 0
    %6236 = vmatpush1.bf16.msra.mxu0 0
    %6237 = vmatprep.subr.bf16.mxu0 0
    %6238 = vmatpush1.bf16.msra.mxu0 0
    %6239 = vmatprep.subr.bf16.mxu0 0
    %6240 = vmatpush1.bf16.msra.mxu0 %v6149
    %6241 = vmatprep.subr.bf16.mxu0 0
    %6242 = vmatpush1.bf16.msra.mxu0 %v6148
    %6243 = vmatprep.subr.bf16.mxu0 0
    %6244 = vmatpush2.bf16.msra.mxu0 0
    %6245 = vmatprep.subr.bf16.mxu0 0
    %6246 = vmatpush2.bf16.msra.mxu0 0
    %6247 = vmatprep.subr.bf16.mxu0 0
    %6248 = vmatpush2.bf16.msra.mxu0 0
    %6249 = vmatprep.subr.bf16.mxu0 0
    %6250 = vmatpush2.bf16.msra.mxu0 0
    %6251 = vmatprep.subr.bf16.mxu0 0
    %6252 = vmatpush2.bf16.msra.mxu0 0
    %6253 = vmatprep.subr.bf16.mxu0 0
    %6254 = vmatpush2.bf16.msra.mxu0 0
    %6255 = vmatprep.subr.bf16.mxu0 0
    %6256 = vmatpush2.bf16.msra.mxu0 0
    %6257 = vmatprep.subr.bf16.mxu0 0
    %6258 = vmatpush2.bf16.msra.mxu0 0
    %6259 = vmatprep.mubr.bf16.mxu0 0
    %6260 = vmatmul.mubr.bf16.gmra.mxu0 %v6225
    %v6261 = vpop.f32.mrf.mxu0
    %v6262 = vadd.f32 0.0, %v6261
    %v6263 = vpop.f32.mrf.mxu0
    %v6264 = vpop.f32.mrf.mxu0
    %v6265 = vpop.f32.mrf.mxu0
    %6266 = vdwg.mxu0
    %v6268 = vrot.slane %v6262, 6
    %v6270 = vadd.f32 %v6130, %v6268
    %v6271 = vsub.f32 0.0, %v6270
    %v6272 = vmul.f32 %v6271, 1.442695
    %v6273 = vpow.pop %v6272
    %v6274 = vadd.f32 %v6273, 1.0
    %v6275 = vrcp.pop %v6274
    %v6276 = vtanh.pop %v6270
    %v6278 = vrot.slane %v6213, 6
    %v6280 = vmul.f32 %v6275, %v6278
    %6282 = vrot.lane.b32.xlu0 %v6276, 64
    %v6283 = vpop.permute.xlu0 %6282
    %v6285 = vmul.f32 %v6275, %v6283
    %6287 = vrot.lane.b32.xlu0 %v6285, 32
    %v6288 = vpop.permute.xlu0 %6287
    %v6290 = vadd.f32 %v6280, %v6288
    %v6291 = vtanh.pop %v6290
    %6293 = vrot.lane.b32.xlu0 %v6291, 64
    %v6294 = vpop.permute.xlu0 %6293
    %v6296 = vmul.f32 %v6275, %v6294
    %v6297 = vpack.c.bf16 %v6296, %v6296
    %v6299 = vrot.slane %v6297, 1
    %6300 = vrot.lane.b32.xlu0 %v6299, 32
    %v6301 = vpop.permute.xlu0 %6300
    %v6303 = vsel %vm6152, %v6301, 0
    %6305 = vmatprep.subr.bf16.mxu0 0
    %6306 = vmatpush1.bf16.msra.mxu0 0
    %6307 = vmatprep.subr.bf16.mxu0 0
    %6308 = vmatpush1.bf16.msra.mxu0 0
    %6309 = vmatprep.subr.bf16.mxu0 0
    %6310 = vmatpush1.bf16.msra.mxu0 0
    %6311 = vmatprep.subr.bf16.mxu0 0
    %6312 = vmatpush1.bf16.msra.mxu0 0
    %6313 = vmatprep.subr.bf16.mxu0 0
    %6314 = vmatpush1.bf16.msra.mxu0 0
    %6315 = vmatprep.subr.bf16.mxu0 0
    %6316 = vmatpush1.bf16.msra.mxu0 0
    %6317 = vmatprep.subr.bf16.mxu0 0
    %6318 = vmatpush1.bf16.msra.mxu0 %v6149
    %6319 = vmatprep.subr.bf16.mxu0 0
    %6320 = vmatpush1.bf16.msra.mxu0 %v6148
    %6321 = vmatprep.subr.bf16.mxu0 0
    %6322 = vmatpush2.bf16.msra.mxu0 0
    %6323 = vmatprep.subr.bf16.mxu0 0
    %6324 = vmatpush2.bf16.msra.mxu0 0
    %6325 = vmatprep.subr.bf16.mxu0 0
    %6326 = vmatpush2.bf16.msra.mxu0 0
    %6327 = vmatprep.subr.bf16.mxu0 0
    %6328 = vmatpush2.bf16.msra.mxu0 0
    %6329 = vmatprep.subr.bf16.mxu0 0
    %6330 = vmatpush2.bf16.msra.mxu0 0
    %6331 = vmatprep.subr.bf16.mxu0 0
    %6332 = vmatpush2.bf16.msra.mxu0 0
    %6333 = vmatprep.subr.bf16.mxu0 0
    %6334 = vmatpush2.bf16.msra.mxu0 0
    %6335 = vmatprep.subr.bf16.mxu0 0
    %6336 = vmatpush2.bf16.msra.mxu0 0
    %6337 = vmatprep.mubr.bf16.mxu0 0
    %6338 = vmatmul.mubr.bf16.gmra.mxu0 %v6303
    %v6339 = vpop.f32.mrf.mxu0
    %v6340 = vadd.f32 0.0, %v6339
    %v6341 = vpop.f32.mrf.mxu0
    %v6342 = vpop.f32.mrf.mxu0
    %v6343 = vpop.f32.mrf.mxu0
    %6344 = vdwg.mxu0
    %v6346 = vrot.slane %v6340, 4
    %v6348 = vadd.f32 %v6130, %v6346
    %v6349 = vsub.f32 0.0, %v6348
    %v6350 = vmul.f32 %v6349, 1.442695
    %v6351 = vpow.pop %v6350
    %v6352 = vadd.f32 %v6351, 1.0
    %v6353 = vrcp.pop %v6352
    %v6354 = vtanh.pop %v6348
    %v6356 = vrot.slane %v6290, 6
    %v6358 = vmul.f32 %v6353, %v6356
    %6360 = vrot.lane.b32.xlu0 %v6354, 64
    %v6361 = vpop.permute.xlu0 %6360
    %v6363 = vmul.f32 %v6353, %v6361
    %6365 = vrot.lane.b32.xlu0 %v6363, 32
    %v6366 = vpop.permute.xlu0 %6365
    %v6368 = vadd.f32 %v6358, %v6366
    %v6369 = vtanh.pop %v6368
    %6371 = vrot.lane.b32.xlu0 %v6369, 64
    %v6372 = vpop.permute.xlu0 %6371
    %v6374 = vmul.f32 %v6353, %v6372
    %v6375 = vpack.c.bf16 %v6374, %v6374
    %v6377 = vrot.slane %v6375, 2
    %6378 = vrot.lane.b32.xlu0 %v6377, 32
    %v6379 = vpop.permute.xlu0 %6378
    %v6381 = vsel %vm6152, %v6379, 0
    %6383 = vmatprep.subr.bf16.mxu0 0
    %6384 = vmatpush1.bf16.msra.mxu0 0
    %6385 = vmatprep.subr.bf16.mxu0 0
    %6386 = vmatpush1.bf16.msra.mxu0 0
    %6387 = vmatprep.subr.bf16.mxu0 0
    %6388 = vmatpush1.bf16.msra.mxu0 0
    %6389 = vmatprep.subr.bf16.mxu0 0
    %6390 = vmatpush1.bf16.msra.mxu0 0
    %6391 = vmatprep.subr.bf16.mxu0 0
    %6392 = vmatpush1.bf16.msra.mxu0 0
    %6393 = vmatprep.subr.bf16.mxu0 0
    %6394 = vmatpush1.bf16.msra.mxu0 0
    %6395 = vmatprep.subr.bf16.mxu0 0
    %6396 = vmatpush1.bf16.msra.mxu0 %v6149
    %6397 = vmatprep.subr.bf16.mxu0 0
    %6398 = vmatpush1.bf16.msra.mxu0 %v6148
    %6399 = vmatprep.subr.bf16.mxu0 0
    %6400 = vmatpush2.bf16.msra.mxu0 0
    %6401 = vmatprep.subr.bf16.mxu0 0
    %6402 = vmatpush2.bf16.msra.mxu0 0
    %6403 = vmatprep.subr.bf16.mxu0 0
    %6404 = vmatpush2.bf16.msra.mxu0 0
    %6405 = vmatprep.subr.bf16.mxu0 0
    %6406 = vmatpush2.bf16.msra.mxu0 0
    %6407 = vmatprep.subr.bf16.mxu0 0
    %6408 = vmatpush2.bf16.msra.mxu0 0
    %6409 = vmatprep.subr.bf16.mxu0 0
    %6410 = vmatpush2.bf16.msra.mxu0 0
    %6411 = vmatprep.subr.bf16.mxu0 0
    %6412 = vmatpush2.bf16.msra.mxu0 0
    %6413 = vmatprep.subr.bf16.mxu0 0
    %6414 = vmatpush2.bf16.msra.mxu0 0
    %6415 = vmatprep.mubr.bf16.mxu0 0
    %6416 = vmatmul.mubr.bf16.gmra.mxu0 %v6381
    %v6417 = vpop.f32.mrf.mxu0
    %v6418 = vadd.f32 0.0, %v6417
    %v6419 = vpop.f32.mrf.mxu0
    %v6420 = vpop.f32.mrf.mxu0
    %v6421 = vpop.f32.mrf.mxu0
    %6422 = vdwg.mxu0
    %v6424 = vrot.slane %v6418, 2
    %v6426 = vadd.f32 %v6130, %v6424
    %v6427 = vsub.f32 0.0, %v6426
    %v6428 = vmul.f32 %v6427, 1.442695
    %v6429 = vpow.pop %v6428
    %v6430 = vadd.f32 %v6429, 1.0
    %v6431 = vrcp.pop %v6430
    %v6432 = vtanh.pop %v6426
    %v6434 = vrot.slane %v6368, 6
    %v6436 = vmul.f32 %v6431, %v6434
    %6438 = vrot.lane.b32.xlu0 %v6432, 64
    %v6439 = vpop.permute.xlu0 %6438
    %v6441 = vmul.f32 %v6431, %v6439
    %6443 = vrot.lane.b32.xlu0 %v6441, 32
    %v6444 = vpop.permute.xlu0 %6443
    %v6446 = vadd.f32 %v6436, %v6444
    %v6447 = vtanh.pop %v6446
    %6449 = vrot.lane.b32.xlu0 %v6447, 64
    %v6450 = vpop.permute.xlu0 %6449
    %v6452 = vmul.f32 %v6431, %v6450
    %v6453 = vpack.c.bf16 %v6452, %v6452
    %v6455 = vrot.slane %v6453, 3
    %6456 = vrot.lane.b32.xlu0 %v6455, 32
    %v6457 = vpop.permute.xlu0 %6456
    %v6459 = vsel %vm6152, %v6457, 0
    %6461 = vmatprep.subr.bf16.mxu0 0
    %6462 = vmatpush1.bf16.msra.mxu0 0
    %6463 = vmatprep.subr.bf16.mxu0 0
    %6464 = vmatpush1.bf16.msra.mxu0 0
    %6465 = vmatprep.subr.bf16.mxu0 0
    %6466 = vmatpush1.bf16.msra.mxu0 0
    %6467 = vmatprep.subr.bf16.mxu0 0
    %6468 = vmatpush1.bf16.msra.mxu0 0
    %6469 = vmatprep.subr.bf16.mxu0 0
    %6470 = vmatpush1.bf16.msra.mxu0 0
    %6471 = vmatprep.subr.bf16.mxu0 0
    %6472 = vmatpush1.bf16.msra.mxu0 0
    %6473 = vmatprep.subr.bf16.mxu0 0
    %6474 = vmatpush1.bf16.msra.mxu0 %v6149
    %6475 = vmatprep.subr.bf16.mxu0 0
    %6476 = vmatpush1.bf16.msra.mxu0 %v6148
    %6477 = vmatprep.subr.bf16.mxu0 0
    %6478 = vmatpush2.bf16.msra.mxu0 0
    %6479 = vmatprep.subr.bf16.mxu0 0
    %6480 = vmatpush2.bf16.msra.mxu0 0
    %6481 = vmatprep.subr.bf16.mxu0 0
    %6482 = vmatpush2.bf16.msra.mxu0 0
    %6483 = vmatprep.subr.bf16.mxu0 0
    %6484 = vmatpush2.bf16.msra.mxu0 0
    %6485 = vmatprep.subr.bf16.mxu0 0
    %6486 = vmatpush2.bf16.msra.mxu0 0
    %6487 = vmatprep.subr.bf16.mxu0 0
    %6488 = vmatpush2.bf16.msra.mxu0 0
    %6489 = vmatprep.subr.bf16.mxu0 0
    %6490 = vmatpush2.bf16.msra.mxu0 0
    %6491 = vmatprep.subr.bf16.mxu0 0
    %6492 = vmatpush2.bf16.msra.mxu0 0
    %6493 = vmatprep.mubr.bf16.mxu0 0
    %6494 = vmatmul.mubr.bf16.gmra.mxu0 %v6459
    %v6495 = vpop.f32.mrf.mxu0
    %v6496 = vadd.f32 0.0, %v6495
    %v6497 = vpop.f32.mrf.mxu0
    %v6498 = vpop.f32.mrf.mxu0
    %v6499 = vpop.f32.mrf.mxu0
    %6500 = vdwg.mxu0
    %v6501 = vadd.f32 %v6133, %v6496
    %v6502 = vsub.f32 0.0, %v6501
    %v6503 = vmul.f32 %v6502, 1.442695
    %v6504 = vpow.pop %v6503
    %v6505 = vadd.f32 %v6504, 1.0
    %v6506 = vrcp.pop %v6505
    %v6507 = vtanh.pop %v6501
    %v6509 = vrot.slane %v6446, 6
    %v6511 = vmul.f32 %v6506, %v6509
    %6513 = vrot.lane.b32.xlu0 %v6507, 64
    %v6514 = vpop.permute.xlu0 %6513
    %v6516 = vmul.f32 %v6506, %v6514
    %6518 = vrot.lane.b32.xlu0 %v6516, 32
    %v6519 = vpop.permute.xlu0 %6518
    %v6521 = vadd.f32 %v6511, %v6519
    %v6522 = vtanh.pop %v6521
    %6524 = vrot.lane.b32.xlu0 %v6522, 64
    %v6525 = vpop.permute.xlu0 %6524
    %v6527 = vmul.f32 %v6506, %v6525
    %v6528 = vpack.c.bf16 %v6527, %v6527
    %6530 = vrot.lane.b32.xlu0 %v6528, 32
    %v6531 = vpop.permute.xlu0 %6530
    %v6533 = vsel %vm6152, %v6531, 0
    %6535 = vmatprep.subr.bf16.mxu0 0
    %6536 = vmatpush1.bf16.msra.mxu0 0
    %6537 = vmatprep.subr.bf16.mxu0 0
    %6538 = vmatpush1.bf16.msra.mxu0 0
    %6539 = vmatprep.subr.bf16.mxu0 0
    %6540 = vmatpush1.bf16.msra.mxu0 0
    %6541 = vmatprep.subr.bf16.mxu0 0
    %6542 = vmatpush1.bf16.msra.mxu0 0
    %6543 = vmatprep.subr.bf16.mxu0 0
    %6544 = vmatpush1.bf16.msra.mxu0 0
    %6545 = vmatprep.subr.bf16.mxu0 0
    %6546 = vmatpush1.bf16.msra.mxu0 0
    %6547 = vmatprep.subr.bf16.mxu0 0
    %6548 = vmatpush1.bf16.msra.mxu0 %v6149
    %6549 = vmatprep.subr.bf16.mxu0 0
    %6550 = vmatpush1.bf16.msra.mxu0 %v6148
    %6551 = vmatprep.subr.bf16.mxu0 0
    %6552 = vmatpush2.bf16.msra.mxu0 0
    %6553 = vmatprep.subr.bf16.mxu0 0
    %6554 = vmatpush2.bf16.msra.mxu0 0
    %6555 = vmatprep.subr.bf16.mxu0 0
    %6556 = vmatpush2.bf16.msra.mxu0 0
    %6557 = vmatprep.subr.bf16.mxu0 0
    %6558 = vmatpush2.bf16.msra.mxu0 0
    %6559 = vmatprep.subr.bf16.mxu0 0
    %6560 = vmatpush2.bf16.msra.mxu0 0
    %6561 = vmatprep.subr.bf16.mxu0 0
    %6562 = vmatpush2.bf16.msra.mxu0 0
    %6563 = vmatprep.subr.bf16.mxu0 0
    %6564 = vmatpush2.bf16.msra.mxu0 0
    %6565 = vmatprep.subr.bf16.mxu0 0
    %6566 = vmatpush2.bf16.msra.mxu0 0
    %6567 = vmatprep.mubr.bf16.mxu0 0
    %6568 = vmatmul.mubr.bf16.gmra.mxu0 %v6533
    %v6569 = vpop.f32.mrf.mxu0
    %v6570 = vadd.f32 0.0, %v6569
    %v6571 = vpop.f32.mrf.mxu0
    %v6572 = vpop.f32.mrf.mxu0
    %v6573 = vpop.f32.mrf.mxu0
    %6574 = vdwg.mxu0
    %v6576 = vrot.slane %v6570, 6
    %v6578 = vadd.f32 %v6133, %v6576
    %v6579 = vsub.f32 0.0, %v6578
    %v6580 = vmul.f32 %v6579, 1.442695
    %v6581 = vpow.pop %v6580
    %v6582 = vadd.f32 %v6581, 1.0
    %v6583 = vrcp.pop %v6582
    %v6584 = vtanh.pop %v6578
    %v6586 = vrot.slane %v6521, 6
    %v6588 = vmul.f32 %v6583, %v6586
    %6590 = vrot.lane.b32.xlu0 %v6584, 64
    %v6591 = vpop.permute.xlu0 %6590
    %v6593 = vmul.f32 %v6583, %v6591
    %6595 = vrot.lane.b32.xlu0 %v6593, 32
    %v6596 = vpop.permute.xlu0 %6595
    %v6598 = vadd.f32 %v6588, %v6596
    %v6599 = vtanh.pop %v6598
    %6601 = vrot.lane.b32.xlu0 %v6599, 64
    %v6602 = vpop.permute.xlu0 %6601
    %v6604 = vmul.f32 %v6583, %v6602
    %v6605 = vpack.c.bf16 %v6604, %v6604
    %v6607 = vrot.slane %v6605, 1
    %6608 = vrot.lane.b32.xlu0 %v6607, 32
    %v6609 = vpop.permute.xlu0 %6608
    %v6611 = vsel %vm6152, %v6609, 0
    %6613 = vmatprep.subr.bf16.mxu0 0
    %6614 = vmatpush1.bf16.msra.mxu0 0
    %6615 = vmatprep.subr.bf16.mxu0 0
    %6616 = vmatpush1.bf16.msra.mxu0 0
    %6617 = vmatprep.subr.bf16.mxu0 0
    %6618 = vmatpush1.bf16.msra.mxu0 0
    %6619 = vmatprep.subr.bf16.mxu0 0
    %6620 = vmatpush1.bf16.msra.mxu0 0
    %6621 = vmatprep.subr.bf16.mxu0 0
    %6622 = vmatpush1.bf16.msra.mxu0 0
    %6623 = vmatprep.subr.bf16.mxu0 0
    %6624 = vmatpush1.bf16.msra.mxu0 0
    %6625 = vmatprep.subr.bf16.mxu0 0
    %6626 = vmatpush1.bf16.msra.mxu0 %v6149
    %6627 = vmatprep.subr.bf16.mxu0 0
    %6628 = vmatpush1.bf16.msra.mxu0 %v6148
    %6629 = vmatprep.subr.bf16.mxu0 0
    %6630 = vmatpush2.bf16.msra.mxu0 0
    %6631 = vmatprep.subr.bf16.mxu0 0
    %6632 = vmatpush2.bf16.msra.mxu0 0
    %6633 = vmatprep.subr.bf16.mxu0 0
    %6634 = vmatpush2.bf16.msra.mxu0 0
    %6635 = vmatprep.subr.bf16.mxu0 0
    %6636 = vmatpush2.bf16.msra.mxu0 0
    %6637 = vmatprep.subr.bf16.mxu0 0
    %6638 = vmatpush2.bf16.msra.mxu0 0
    %6639 = vmatprep.subr.bf16.mxu0 0
    %6640 = vmatpush2.bf16.msra.mxu0 0
    %6641 = vmatprep.subr.bf16.mxu0 0
    %6642 = vmatpush2.bf16.msra.mxu0 0
    %6643 = vmatprep.subr.bf16.mxu0 0
    %6644 = vmatpush2.bf16.msra.mxu0 0
    %6645 = vmatprep.mubr.bf16.mxu0 0
    %6646 = vmatmul.mubr.bf16.gmra.mxu0 %v6611
    %v6647 = vpop.f32.mrf.mxu0
    %v6648 = vadd.f32 0.0, %v6647
    %v6649 = vpop.f32.mrf.mxu0
    %v6650 = vpop.f32.mrf.mxu0
    %v6651 = vpop.f32.mrf.mxu0
    %6652 = vdwg.mxu0
    %v6654 = vrot.slane %v6648, 4
    %v6656 = vadd.f32 %v6133, %v6654
    %v6657 = vsub.f32 0.0, %v6656
    %v6658 = vmul.f32 %v6657, 1.442695
    %v6659 = vpow.pop %v6658
    %v6660 = vadd.f32 %v6659, 1.0
    %v6661 = vrcp.pop %v6660
    %v6662 = vtanh.pop %v6656
    %v6664 = vrot.slane %v6598, 6
    %v6666 = vmul.f32 %v6661, %v6664
    %6668 = vrot.lane.b32.xlu0 %v6662, 64
    %v6669 = vpop.permute.xlu0 %6668
    %v6671 = vmul.f32 %v6661, %v6669
    %6673 = vrot.lane.b32.xlu0 %v6671, 32
    %v6674 = vpop.permute.xlu0 %6673
    %v6676 = vadd.f32 %v6666, %v6674
    %v6677 = vtanh.pop %v6676
    %6679 = vrot.lane.b32.xlu0 %v6677, 64
    %v6680 = vpop.permute.xlu0 %6679
    %v6682 = vmul.f32 %v6661, %v6680
    %v6683 = vpack.c.bf16 %v6682, %v6682
    %v6685 = vrot.slane %v6683, 2
    %6686 = vrot.lane.b32.xlu0 %v6685, 32
    %v6687 = vpop.permute.xlu0 %6686
    %v6689 = vsel %vm6152, %v6687, 0
    %6691 = vmatprep.subr.bf16.mxu0 0
    %6692 = vmatpush1.bf16.msra.mxu0 0
    %6693 = vmatprep.subr.bf16.mxu0 0
    %6694 = vmatpush1.bf16.msra.mxu0 0
    %6695 = vmatprep.subr.bf16.mxu0 0
    %6696 = vmatpush1.bf16.msra.mxu0 0
    %6697 = vmatprep.subr.bf16.mxu0 0
    %6698 = vmatpush1.bf16.msra.mxu0 0
    %6699 = vmatprep.subr.bf16.mxu0 0
    %6700 = vmatpush1.bf16.msra.mxu0 0
    %6701 = vmatprep.subr.bf16.mxu0 0
    %6702 = vmatpush1.bf16.msra.mxu0 0
    %6703 = vmatprep.subr.bf16.mxu0 0
    %6704 = vmatpush1.bf16.msra.mxu0 %v6149
    %6705 = vmatprep.subr.bf16.mxu0 0
    %6706 = vmatpush1.bf16.msra.mxu0 %v6148
    %6707 = vmatprep.subr.bf16.mxu0 0
    %6708 = vmatpush2.bf16.msra.mxu0 0
    %6709 = vmatprep.subr.bf16.mxu0 0
    %6710 = vmatpush2.bf16.msra.mxu0 0
    %6711 = vmatprep.subr.bf16.mxu0 0
    %6712 = vmatpush2.bf16.msra.mxu0 0
    %6713 = vmatprep.subr.bf16.mxu0 0
    %6714 = vmatpush2.bf16.msra.mxu0 0
    %6715 = vmatprep.subr.bf16.mxu0 0
    %6716 = vmatpush2.bf16.msra.mxu0 0
    %6717 = vmatprep.subr.bf16.mxu0 0
    %6718 = vmatpush2.bf16.msra.mxu0 0
    %6719 = vmatprep.subr.bf16.mxu0 0
    %6720 = vmatpush2.bf16.msra.mxu0 0
    %6721 = vmatprep.subr.bf16.mxu0 0
    %6722 = vmatpush2.bf16.msra.mxu0 0
    %6723 = vmatprep.mubr.bf16.mxu0 0
    %6724 = vmatmul.mubr.bf16.gmra.mxu0 %v6689
    %v6725 = vpop.f32.mrf.mxu0
    %v6726 = vadd.f32 0.0, %v6725
    %v6727 = vpop.f32.mrf.mxu0
    %v6728 = vpop.f32.mrf.mxu0
    %v6729 = vpop.f32.mrf.mxu0
    %6730 = vdwg.mxu0
    %v6732 = vrot.slane %v6726, 2
    %v6734 = vadd.f32 %v6133, %v6732
    %v6735 = vsub.f32 0.0, %v6734
    %v6736 = vmul.f32 %v6735, 1.442695
    %v6737 = vpow.pop %v6736
    %v6738 = vadd.f32 %v6737, 1.0
    %v6739 = vrcp.pop %v6738
    %v6740 = vtanh.pop %v6734
    %v6742 = vrot.slane %v6676, 6
    %v6744 = vmul.f32 %v6739, %v6742
    %6746 = vrot.lane.b32.xlu0 %v6740, 64
    %v6747 = vpop.permute.xlu0 %6746
    %v6749 = vmul.f32 %v6739, %v6747
    %6751 = vrot.lane.b32.xlu0 %v6749, 32
    %v6752 = vpop.permute.xlu0 %6751
    %v6754 = vadd.f32 %v6744, %v6752
    %v6755 = vtanh.pop %v6754
    %6757 = vrot.lane.b32.xlu0 %v6755, 64
    %v6758 = vpop.permute.xlu0 %6757
    %v6760 = vmul.f32 %v6739, %v6758
    %v6761 = vpack.c.bf16 %v6760, %v6760
    %v6762 = vld [vmem:[%s12] sm:$0xf]
    %v6763 = vld [vmem:[%s12 + $0x4] sm:$0xf]
    %v6764 = vld [vmem:[%s12 + $0x8] sm:$0xf]
    %v6765 = vld [vmem:[%s12 + $0xc] sm:$0xf]
    %v6766 = vld [vmem:[%s13] sm:$0x1]
    %v6768 = vlaneseq
    %v6769 = vshrl.u32 %v6768, 7
    %v6770 = vsub.s32 0, %v6769
    %v6771 = vrot.slane %v6766, %v6770
    %v6774 = vrot.slane %v6761, 3
    %6775 = vrot.lane.b32.xlu0 %v6774, 32
    %v6776 = vpop.permute.xlu0 %6775
    %v6781 = vunpack.c.l.b16 %v6762
    %v6782 = vunpack.c.l.b16 %v6763
    %v6783 = vunpack.c.l.b16 %v6764
    %v6784 = vunpack.c.l.b16 %v6765
    %v6785 = vpack.c.b16 %v6782, %v6781
    %v6786 = vpack.c.b16 %v6784, %v6783
    %v6790 = vsel %vm6152, %v6776, 0
    %6792 = vmatprep.subr.bf16.mxu0 0
    %6793 = vmatpush1.bf16.msra.mxu0 0
    %6794 = vmatprep.subr.bf16.mxu0 0
    %6795 = vmatpush1.bf16.msra.mxu0 0
    %6796 = vmatprep.subr.bf16.mxu0 0
    %6797 = vmatpush1.bf16.msra.mxu0 0
    %6798 = vmatprep.subr.bf16.mxu0 0
    %6799 = vmatpush1.bf16.msra.mxu0 0
    %6800 = vmatprep.subr.bf16.mxu0 0
    %6801 = vmatpush1.bf16.msra.mxu0 0
    %6802 = vmatprep.subr.bf16.mxu0 0
    %6803 = vmatpush1.bf16.msra.mxu0 0
    %6804 = vmatprep.subr.bf16.mxu0 0
    %6805 = vmatpush1.bf16.msra.mxu0 %v6786
    %6806 = vmatprep.subr.bf16.mxu0 0
    %6807 = vmatpush1.bf16.msra.mxu0 %v6785
    %6808 = vmatprep.subr.bf16.mxu0 0
    %6809 = vmatpush2.bf16.msra.mxu0 0
    %6810 = vmatprep.subr.bf16.mxu0 0
    %6811 = vmatpush2.bf16.msra.mxu0 0
    %6812 = vmatprep.subr.bf16.mxu0 0
    %6813 = vmatpush2.bf16.msra.mxu0 0
    %6814 = vmatprep.subr.bf16.mxu0 0
    %6815 = vmatpush2.bf16.msra.mxu0 0
    %6816 = vmatprep.subr.bf16.mxu0 0
    %6817 = vmatpush2.bf16.msra.mxu0 0
    %6818 = vmatprep.subr.bf16.mxu0 0
    %6819 = vmatpush2.bf16.msra.mxu0 0
    %6820 = vmatprep.subr.bf16.mxu0 0
    %6821 = vmatpush2.bf16.msra.mxu0 0
    %6822 = vmatprep.subr.bf16.mxu0 0
    %6823 = vmatpush2.bf16.msra.mxu0 0
    %6824 = vmatprep.mubr.bf16.mxu0 0
    %6825 = vmatmul.mubr.bf16.gmra.mxu0 %v6790
    %v6826 = vpop.f32.mrf.mxu0
    %v6827 = vadd.f32 %v6771, %v6826
    %v6828 = vpop.f32.mrf.mxu0
    %v6829 = vpop.f32.mrf.mxu0
    %v6830 = vpop.f32.mrf.mxu0
    %6831 = vdwg.mxu0
    %vm6832 = vcmask 9216
    %v6833 = vsel %vm6832, %v6827, -inf
    %6834 = vmax.xlane.f32.xlu0 %v6833
    %v6835 = vpop.xlane.xlu0 %6834
    %v6836 = vsub.f32 %v6827, %v6835
    %v6837 = vmul.f32 %v6836, 1.442695
    %v6838 = vpow.pop %v6837
    %v6839 = vsel %vm6832, %v6838, 0.0
    %6840 = vadd.xlane.f32.xlu0 %v6839
    %v6841 = vpop.xlane.xlu0 %6840
    %v6842 = vlog2.pop %v6841
    %v6843 = vmul.f32 %v6842, 0.6931472
    %v6844 = vadd.f32 %v6835, %v6843
    %v6845 = vsub.f32 %v6827, %v6844
    %6846 = vst.msk [vmem:[#allocation6] sm:$0x3] %vm6832, %v6845
    // Predicated region
    $region72: #{forward.1} parent=1 // pred_check
      _
    $region73: #{forward.1} parent=1 // pred_check_branch
      %6848 = sbr.rel (0) target = $region75
    $region74: #{forward.1} parent=1 // pred_region
      %s6850 = ssub.s32 32, 32
      %6851 = vsyncadd [#allocation7], %s6850
      %s6853 = sshll.u32 [#allocation6], 4
      %s6854 = int_to_ptr.vmem [resolvable:$true] %s6853
      %6856 = dma.vmem_to_hbm [thread:$0]  %s6854, 32, %s14, [#allocation7]
    $region75: #{forward.1} parent=1 // pred_fallthru
      _
    // Predicated region
    $region76: #{forward.1} parent=1 // pred_check
      _
    $region77: #{forward.1} parent=1 // pred_check_branch
      %6858 = sbr.rel (0) target = $region79
    $region78: #{forward.1} parent=1 // pred_region
      %6859 = dma.done [#allocation7], 32
    $region79: #{forward.1} parent=1 // pred_fallthru
      _
    %6860 = vsyncpa [#allocation7], 1

</llo_original>
